<compile_context>
chip_gen: v6e
topology: v6e:2x2x1
jax: 0.10.0
libtpu: 0.0.40
codegen_flags: <defaults>
</compile_context>

<pallas_src>
import functools

import jax
import jax.numpy as jnp
from jax.experimental import pallas as pl
from jax.experimental.pallas import tpu as pltpu


# ---------------------------------------------------------------------------
# Head layout (matches the PyTorch module exactly), 128-aligned offsets
# ---------------------------------------------------------------------------
HEAD_SIZES = {
    "conv1.weight": 16 * 1 * 5 * 5,    # 400
    "conv1.bias":   16,
    "conv2.weight": 32 * 16 * 5 * 5,   # 12800
    "conv2.bias":   32,
    "fc1.weight":   128 * 32 * 5 * 5,  # 102400
    "fc1.bias":     128,
}
HEAD_SHAPES = {
    "conv1.weight": (16, 1, 5, 5),
    "conv1.bias":   (16,),
    "conv2.weight": (32, 16, 5, 5),
    "conv2.bias":   (32,),
    "fc1.weight":   (128, 32 * 5 * 5),
    "fc1.bias":     (128,),
}


def _align128(n):
    return ((n + 127) // 128) * 128


HEAD_OFFSETS = {}
_off = 0
for _name, _size in HEAD_SIZES.items():
    HEAD_OFFSETS[_name] = _off
    _off += _align128(_size)
N_ALIGNED = _off                 # 116096 = 128 * 907

DEFAULT_TN = 29184               # 4 grid steps; n_pad = 116736 = 128 * 912


# ---------------------------------------------------------------------------
# Pallas kernel: fused MLP + concatenated hypernet heads (one N tile per step)
# ---------------------------------------------------------------------------
def _hypernet_kernel(x_ref, w1_ref, b1_ref, wh_ref, out_ref):
    # Tiny shared MLP, recomputed every grid step (negligible: 1x32 @ 32x33).
    # Column H of w1/b1 is (zeros, bias=1) so feat[0, H] = ReLU(1) = 1, which
    # selects the bias row folded into wh.  No persistent scratch, no step-0
    # init -> the grid axis is truly parallel (megacore-shardable).
    feat = jnp.maximum(
        jnp.dot(x_ref[...], w1_ref[...], preferred_element_type=jnp.float32)
        + b1_ref[...],
        0.0,
    )  # (1, H+1)

    # Hot path: native bf16 x bf16 MXU matmul with f32 accumulation over one
    # lane-dense N tile of the concatenated head weights (+ bias row).
    out_ref[...] = jnp.dot(
        feat.astype(jnp.bfloat16), wh_ref[...],
        preferred_element_type=jnp.float32,
    )  # (1, tn), stored directly — sublane-minimal, lane-dense output.


def _hypernet_forward_flat(x, w1_ext, b1_ext, wh_ext, tn):
    """x:(1,E) f32; w1_ext:(E,H+1) f32; b1_ext:(1,H+1) f32;
    wh_ext:(H+1,Npad) bf16 (last row = head biases). Returns (1,Npad) f32."""
    E = x.shape[1]
    hp1 = w1_ext.shape[1]
    n_pad = wh_ext.shape[1]
    assert n_pad % tn == 0
    n_steps = n_pad // tn

    flops = 2 * 1 * hp1 * n_pad + 2 * 1 * E * hp1 * n_steps
    bytes_accessed = (
        wh_ext.size * wh_ext.dtype.itemsize          # dominant: bf16 heads+bias
        + n_pad * 4                                  # f32 output row
        + (x.size + w1_ext.size + b1_ext.size) * 4   # resident inputs (once)
    )

    return pl.pallas_call(
        _hypernet_kernel,
        out_shape=jax.ShapeDtypeStruct((1, n_pad), jnp.float32),
        grid_spec=pltpu.PrefetchScalarGridSpec(
            num_scalar_prefetch=0,
            grid=(n_steps,),
            in_specs=[
                pl.BlockSpec((1, E), lambda j: (0, 0)),     # embedding row
                pl.BlockSpec((E, hp1), lambda j: (0, 0)),   # MLP weight (+0 col)
                pl.BlockSpec((1, hp1), lambda j: (0, 0)),   # MLP bias  (+1 col)
                pl.BlockSpec((hp1, tn), lambda j: (0, j)),  # head-weight tile
            ],
            out_specs=pl.BlockSpec((1, tn), lambda j: (0, j)),
        ),
        compiler_params=pltpu.CompilerParams(
            dimension_semantics=("parallel",),   # megacore-shardable on v7x
            vmem_limit_bytes=32 * 1024 * 1024,   # ~4 MiB used; safe on all gens
        ),
        cost_estimate=pl.CostEstimate(
            flops=int(flops),
            transcendentals=0,
            bytes_accessed=int(bytes_accessed),
        ),
    )(x, w1_ext, b1_ext, wh_ext)


# ---------------------------------------------------------------------------
# Parameter construction: pad + bf16-cast + bias-fold the head matrix at init.
# ---------------------------------------------------------------------------
def init_params(key, embedding_dim, hidden_dim, *, tn=DEFAULT_TN):
    """Deterministic synthetic parameters (same shapes as the torch module)."""
    keys = jax.random.split(key, 2 + 2 * len(HEAD_SIZES))
    scale = 0.05
    w1 = scale * jax.random.normal(keys[0], (embedding_dim, hidden_dim),
                                   jnp.float32)
    b1 = scale * jax.random.normal(keys[1], (hidden_dim,), jnp.float32)

    n_pad = ((N_ALIGNED + tn - 1) // tn) * tn
    wh_ext = jnp.zeros((hidden_dim + 1, n_pad), jnp.bfloat16)
    for i, (name, size) in enumerate(HEAD_SIZES.items()):
        w = scale * jax.random.normal(keys[2 + 2 * i], (hidden_dim, size),
                                      jnp.float32)
        b = scale * jax.random.normal(keys[3 + 2 * i], (size,), jnp.float32)
        off = HEAD_OFFSETS[name]
        wh_ext = wh_ext.at[:hidden_dim, off:off + size].set(
            w.astype(jnp.bfloat16))
        wh_ext = wh_ext.at[hidden_dim, off:off + size].set(
            b.astype(jnp.bfloat16))             # bias folded as last bf16 row

    w1_ext = jnp.zeros((embedding_dim, hidden_dim + 1), jnp.float32)
    w1_ext = w1_ext.at[:, :hidden_dim].set(w1)
    b1_ext = jnp.zeros((1, hidden_dim + 1), jnp.float32)
    b1_ext = b1_ext.at[0, :hidden_dim].set(b1)
    b1_ext = b1_ext.at[0, hidden_dim].set(1.0)  # constant-1 feature -> bias row
    return w1_ext, b1_ext, wh_ext


# ---------------------------------------------------------------------------
# Fully-jitted wrapper: run kernel, slice at 128-aligned offsets into the dict
# ---------------------------------------------------------------------------
@functools.partial(jax.jit, static_argnames=("tn",))
def hypernetwork_cnn_fmnist(client_embedding, params, *, tn=DEFAULT_TN):
    """client_embedding: (embedding_dim,) -> dict of generated CNN weights."""
    w1_ext, b1_ext, wh_ext = params
    E = w1_ext.shape[0]

    x = client_embedding.astype(jnp.float32).reshape(1, E)
    flat = _hypernet_forward_flat(x, w1_ext, b1_ext, wh_ext, tn)[0]

    weights = {}
    for name, size in HEAD_SIZES.items():
        off = HEAD_OFFSETS[name]                # 128-aligned -> cheap slices
        weights[name] = flat[off:off + size].reshape(HEAD_SHAPES[name])
    return weights


# ---------------------------------------------------------------------------
# Pure-JAX reference (mirrors the kernel's bf16 rounding of features, head
# weights and folded bias; accumulation in f32) for tight verification.
# ---------------------------------------------------------------------------
def reference_forward(client_embedding, params):
    w1_ext, b1_ext, wh_ext = params
    H = w1_ext.shape[1] - 1
    w1 = w1_ext[:, :H]
    b1 = b1_ext[0, :H]
    features = jnp.maximum(client_embedding.astype(jnp.float32) @ w1 + b1, 0.0)
    feat_q = features.astype(jnp.bfloat16).astype(jnp.float32)

    weights = {}
    for name, size in HEAD_SIZES.items():
        off = HEAD_OFFSETS[name]
        w = wh_ext[:H, off:off + size].astype(jnp.float32)
        b = wh_ext[H, off:off + size].astype(jnp.float32)
        weights[name] = (feat_q @ w + b).reshape(HEAD_SHAPES[name])
    return weights


if __name__ == "__main__":
    embedding_dim = 32
    hidden_dim = 32

    key = jax.random.PRNGKey(0)
    k_emb, k_params = jax.random.split(key)
    client_embedding = jax.random.normal(k_emb, (embedding_dim,), jnp.float32)
    params = init_params(k_params, embedding_dim, hidden_dim)

    weights = hypernetwork_cnn_fmnist(client_embedding, params)
    weights = jax.tree_util.tree_map(jax.block_until_ready, weights)

    ref = reference_forward(client_embedding, params)
    for name in HEAD_SIZES:
        assert weights[name].shape == HEAD_SHAPES[name], name
        assert jnp.allclose(weights[name], ref[name], atol=1e-3, rtol=1e-3), name

    print("KERNEL_OK")
</pallas_src>

<mosaic_0001>
module attributes {stable_mosaic.version = 11 : i64} {
  func.func @_hypernet_kernel(%arg0: i32, %arg1: memref<1x32xf32, #tpu.memory_space<vmem>>, %arg2: memref<32x33xf32, #tpu.memory_space<vmem>>, %arg3: memref<1x33xf32, #tpu.memory_space<vmem>>, %arg4: memref<33x29184xbf16, #tpu.memory_space<vmem>>, %arg5: memref<1x29184xf32, #tpu.memory_space<vmem>>) attributes {dimension_semantics = [#tpu.dimension_semantics<parallel>], iteration_bounds = array<i64: 4>, scalar_prefetch = 0 : i64, scratch_operands = 0 : i64, tpu.core_type = #tpu.core_type<tc>, window_params = [{pipeline_mode = #tpu.pipeline_mode<synchronous>, transform_indices = @transform_0, window_bounds = array<i64: 1, 32>}, {pipeline_mode = #tpu.pipeline_mode<synchronous>, transform_indices = @transform_1, window_bounds = array<i64: 32, 33>}, {pipeline_mode = #tpu.pipeline_mode<synchronous>, transform_indices = @transform_2, window_bounds = array<i64: 1, 33>}, {transform_indices = @transform_3, window_bounds = array<i64: 33, 29184>}, {transform_indices = @transform_4, window_bounds = array<i64: 1, 29184>}]} {
    %c0 = arith.constant 0 : index
    %c0_0 = arith.constant 0 : index
    %0 = vector.load %arg1[%c0, %c0_0] : memref<1x32xf32, #tpu.memory_space<vmem>>, vector<1x32xf32>
    %c0_1 = arith.constant 0 : index
    %c0_2 = arith.constant 0 : index
    %1 = vector.load %arg2[%c0_1, %c0_2] : memref<32x33xf32, #tpu.memory_space<vmem>>, vector<32x33xf32>
    %cst = arith.constant dense<0.000000e+00> : vector<1x33xf32>
    %2 = tpu.matmul %0, %1, %cst {dimension_numbers = #tpu.dot_dimension_numbers<[1], [0], [0], [1], [0, 0, 1, 1], [], []>} : vector<1x32xf32>, vector<32x33xf32>, vector<1x33xf32> -> vector<1x33xf32>
    %c0_3 = arith.constant 0 : index
    %c0_4 = arith.constant 0 : index
    %3 = vector.load %arg3[%c0_3, %c0_4] : memref<1x33xf32, #tpu.memory_space<vmem>>, vector<1x33xf32>
    %4 = arith.addf %2, %3 : vector<1x33xf32>
    %cst_5 = arith.constant 0.000000e+00 : f32
    %5 = vector.broadcast %cst_5 : f32 to vector<1x33xf32>
    %6 = arith.maximumf %4, %5 : vector<1x33xf32>
    %7 = arith.truncf %6 : vector<1x33xf32> to vector<1x33xbf16>
    %c0_6 = arith.constant 0 : index
    %c0_7 = arith.constant 0 : index
    %8 = vector.load %arg4[%c0_6, %c0_7] : memref<33x29184xbf16, #tpu.memory_space<vmem>>, vector<33x29184xbf16>
    %cst_8 = arith.constant dense<0.000000e+00> : vector<1x29184xf32>
    %9 = tpu.matmul %7, %8, %cst_8 {dimension_numbers = #tpu.dot_dimension_numbers<[1], [0], [0], [1], [0, 0, 1, 1], [], []>} : vector<1x33xbf16>, vector<33x29184xbf16>, vector<1x29184xf32> -> vector<1x29184xf32>
    %c0_9 = arith.constant 0 : index
    %c0_10 = arith.constant 0 : index
    %10 = vector.load %arg5[%c0_9, %c0_10] : memref<1x29184xf32, #tpu.memory_space<vmem>>, vector<1x29184xf32>
    tpu.vector_store %arg5[%c0_9, %c0_10], %9 {strides = array<i32>} : memref<1x29184xf32, #tpu.memory_space<vmem>>, vector<1x29184xf32>,
    return
  }
  func.func @transform_0(%arg0: i32) -> (i32, i32) {
    %c0_i32 = arith.constant 0 : i32
    %c0_i32_0 = arith.constant 0 : i32
    %c0_i32_1 = arith.constant 0 : i32
    return %c0_i32, %c0_i32_0 : i32, i32
  }
  func.func @transform_1(%arg0: i32) -> (i32, i32) {
    %c0_i32 = arith.constant 0 : i32
    %c0_i32_0 = arith.constant 0 : i32
    %c0_i32_1 = arith.constant 0 : i32
    return %c0_i32, %c0_i32_0 : i32, i32
  }
  func.func @transform_2(%arg0: i32) -> (i32, i32) {
    %c0_i32 = arith.constant 0 : i32
    %c0_i32_0 = arith.constant 0 : i32
    %c0_i32_1 = arith.constant 0 : i32
    return %c0_i32, %c0_i32_0 : i32, i32
  }
  func.func @transform_3(%arg0: i32) -> (i32, i32) {
    %c0_i32 = arith.constant 0 : i32
    %c0_i32_0 = arith.constant 0 : i32
    return %c0_i32, %arg0 : i32, i32
  }
  func.func @transform_4(%arg0: i32) -> (i32, i32) {
    %c0_i32 = arith.constant 0 : i32
    %c0_i32_0 = arith.constant 0 : i32
    return %c0_i32, %arg0 : i32, i32
  }
}

</mosaic_0001>

<llo_original>
// kernel: hypernetwork_cnn_fmnist.1
$region0: #{hypernetwork_cnn_fmnist.1}
  #allocation0 [shape = 'u32[]', space=smem, size = 0x4, offset = 0x4, fixed_abs, tag = 'smem constant byte address 0x4 - core index']
  #allocation1 [shape = 'u32[144,128]{1,0:T(1,128)}', space=vmem, size = 0x12000, scoped, tag = 'internal scratch']
  %s0 = inlined_call_operand.hbm [shape: f32[1,32], index: 0, kind: input, shape index: {}]
  %s1 = inlined_call_operand.hbm [shape: f32[32,33], index: 1, kind: input, shape index: {}]
  %s2 = inlined_call_operand.hbm [shape: f32[1,33], index: 2, kind: input, shape index: {}]
  %s3 = inlined_call_operand.hbm [shape: bf16[33,116736], index: 3, kind: input, shape index: {}]
  %s4 = inlined_call_operand.vmem [shape: f32[1,116736], index: 4, kind: output, shape index: {}]
  %s5 = sld [smem:[#allocation0]]
  $region65: #{hypernetwork_cnn_fmnist.1} parent=0
    _
  %s7 = ssub.s32 1, %s5
  %s8 = scalar_select 0, %s7, %s5
  $region1: #{hypernetwork_cnn_fmnist.1} parent=0
    #allocation2 [shape = 'u8[512]{0}', space=vmem, size = 0x400, scoped, tag = 'input window, operand 0, single buffered']
    #allocation3 [shape = 's32[2]{0}', space=sflag, size = 0x8, scoped, tag = 'scoped memory for hypernetwork_cnn_fmnist.1']
    #allocation4 [shape = 'u8[16384]{0}', space=vmem, size = 0x4000, scoped, tag = 'input window, operand 1, single buffered']
    #allocation5 [shape = 's32[1]{0}', space=sflag, size = 0x4, scoped, tag = 'scoped memory for hypernetwork_cnn_fmnist.1']
    #allocation6 [shape = 'u8[512]{0}', space=vmem, size = 0x400, scoped, tag = 'input window, operand 2, single buffered']
    #allocation7 [shape = 'u8[4669440]{0}', space=vmem, size = 0x474000, scoped, tag = 'input window, operand 3']
    #allocation8 [shape = 's32[2]{0}', space=sflag, size = 0x8, scoped, tag = 'scoped memory for hypernetwork_cnn_fmnist.1']
    %9 = vsyncpa [#allocation3], 0
    %10 = vsyncpa [#allocation5], 0
    %11 = vsyncpa [#allocation8], 0
    %s12 = scalar_lea.sflag [#allocation8], 1
    %13 = vsyncpa %s12, 0
    loop: start=0, step=1, limit=6
    $region2: #{hypernetwork_cnn_fmnist.1} parent=1 // loop_pre_header
      _
    $region3: #{hypernetwork_cnn_fmnist.1} parent=1 // loop_header
      %s15 = sphi 0, %s19
      %p16 = scmp.ge.s32.totalorder %s15, 6
      %s23 = sphi 0, %s23
      %s25 = sphi 0, %s23
      %s26 = sphi 0, %s25
      %s40 = sphi 0, %s26
      %s44 = sphi 0, %s44
      %s46 = sphi 0, %s44
      %s47 = sphi 0, %s46
      %s61 = sphi 0, %s47
      %s65 = sphi 0, %s65
      %s67 = sphi 0, %s65
      %s68 = sphi 0, %s67
      %s82 = sphi 0, %s68
      %s88 = sphi 0, %s90
      %s91 = sphi 0, %s88
      %s92 = sphi 0, %s91
      %s108 = sphi 0, %s92
      %s114 = sphi 0, %s116
      %s117 = sphi 0, %s114
      %s118 = sphi 0, %s117
      %s134 = sphi 0, %s118
    $region4: #{hypernetwork_cnn_fmnist.1} parent=1 // loop_header_branch
      %18 = sbr.rel (%p16) target = $region8
    $region5: #{hypernetwork_cnn_fmnist.1} parent=1 // loop_body
      %s20 = ssub.s32 %s15, 1
      %s21 = ssub.s32 %s15, 2
      %s22 = sadd.s32 %s15, 1
      %s24 = sadd.s32 %s23, 1
      %p27 = scmp.eq.s32.totalorder %s15, 3
      %p28 = scmp.ne.s32.totalorder %s23, %s25
      %p29 = scmp.eq.s32.totalorder %s15, 0
      %p30 = por %p28, %p29
      %p31 = scmp.ne.s32.totalorder %s23, %s25
      %p32 = scmp.eq.s32.totalorder %s20, 3
      %p33 = por %p31, %p32
      %p34 = scmp.ne.s32.totalorder %s25, %s26
      %p35 = scmp.eq.s32.totalorder %s20, 0
      %p36 = por %p34, %p35
      %p37 = scmp.ne.s32.totalorder %s25, %s26
      %p38 = scmp.eq.s32.totalorder %s21, 3
      %p39 = por %p37, %p38
      %p41 = scmp.ne.s32.totalorder %s26, %s40
      %p42 = scmp.eq.s32.totalorder %s21, 0
      %p43 = por %p41, %p42
      %s45 = sadd.s32 %s44, 1
      %p48 = scmp.eq.s32.totalorder %s15, 3
      %p49 = scmp.ne.s32.totalorder %s44, %s46
      %p50 = scmp.eq.s32.totalorder %s15, 0
      %p51 = por %p49, %p50
      %p52 = scmp.ne.s32.totalorder %s44, %s46
      %p53 = scmp.eq.s32.totalorder %s20, 3
      %p54 = por %p52, %p53
      %p55 = scmp.ne.s32.totalorder %s46, %s47
      %p56 = scmp.eq.s32.totalorder %s20, 0
      %p57 = por %p55, %p56
      %p58 = scmp.ne.s32.totalorder %s46, %s47
      %p59 = scmp.eq.s32.totalorder %s21, 3
      %p60 = por %p58, %p59
      %p62 = scmp.ne.s32.totalorder %s47, %s61
      %p63 = scmp.eq.s32.totalorder %s21, 0
      %p64 = por %p62, %p63
      %s66 = sadd.s32 %s65, 1
      %p69 = scmp.eq.s32.totalorder %s15, 3
      %p70 = scmp.ne.s32.totalorder %s65, %s67
      %p71 = scmp.eq.s32.totalorder %s15, 0
      %p72 = por %p70, %p71
      %p73 = scmp.ne.s32.totalorder %s65, %s67
      %p74 = scmp.eq.s32.totalorder %s20, 3
      %p75 = por %p73, %p74
      %p76 = scmp.ne.s32.totalorder %s67, %s68
      %p77 = scmp.eq.s32.totalorder %s20, 0
      %p78 = por %p76, %p77
      %p79 = scmp.ne.s32.totalorder %s67, %s68
      %p80 = scmp.eq.s32.totalorder %s21, 3
      %p81 = por %p79, %p80
      %p83 = scmp.ne.s32.totalorder %s68, %s82
      %p84 = scmp.eq.s32.totalorder %s21, 0
      %p85 = por %p83, %p84
      %s86 = ssub.s32 %s15, %s22
      %p87 = scmp.eq.s32.totalorder %s86, 0
      %s89 = sadd.s32 %s88, 1
      %s90 = scalar_select %p87, %s88, %s89
      %p93 = pneg %p87
      %p94 = scmp.eq.s32.totalorder %s15, 3
      %p95 = por %p93, %p94
      %p96 = scmp.ne.s32.totalorder %s88, %s91
      %p97 = scmp.eq.s32.totalorder %s15, 0
      %p98 = por %p96, %p97
      %p99 = scmp.ne.s32.totalorder %s88, %s91
      %p100 = scmp.eq.s32.totalorder %s20, 3
      %p101 = por %p99, %p100
      %p102 = scmp.ne.s32.totalorder %s91, %s92
      %p103 = scmp.eq.s32.totalorder %s20, 0
      %p104 = por %p102, %p103
      %p105 = scmp.ne.s32.totalorder %s91, %s92
      %p106 = scmp.eq.s32.totalorder %s21, 3
      %p107 = por %p105, %p106
      %p109 = scmp.ne.s32.totalorder %s92, %s108
      %p110 = scmp.eq.s32.totalorder %s21, 0
      %p111 = por %p109, %p110
      %s112 = ssub.s32 %s15, %s22
      %p113 = scmp.eq.s32.totalorder %s112, 0
      %s115 = sadd.s32 %s114, 1
      %s116 = scalar_select %p113, %s114, %s115
      %p119 = pneg %p113
      %p120 = scmp.eq.s32.totalorder %s15, 3
      %p121 = por %p119, %p120
      %p122 = scmp.ne.s32.totalorder %s114, %s117
      %p123 = scmp.eq.s32.totalorder %s15, 0
      %p124 = por %p122, %p123
      %p125 = scmp.ne.s32.totalorder %s114, %s117
      %p126 = scmp.eq.s32.totalorder %s20, 3
      %p127 = por %p125, %p126
      %p128 = scmp.ne.s32.totalorder %s117, %s118
      %p129 = scmp.eq.s32.totalorder %s20, 0
      %p130 = por %p128, %p129
      %p131 = scmp.ne.s32.totalorder %s117, %s118
      %p132 = scmp.eq.s32.totalorder %s21, 3
      %p133 = por %p131, %p132
      %p135 = scmp.ne.s32.totalorder %s118, %s134
      %p136 = scmp.eq.s32.totalorder %s21, 0
      %p137 = por %p135, %p136
      %p138 = scmp.le.s32.totalorder 1, %s15
      %p139 = scmp.lt.s32.totalorder %s15, 5
      %p140 = pnand %p138, %p139
      %p141 = pneg %p140
      // Predicated region
      $region9: #{hypernetwork_cnn_fmnist.1} parent=5 // pred_check
        _
      $region10: #{hypernetwork_cnn_fmnist.1} parent=5 // pred_check_branch
        %143 = sbr.rel (%p140) target = $region12
      $region11: #{hypernetwork_cnn_fmnist.1} parent=5 // pred_region
        %s144 = ssub.s32 %s15, 1
        // Predicated region
        $region13: #{hypernetwork_cnn_fmnist.1} parent=11 // pred_check
          %p145 = pneg %p36
        $region14: #{hypernetwork_cnn_fmnist.1} parent=11 // pred_check_branch
          %147 = sbr.rel (%p145) target = $region16
        $region15: #{hypernetwork_cnn_fmnist.1} parent=11 // pred_region
          %s149 = ssub.s32 16, 16
          %150 = vsyncadd [#allocation3], %s149
          %s152 = sshll.u32 [#allocation2], 4
          %s153 = int_to_ptr.vmem [resolvable:$true] %s152
          %155 = dma.hbm_to_vmem [thread:$0]  %s0, 16, %s153, [#allocation3]
        $region16: #{hypernetwork_cnn_fmnist.1} parent=11 // pred_fallthru
          _
        // Predicated region
        $region17: #{hypernetwork_cnn_fmnist.1} parent=11 // pred_check
          %p156 = pneg %p57
        $region18: #{hypernetwork_cnn_fmnist.1} parent=11 // pred_check_branch
          %158 = sbr.rel (%p156) target = $region20
        $region19: #{hypernetwork_cnn_fmnist.1} parent=11 // pred_region
          %s160 = ssub.s32 512, 512
          %161 = vsyncadd [#allocation5], %s160
          %s162 = sshll.u32 [#allocation4], 4
          %s163 = int_to_ptr.vmem [resolvable:$true] %s162
          %168 = dma.hbm_to_vmem [thread:$0]  %s1, 512, %s163, [#allocation5], 128, 128, 8
        $region20: #{hypernetwork_cnn_fmnist.1} parent=11 // pred_fallthru
          _
        // Predicated region
        $region21: #{hypernetwork_cnn_fmnist.1} parent=11 // pred_check
          %p169 = pneg %p78
        $region22: #{hypernetwork_cnn_fmnist.1} parent=11 // pred_check_branch
          %171 = sbr.rel (%p169) target = $region24
        $region23: #{hypernetwork_cnn_fmnist.1} parent=11 // pred_region
          %s173 = ssub.s32 16, 16
          %174 = vsyncadd [#allocation5], %s173
          %s176 = sshll.u32 [#allocation6], 4
          %s177 = int_to_ptr.vmem [resolvable:$true] %s176
          %179 = dma.hbm_to_vmem [thread:$0]  %s2, 16, %s177, [#allocation5]
        $region24: #{hypernetwork_cnn_fmnist.1} parent=11 // pred_fallthru
          _
      $region12: #{hypernetwork_cnn_fmnist.1} parent=5 // pred_fallthru
        _
      %p180 = scmp.lt.s32.totalorder %s15, 4
      // Predicated region
      $region25: #{hypernetwork_cnn_fmnist.1} parent=5 // pred_check
        %p181 = pneg %p180
      $region26: #{hypernetwork_cnn_fmnist.1} parent=5 // pred_check_branch
        %183 = sbr.rel (%p181) target = $region28
      $region27: #{hypernetwork_cnn_fmnist.1} parent=5 // pred_region
        // Predicated region
        $region29: #{hypernetwork_cnn_fmnist.1} parent=27 // pred_check
          %p184 = pneg %p98
        $region30: #{hypernetwork_cnn_fmnist.1} parent=27 // pred_check_branch
          %186 = sbr.rel (%p184) target = $region32
        $region31: #{hypernetwork_cnn_fmnist.1} parent=27 // pred_region
          %s187 = sand.u32 %s88, 1
          %s188 = scalar_lea.sflag [#allocation8], %s187
          %s189 = sand.u32 %s88, 1
          %s190 = smul.addr %s189, 4560
          %s191 = scalar_lea.vmem [#allocation7], %s190
          %s192 = smul.u32 228, %s15
          %s194 = ssub.s32 72960, 72960
          %195 = vsyncadd %s188, %s194
          %s196 = smul.addr %s192, 64
          %s197 = scalar_lea.hbm %s3, %s196
          %s198 = sshll.u32 %s191, 4
          %s199 = int_to_ptr.vmem [resolvable:$true] %s198
          %204 = dma.hbm_to_vmem [thread:$0]  %s197, 72960, %s199, %s188, 58368, 14592, 912
        $region32: #{hypernetwork_cnn_fmnist.1} parent=27 // pred_fallthru
          _
      $region28: #{hypernetwork_cnn_fmnist.1} parent=5 // pred_fallthru
        _
      %p205 = scmp.le.s32.totalorder 1, %s15
      %p206 = scmp.lt.s32.totalorder %s15, 5
      %p207 = pnand %p205, %p206
      %p208 = pneg %p207
      // Predicated region
      $region33: #{hypernetwork_cnn_fmnist.1} parent=5 // pred_check
        _
      $region34: #{hypernetwork_cnn_fmnist.1} parent=5 // pred_check_branch
        %210 = sbr.rel (%p207) target = $region36
      $region35: #{hypernetwork_cnn_fmnist.1} parent=5 // pred_region
        %s211 = ssub.s32 %s15, 1
        // Predicated region
        $region37: #{hypernetwork_cnn_fmnist.1} parent=35 // pred_check
          %p212 = pneg %p36
        $region38: #{hypernetwork_cnn_fmnist.1} parent=35 // pred_check_branch
          %214 = sbr.rel (%p212) target = $region40
        $region39: #{hypernetwork_cnn_fmnist.1} parent=35 // pred_region
          %215 = dma.done [#allocation3], 16
        $region40: #{hypernetwork_cnn_fmnist.1} parent=35 // pred_fallthru
          _
        // Predicated region
        $region41: #{hypernetwork_cnn_fmnist.1} parent=35 // pred_check
          %p216 = pneg %p57
        $region42: #{hypernetwork_cnn_fmnist.1} parent=35 // pred_check_branch
          %218 = sbr.rel (%p216) target = $region44
        $region43: #{hypernetwork_cnn_fmnist.1} parent=35 // pred_region
          %219 = dma.done [#allocation5], 512
        $region44: #{hypernetwork_cnn_fmnist.1} parent=35 // pred_fallthru
          _
        // Predicated region
        $region45: #{hypernetwork_cnn_fmnist.1} parent=35 // pred_check
          %p220 = pneg %p78
        $region46: #{hypernetwork_cnn_fmnist.1} parent=35 // pred_check_branch
          %222 = sbr.rel (%p220) target = $region48
        $region47: #{hypernetwork_cnn_fmnist.1} parent=35 // pred_region
          %223 = dma.done [#allocation5], 16
        $region48: #{hypernetwork_cnn_fmnist.1} parent=35 // pred_fallthru
          _
        %s224 = sand.u32 %s91, 1
        %s225 = scalar_lea.sflag [#allocation8], %s224
        %s226 = sand.u32 %s91, 1
        %s227 = smul.addr %s226, 4560
        %s228 = scalar_lea.vmem [#allocation7], %s227
        // Predicated region
        $region49: #{hypernetwork_cnn_fmnist.1} parent=35 // pred_check
          %p229 = pneg %p104
        $region50: #{hypernetwork_cnn_fmnist.1} parent=35 // pred_check_branch
          %231 = sbr.rel (%p229) target = $region52
        $region51: #{hypernetwork_cnn_fmnist.1} parent=35 // pred_region
          %232 = dma.done %s225, 72960
        $region52: #{hypernetwork_cnn_fmnist.1} parent=35 // pred_fallthru
          _
        %p233 = pneg %p36
        %p234 = pneg %p33
        %p235 = pneg %p57
        %p236 = pneg %p54
        %p237 = pneg %p78
        %p238 = pneg %p75
        %s239 = sand.u32 %s91, 1
        %s240 = scalar_lea.sflag [#allocation8], %s239
        %s241 = sand.u32 %s91, 1
        %s242 = smul.addr %s241, 4560
        %s243 = scalar_lea.vmem [#allocation7], %s242
        %p244 = pneg %p104
        %p245 = pneg %p101
        %p246 = pneg %p130
        %p247 = pneg %p127
        %s248 = smul.u32 228, %s20
        %p249 = scmp.lt.s32.totalorder %s248, 911
        %s250 = scalar_select %p249, %s248, 911
        %s251 = scalar_lea.vmem %s4, %s250
        %s252 = smul.u32 228, %s20
        %s253 = smul.u32 228, %s20
        %p254 = scmp.lt.s32.totalorder %s253, 911
        %s255 = scalar_select %p254, %s253, 911
        %s256 = scalar_lea.vmem %s4, %s255
        %s257 = smul.u32 228, %s20
        %v259 = vld [vmem:[#allocation2] sm:$0x1]
        %v260 = vld [vmem:[#allocation4] sm:$0xff]
        %v261 = vld [vmem:[#allocation4 + $0x8] sm:$0xff]
        %v262 = vld [vmem:[#allocation4 + $0x10] sm:$0xff]
        %v263 = vld [vmem:[#allocation4 + $0x18] sm:$0xff]
        %v264 = vld [vmem:[#allocation6] sm:$0x1]
        %vm265 = vcmask 261120
        %v267 = vsel %vm265, %v259, 0
        %269 = vmatprep.subr.mxu0 0.0
        %270 = vmatpush1.msra.mxu0 0.0
        %271 = vmatprep.subr.mxu0 0.0
        %272 = vmatpush1.msra.mxu0 0.0
        %273 = vmatprep.subr.mxu0 0.0
        %274 = vmatpush1.msra.mxu0 0.0
        %275 = vmatprep.subr.mxu0 0.0
        %276 = vmatpush1.msra.mxu0 0.0
        %277 = vmatprep.subr.mxu0 0.0
        %278 = vmatpush1.msra.mxu0 0.0
        %279 = vmatprep.subr.mxu0 0.0
        %280 = vmatpush1.msra.mxu0 0.0
        %281 = vmatprep.subr.mxu0 0.0
        %282 = vmatpush1.msra.mxu0 0.0
        %283 = vmatprep.subr.mxu0 0.0
        %284 = vmatpush1.msra.mxu0 0.0
        %285 = vmatprep.subr.mxu0 0.0
        %286 = vmatpush1.msra.mxu0 0.0
        %287 = vmatprep.subr.mxu0 0.0
        %288 = vmatpush1.msra.mxu0 0.0
        %289 = vmatprep.subr.mxu0 0.0
        %290 = vmatpush1.msra.mxu0 0.0
        %291 = vmatprep.subr.mxu0 0.0
        %292 = vmatpush1.msra.mxu0 0.0
        %293 = vmatprep.subr.mxu0 0.0
        %294 = vmatpush1.msra.mxu0 %v263
        %295 = vmatprep.subr.mxu0 0.0
        %296 = vmatpush1.msra.mxu0 %v262
        %297 = vmatprep.subr.mxu0 0.0
        %298 = vmatpush1.msra.mxu0 %v261
        %299 = vmatprep.subr.mxu0 0.0
        %300 = vmatpush1.msra.mxu0 %v260
        %301 = vmatprep.subr.mxu0 0.0
        %302 = vmatpush2.msra.mxu0 0.0
        %303 = vmatprep.subr.mxu0 0.0
        %304 = vmatpush2.msra.mxu0 0.0
        %305 = vmatprep.subr.mxu0 0.0
        %306 = vmatpush2.msra.mxu0 0.0
        %307 = vmatprep.subr.mxu0 0.0
        %308 = vmatpush2.msra.mxu0 0.0
        %309 = vmatprep.subr.mxu0 0.0
        %310 = vmatpush2.msra.mxu0 0.0
        %311 = vmatprep.subr.mxu0 0.0
        %312 = vmatpush2.msra.mxu0 0.0
        %313 = vmatprep.subr.mxu0 0.0
        %314 = vmatpush2.msra.mxu0 0.0
        %315 = vmatprep.subr.mxu0 0.0
        %316 = vmatpush2.msra.mxu0 0.0
        %317 = vmatprep.subr.mxu0 0.0
        %318 = vmatpush2.msra.mxu0 0.0
        %319 = vmatprep.subr.mxu0 0.0
        %320 = vmatpush2.msra.mxu0 0.0
        %321 = vmatprep.subr.mxu0 0.0
        %322 = vmatpush2.msra.mxu0 0.0
        %323 = vmatprep.subr.mxu0 0.0
        %324 = vmatpush2.msra.mxu0 0.0
        %325 = vmatprep.subr.mxu0 0.0
        %326 = vmatpush2.msra.mxu0 0.0
        %327 = vmatprep.subr.mxu0 0.0
        %328 = vmatpush2.msra.mxu0 0.0
        %329 = vmatprep.subr.mxu0 0.0
        %330 = vmatpush2.msra.mxu0 0.0
        %331 = vmatprep.subr.mxu0 0.0
        %332 = vmatpush2.msra.mxu0 0.0
        %333 = vmatprep.mubr.f32.mxu0 0.0
        %334 = vmatmul.mubr.f32.gmra.mxu0 %v267
        %v335 = vpop.f32.mrf.mxu0
        %v336 = vadd.f32 %v264, %v335
        %v337 = vpop.f32.mrf.mxu0
        %338 = vdwg.mxu0
        %v339 = vmax.f32 %v336, 0.0
        %v340 = vpack.c.bf16 %v339, %v339
        %v341 = vld [vmem:[%s228] sm:$0xff]
        %v342 = vld [vmem:[%s228 + $0x8] sm:$0xff]
        %v343 = vld [vmem:[%s228 + $0x10] sm:$0xff]
        %v344 = vld [vmem:[%s228 + $0x18] sm:$0xff]
        %v345 = vld [vmem:[%s228 + $0x20] sm:$0xff]
        %v346 = vld [vmem:[%s228 + $0x28] sm:$0xff]
        %v347 = vld [vmem:[%s228 + $0x30] sm:$0xff]
        %v348 = vld [vmem:[%s228 + $0x38] sm:$0xff]
        %v349 = vld [vmem:[%s228 + $0x40] sm:$0xff]
        %v350 = vld [vmem:[%s228 + $0x48] sm:$0xff]
        %v351 = vld [vmem:[%s228 + $0x50] sm:$0xff]
        %v352 = vld [vmem:[%s228 + $0x58] sm:$0xff]
        %v353 = vld [vmem:[%s228 + $0x60] sm:$0xff]
        %v354 = vld [vmem:[%s228 + $0x68] sm:$0xff]
        %v355 = vld [vmem:[%s228 + $0x70] sm:$0xff]
        %v356 = vld [vmem:[%s228 + $0x78] sm:$0xff]
        %v357 = vld [vmem:[%s228 + $0x80] sm:$0xff]
        %v358 = vld [vmem:[%s228 + $0x88] sm:$0xff]
        %v359 = vld [vmem:[%s228 + $0x90] sm:$0xff]
        %v360 = vld [vmem:[%s228 + $0x98] sm:$0xff]
        %v361 = vld [vmem:[%s228 + $0xa0] sm:$0xff]
        %v362 = vld [vmem:[%s228 + $0xa8] sm:$0xff]
        %v363 = vld [vmem:[%s228 + $0xb0] sm:$0xff]
        %v364 = vld [vmem:[%s228 + $0xb8] sm:$0xff]
        %v365 = vld [vmem:[%s228 + $0xc0] sm:$0xff]
        %v366 = vld [vmem:[%s228 + $0xc8] sm:$0xff]
        %v367 = vld [vmem:[%s228 + $0xd0] sm:$0xff]
        %v368 = vld [vmem:[%s228 + $0xd8] sm:$0xff]
        %v369 = vld [vmem:[%s228 + $0xe0] sm:$0xff]
        %v370 = vld [vmem:[%s228 + $0xe8] sm:$0xff]
        %v371 = vld [vmem:[%s228 + $0xf0] sm:$0xff]
        %v372 = vld [vmem:[%s228 + $0xf8] sm:$0xff]
        %v373 = vld [vmem:[%s228 + $0x100] sm:$0xff]
        %v374 = vld [vmem:[%s228 + $0x108] sm:$0xff]
        %v375 = vld [vmem:[%s228 + $0x110] sm:$0xff]
        %v376 = vld [vmem:[%s228 + $0x118] sm:$0xff]
        %v377 = vld [vmem:[%s228 + $0x120] sm:$0xff]
        %v378 = vld [vmem:[%s228 + $0x128] sm:$0xff]
        %v379 = vld [vmem:[%s228 + $0x130] sm:$0xff]
        %v380 = vld [vmem:[%s228 + $0x138] sm:$0xff]
        %v381 = vld [vmem:[%s228 + $0x140] sm:$0xff]
        %v382 = vld [vmem:[%s228 + $0x148] sm:$0xff]
        %v383 = vld [vmem:[%s228 + $0x150] sm:$0xff]
        %v384 = vld [vmem:[%s228 + $0x158] sm:$0xff]
        %v385 = vld [vmem:[%s228 + $0x160] sm:$0xff]
        %v386 = vld [vmem:[%s228 + $0x168] sm:$0xff]
        %v387 = vld [vmem:[%s228 + $0x170] sm:$0xff]
        %v388 = vld [vmem:[%s228 + $0x178] sm:$0xff]
        %v389 = vld [vmem:[%s228 + $0x180] sm:$0xff]
        %v390 = vld [vmem:[%s228 + $0x188] sm:$0xff]
        %v391 = vld [vmem:[%s228 + $0x190] sm:$0xff]
        %v392 = vld [vmem:[%s228 + $0x198] sm:$0xff]
        %v393 = vld [vmem:[%s228 + $0x1a0] sm:$0xff]
        %v394 = vld [vmem:[%s228 + $0x1a8] sm:$0xff]
        %v395 = vld [vmem:[%s228 + $0x1b0] sm:$0xff]
        %v396 = vld [vmem:[%s228 + $0x1b8] sm:$0xff]
        %v397 = vld [vmem:[%s228 + $0x1c0] sm:$0xff]
        %v398 = vld [vmem:[%s228 + $0x1c8] sm:$0xff]
        %v399 = vld [vmem:[%s228 + $0x1d0] sm:$0xff]
        %v400 = vld [vmem:[%s228 + $0x1d8] sm:$0xff]
        %v401 = vld [vmem:[%s228 + $0x1e0] sm:$0xff]
        %v402 = vld [vmem:[%s228 + $0x1e8] sm:$0xff]
        %v403 = vld [vmem:[%s228 + $0x1f0] sm:$0xff]
        %v404 = vld [vmem:[%s228 + $0x1f8] sm:$0xff]
        %v405 = vld [vmem:[%s228 + $0x200] sm:$0xff]
        %v406 = vld [vmem:[%s228 + $0x208] sm:$0xff]
        %v407 = vld [vmem:[%s228 + $0x210] sm:$0xff]
        %v408 = vld [vmem:[%s228 + $0x218] sm:$0xff]
        %v409 = vld [vmem:[%s228 + $0x220] sm:$0xff]
        %v410 = vld [vmem:[%s228 + $0x228] sm:$0xff]
        %v411 = vld [vmem:[%s228 + $0x230] sm:$0xff]
        %v412 = vld [vmem:[%s228 + $0x238] sm:$0xff]
        %v413 = vld [vmem:[%s228 + $0x240] sm:$0xff]
        %v414 = vld [vmem:[%s228 + $0x248] sm:$0xff]
        %v415 = vld [vmem:[%s228 + $0x250] sm:$0xff]
        %v416 = vld [vmem:[%s228 + $0x258] sm:$0xff]
        %v417 = vld [vmem:[%s228 + $0x260] sm:$0xff]
        %v418 = vld [vmem:[%s228 + $0x268] sm:$0xff]
        %v419 = vld [vmem:[%s228 + $0x270] sm:$0xff]
        %v420 = vld [vmem:[%s228 + $0x278] sm:$0xff]
        %v421 = vld [vmem:[%s228 + $0x280] sm:$0xff]
        %v422 = vld [vmem:[%s228 + $0x288] sm:$0xff]
        %v423 = vld [vmem:[%s228 + $0x290] sm:$0xff]
        %v424 = vld [vmem:[%s228 + $0x298] sm:$0xff]
        %v425 = vld [vmem:[%s228 + $0x2a0] sm:$0xff]
        %v426 = vld [vmem:[%s228 + $0x2a8] sm:$0xff]
        %v427 = vld [vmem:[%s228 + $0x2b0] sm:$0xff]
        %v428 = vld [vmem:[%s228 + $0x2b8] sm:$0xff]
        %v429 = vld [vmem:[%s228 + $0x2c0] sm:$0xff]
        %v430 = vld [vmem:[%s228 + $0x2c8] sm:$0xff]
        %v431 = vld [vmem:[%s228 + $0x2d0] sm:$0xff]
        %v432 = vld [vmem:[%s228 + $0x2d8] sm:$0xff]
        %v433 = vld [vmem:[%s228 + $0x2e0] sm:$0xff]
        %v434 = vld [vmem:[%s228 + $0x2e8] sm:$0xff]
        %v435 = vld [vmem:[%s228 + $0x2f0] sm:$0xff]
        %v436 = vld [vmem:[%s228 + $0x2f8] sm:$0xff]
        %v437 = vld [vmem:[%s228 + $0x300] sm:$0xff]
        %v438 = vld [vmem:[%s228 + $0x308] sm:$0xff]
        %v439 = vld [vmem:[%s228 + $0x310] sm:$0xff]
        %v440 = vld [vmem:[%s228 + $0x318] sm:$0xff]
        %v441 = vld [vmem:[%s228 + $0x320] sm:$0xff]
        %v442 = vld [vmem:[%s228 + $0x328] sm:$0xff]
        %v443 = vld [vmem:[%s228 + $0x330] sm:$0xff]
        %v444 = vld [vmem:[%s228 + $0x338] sm:$0xff]
        %v445 = vld [vmem:[%s228 + $0x340] sm:$0xff]
        %v446 = vld [vmem:[%s228 + $0x348] sm:$0xff]
        %v447 = vld [vmem:[%s228 + $0x350] sm:$0xff]
        %v448 = vld [vmem:[%s228 + $0x358] sm:$0xff]
        %v449 = vld [vmem:[%s228 + $0x360] sm:$0xff]
        %v450 = vld [vmem:[%s228 + $0x368] sm:$0xff]
        %v451 = vld [vmem:[%s228 + $0x370] sm:$0xff]
        %v452 = vld [vmem:[%s228 + $0x378] sm:$0xff]
        %v453 = vld [vmem:[%s228 + $0x380] sm:$0xff]
        %v454 = vld [vmem:[%s228 + $0x388] sm:$0xff]
        %v455 = vld [vmem:[%s228 + $0x390] sm:$0xff]
        %v456 = vld [vmem:[%s228 + $0x398] sm:$0xff]
        %v457 = vld [vmem:[%s228 + $0x3a0] sm:$0xff]
        %v458 = vld [vmem:[%s228 + $0x3a8] sm:$0xff]
        %v459 = vld [vmem:[%s228 + $0x3b0] sm:$0xff]
        %v460 = vld [vmem:[%s228 + $0x3b8] sm:$0xff]
        %v461 = vld [vmem:[%s228 + $0x3c0] sm:$0xff]
        %v462 = vld [vmem:[%s228 + $0x3c8] sm:$0xff]
        %v463 = vld [vmem:[%s228 + $0x3d0] sm:$0xff]
        %v464 = vld [vmem:[%s228 + $0x3d8] sm:$0xff]
        %v465 = vld [vmem:[%s228 + $0x3e0] sm:$0xff]
        %v466 = vld [vmem:[%s228 + $0x3e8] sm:$0xff]
        %v467 = vld [vmem:[%s228 + $0x3f0] sm:$0xff]
        %v468 = vld [vmem:[%s228 + $0x3f8] sm:$0xff]
        %v469 = vld [vmem:[%s228 + $0x400] sm:$0xff]
        %v470 = vld [vmem:[%s228 + $0x408] sm:$0xff]
        %v471 = vld [vmem:[%s228 + $0x410] sm:$0xff]
        %v472 = vld [vmem:[%s228 + $0x418] sm:$0xff]
        %v473 = vld [vmem:[%s228 + $0x420] sm:$0xff]
        %v474 = vld [vmem:[%s228 + $0x428] sm:$0xff]
        %v475 = vld [vmem:[%s228 + $0x430] sm:$0xff]
        %v476 = vld [vmem:[%s228 + $0x438] sm:$0xff]
        %v477 = vld [vmem:[%s228 + $0x440] sm:$0xff]
        %v478 = vld [vmem:[%s228 + $0x448] sm:$0xff]
        %v479 = vld [vmem:[%s228 + $0x450] sm:$0xff]
        %v480 = vld [vmem:[%s228 + $0x458] sm:$0xff]
        %v481 = vld [vmem:[%s228 + $0x460] sm:$0xff]
        %v482 = vld [vmem:[%s228 + $0x468] sm:$0xff]
        %v483 = vld [vmem:[%s228 + $0x470] sm:$0xff]
        %v484 = vld [vmem:[%s228 + $0x478] sm:$0xff]
        %v485 = vld [vmem:[%s228 + $0x480] sm:$0xff]
        %v486 = vld [vmem:[%s228 + $0x488] sm:$0xff]
        %v487 = vld [vmem:[%s228 + $0x490] sm:$0xff]
        %v488 = vld [vmem:[%s228 + $0x498] sm:$0xff]
        %v489 = vld [vmem:[%s228 + $0x4a0] sm:$0xff]
        %v490 = vld [vmem:[%s228 + $0x4a8] sm:$0xff]
        %v491 = vld [vmem:[%s228 + $0x4b0] sm:$0xff]
        %v492 = vld [vmem:[%s228 + $0x4b8] sm:$0xff]
        %v493 = vld [vmem:[%s228 + $0x4c0] sm:$0xff]
        %v494 = vld [vmem:[%s228 + $0x4c8] sm:$0xff]
        %v495 = vld [vmem:[%s228 + $0x4d0] sm:$0xff]
        %v496 = vld [vmem:[%s228 + $0x4d8] sm:$0xff]
        %v497 = vld [vmem:[%s228 + $0x4e0] sm:$0xff]
        %v498 = vld [vmem:[%s228 + $0x4e8] sm:$0xff]
        %v499 = vld [vmem:[%s228 + $0x4f0] sm:$0xff]
        %v500 = vld [vmem:[%s228 + $0x4f8] sm:$0xff]
        %v501 = vld [vmem:[%s228 + $0x500] sm:$0xff]
        %v502 = vld [vmem:[%s228 + $0x508] sm:$0xff]
        %v503 = vld [vmem:[%s228 + $0x510] sm:$0xff]
        %v504 = vld [vmem:[%s228 + $0x518] sm:$0xff]
        %v505 = vld [vmem:[%s228 + $0x520] sm:$0xff]
        %v506 = vld [vmem:[%s228 + $0x528] sm:$0xff]
        %v507 = vld [vmem:[%s228 + $0x530] sm:$0xff]
        %v508 = vld [vmem:[%s228 + $0x538] sm:$0xff]
        %v509 = vld [vmem:[%s228 + $0x540] sm:$0xff]
        %v510 = vld [vmem:[%s228 + $0x548] sm:$0xff]
        %v511 = vld [vmem:[%s228 + $0x550] sm:$0xff]
        %v512 = vld [vmem:[%s228 + $0x558] sm:$0xff]
        %v513 = vld [vmem:[%s228 + $0x560] sm:$0xff]
        %v514 = vld [vmem:[%s228 + $0x568] sm:$0xff]
        %v515 = vld [vmem:[%s228 + $0x570] sm:$0xff]
        %v516 = vld [vmem:[%s228 + $0x578] sm:$0xff]
        %v517 = vld [vmem:[%s228 + $0x580] sm:$0xff]
        %v518 = vld [vmem:[%s228 + $0x588] sm:$0xff]
        %v519 = vld [vmem:[%s228 + $0x590] sm:$0xff]
        %v520 = vld [vmem:[%s228 + $0x598] sm:$0xff]
        %v521 = vld [vmem:[%s228 + $0x5a0] sm:$0xff]
        %v522 = vld [vmem:[%s228 + $0x5a8] sm:$0xff]
        %v523 = vld [vmem:[%s228 + $0x5b0] sm:$0xff]
        %v524 = vld [vmem:[%s228 + $0x5b8] sm:$0xff]
        %v525 = vld [vmem:[%s228 + $0x5c0] sm:$0xff]
        %v526 = vld [vmem:[%s228 + $0x5c8] sm:$0xff]
        %v527 = vld [vmem:[%s228 + $0x5d0] sm:$0xff]
        %v528 = vld [vmem:[%s228 + $0x5d8] sm:$0xff]
        %v529 = vld [vmem:[%s228 + $0x5e0] sm:$0xff]
        %v530 = vld [vmem:[%s228 + $0x5e8] sm:$0xff]
        %v531 = vld [vmem:[%s228 + $0x5f0] sm:$0xff]
        %v532 = vld [vmem:[%s228 + $0x5f8] sm:$0xff]
        %v533 = vld [vmem:[%s228 + $0x600] sm:$0xff]
        %v534 = vld [vmem:[%s228 + $0x608] sm:$0xff]
        %v535 = vld [vmem:[%s228 + $0x610] sm:$0xff]
        %v536 = vld [vmem:[%s228 + $0x618] sm:$0xff]
        %v537 = vld [vmem:[%s228 + $0x620] sm:$0xff]
        %v538 = vld [vmem:[%s228 + $0x628] sm:$0xff]
        %v539 = vld [vmem:[%s228 + $0x630] sm:$0xff]
        %v540 = vld [vmem:[%s228 + $0x638] sm:$0xff]
        %v541 = vld [vmem:[%s228 + $0x640] sm:$0xff]
        %v542 = vld [vmem:[%s228 + $0x648] sm:$0xff]
        %v543 = vld [vmem:[%s228 + $0x650] sm:$0xff]
        %v544 = vld [vmem:[%s228 + $0x658] sm:$0xff]
        %v545 = vld [vmem:[%s228 + $0x660] sm:$0xff]
        %v546 = vld [vmem:[%s228 + $0x668] sm:$0xff]
        %v547 = vld [vmem:[%s228 + $0x670] sm:$0xff]
        %v548 = vld [vmem:[%s228 + $0x678] sm:$0xff]
        %v549 = vld [vmem:[%s228 + $0x680] sm:$0xff]
        %v550 = vld [vmem:[%s228 + $0x688] sm:$0xff]
        %v551 = vld [vmem:[%s228 + $0x690] sm:$0xff]
        %v552 = vld [vmem:[%s228 + $0x698] sm:$0xff]
        %v553 = vld [vmem:[%s228 + $0x6a0] sm:$0xff]
        %v554 = vld [vmem:[%s228 + $0x6a8] sm:$0xff]
        %v555 = vld [vmem:[%s228 + $0x6b0] sm:$0xff]
        %v556 = vld [vmem:[%s228 + $0x6b8] sm:$0xff]
        %v557 = vld [vmem:[%s228 + $0x6c0] sm:$0xff]
        %v558 = vld [vmem:[%s228 + $0x6c8] sm:$0xff]
        %v559 = vld [vmem:[%s228 + $0x6d0] sm:$0xff]
        %v560 = vld [vmem:[%s228 + $0x6d8] sm:$0xff]
        %v561 = vld [vmem:[%s228 + $0x6e0] sm:$0xff]
        %v562 = vld [vmem:[%s228 + $0x6e8] sm:$0xff]
        %v563 = vld [vmem:[%s228 + $0x6f0] sm:$0xff]
        %v564 = vld [vmem:[%s228 + $0x6f8] sm:$0xff]
        %v565 = vld [vmem:[%s228 + $0x700] sm:$0xff]
        %v566 = vld [vmem:[%s228 + $0x708] sm:$0xff]
        %v567 = vld [vmem:[%s228 + $0x710] sm:$0xff]
        %v568 = vld [vmem:[%s228 + $0x718] sm:$0xff]
        %v569 = vld [vmem:[%s228 + $0x720] sm:$0xff]
        %v570 = vld [vmem:[%s228 + $0x728] sm:$0xff]
        %v571 = vld [vmem:[%s228 + $0x730] sm:$0xff]
        %v572 = vld [vmem:[%s228 + $0x738] sm:$0xff]
        %v573 = vld [vmem:[%s228 + $0x740] sm:$0xff]
        %v574 = vld [vmem:[%s228 + $0x748] sm:$0xff]
        %v575 = vld [vmem:[%s228 + $0x750] sm:$0xff]
        %v576 = vld [vmem:[%s228 + $0x758] sm:$0xff]
        %v577 = vld [vmem:[%s228 + $0x760] sm:$0xff]
        %v578 = vld [vmem:[%s228 + $0x768] sm:$0xff]
        %v579 = vld [vmem:[%s228 + $0x770] sm:$0xff]
        %v580 = vld [vmem:[%s228 + $0x778] sm:$0xff]
        %v581 = vld [vmem:[%s228 + $0x780] sm:$0xff]
        %v582 = vld [vmem:[%s228 + $0x788] sm:$0xff]
        %v583 = vld [vmem:[%s228 + $0x790] sm:$0xff]
        %v584 = vld [vmem:[%s228 + $0x798] sm:$0xff]
        %v585 = vld [vmem:[%s228 + $0x7a0] sm:$0xff]
        %v586 = vld [vmem:[%s228 + $0x7a8] sm:$0xff]
        %v587 = vld [vmem:[%s228 + $0x7b0] sm:$0xff]
        %v588 = vld [vmem:[%s228 + $0x7b8] sm:$0xff]
        %v589 = vld [vmem:[%s228 + $0x7c0] sm:$0xff]
        %v590 = vld [vmem:[%s228 + $0x7c8] sm:$0xff]
        %v591 = vld [vmem:[%s228 + $0x7d0] sm:$0xff]
        %v592 = vld [vmem:[%s228 + $0x7d8] sm:$0xff]
        %v593 = vld [vmem:[%s228 + $0x7e0] sm:$0xff]
        %v594 = vld [vmem:[%s228 + $0x7e8] sm:$0xff]
        %v595 = vld [vmem:[%s228 + $0x7f0] sm:$0xff]
        %v596 = vld [vmem:[%s228 + $0x7f8] sm:$0xff]
        %v597 = vld [vmem:[%s228 + $0x800] sm:$0xff]
        %v598 = vld [vmem:[%s228 + $0x808] sm:$0xff]
        %v599 = vld [vmem:[%s228 + $0x810] sm:$0xff]
        %v600 = vld [vmem:[%s228 + $0x818] sm:$0xff]
        %v601 = vld [vmem:[%s228 + $0x820] sm:$0xff]
        %v602 = vld [vmem:[%s228 + $0x828] sm:$0xff]
        %v603 = vld [vmem:[%s228 + $0x830] sm:$0xff]
        %v604 = vld [vmem:[%s228 + $0x838] sm:$0xff]
        %v605 = vld [vmem:[%s228 + $0x840] sm:$0xff]
        %v606 = vld [vmem:[%s228 + $0x848] sm:$0xff]
        %v607 = vld [vmem:[%s228 + $0x850] sm:$0xff]
        %v608 = vld [vmem:[%s228 + $0x858] sm:$0xff]
        %v609 = vld [vmem:[%s228 + $0x860] sm:$0xff]
        %v610 = vld [vmem:[%s228 + $0x868] sm:$0xff]
        %v611 = vld [vmem:[%s228 + $0x870] sm:$0xff]
        %v612 = vld [vmem:[%s228 + $0x878] sm:$0xff]
        %v613 = vld [vmem:[%s228 + $0x880] sm:$0xff]
        %v614 = vld [vmem:[%s228 + $0x888] sm:$0xff]
        %v615 = vld [vmem:[%s228 + $0x890] sm:$0xff]
        %v616 = vld [vmem:[%s228 + $0x898] sm:$0xff]
        %v617 = vld [vmem:[%s228 + $0x8a0] sm:$0xff]
        %v618 = vld [vmem:[%s228 + $0x8a8] sm:$0xff]
        %v619 = vld [vmem:[%s228 + $0x8b0] sm:$0xff]
        %v620 = vld [vmem:[%s228 + $0x8b8] sm:$0xff]
        %v621 = vld [vmem:[%s228 + $0x8c0] sm:$0xff]
        %v622 = vld [vmem:[%s228 + $0x8c8] sm:$0xff]
        %v623 = vld [vmem:[%s228 + $0x8d0] sm:$0xff]
        %v624 = vld [vmem:[%s228 + $0x8d8] sm:$0xff]
        %v625 = vld [vmem:[%s228 + $0x8e0] sm:$0xff]
        %v626 = vld [vmem:[%s228 + $0x8e8] sm:$0xff]
        %v627 = vld [vmem:[%s228 + $0x8f0] sm:$0xff]
        %v628 = vld [vmem:[%s228 + $0x8f8] sm:$0xff]
        %v629 = vld [vmem:[%s228 + $0x900] sm:$0xff]
        %v630 = vld [vmem:[%s228 + $0x908] sm:$0xff]
        %v631 = vld [vmem:[%s228 + $0x910] sm:$0xff]
        %v632 = vld [vmem:[%s228 + $0x918] sm:$0xff]
        %v633 = vld [vmem:[%s228 + $0x920] sm:$0xff]
        %v634 = vld [vmem:[%s228 + $0x928] sm:$0xff]
        %v635 = vld [vmem:[%s228 + $0x930] sm:$0xff]
        %v636 = vld [vmem:[%s228 + $0x938] sm:$0xff]
        %v637 = vld [vmem:[%s228 + $0x940] sm:$0xff]
        %v638 = vld [vmem:[%s228 + $0x948] sm:$0xff]
        %v639 = vld [vmem:[%s228 + $0x950] sm:$0xff]
        %v640 = vld [vmem:[%s228 + $0x958] sm:$0xff]
        %v641 = vld [vmem:[%s228 + $0x960] sm:$0xff]
        %v642 = vld [vmem:[%s228 + $0x968] sm:$0xff]
        %v643 = vld [vmem:[%s228 + $0x970] sm:$0xff]
        %v644 = vld [vmem:[%s228 + $0x978] sm:$0xff]
        %v645 = vld [vmem:[%s228 + $0x980] sm:$0xff]
        %v646 = vld [vmem:[%s228 + $0x988] sm:$0xff]
        %v647 = vld [vmem:[%s228 + $0x990] sm:$0xff]
        %v648 = vld [vmem:[%s228 + $0x998] sm:$0xff]
        %v649 = vld [vmem:[%s228 + $0x9a0] sm:$0xff]
        %v650 = vld [vmem:[%s228 + $0x9a8] sm:$0xff]
        %v651 = vld [vmem:[%s228 + $0x9b0] sm:$0xff]
        %v652 = vld [vmem:[%s228 + $0x9b8] sm:$0xff]
        %v653 = vld [vmem:[%s228 + $0x9c0] sm:$0xff]
        %v654 = vld [vmem:[%s228 + $0x9c8] sm:$0xff]
        %v655 = vld [vmem:[%s228 + $0x9d0] sm:$0xff]
        %v656 = vld [vmem:[%s228 + $0x9d8] sm:$0xff]
        %v657 = vld [vmem:[%s228 + $0x9e0] sm:$0xff]
        %v658 = vld [vmem:[%s228 + $0x9e8] sm:$0xff]
        %v659 = vld [vmem:[%s228 + $0x9f0] sm:$0xff]
        %v660 = vld [vmem:[%s228 + $0x9f8] sm:$0xff]
        %v661 = vld [vmem:[%s228 + $0xa00] sm:$0xff]
        %v662 = vld [vmem:[%s228 + $0xa08] sm:$0xff]
        %v663 = vld [vmem:[%s228 + $0xa10] sm:$0xff]
        %v664 = vld [vmem:[%s228 + $0xa18] sm:$0xff]
        %v665 = vld [vmem:[%s228 + $0xa20] sm:$0xff]
        %v666 = vld [vmem:[%s228 + $0xa28] sm:$0xff]
        %v667 = vld [vmem:[%s228 + $0xa30] sm:$0xff]
        %v668 = vld [vmem:[%s228 + $0xa38] sm:$0xff]
        %v669 = vld [vmem:[%s228 + $0xa40] sm:$0xff]
        %v670 = vld [vmem:[%s228 + $0xa48] sm:$0xff]
        %v671 = vld [vmem:[%s228 + $0xa50] sm:$0xff]
        %v672 = vld [vmem:[%s228 + $0xa58] sm:$0xff]
        %v673 = vld [vmem:[%s228 + $0xa60] sm:$0xff]
        %v674 = vld [vmem:[%s228 + $0xa68] sm:$0xff]
        %v675 = vld [vmem:[%s228 + $0xa70] sm:$0xff]
        %v676 = vld [vmem:[%s228 + $0xa78] sm:$0xff]
        %v677 = vld [vmem:[%s228 + $0xa80] sm:$0xff]
        %v678 = vld [vmem:[%s228 + $0xa88] sm:$0xff]
        %v679 = vld [vmem:[%s228 + $0xa90] sm:$0xff]
        %v680 = vld [vmem:[%s228 + $0xa98] sm:$0xff]
        %v681 = vld [vmem:[%s228 + $0xaa0] sm:$0xff]
        %v682 = vld [vmem:[%s228 + $0xaa8] sm:$0xff]
        %v683 = vld [vmem:[%s228 + $0xab0] sm:$0xff]
        %v684 = vld [vmem:[%s228 + $0xab8] sm:$0xff]
        %v685 = vld [vmem:[%s228 + $0xac0] sm:$0xff]
        %v686 = vld [vmem:[%s228 + $0xac8] sm:$0xff]
        %v687 = vld [vmem:[%s228 + $0xad0] sm:$0xff]
        %v688 = vld [vmem:[%s228 + $0xad8] sm:$0xff]
        %v689 = vld [vmem:[%s228 + $0xae0] sm:$0xff]
        %v690 = vld [vmem:[%s228 + $0xae8] sm:$0xff]
        %v691 = vld [vmem:[%s228 + $0xaf0] sm:$0xff]
        %v692 = vld [vmem:[%s228 + $0xaf8] sm:$0xff]
        %v693 = vld [vmem:[%s228 + $0xb00] sm:$0xff]
        %v694 = vld [vmem:[%s228 + $0xb08] sm:$0xff]
        %v695 = vld [vmem:[%s228 + $0xb10] sm:$0xff]
        %v696 = vld [vmem:[%s228 + $0xb18] sm:$0xff]
        %v697 = vld [vmem:[%s228 + $0xb20] sm:$0xff]
        %v698 = vld [vmem:[%s228 + $0xb28] sm:$0xff]
        %v699 = vld [vmem:[%s228 + $0xb30] sm:$0xff]
        %v700 = vld [vmem:[%s228 + $0xb38] sm:$0xff]
        %v701 = vld [vmem:[%s228 + $0xb40] sm:$0xff]
        %v702 = vld [vmem:[%s228 + $0xb48] sm:$0xff]
        %v703 = vld [vmem:[%s228 + $0xb50] sm:$0xff]
        %v704 = vld [vmem:[%s228 + $0xb58] sm:$0xff]
        %v705 = vld [vmem:[%s228 + $0xb60] sm:$0xff]
        %v706 = vld [vmem:[%s228 + $0xb68] sm:$0xff]
        %v707 = vld [vmem:[%s228 + $0xb70] sm:$0xff]
        %v708 = vld [vmem:[%s228 + $0xb78] sm:$0xff]
        %v709 = vld [vmem:[%s228 + $0xb80] sm:$0xff]
        %v710 = vld [vmem:[%s228 + $0xb88] sm:$0xff]
        %v711 = vld [vmem:[%s228 + $0xb90] sm:$0xff]
        %v712 = vld [vmem:[%s228 + $0xb98] sm:$0xff]
        %v713 = vld [vmem:[%s228 + $0xba0] sm:$0xff]
        %v714 = vld [vmem:[%s228 + $0xba8] sm:$0xff]
        %v715 = vld [vmem:[%s228 + $0xbb0] sm:$0xff]
        %v716 = vld [vmem:[%s228 + $0xbb8] sm:$0xff]
        %v717 = vld [vmem:[%s228 + $0xbc0] sm:$0xff]
        %v718 = vld [vmem:[%s228 + $0xbc8] sm:$0xff]
        %v719 = vld [vmem:[%s228 + $0xbd0] sm:$0xff]
        %v720 = vld [vmem:[%s228 + $0xbd8] sm:$0xff]
        %v721 = vld [vmem:[%s228 + $0xbe0] sm:$0xff]
        %v722 = vld [vmem:[%s228 + $0xbe8] sm:$0xff]
        %v723 = vld [vmem:[%s228 + $0xbf0] sm:$0xff]
        %v724 = vld [vmem:[%s228 + $0xbf8] sm:$0xff]
        %v725 = vld [vmem:[%s228 + $0xc00] sm:$0xff]
        %v726 = vld [vmem:[%s228 + $0xc08] sm:$0xff]
        %v727 = vld [vmem:[%s228 + $0xc10] sm:$0xff]
        %v728 = vld [vmem:[%s228 + $0xc18] sm:$0xff]
        %v729 = vld [vmem:[%s228 + $0xc20] sm:$0xff]
        %v730 = vld [vmem:[%s228 + $0xc28] sm:$0xff]
        %v731 = vld [vmem:[%s228 + $0xc30] sm:$0xff]
        %v732 = vld [vmem:[%s228 + $0xc38] sm:$0xff]
        %v733 = vld [vmem:[%s228 + $0xc40] sm:$0xff]
        %v734 = vld [vmem:[%s228 + $0xc48] sm:$0xff]
        %v735 = vld [vmem:[%s228 + $0xc50] sm:$0xff]
        %v736 = vld [vmem:[%s228 + $0xc58] sm:$0xff]
        %v737 = vld [vmem:[%s228 + $0xc60] sm:$0xff]
        %v738 = vld [vmem:[%s228 + $0xc68] sm:$0xff]
        %v739 = vld [vmem:[%s228 + $0xc70] sm:$0xff]
        %v740 = vld [vmem:[%s228 + $0xc78] sm:$0xff]
        %v741 = vld [vmem:[%s228 + $0xc80] sm:$0xff]
        %v742 = vld [vmem:[%s228 + $0xc88] sm:$0xff]
        %v743 = vld [vmem:[%s228 + $0xc90] sm:$0xff]
        %v744 = vld [vmem:[%s228 + $0xc98] sm:$0xff]
        %v745 = vld [vmem:[%s228 + $0xca0] sm:$0xff]
        %v746 = vld [vmem:[%s228 + $0xca8] sm:$0xff]
        %v747 = vld [vmem:[%s228 + $0xcb0] sm:$0xff]
        %v748 = vld [vmem:[%s228 + $0xcb8] sm:$0xff]
        %v749 = vld [vmem:[%s228 + $0xcc0] sm:$0xff]
        %v750 = vld [vmem:[%s228 + $0xcc8] sm:$0xff]
        %v751 = vld [vmem:[%s228 + $0xcd0] sm:$0xff]
        %v752 = vld [vmem:[%s228 + $0xcd8] sm:$0xff]
        %v753 = vld [vmem:[%s228 + $0xce0] sm:$0xff]
        %v754 = vld [vmem:[%s228 + $0xce8] sm:$0xff]
        %v755 = vld [vmem:[%s228 + $0xcf0] sm:$0xff]
        %v756 = vld [vmem:[%s228 + $0xcf8] sm:$0xff]
        %v757 = vld [vmem:[%s228 + $0xd00] sm:$0xff]
        %v758 = vld [vmem:[%s228 + $0xd08] sm:$0xff]
        %v759 = vld [vmem:[%s228 + $0xd10] sm:$0xff]
        %v760 = vld [vmem:[%s228 + $0xd18] sm:$0xff]
        %v761 = vld [vmem:[%s228 + $0xd20] sm:$0xff]
        %v762 = vld [vmem:[%s228 + $0xd28] sm:$0xff]
        %v763 = vld [vmem:[%s228 + $0xd30] sm:$0xff]
        %v764 = vld [vmem:[%s228 + $0xd38] sm:$0xff]
        %v765 = vld [vmem:[%s228 + $0xd40] sm:$0xff]
        %v766 = vld [vmem:[%s228 + $0xd48] sm:$0xff]
        %v767 = vld [vmem:[%s228 + $0xd50] sm:$0xff]
        %v768 = vld [vmem:[%s228 + $0xd58] sm:$0xff]
        %v769 = vld [vmem:[%s228 + $0xd60] sm:$0xff]
        %v770 = vld [vmem:[%s228 + $0xd68] sm:$0xff]
        %v771 = vld [vmem:[%s228 + $0xd70] sm:$0xff]
        %v772 = vld [vmem:[%s228 + $0xd78] sm:$0xff]
        %v773 = vld [vmem:[%s228 + $0xd80] sm:$0xff]
        %v774 = vld [vmem:[%s228 + $0xd88] sm:$0xff]
        %v775 = vld [vmem:[%s228 + $0xd90] sm:$0xff]
        %v776 = vld [vmem:[%s228 + $0xd98] sm:$0xff]
        %v777 = vld [vmem:[%s228 + $0xda0] sm:$0xff]
        %v778 = vld [vmem:[%s228 + $0xda8] sm:$0xff]
        %v779 = vld [vmem:[%s228 + $0xdb0] sm:$0xff]
        %v780 = vld [vmem:[%s228 + $0xdb8] sm:$0xff]
        %v781 = vld [vmem:[%s228 + $0xdc0] sm:$0xff]
        %v782 = vld [vmem:[%s228 + $0xdc8] sm:$0xff]
        %v783 = vld [vmem:[%s228 + $0xdd0] sm:$0xff]
        %v784 = vld [vmem:[%s228 + $0xdd8] sm:$0xff]
        %v785 = vld [vmem:[%s228 + $0xde0] sm:$0xff]
        %v786 = vld [vmem:[%s228 + $0xde8] sm:$0xff]
        %v787 = vld [vmem:[%s228 + $0xdf0] sm:$0xff]
        %v788 = vld [vmem:[%s228 + $0xdf8] sm:$0xff]
        %v789 = vld [vmem:[%s228 + $0xe00] sm:$0xff]
        %v790 = vld [vmem:[%s228 + $0xe08] sm:$0xff]
        %v791 = vld [vmem:[%s228 + $0xe10] sm:$0xff]
        %v792 = vld [vmem:[%s228 + $0xe18] sm:$0xff]
        %v793 = vld [vmem:[%s228 + $0xe20] sm:$0xff]
        %v794 = vld [vmem:[%s228 + $0xe28] sm:$0xff]
        %v795 = vld [vmem:[%s228 + $0xe30] sm:$0xff]
        %v796 = vld [vmem:[%s228 + $0xe38] sm:$0xff]
        %v797 = vld [vmem:[%s228 + $0xe40] sm:$0x11]
        %v798 = vld [vmem:[%s228 + $0xe48] sm:$0x11]
        %v799 = vld [vmem:[%s228 + $0xe50] sm:$0x11]
        %v800 = vld [vmem:[%s228 + $0xe58] sm:$0x11]
        %v801 = vld [vmem:[%s228 + $0xe60] sm:$0x11]
        %v802 = vld [vmem:[%s228 + $0xe68] sm:$0x11]
        %v803 = vld [vmem:[%s228 + $0xe70] sm:$0x11]
        %v804 = vld [vmem:[%s228 + $0xe78] sm:$0x11]
        %v805 = vld [vmem:[%s228 + $0xe80] sm:$0x11]
        %v806 = vld [vmem:[%s228 + $0xe88] sm:$0x11]
        %v807 = vld [vmem:[%s228 + $0xe90] sm:$0x11]
        %v808 = vld [vmem:[%s228 + $0xe98] sm:$0x11]
        %v809 = vld [vmem:[%s228 + $0xea0] sm:$0x11]
        %v810 = vld [vmem:[%s228 + $0xea8] sm:$0x11]
        %v811 = vld [vmem:[%s228 + $0xeb0] sm:$0x11]
        %v812 = vld [vmem:[%s228 + $0xeb8] sm:$0x11]
        %v813 = vld [vmem:[%s228 + $0xec0] sm:$0x11]
        %v814 = vld [vmem:[%s228 + $0xec8] sm:$0x11]
        %v815 = vld [vmem:[%s228 + $0xed0] sm:$0x11]
        %v816 = vld [vmem:[%s228 + $0xed8] sm:$0x11]
        %v817 = vld [vmem:[%s228 + $0xee0] sm:$0x11]
        %v818 = vld [vmem:[%s228 + $0xee8] sm:$0x11]
        %v819 = vld [vmem:[%s228 + $0xef0] sm:$0x11]
        %v820 = vld [vmem:[%s228 + $0xef8] sm:$0x11]
        %v821 = vld [vmem:[%s228 + $0xf00] sm:$0x11]
        %v822 = vld [vmem:[%s228 + $0xf08] sm:$0x11]
        %v823 = vld [vmem:[%s228 + $0xf10] sm:$0x11]
        %v824 = vld [vmem:[%s228 + $0xf18] sm:$0x11]
        %v825 = vld [vmem:[%s228 + $0xf20] sm:$0x11]
        %v826 = vld [vmem:[%s228 + $0xf28] sm:$0x11]
        %v827 = vld [vmem:[%s228 + $0xf30] sm:$0x11]
        %v828 = vld [vmem:[%s228 + $0xf38] sm:$0x11]
        %v829 = vld [vmem:[%s228 + $0xf40] sm:$0x11]
        %v830 = vld [vmem:[%s228 + $0xf48] sm:$0x11]
        %v831 = vld [vmem:[%s228 + $0xf50] sm:$0x11]
        %v832 = vld [vmem:[%s228 + $0xf58] sm:$0x11]
        %v833 = vld [vmem:[%s228 + $0xf60] sm:$0x11]
        %v834 = vld [vmem:[%s228 + $0xf68] sm:$0x11]
        %v835 = vld [vmem:[%s228 + $0xf70] sm:$0x11]
        %v836 = vld [vmem:[%s228 + $0xf78] sm:$0x11]
        %v837 = vld [vmem:[%s228 + $0xf80] sm:$0x11]
        %v838 = vld [vmem:[%s228 + $0xf88] sm:$0x11]
        %v839 = vld [vmem:[%s228 + $0xf90] sm:$0x11]
        %v840 = vld [vmem:[%s228 + $0xf98] sm:$0x11]
        %v841 = vld [vmem:[%s228 + $0xfa0] sm:$0x11]
        %v842 = vld [vmem:[%s228 + $0xfa8] sm:$0x11]
        %v843 = vld [vmem:[%s228 + $0xfb0] sm:$0x11]
        %v844 = vld [vmem:[%s228 + $0xfb8] sm:$0x11]
        %v845 = vld [vmem:[%s228 + $0xfc0] sm:$0x11]
        %v846 = vld [vmem:[%s228 + $0xfc8] sm:$0x11]
        %v847 = vld [vmem:[%s228 + $0xfd0] sm:$0x11]
        %v848 = vld [vmem:[%s228 + $0xfd8] sm:$0x11]
        %v849 = vld [vmem:[%s228 + $0xfe0] sm:$0x11]
        %v850 = vld [vmem:[%s228 + $0xfe8] sm:$0x11]
        %v851 = vld [vmem:[%s228 + $0xff0] sm:$0x11]
        %v852 = vld [vmem:[%s228 + $0xff8] sm:$0x11]
        %v853 = vld [vmem:[%s228 + $0x1000] sm:$0x11]
        %v854 = vld [vmem:[%s228 + $0x1008] sm:$0x11]
        %v855 = vld [vmem:[%s228 + $0x1010] sm:$0x11]
        %v856 = vld [vmem:[%s228 + $0x1018] sm:$0x11]
        %v857 = vld [vmem:[%s228 + $0x1020] sm:$0x11]
        %v858 = vld [vmem:[%s228 + $0x1028] sm:$0x11]
        %v859 = vld [vmem:[%s228 + $0x1030] sm:$0x11]
        %v860 = vld [vmem:[%s228 + $0x1038] sm:$0x11]
        %v861 = vld [vmem:[%s228 + $0x1040] sm:$0x11]
        %v862 = vld [vmem:[%s228 + $0x1048] sm:$0x11]
        %v863 = vld [vmem:[%s228 + $0x1050] sm:$0x11]
        %v864 = vld [vmem:[%s228 + $0x1058] sm:$0x11]
        %v865 = vld [vmem:[%s228 + $0x1060] sm:$0x11]
        %v866 = vld [vmem:[%s228 + $0x1068] sm:$0x11]
        %v867 = vld [vmem:[%s228 + $0x1070] sm:$0x11]
        %v868 = vld [vmem:[%s228 + $0x1078] sm:$0x11]
        %v869 = vld [vmem:[%s228 + $0x1080] sm:$0x11]
        %v870 = vld [vmem:[%s228 + $0x1088] sm:$0x11]
        %v871 = vld [vmem:[%s228 + $0x1090] sm:$0x11]
        %v872 = vld [vmem:[%s228 + $0x1098] sm:$0x11]
        %v873 = vld [vmem:[%s228 + $0x10a0] sm:$0x11]
        %v874 = vld [vmem:[%s228 + $0x10a8] sm:$0x11]
        %v875 = vld [vmem:[%s228 + $0x10b0] sm:$0x11]
        %v876 = vld [vmem:[%s228 + $0x10b8] sm:$0x11]
        %v877 = vld [vmem:[%s228 + $0x10c0] sm:$0x11]
        %v878 = vld [vmem:[%s228 + $0x10c8] sm:$0x11]
        %v879 = vld [vmem:[%s228 + $0x10d0] sm:$0x11]
        %v880 = vld [vmem:[%s228 + $0x10d8] sm:$0x11]
        %v881 = vld [vmem:[%s228 + $0x10e0] sm:$0x11]
        %v882 = vld [vmem:[%s228 + $0x10e8] sm:$0x11]
        %v883 = vld [vmem:[%s228 + $0x10f0] sm:$0x11]
        %v884 = vld [vmem:[%s228 + $0x10f8] sm:$0x11]
        %v885 = vld [vmem:[%s228 + $0x1100] sm:$0x11]
        %v886 = vld [vmem:[%s228 + $0x1108] sm:$0x11]
        %v887 = vld [vmem:[%s228 + $0x1110] sm:$0x11]
        %v888 = vld [vmem:[%s228 + $0x1118] sm:$0x11]
        %v889 = vld [vmem:[%s228 + $0x1120] sm:$0x11]
        %v890 = vld [vmem:[%s228 + $0x1128] sm:$0x11]
        %v891 = vld [vmem:[%s228 + $0x1130] sm:$0x11]
        %v892 = vld [vmem:[%s228 + $0x1138] sm:$0x11]
        %v893 = vld [vmem:[%s228 + $0x1140] sm:$0x11]
        %v894 = vld [vmem:[%s228 + $0x1148] sm:$0x11]
        %v895 = vld [vmem:[%s228 + $0x1150] sm:$0x11]
        %v896 = vld [vmem:[%s228 + $0x1158] sm:$0x11]
        %v897 = vld [vmem:[%s228 + $0x1160] sm:$0x11]
        %v898 = vld [vmem:[%s228 + $0x1168] sm:$0x11]
        %v899 = vld [vmem:[%s228 + $0x1170] sm:$0x11]
        %v900 = vld [vmem:[%s228 + $0x1178] sm:$0x11]
        %v901 = vld [vmem:[%s228 + $0x1180] sm:$0x11]
        %v902 = vld [vmem:[%s228 + $0x1188] sm:$0x11]
        %v903 = vld [vmem:[%s228 + $0x1190] sm:$0x11]
        %v904 = vld [vmem:[%s228 + $0x1198] sm:$0x11]
        %v905 = vld [vmem:[%s228 + $0x11a0] sm:$0x11]
        %v906 = vld [vmem:[%s228 + $0x11a8] sm:$0x11]
        %v907 = vld [vmem:[%s228 + $0x11b0] sm:$0x11]
        %v908 = vld [vmem:[%s228 + $0x11b8] sm:$0x11]
        %v909 = vld [vmem:[%s228 + $0x11c0] sm:$0x11]
        %v910 = vld [vmem:[%s228 + $0x11c8] sm:$0x11]
        %v1481 = vunpack.c.l.b16 %v341
        %v1482 = vunpack.c.h.b16 %v341
        %v1483 = vunpack.c.l.b16 %v342
        %v1484 = vunpack.c.h.b16 %v342
        %v1485 = vunpack.c.l.b16 %v343
        %v1486 = vunpack.c.h.b16 %v343
        %v1487 = vunpack.c.l.b16 %v344
        %v1488 = vunpack.c.h.b16 %v344
        %v1489 = vunpack.c.l.b16 %v345
        %v1490 = vunpack.c.h.b16 %v345
        %v1491 = vunpack.c.l.b16 %v346
        %v1492 = vunpack.c.h.b16 %v346
        %v1493 = vunpack.c.l.b16 %v347
        %v1494 = vunpack.c.h.b16 %v347
        %v1495 = vunpack.c.l.b16 %v348
        %v1496 = vunpack.c.h.b16 %v348
        %v1497 = vunpack.c.l.b16 %v349
        %v1498 = vunpack.c.h.b16 %v349
        %v1499 = vunpack.c.l.b16 %v350
        %v1500 = vunpack.c.h.b16 %v350
        %v1501 = vunpack.c.l.b16 %v351
        %v1502 = vunpack.c.h.b16 %v351
        %v1503 = vunpack.c.l.b16 %v352
        %v1504 = vunpack.c.h.b16 %v352
        %v1505 = vunpack.c.l.b16 %v353
        %v1506 = vunpack.c.h.b16 %v353
        %v1507 = vunpack.c.l.b16 %v354
        %v1508 = vunpack.c.h.b16 %v354
        %v1509 = vunpack.c.l.b16 %v355
        %v1510 = vunpack.c.h.b16 %v355
        %v1511 = vunpack.c.l.b16 %v356
        %v1512 = vunpack.c.h.b16 %v356
        %v1513 = vunpack.c.l.b16 %v357
        %v1514 = vunpack.c.h.b16 %v357
        %v1515 = vunpack.c.l.b16 %v358
        %v1516 = vunpack.c.h.b16 %v358
        %v1517 = vunpack.c.l.b16 %v359
        %v1518 = vunpack.c.h.b16 %v359
        %v1519 = vunpack.c.l.b16 %v360
        %v1520 = vunpack.c.h.b16 %v360
        %v1521 = vunpack.c.l.b16 %v361
        %v1522 = vunpack.c.h.b16 %v361
        %v1523 = vunpack.c.l.b16 %v362
        %v1524 = vunpack.c.h.b16 %v362
        %v1525 = vunpack.c.l.b16 %v363
        %v1526 = vunpack.c.h.b16 %v363
        %v1527 = vunpack.c.l.b16 %v364
        %v1528 = vunpack.c.h.b16 %v364
        %v1529 = vunpack.c.l.b16 %v365
        %v1530 = vunpack.c.h.b16 %v365
        %v1531 = vunpack.c.l.b16 %v366
        %v1532 = vunpack.c.h.b16 %v366
        %v1533 = vunpack.c.l.b16 %v367
        %v1534 = vunpack.c.h.b16 %v367
        %v1535 = vunpack.c.l.b16 %v368
        %v1536 = vunpack.c.h.b16 %v368
        %v1537 = vunpack.c.l.b16 %v369
        %v1538 = vunpack.c.h.b16 %v369
        %v1539 = vunpack.c.l.b16 %v370
        %v1540 = vunpack.c.h.b16 %v370
        %v1541 = vunpack.c.l.b16 %v371
        %v1542 = vunpack.c.h.b16 %v371
        %v1543 = vunpack.c.l.b16 %v372
        %v1544 = vunpack.c.h.b16 %v372
        %v1545 = vunpack.c.l.b16 %v373
        %v1546 = vunpack.c.h.b16 %v373
        %v1547 = vunpack.c.l.b16 %v374
        %v1548 = vunpack.c.h.b16 %v374
        %v1549 = vunpack.c.l.b16 %v375
        %v1550 = vunpack.c.h.b16 %v375
        %v1551 = vunpack.c.l.b16 %v376
        %v1552 = vunpack.c.h.b16 %v376
        %v1553 = vunpack.c.l.b16 %v377
        %v1554 = vunpack.c.h.b16 %v377
        %v1555 = vunpack.c.l.b16 %v378
        %v1556 = vunpack.c.h.b16 %v378
        %v1557 = vunpack.c.l.b16 %v379
        %v1558 = vunpack.c.h.b16 %v379
        %v1559 = vunpack.c.l.b16 %v380
        %v1560 = vunpack.c.h.b16 %v380
        %v1561 = vunpack.c.l.b16 %v381
        %v1562 = vunpack.c.h.b16 %v381
        %v1563 = vunpack.c.l.b16 %v382
        %v1564 = vunpack.c.h.b16 %v382
        %v1565 = vunpack.c.l.b16 %v383
        %v1566 = vunpack.c.h.b16 %v383
        %v1567 = vunpack.c.l.b16 %v384
        %v1568 = vunpack.c.h.b16 %v384
        %v1569 = vunpack.c.l.b16 %v385
        %v1570 = vunpack.c.h.b16 %v385
        %v1571 = vunpack.c.l.b16 %v386
        %v1572 = vunpack.c.h.b16 %v386
        %v1573 = vunpack.c.l.b16 %v387
        %v1574 = vunpack.c.h.b16 %v387
        %v1575 = vunpack.c.l.b16 %v388
        %v1576 = vunpack.c.h.b16 %v388
        %v1577 = vunpack.c.l.b16 %v389
        %v1578 = vunpack.c.h.b16 %v389
        %v1579 = vunpack.c.l.b16 %v390
        %v1580 = vunpack.c.h.b16 %v390
        %v1581 = vunpack.c.l.b16 %v391
        %v1582 = vunpack.c.h.b16 %v391
        %v1583 = vunpack.c.l.b16 %v392
        %v1584 = vunpack.c.h.b16 %v392
        %v1585 = vunpack.c.l.b16 %v393
        %v1586 = vunpack.c.h.b16 %v393
        %v1587 = vunpack.c.l.b16 %v394
        %v1588 = vunpack.c.h.b16 %v394
        %v1589 = vunpack.c.l.b16 %v395
        %v1590 = vunpack.c.h.b16 %v395
        %v1591 = vunpack.c.l.b16 %v396
        %v1592 = vunpack.c.h.b16 %v396
        %v1593 = vunpack.c.l.b16 %v397
        %v1594 = vunpack.c.h.b16 %v397
        %v1595 = vunpack.c.l.b16 %v398
        %v1596 = vunpack.c.h.b16 %v398
        %v1597 = vunpack.c.l.b16 %v399
        %v1598 = vunpack.c.h.b16 %v399
        %v1599 = vunpack.c.l.b16 %v400
        %v1600 = vunpack.c.h.b16 %v400
        %v1601 = vunpack.c.l.b16 %v401
        %v1602 = vunpack.c.h.b16 %v401
        %v1603 = vunpack.c.l.b16 %v402
        %v1604 = vunpack.c.h.b16 %v402
        %v1605 = vunpack.c.l.b16 %v403
        %v1606 = vunpack.c.h.b16 %v403
        %v1607 = vunpack.c.l.b16 %v404
        %v1608 = vunpack.c.h.b16 %v404
        %v1609 = vunpack.c.l.b16 %v405
        %v1610 = vunpack.c.h.b16 %v405
        %v1611 = vunpack.c.l.b16 %v406
        %v1612 = vunpack.c.h.b16 %v406
        %v1613 = vunpack.c.l.b16 %v407
        %v1614 = vunpack.c.h.b16 %v407
        %v1615 = vunpack.c.l.b16 %v408
        %v1616 = vunpack.c.h.b16 %v408
        %v1617 = vunpack.c.l.b16 %v409
        %v1618 = vunpack.c.h.b16 %v409
        %v1619 = vunpack.c.l.b16 %v410
        %v1620 = vunpack.c.h.b16 %v410
        %v1621 = vunpack.c.l.b16 %v411
        %v1622 = vunpack.c.h.b16 %v411
        %v1623 = vunpack.c.l.b16 %v412
        %v1624 = vunpack.c.h.b16 %v412
        %v1625 = vunpack.c.l.b16 %v413
        %v1626 = vunpack.c.h.b16 %v413
        %v1627 = vunpack.c.l.b16 %v414
        %v1628 = vunpack.c.h.b16 %v414
        %v1629 = vunpack.c.l.b16 %v415
        %v1630 = vunpack.c.h.b16 %v415
        %v1631 = vunpack.c.l.b16 %v416
        %v1632 = vunpack.c.h.b16 %v416
        %v1633 = vunpack.c.l.b16 %v417
        %v1634 = vunpack.c.h.b16 %v417
        %v1635 = vunpack.c.l.b16 %v418
        %v1636 = vunpack.c.h.b16 %v418
        %v1637 = vunpack.c.l.b16 %v419
        %v1638 = vunpack.c.h.b16 %v419
        %v1639 = vunpack.c.l.b16 %v420
        %v1640 = vunpack.c.h.b16 %v420
        %v1641 = vunpack.c.l.b16 %v421
        %v1642 = vunpack.c.h.b16 %v421
        %v1643 = vunpack.c.l.b16 %v422
        %v1644 = vunpack.c.h.b16 %v422
        %v1645 = vunpack.c.l.b16 %v423
        %v1646 = vunpack.c.h.b16 %v423
        %v1647 = vunpack.c.l.b16 %v424
        %v1648 = vunpack.c.h.b16 %v424
        %v1649 = vunpack.c.l.b16 %v425
        %v1650 = vunpack.c.h.b16 %v425
        %v1651 = vunpack.c.l.b16 %v426
        %v1652 = vunpack.c.h.b16 %v426
        %v1653 = vunpack.c.l.b16 %v427
        %v1654 = vunpack.c.h.b16 %v427
        %v1655 = vunpack.c.l.b16 %v428
        %v1656 = vunpack.c.h.b16 %v428
        %v1657 = vunpack.c.l.b16 %v429
        %v1658 = vunpack.c.h.b16 %v429
        %v1659 = vunpack.c.l.b16 %v430
        %v1660 = vunpack.c.h.b16 %v430
        %v1661 = vunpack.c.l.b16 %v431
        %v1662 = vunpack.c.h.b16 %v431
        %v1663 = vunpack.c.l.b16 %v432
        %v1664 = vunpack.c.h.b16 %v432
        %v1665 = vunpack.c.l.b16 %v433
        %v1666 = vunpack.c.h.b16 %v433
        %v1667 = vunpack.c.l.b16 %v434
        %v1668 = vunpack.c.h.b16 %v434
        %v1669 = vunpack.c.l.b16 %v435
        %v1670 = vunpack.c.h.b16 %v435
        %v1671 = vunpack.c.l.b16 %v436
        %v1672 = vunpack.c.h.b16 %v436
        %v1673 = vunpack.c.l.b16 %v437
        %v1674 = vunpack.c.h.b16 %v437
        %v1675 = vunpack.c.l.b16 %v438
        %v1676 = vunpack.c.h.b16 %v438
        %v1677 = vunpack.c.l.b16 %v439
        %v1678 = vunpack.c.h.b16 %v439
        %v1679 = vunpack.c.l.b16 %v440
        %v1680 = vunpack.c.h.b16 %v440
        %v1681 = vunpack.c.l.b16 %v441
        %v1682 = vunpack.c.h.b16 %v441
        %v1683 = vunpack.c.l.b16 %v442
        %v1684 = vunpack.c.h.b16 %v442
        %v1685 = vunpack.c.l.b16 %v443
        %v1686 = vunpack.c.h.b16 %v443
        %v1687 = vunpack.c.l.b16 %v444
        %v1688 = vunpack.c.h.b16 %v444
        %v1689 = vunpack.c.l.b16 %v445
        %v1690 = vunpack.c.h.b16 %v445
        %v1691 = vunpack.c.l.b16 %v446
        %v1692 = vunpack.c.h.b16 %v446
        %v1693 = vunpack.c.l.b16 %v447
        %v1694 = vunpack.c.h.b16 %v447
        %v1695 = vunpack.c.l.b16 %v448
        %v1696 = vunpack.c.h.b16 %v448
        %v1697 = vunpack.c.l.b16 %v449
        %v1698 = vunpack.c.h.b16 %v449
        %v1699 = vunpack.c.l.b16 %v450
        %v1700 = vunpack.c.h.b16 %v450
        %v1701 = vunpack.c.l.b16 %v451
        %v1702 = vunpack.c.h.b16 %v451
        %v1703 = vunpack.c.l.b16 %v452
        %v1704 = vunpack.c.h.b16 %v452
        %v1705 = vunpack.c.l.b16 %v453
        %v1706 = vunpack.c.h.b16 %v453
        %v1707 = vunpack.c.l.b16 %v454
        %v1708 = vunpack.c.h.b16 %v454
        %v1709 = vunpack.c.l.b16 %v455
        %v1710 = vunpack.c.h.b16 %v455
        %v1711 = vunpack.c.l.b16 %v456
        %v1712 = vunpack.c.h.b16 %v456
        %v1713 = vunpack.c.l.b16 %v457
        %v1714 = vunpack.c.h.b16 %v457
        %v1715 = vunpack.c.l.b16 %v458
        %v1716 = vunpack.c.h.b16 %v458
        %v1717 = vunpack.c.l.b16 %v459
        %v1718 = vunpack.c.h.b16 %v459
        %v1719 = vunpack.c.l.b16 %v460
        %v1720 = vunpack.c.h.b16 %v460
        %v1721 = vunpack.c.l.b16 %v461
        %v1722 = vunpack.c.h.b16 %v461
        %v1723 = vunpack.c.l.b16 %v462
        %v1724 = vunpack.c.h.b16 %v462
        %v1725 = vunpack.c.l.b16 %v463
        %v1726 = vunpack.c.h.b16 %v463
        %v1727 = vunpack.c.l.b16 %v464
        %v1728 = vunpack.c.h.b16 %v464
        %v1729 = vunpack.c.l.b16 %v465
        %v1730 = vunpack.c.h.b16 %v465
        %v1731 = vunpack.c.l.b16 %v466
        %v1732 = vunpack.c.h.b16 %v466
        %v1733 = vunpack.c.l.b16 %v467
        %v1734 = vunpack.c.h.b16 %v467
        %v1735 = vunpack.c.l.b16 %v468
        %v1736 = vunpack.c.h.b16 %v468
        %v1737 = vunpack.c.l.b16 %v469
        %v1738 = vunpack.c.h.b16 %v469
        %v1739 = vunpack.c.l.b16 %v470
        %v1740 = vunpack.c.h.b16 %v470
        %v1741 = vunpack.c.l.b16 %v471
        %v1742 = vunpack.c.h.b16 %v471
        %v1743 = vunpack.c.l.b16 %v472
        %v1744 = vunpack.c.h.b16 %v472
        %v1745 = vunpack.c.l.b16 %v473
        %v1746 = vunpack.c.h.b16 %v473
        %v1747 = vunpack.c.l.b16 %v474
        %v1748 = vunpack.c.h.b16 %v474
        %v1749 = vunpack.c.l.b16 %v475
        %v1750 = vunpack.c.h.b16 %v475
        %v1751 = vunpack.c.l.b16 %v476
        %v1752 = vunpack.c.h.b16 %v476
        %v1753 = vunpack.c.l.b16 %v477
        %v1754 = vunpack.c.h.b16 %v477
        %v1755 = vunpack.c.l.b16 %v478
        %v1756 = vunpack.c.h.b16 %v478
        %v1757 = vunpack.c.l.b16 %v479
        %v1758 = vunpack.c.h.b16 %v479
        %v1759 = vunpack.c.l.b16 %v480
        %v1760 = vunpack.c.h.b16 %v480
        %v1761 = vunpack.c.l.b16 %v481
        %v1762 = vunpack.c.h.b16 %v481
        %v1763 = vunpack.c.l.b16 %v482
        %v1764 = vunpack.c.h.b16 %v482
        %v1765 = vunpack.c.l.b16 %v483
        %v1766 = vunpack.c.h.b16 %v483
        %v1767 = vunpack.c.l.b16 %v484
        %v1768 = vunpack.c.h.b16 %v484
        %v1769 = vunpack.c.l.b16 %v485
        %v1770 = vunpack.c.h.b16 %v485
        %v1771 = vunpack.c.l.b16 %v486
        %v1772 = vunpack.c.h.b16 %v486
        %v1773 = vunpack.c.l.b16 %v487
        %v1774 = vunpack.c.h.b16 %v487
        %v1775 = vunpack.c.l.b16 %v488
        %v1776 = vunpack.c.h.b16 %v488
        %v1777 = vunpack.c.l.b16 %v489
        %v1778 = vunpack.c.h.b16 %v489
        %v1779 = vunpack.c.l.b16 %v490
        %v1780 = vunpack.c.h.b16 %v490
        %v1781 = vunpack.c.l.b16 %v491
        %v1782 = vunpack.c.h.b16 %v491
        %v1783 = vunpack.c.l.b16 %v492
        %v1784 = vunpack.c.h.b16 %v492
        %v1785 = vunpack.c.l.b16 %v493
        %v1786 = vunpack.c.h.b16 %v493
        %v1787 = vunpack.c.l.b16 %v494
        %v1788 = vunpack.c.h.b16 %v494
        %v1789 = vunpack.c.l.b16 %v495
        %v1790 = vunpack.c.h.b16 %v495
        %v1791 = vunpack.c.l.b16 %v496
        %v1792 = vunpack.c.h.b16 %v496
        %v1793 = vunpack.c.l.b16 %v497
        %v1794 = vunpack.c.h.b16 %v497
        %v1795 = vunpack.c.l.b16 %v498
        %v1796 = vunpack.c.h.b16 %v498
        %v1797 = vunpack.c.l.b16 %v499
        %v1798 = vunpack.c.h.b16 %v499
        %v1799 = vunpack.c.l.b16 %v500
        %v1800 = vunpack.c.h.b16 %v500
        %v1801 = vunpack.c.l.b16 %v501
        %v1802 = vunpack.c.h.b16 %v501
        %v1803 = vunpack.c.l.b16 %v502
        %v1804 = vunpack.c.h.b16 %v502
        %v1805 = vunpack.c.l.b16 %v503
        %v1806 = vunpack.c.h.b16 %v503
        %v1807 = vunpack.c.l.b16 %v504
        %v1808 = vunpack.c.h.b16 %v504
        %v1809 = vunpack.c.l.b16 %v505
        %v1810 = vunpack.c.h.b16 %v505
        %v1811 = vunpack.c.l.b16 %v506
        %v1812 = vunpack.c.h.b16 %v506
        %v1813 = vunpack.c.l.b16 %v507
        %v1814 = vunpack.c.h.b16 %v507
        %v1815 = vunpack.c.l.b16 %v508
        %v1816 = vunpack.c.h.b16 %v508
        %v1817 = vunpack.c.l.b16 %v509
        %v1818 = vunpack.c.h.b16 %v509
        %v1819 = vunpack.c.l.b16 %v510
        %v1820 = vunpack.c.h.b16 %v510
        %v1821 = vunpack.c.l.b16 %v511
        %v1822 = vunpack.c.h.b16 %v511
        %v1823 = vunpack.c.l.b16 %v512
        %v1824 = vunpack.c.h.b16 %v512
        %v1825 = vunpack.c.l.b16 %v513
        %v1826 = vunpack.c.h.b16 %v513
        %v1827 = vunpack.c.l.b16 %v514
        %v1828 = vunpack.c.h.b16 %v514
        %v1829 = vunpack.c.l.b16 %v515
        %v1830 = vunpack.c.h.b16 %v515
        %v1831 = vunpack.c.l.b16 %v516
        %v1832 = vunpack.c.h.b16 %v516
        %v1833 = vunpack.c.l.b16 %v517
        %v1834 = vunpack.c.h.b16 %v517
        %v1835 = vunpack.c.l.b16 %v518
        %v1836 = vunpack.c.h.b16 %v518
        %v1837 = vunpack.c.l.b16 %v519
        %v1838 = vunpack.c.h.b16 %v519
        %v1839 = vunpack.c.l.b16 %v520
        %v1840 = vunpack.c.h.b16 %v520
        %v1841 = vunpack.c.l.b16 %v521
        %v1842 = vunpack.c.h.b16 %v521
        %v1843 = vunpack.c.l.b16 %v522
        %v1844 = vunpack.c.h.b16 %v522
        %v1845 = vunpack.c.l.b16 %v523
        %v1846 = vunpack.c.h.b16 %v523
        %v1847 = vunpack.c.l.b16 %v524
        %v1848 = vunpack.c.h.b16 %v524
        %v1849 = vunpack.c.l.b16 %v525
        %v1850 = vunpack.c.h.b16 %v525
        %v1851 = vunpack.c.l.b16 %v526
        %v1852 = vunpack.c.h.b16 %v526
        %v1853 = vunpack.c.l.b16 %v527
        %v1854 = vunpack.c.h.b16 %v527
        %v1855 = vunpack.c.l.b16 %v528
        %v1856 = vunpack.c.h.b16 %v528
        %v1857 = vunpack.c.l.b16 %v529
        %v1858 = vunpack.c.h.b16 %v529
        %v1859 = vunpack.c.l.b16 %v530
        %v1860 = vunpack.c.h.b16 %v530
        %v1861 = vunpack.c.l.b16 %v531
        %v1862 = vunpack.c.h.b16 %v531
        %v1863 = vunpack.c.l.b16 %v532
        %v1864 = vunpack.c.h.b16 %v532
        %v1865 = vunpack.c.l.b16 %v533
        %v1866 = vunpack.c.h.b16 %v533
        %v1867 = vunpack.c.l.b16 %v534
        %v1868 = vunpack.c.h.b16 %v534
        %v1869 = vunpack.c.l.b16 %v535
        %v1870 = vunpack.c.h.b16 %v535
        %v1871 = vunpack.c.l.b16 %v536
        %v1872 = vunpack.c.h.b16 %v536
        %v1873 = vunpack.c.l.b16 %v537
        %v1874 = vunpack.c.h.b16 %v537
        %v1875 = vunpack.c.l.b16 %v538
        %v1876 = vunpack.c.h.b16 %v538
        %v1877 = vunpack.c.l.b16 %v539
        %v1878 = vunpack.c.h.b16 %v539
        %v1879 = vunpack.c.l.b16 %v540
        %v1880 = vunpack.c.h.b16 %v540
        %v1881 = vunpack.c.l.b16 %v541
        %v1882 = vunpack.c.h.b16 %v541
        %v1883 = vunpack.c.l.b16 %v542
        %v1884 = vunpack.c.h.b16 %v542
        %v1885 = vunpack.c.l.b16 %v543
        %v1886 = vunpack.c.h.b16 %v543
        %v1887 = vunpack.c.l.b16 %v544
        %v1888 = vunpack.c.h.b16 %v544
        %v1889 = vunpack.c.l.b16 %v545
        %v1890 = vunpack.c.h.b16 %v545
        %v1891 = vunpack.c.l.b16 %v546
        %v1892 = vunpack.c.h.b16 %v546
        %v1893 = vunpack.c.l.b16 %v547
        %v1894 = vunpack.c.h.b16 %v547
        %v1895 = vunpack.c.l.b16 %v548
        %v1896 = vunpack.c.h.b16 %v548
        %v1897 = vunpack.c.l.b16 %v549
        %v1898 = vunpack.c.h.b16 %v549
        %v1899 = vunpack.c.l.b16 %v550
        %v1900 = vunpack.c.h.b16 %v550
        %v1901 = vunpack.c.l.b16 %v551
        %v1902 = vunpack.c.h.b16 %v551
        %v1903 = vunpack.c.l.b16 %v552
        %v1904 = vunpack.c.h.b16 %v552
        %v1905 = vunpack.c.l.b16 %v553
        %v1906 = vunpack.c.h.b16 %v553
        %v1907 = vunpack.c.l.b16 %v554
        %v1908 = vunpack.c.h.b16 %v554
        %v1909 = vunpack.c.l.b16 %v555
        %v1910 = vunpack.c.h.b16 %v555
        %v1911 = vunpack.c.l.b16 %v556
        %v1912 = vunpack.c.h.b16 %v556
        %v1913 = vunpack.c.l.b16 %v557
        %v1914 = vunpack.c.h.b16 %v557
        %v1915 = vunpack.c.l.b16 %v558
        %v1916 = vunpack.c.h.b16 %v558
        %v1917 = vunpack.c.l.b16 %v559
        %v1918 = vunpack.c.h.b16 %v559
        %v1919 = vunpack.c.l.b16 %v560
        %v1920 = vunpack.c.h.b16 %v560
        %v1921 = vunpack.c.l.b16 %v561
        %v1922 = vunpack.c.h.b16 %v561
        %v1923 = vunpack.c.l.b16 %v562
        %v1924 = vunpack.c.h.b16 %v562
        %v1925 = vunpack.c.l.b16 %v563
        %v1926 = vunpack.c.h.b16 %v563
        %v1927 = vunpack.c.l.b16 %v564
        %v1928 = vunpack.c.h.b16 %v564
        %v1929 = vunpack.c.l.b16 %v565
        %v1930 = vunpack.c.h.b16 %v565
        %v1931 = vunpack.c.l.b16 %v566
        %v1932 = vunpack.c.h.b16 %v566
        %v1933 = vunpack.c.l.b16 %v567
        %v1934 = vunpack.c.h.b16 %v567
        %v1935 = vunpack.c.l.b16 %v568
        %v1936 = vunpack.c.h.b16 %v568
        %v1937 = vunpack.c.l.b16 %v569
        %v1938 = vunpack.c.h.b16 %v569
        %v1939 = vunpack.c.l.b16 %v570
        %v1940 = vunpack.c.h.b16 %v570
        %v1941 = vunpack.c.l.b16 %v571
        %v1942 = vunpack.c.h.b16 %v571
        %v1943 = vunpack.c.l.b16 %v572
        %v1944 = vunpack.c.h.b16 %v572
        %v1945 = vunpack.c.l.b16 %v573
        %v1946 = vunpack.c.h.b16 %v573
        %v1947 = vunpack.c.l.b16 %v574
        %v1948 = vunpack.c.h.b16 %v574
        %v1949 = vunpack.c.l.b16 %v575
        %v1950 = vunpack.c.h.b16 %v575
        %v1951 = vunpack.c.l.b16 %v576
        %v1952 = vunpack.c.h.b16 %v576
        %v1953 = vunpack.c.l.b16 %v577
        %v1954 = vunpack.c.h.b16 %v577
        %v1955 = vunpack.c.l.b16 %v578
        %v1956 = vunpack.c.h.b16 %v578
        %v1957 = vunpack.c.l.b16 %v579
        %v1958 = vunpack.c.h.b16 %v579
        %v1959 = vunpack.c.l.b16 %v580
        %v1960 = vunpack.c.h.b16 %v580
        %v1961 = vunpack.c.l.b16 %v581
        %v1962 = vunpack.c.h.b16 %v581
        %v1963 = vunpack.c.l.b16 %v582
        %v1964 = vunpack.c.h.b16 %v582
        %v1965 = vunpack.c.l.b16 %v583
        %v1966 = vunpack.c.h.b16 %v583
        %v1967 = vunpack.c.l.b16 %v584
        %v1968 = vunpack.c.h.b16 %v584
        %v1969 = vunpack.c.l.b16 %v585
        %v1970 = vunpack.c.h.b16 %v585
        %v1971 = vunpack.c.l.b16 %v586
        %v1972 = vunpack.c.h.b16 %v586
        %v1973 = vunpack.c.l.b16 %v587
        %v1974 = vunpack.c.h.b16 %v587
        %v1975 = vunpack.c.l.b16 %v588
        %v1976 = vunpack.c.h.b16 %v588
        %v1977 = vunpack.c.l.b16 %v589
        %v1978 = vunpack.c.h.b16 %v589
        %v1979 = vunpack.c.l.b16 %v590
        %v1980 = vunpack.c.h.b16 %v590
        %v1981 = vunpack.c.l.b16 %v591
        %v1982 = vunpack.c.h.b16 %v591
        %v1983 = vunpack.c.l.b16 %v592
        %v1984 = vunpack.c.h.b16 %v592
        %v1985 = vunpack.c.l.b16 %v593
        %v1986 = vunpack.c.h.b16 %v593
        %v1987 = vunpack.c.l.b16 %v594
        %v1988 = vunpack.c.h.b16 %v594
        %v1989 = vunpack.c.l.b16 %v595
        %v1990 = vunpack.c.h.b16 %v595
        %v1991 = vunpack.c.l.b16 %v596
        %v1992 = vunpack.c.h.b16 %v596
        %v1993 = vunpack.c.l.b16 %v597
        %v1994 = vunpack.c.h.b16 %v597
        %v1995 = vunpack.c.l.b16 %v598
        %v1996 = vunpack.c.h.b16 %v598
        %v1997 = vunpack.c.l.b16 %v599
        %v1998 = vunpack.c.h.b16 %v599
        %v1999 = vunpack.c.l.b16 %v600
        %v2000 = vunpack.c.h.b16 %v600
        %v2001 = vunpack.c.l.b16 %v601
        %v2002 = vunpack.c.h.b16 %v601
        %v2003 = vunpack.c.l.b16 %v602
        %v2004 = vunpack.c.h.b16 %v602
        %v2005 = vunpack.c.l.b16 %v603
        %v2006 = vunpack.c.h.b16 %v603
        %v2007 = vunpack.c.l.b16 %v604
        %v2008 = vunpack.c.h.b16 %v604
        %v2009 = vunpack.c.l.b16 %v605
        %v2010 = vunpack.c.h.b16 %v605
        %v2011 = vunpack.c.l.b16 %v606
        %v2012 = vunpack.c.h.b16 %v606
        %v2013 = vunpack.c.l.b16 %v607
        %v2014 = vunpack.c.h.b16 %v607
        %v2015 = vunpack.c.l.b16 %v608
        %v2016 = vunpack.c.h.b16 %v608
        %v2017 = vunpack.c.l.b16 %v609
        %v2018 = vunpack.c.h.b16 %v609
        %v2019 = vunpack.c.l.b16 %v610
        %v2020 = vunpack.c.h.b16 %v610
        %v2021 = vunpack.c.l.b16 %v611
        %v2022 = vunpack.c.h.b16 %v611
        %v2023 = vunpack.c.l.b16 %v612
        %v2024 = vunpack.c.h.b16 %v612
        %v2025 = vunpack.c.l.b16 %v613
        %v2026 = vunpack.c.h.b16 %v613
        %v2027 = vunpack.c.l.b16 %v614
        %v2028 = vunpack.c.h.b16 %v614
        %v2029 = vunpack.c.l.b16 %v615
        %v2030 = vunpack.c.h.b16 %v615
        %v2031 = vunpack.c.l.b16 %v616
        %v2032 = vunpack.c.h.b16 %v616
        %v2033 = vunpack.c.l.b16 %v617
        %v2034 = vunpack.c.h.b16 %v617
        %v2035 = vunpack.c.l.b16 %v618
        %v2036 = vunpack.c.h.b16 %v618
        %v2037 = vunpack.c.l.b16 %v619
        %v2038 = vunpack.c.h.b16 %v619
        %v2039 = vunpack.c.l.b16 %v620
        %v2040 = vunpack.c.h.b16 %v620
        %v2041 = vunpack.c.l.b16 %v621
        %v2042 = vunpack.c.h.b16 %v621
        %v2043 = vunpack.c.l.b16 %v622
        %v2044 = vunpack.c.h.b16 %v622
        %v2045 = vunpack.c.l.b16 %v623
        %v2046 = vunpack.c.h.b16 %v623
        %v2047 = vunpack.c.l.b16 %v624
        %v2048 = vunpack.c.h.b16 %v624
        %v2049 = vunpack.c.l.b16 %v625
        %v2050 = vunpack.c.h.b16 %v625
        %v2051 = vunpack.c.l.b16 %v626
        %v2052 = vunpack.c.h.b16 %v626
        %v2053 = vunpack.c.l.b16 %v627
        %v2054 = vunpack.c.h.b16 %v627
        %v2055 = vunpack.c.l.b16 %v628
        %v2056 = vunpack.c.h.b16 %v628
        %v2057 = vunpack.c.l.b16 %v629
        %v2058 = vunpack.c.h.b16 %v629
        %v2059 = vunpack.c.l.b16 %v630
        %v2060 = vunpack.c.h.b16 %v630
        %v2061 = vunpack.c.l.b16 %v631
        %v2062 = vunpack.c.h.b16 %v631
        %v2063 = vunpack.c.l.b16 %v632
        %v2064 = vunpack.c.h.b16 %v632
        %v2065 = vunpack.c.l.b16 %v633
        %v2066 = vunpack.c.h.b16 %v633
        %v2067 = vunpack.c.l.b16 %v634
        %v2068 = vunpack.c.h.b16 %v634
        %v2069 = vunpack.c.l.b16 %v635
        %v2070 = vunpack.c.h.b16 %v635
        %v2071 = vunpack.c.l.b16 %v636
        %v2072 = vunpack.c.h.b16 %v636
        %v2073 = vunpack.c.l.b16 %v637
        %v2074 = vunpack.c.h.b16 %v637
        %v2075 = vunpack.c.l.b16 %v638
        %v2076 = vunpack.c.h.b16 %v638
        %v2077 = vunpack.c.l.b16 %v639
        %v2078 = vunpack.c.h.b16 %v639
        %v2079 = vunpack.c.l.b16 %v640
        %v2080 = vunpack.c.h.b16 %v640
        %v2081 = vunpack.c.l.b16 %v641
        %v2082 = vunpack.c.h.b16 %v641
        %v2083 = vunpack.c.l.b16 %v642
        %v2084 = vunpack.c.h.b16 %v642
        %v2085 = vunpack.c.l.b16 %v643
        %v2086 = vunpack.c.h.b16 %v643
        %v2087 = vunpack.c.l.b16 %v644
        %v2088 = vunpack.c.h.b16 %v644
        %v2089 = vunpack.c.l.b16 %v645
        %v2090 = vunpack.c.h.b16 %v645
        %v2091 = vunpack.c.l.b16 %v646
        %v2092 = vunpack.c.h.b16 %v646
        %v2093 = vunpack.c.l.b16 %v647
        %v2094 = vunpack.c.h.b16 %v647
        %v2095 = vunpack.c.l.b16 %v648
        %v2096 = vunpack.c.h.b16 %v648
        %v2097 = vunpack.c.l.b16 %v649
        %v2098 = vunpack.c.h.b16 %v649
        %v2099 = vunpack.c.l.b16 %v650
        %v2100 = vunpack.c.h.b16 %v650
        %v2101 = vunpack.c.l.b16 %v651
        %v2102 = vunpack.c.h.b16 %v651
        %v2103 = vunpack.c.l.b16 %v652
        %v2104 = vunpack.c.h.b16 %v652
        %v2105 = vunpack.c.l.b16 %v653
        %v2106 = vunpack.c.h.b16 %v653
        %v2107 = vunpack.c.l.b16 %v654
        %v2108 = vunpack.c.h.b16 %v654
        %v2109 = vunpack.c.l.b16 %v655
        %v2110 = vunpack.c.h.b16 %v655
        %v2111 = vunpack.c.l.b16 %v656
        %v2112 = vunpack.c.h.b16 %v656
        %v2113 = vunpack.c.l.b16 %v657
        %v2114 = vunpack.c.h.b16 %v657
        %v2115 = vunpack.c.l.b16 %v658
        %v2116 = vunpack.c.h.b16 %v658
        %v2117 = vunpack.c.l.b16 %v659
        %v2118 = vunpack.c.h.b16 %v659
        %v2119 = vunpack.c.l.b16 %v660
        %v2120 = vunpack.c.h.b16 %v660
        %v2121 = vunpack.c.l.b16 %v661
        %v2122 = vunpack.c.h.b16 %v661
        %v2123 = vunpack.c.l.b16 %v662
        %v2124 = vunpack.c.h.b16 %v662
        %v2125 = vunpack.c.l.b16 %v663
        %v2126 = vunpack.c.h.b16 %v663
        %v2127 = vunpack.c.l.b16 %v664
        %v2128 = vunpack.c.h.b16 %v664
        %v2129 = vunpack.c.l.b16 %v665
        %v2130 = vunpack.c.h.b16 %v665
        %v2131 = vunpack.c.l.b16 %v666
        %v2132 = vunpack.c.h.b16 %v666
        %v2133 = vunpack.c.l.b16 %v667
        %v2134 = vunpack.c.h.b16 %v667
        %v2135 = vunpack.c.l.b16 %v668
        %v2136 = vunpack.c.h.b16 %v668
        %v2137 = vunpack.c.l.b16 %v669
        %v2138 = vunpack.c.h.b16 %v669
        %v2139 = vunpack.c.l.b16 %v670
        %v2140 = vunpack.c.h.b16 %v670
        %v2141 = vunpack.c.l.b16 %v671
        %v2142 = vunpack.c.h.b16 %v671
        %v2143 = vunpack.c.l.b16 %v672
        %v2144 = vunpack.c.h.b16 %v672
        %v2145 = vunpack.c.l.b16 %v673
        %v2146 = vunpack.c.h.b16 %v673
        %v2147 = vunpack.c.l.b16 %v674
        %v2148 = vunpack.c.h.b16 %v674
        %v2149 = vunpack.c.l.b16 %v675
        %v2150 = vunpack.c.h.b16 %v675
        %v2151 = vunpack.c.l.b16 %v676
        %v2152 = vunpack.c.h.b16 %v676
        %v2153 = vunpack.c.l.b16 %v677
        %v2154 = vunpack.c.h.b16 %v677
        %v2155 = vunpack.c.l.b16 %v678
        %v2156 = vunpack.c.h.b16 %v678
        %v2157 = vunpack.c.l.b16 %v679
        %v2158 = vunpack.c.h.b16 %v679
        %v2159 = vunpack.c.l.b16 %v680
        %v2160 = vunpack.c.h.b16 %v680
        %v2161 = vunpack.c.l.b16 %v681
        %v2162 = vunpack.c.h.b16 %v681
        %v2163 = vunpack.c.l.b16 %v682
        %v2164 = vunpack.c.h.b16 %v682
        %v2165 = vunpack.c.l.b16 %v683
        %v2166 = vunpack.c.h.b16 %v683
        %v2167 = vunpack.c.l.b16 %v684
        %v2168 = vunpack.c.h.b16 %v684
        %v2169 = vunpack.c.l.b16 %v685
        %v2170 = vunpack.c.h.b16 %v685
        %v2171 = vunpack.c.l.b16 %v686
        %v2172 = vunpack.c.h.b16 %v686
        %v2173 = vunpack.c.l.b16 %v687
        %v2174 = vunpack.c.h.b16 %v687
        %v2175 = vunpack.c.l.b16 %v688
        %v2176 = vunpack.c.h.b16 %v688
        %v2177 = vunpack.c.l.b16 %v689
        %v2178 = vunpack.c.h.b16 %v689
        %v2179 = vunpack.c.l.b16 %v690
        %v2180 = vunpack.c.h.b16 %v690
        %v2181 = vunpack.c.l.b16 %v691
        %v2182 = vunpack.c.h.b16 %v691
        %v2183 = vunpack.c.l.b16 %v692
        %v2184 = vunpack.c.h.b16 %v692
        %v2185 = vunpack.c.l.b16 %v693
        %v2186 = vunpack.c.h.b16 %v693
        %v2187 = vunpack.c.l.b16 %v694
        %v2188 = vunpack.c.h.b16 %v694
        %v2189 = vunpack.c.l.b16 %v695
        %v2190 = vunpack.c.h.b16 %v695
        %v2191 = vunpack.c.l.b16 %v696
        %v2192 = vunpack.c.h.b16 %v696
        %v2193 = vunpack.c.l.b16 %v697
        %v2194 = vunpack.c.h.b16 %v697
        %v2195 = vunpack.c.l.b16 %v698
        %v2196 = vunpack.c.h.b16 %v698
        %v2197 = vunpack.c.l.b16 %v699
        %v2198 = vunpack.c.h.b16 %v699
        %v2199 = vunpack.c.l.b16 %v700
        %v2200 = vunpack.c.h.b16 %v700
        %v2201 = vunpack.c.l.b16 %v701
        %v2202 = vunpack.c.h.b16 %v701
        %v2203 = vunpack.c.l.b16 %v702
        %v2204 = vunpack.c.h.b16 %v702
        %v2205 = vunpack.c.l.b16 %v703
        %v2206 = vunpack.c.h.b16 %v703
        %v2207 = vunpack.c.l.b16 %v704
        %v2208 = vunpack.c.h.b16 %v704
        %v2209 = vunpack.c.l.b16 %v705
        %v2210 = vunpack.c.h.b16 %v705
        %v2211 = vunpack.c.l.b16 %v706
        %v2212 = vunpack.c.h.b16 %v706
        %v2213 = vunpack.c.l.b16 %v707
        %v2214 = vunpack.c.h.b16 %v707
        %v2215 = vunpack.c.l.b16 %v708
        %v2216 = vunpack.c.h.b16 %v708
        %v2217 = vunpack.c.l.b16 %v709
        %v2218 = vunpack.c.h.b16 %v709
        %v2219 = vunpack.c.l.b16 %v710
        %v2220 = vunpack.c.h.b16 %v710
        %v2221 = vunpack.c.l.b16 %v711
        %v2222 = vunpack.c.h.b16 %v711
        %v2223 = vunpack.c.l.b16 %v712
        %v2224 = vunpack.c.h.b16 %v712
        %v2225 = vunpack.c.l.b16 %v713
        %v2226 = vunpack.c.h.b16 %v713
        %v2227 = vunpack.c.l.b16 %v714
        %v2228 = vunpack.c.h.b16 %v714
        %v2229 = vunpack.c.l.b16 %v715
        %v2230 = vunpack.c.h.b16 %v715
        %v2231 = vunpack.c.l.b16 %v716
        %v2232 = vunpack.c.h.b16 %v716
        %v2233 = vunpack.c.l.b16 %v717
        %v2234 = vunpack.c.h.b16 %v717
        %v2235 = vunpack.c.l.b16 %v718
        %v2236 = vunpack.c.h.b16 %v718
        %v2237 = vunpack.c.l.b16 %v719
        %v2238 = vunpack.c.h.b16 %v719
        %v2239 = vunpack.c.l.b16 %v720
        %v2240 = vunpack.c.h.b16 %v720
        %v2241 = vunpack.c.l.b16 %v721
        %v2242 = vunpack.c.h.b16 %v721
        %v2243 = vunpack.c.l.b16 %v722
        %v2244 = vunpack.c.h.b16 %v722
        %v2245 = vunpack.c.l.b16 %v723
        %v2246 = vunpack.c.h.b16 %v723
        %v2247 = vunpack.c.l.b16 %v724
        %v2248 = vunpack.c.h.b16 %v724
        %v2249 = vunpack.c.l.b16 %v725
        %v2250 = vunpack.c.h.b16 %v725
        %v2251 = vunpack.c.l.b16 %v726
        %v2252 = vunpack.c.h.b16 %v726
        %v2253 = vunpack.c.l.b16 %v727
        %v2254 = vunpack.c.h.b16 %v727
        %v2255 = vunpack.c.l.b16 %v728
        %v2256 = vunpack.c.h.b16 %v728
        %v2257 = vunpack.c.l.b16 %v729
        %v2258 = vunpack.c.h.b16 %v729
        %v2259 = vunpack.c.l.b16 %v730
        %v2260 = vunpack.c.h.b16 %v730
        %v2261 = vunpack.c.l.b16 %v731
        %v2262 = vunpack.c.h.b16 %v731
        %v2263 = vunpack.c.l.b16 %v732
        %v2264 = vunpack.c.h.b16 %v732
        %v2265 = vunpack.c.l.b16 %v733
        %v2266 = vunpack.c.h.b16 %v733
        %v2267 = vunpack.c.l.b16 %v734
        %v2268 = vunpack.c.h.b16 %v734
        %v2269 = vunpack.c.l.b16 %v735
        %v2270 = vunpack.c.h.b16 %v735
        %v2271 = vunpack.c.l.b16 %v736
        %v2272 = vunpack.c.h.b16 %v736
        %v2273 = vunpack.c.l.b16 %v737
        %v2274 = vunpack.c.h.b16 %v737
        %v2275 = vunpack.c.l.b16 %v738
        %v2276 = vunpack.c.h.b16 %v738
        %v2277 = vunpack.c.l.b16 %v739
        %v2278 = vunpack.c.h.b16 %v739
        %v2279 = vunpack.c.l.b16 %v740
        %v2280 = vunpack.c.h.b16 %v740
        %v2281 = vunpack.c.l.b16 %v741
        %v2282 = vunpack.c.h.b16 %v741
        %v2283 = vunpack.c.l.b16 %v742
        %v2284 = vunpack.c.h.b16 %v742
        %v2285 = vunpack.c.l.b16 %v743
        %v2286 = vunpack.c.h.b16 %v743
        %v2287 = vunpack.c.l.b16 %v744
        %v2288 = vunpack.c.h.b16 %v744
        %v2289 = vunpack.c.l.b16 %v745
        %v2290 = vunpack.c.h.b16 %v745
        %v2291 = vunpack.c.l.b16 %v746
        %v2292 = vunpack.c.h.b16 %v746
        %v2293 = vunpack.c.l.b16 %v747
        %v2294 = vunpack.c.h.b16 %v747
        %v2295 = vunpack.c.l.b16 %v748
        %v2296 = vunpack.c.h.b16 %v748
        %v2297 = vunpack.c.l.b16 %v749
        %v2298 = vunpack.c.h.b16 %v749
        %v2299 = vunpack.c.l.b16 %v750
        %v2300 = vunpack.c.h.b16 %v750
        %v2301 = vunpack.c.l.b16 %v751
        %v2302 = vunpack.c.h.b16 %v751
        %v2303 = vunpack.c.l.b16 %v752
        %v2304 = vunpack.c.h.b16 %v752
        %v2305 = vunpack.c.l.b16 %v753
        %v2306 = vunpack.c.h.b16 %v753
        %v2307 = vunpack.c.l.b16 %v754
        %v2308 = vunpack.c.h.b16 %v754
        %v2309 = vunpack.c.l.b16 %v755
        %v2310 = vunpack.c.h.b16 %v755
        %v2311 = vunpack.c.l.b16 %v756
        %v2312 = vunpack.c.h.b16 %v756
        %v2313 = vunpack.c.l.b16 %v757
        %v2314 = vunpack.c.h.b16 %v757
        %v2315 = vunpack.c.l.b16 %v758
        %v2316 = vunpack.c.h.b16 %v758
        %v2317 = vunpack.c.l.b16 %v759
        %v2318 = vunpack.c.h.b16 %v759
        %v2319 = vunpack.c.l.b16 %v760
        %v2320 = vunpack.c.h.b16 %v760
        %v2321 = vunpack.c.l.b16 %v761
        %v2322 = vunpack.c.h.b16 %v761
        %v2323 = vunpack.c.l.b16 %v762
        %v2324 = vunpack.c.h.b16 %v762
        %v2325 = vunpack.c.l.b16 %v763
        %v2326 = vunpack.c.h.b16 %v763
        %v2327 = vunpack.c.l.b16 %v764
        %v2328 = vunpack.c.h.b16 %v764
        %v2329 = vunpack.c.l.b16 %v765
        %v2330 = vunpack.c.h.b16 %v765
        %v2331 = vunpack.c.l.b16 %v766
        %v2332 = vunpack.c.h.b16 %v766
        %v2333 = vunpack.c.l.b16 %v767
        %v2334 = vunpack.c.h.b16 %v767
        %v2335 = vunpack.c.l.b16 %v768
        %v2336 = vunpack.c.h.b16 %v768
        %v2337 = vunpack.c.l.b16 %v769
        %v2338 = vunpack.c.h.b16 %v769
        %v2339 = vunpack.c.l.b16 %v770
        %v2340 = vunpack.c.h.b16 %v770
        %v2341 = vunpack.c.l.b16 %v771
        %v2342 = vunpack.c.h.b16 %v771
        %v2343 = vunpack.c.l.b16 %v772
        %v2344 = vunpack.c.h.b16 %v772
        %v2345 = vunpack.c.l.b16 %v773
        %v2346 = vunpack.c.h.b16 %v773
        %v2347 = vunpack.c.l.b16 %v774
        %v2348 = vunpack.c.h.b16 %v774
        %v2349 = vunpack.c.l.b16 %v775
        %v2350 = vunpack.c.h.b16 %v775
        %v2351 = vunpack.c.l.b16 %v776
        %v2352 = vunpack.c.h.b16 %v776
        %v2353 = vunpack.c.l.b16 %v777
        %v2354 = vunpack.c.h.b16 %v777
        %v2355 = vunpack.c.l.b16 %v778
        %v2356 = vunpack.c.h.b16 %v778
        %v2357 = vunpack.c.l.b16 %v779
        %v2358 = vunpack.c.h.b16 %v779
        %v2359 = vunpack.c.l.b16 %v780
        %v2360 = vunpack.c.h.b16 %v780
        %v2361 = vunpack.c.l.b16 %v781
        %v2362 = vunpack.c.h.b16 %v781
        %v2363 = vunpack.c.l.b16 %v782
        %v2364 = vunpack.c.h.b16 %v782
        %v2365 = vunpack.c.l.b16 %v783
        %v2366 = vunpack.c.h.b16 %v783
        %v2367 = vunpack.c.l.b16 %v784
        %v2368 = vunpack.c.h.b16 %v784
        %v2369 = vunpack.c.l.b16 %v785
        %v2370 = vunpack.c.h.b16 %v785
        %v2371 = vunpack.c.l.b16 %v786
        %v2372 = vunpack.c.h.b16 %v786
        %v2373 = vunpack.c.l.b16 %v787
        %v2374 = vunpack.c.h.b16 %v787
        %v2375 = vunpack.c.l.b16 %v788
        %v2376 = vunpack.c.h.b16 %v788
        %v2377 = vunpack.c.l.b16 %v789
        %v2378 = vunpack.c.h.b16 %v789
        %v2379 = vunpack.c.l.b16 %v790
        %v2380 = vunpack.c.h.b16 %v790
        %v2381 = vunpack.c.l.b16 %v791
        %v2382 = vunpack.c.h.b16 %v791
        %v2383 = vunpack.c.l.b16 %v792
        %v2384 = vunpack.c.h.b16 %v792
        %v2385 = vunpack.c.l.b16 %v793
        %v2386 = vunpack.c.h.b16 %v793
        %v2387 = vunpack.c.l.b16 %v794
        %v2388 = vunpack.c.h.b16 %v794
        %v2389 = vunpack.c.l.b16 %v795
        %v2390 = vunpack.c.h.b16 %v795
        %v2391 = vunpack.c.l.b16 %v796
        %v2392 = vunpack.c.h.b16 %v796
        %v2393 = vunpack.c.l.b16 %v797
        %v2394 = vunpack.c.h.b16 %v797
        %v2395 = vunpack.c.l.b16 %v798
        %v2396 = vunpack.c.h.b16 %v798
        %v2397 = vunpack.c.l.b16 %v799
        %v2398 = vunpack.c.h.b16 %v799
        %v2399 = vunpack.c.l.b16 %v800
        %v2400 = vunpack.c.h.b16 %v800
        %v2401 = vunpack.c.l.b16 %v801
        %v2402 = vunpack.c.h.b16 %v801
        %v2403 = vunpack.c.l.b16 %v802
        %v2404 = vunpack.c.h.b16 %v802
        %v2405 = vunpack.c.l.b16 %v803
        %v2406 = vunpack.c.h.b16 %v803
        %v2407 = vunpack.c.l.b16 %v804
        %v2408 = vunpack.c.h.b16 %v804
        %v2409 = vunpack.c.l.b16 %v805
        %v2410 = vunpack.c.h.b16 %v805
        %v2411 = vunpack.c.l.b16 %v806
        %v2412 = vunpack.c.h.b16 %v806
        %v2413 = vunpack.c.l.b16 %v807
        %v2414 = vunpack.c.h.b16 %v807
        %v2415 = vunpack.c.l.b16 %v808
        %v2416 = vunpack.c.h.b16 %v808
        %v2417 = vunpack.c.l.b16 %v809
        %v2418 = vunpack.c.h.b16 %v809
        %v2419 = vunpack.c.l.b16 %v810
        %v2420 = vunpack.c.h.b16 %v810
        %v2421 = vunpack.c.l.b16 %v811
        %v2422 = vunpack.c.h.b16 %v811
        %v2423 = vunpack.c.l.b16 %v812
        %v2424 = vunpack.c.h.b16 %v812
        %v2425 = vunpack.c.l.b16 %v813
        %v2426 = vunpack.c.h.b16 %v813
        %v2427 = vunpack.c.l.b16 %v814
        %v2428 = vunpack.c.h.b16 %v814
        %v2429 = vunpack.c.l.b16 %v815
        %v2430 = vunpack.c.h.b16 %v815
        %v2431 = vunpack.c.l.b16 %v816
        %v2432 = vunpack.c.h.b16 %v816
        %v2433 = vunpack.c.l.b16 %v817
        %v2434 = vunpack.c.h.b16 %v817
        %v2435 = vunpack.c.l.b16 %v818
        %v2436 = vunpack.c.h.b16 %v818
        %v2437 = vunpack.c.l.b16 %v819
        %v2438 = vunpack.c.h.b16 %v819
        %v2439 = vunpack.c.l.b16 %v820
        %v2440 = vunpack.c.h.b16 %v820
        %v2441 = vunpack.c.l.b16 %v821
        %v2442 = vunpack.c.h.b16 %v821
        %v2443 = vunpack.c.l.b16 %v822
        %v2444 = vunpack.c.h.b16 %v822
        %v2445 = vunpack.c.l.b16 %v823
        %v2446 = vunpack.c.h.b16 %v823
        %v2447 = vunpack.c.l.b16 %v824
        %v2448 = vunpack.c.h.b16 %v824
        %v2449 = vunpack.c.l.b16 %v825
        %v2450 = vunpack.c.h.b16 %v825
        %v2451 = vunpack.c.l.b16 %v826
        %v2452 = vunpack.c.h.b16 %v826
        %v2453 = vunpack.c.l.b16 %v827
        %v2454 = vunpack.c.h.b16 %v827
        %v2455 = vunpack.c.l.b16 %v828
        %v2456 = vunpack.c.h.b16 %v828
        %v2457 = vunpack.c.l.b16 %v829
        %v2458 = vunpack.c.h.b16 %v829
        %v2459 = vunpack.c.l.b16 %v830
        %v2460 = vunpack.c.h.b16 %v830
        %v2461 = vunpack.c.l.b16 %v831
        %v2462 = vunpack.c.h.b16 %v831
        %v2463 = vunpack.c.l.b16 %v832
        %v2464 = vunpack.c.h.b16 %v832
        %v2465 = vunpack.c.l.b16 %v833
        %v2466 = vunpack.c.h.b16 %v833
        %v2467 = vunpack.c.l.b16 %v834
        %v2468 = vunpack.c.h.b16 %v834
        %v2469 = vunpack.c.l.b16 %v835
        %v2470 = vunpack.c.h.b16 %v835
        %v2471 = vunpack.c.l.b16 %v836
        %v2472 = vunpack.c.h.b16 %v836
        %v2473 = vunpack.c.l.b16 %v837
        %v2474 = vunpack.c.h.b16 %v837
        %v2475 = vunpack.c.l.b16 %v838
        %v2476 = vunpack.c.h.b16 %v838
        %v2477 = vunpack.c.l.b16 %v839
        %v2478 = vunpack.c.h.b16 %v839
        %v2479 = vunpack.c.l.b16 %v840
        %v2480 = vunpack.c.h.b16 %v840
        %v2481 = vunpack.c.l.b16 %v841
        %v2482 = vunpack.c.h.b16 %v841
        %v2483 = vunpack.c.l.b16 %v842
        %v2484 = vunpack.c.h.b16 %v842
        %v2485 = vunpack.c.l.b16 %v843
        %v2486 = vunpack.c.h.b16 %v843
        %v2487 = vunpack.c.l.b16 %v844
        %v2488 = vunpack.c.h.b16 %v844
        %v2489 = vunpack.c.l.b16 %v845
        %v2490 = vunpack.c.h.b16 %v845
        %v2491 = vunpack.c.l.b16 %v846
        %v2492 = vunpack.c.h.b16 %v846
        %v2493 = vunpack.c.l.b16 %v847
        %v2494 = vunpack.c.h.b16 %v847
        %v2495 = vunpack.c.l.b16 %v848
        %v2496 = vunpack.c.h.b16 %v848
        %v2497 = vunpack.c.l.b16 %v849
        %v2498 = vunpack.c.h.b16 %v849
        %v2499 = vunpack.c.l.b16 %v850
        %v2500 = vunpack.c.h.b16 %v850
        %v2501 = vunpack.c.l.b16 %v851
        %v2502 = vunpack.c.h.b16 %v851
        %v2503 = vunpack.c.l.b16 %v852
        %v2504 = vunpack.c.h.b16 %v852
        %v2505 = vunpack.c.l.b16 %v853
        %v2506 = vunpack.c.h.b16 %v853
        %v2507 = vunpack.c.l.b16 %v854
        %v2508 = vunpack.c.h.b16 %v854
        %v2509 = vunpack.c.l.b16 %v855
        %v2510 = vunpack.c.h.b16 %v855
        %v2511 = vunpack.c.l.b16 %v856
        %v2512 = vunpack.c.h.b16 %v856
        %v2513 = vunpack.c.l.b16 %v857
        %v2514 = vunpack.c.h.b16 %v857
        %v2515 = vunpack.c.l.b16 %v858
        %v2516 = vunpack.c.h.b16 %v858
        %v2517 = vunpack.c.l.b16 %v859
        %v2518 = vunpack.c.h.b16 %v859
        %v2519 = vunpack.c.l.b16 %v860
        %v2520 = vunpack.c.h.b16 %v860
        %v2521 = vunpack.c.l.b16 %v861
        %v2522 = vunpack.c.h.b16 %v861
        %v2523 = vunpack.c.l.b16 %v862
        %v2524 = vunpack.c.h.b16 %v862
        %v2525 = vunpack.c.l.b16 %v863
        %v2526 = vunpack.c.h.b16 %v863
        %v2527 = vunpack.c.l.b16 %v864
        %v2528 = vunpack.c.h.b16 %v864
        %v2529 = vunpack.c.l.b16 %v865
        %v2530 = vunpack.c.h.b16 %v865
        %v2531 = vunpack.c.l.b16 %v866
        %v2532 = vunpack.c.h.b16 %v866
        %v2533 = vunpack.c.l.b16 %v867
        %v2534 = vunpack.c.h.b16 %v867
        %v2535 = vunpack.c.l.b16 %v868
        %v2536 = vunpack.c.h.b16 %v868
        %v2537 = vunpack.c.l.b16 %v869
        %v2538 = vunpack.c.h.b16 %v869
        %v2539 = vunpack.c.l.b16 %v870
        %v2540 = vunpack.c.h.b16 %v870
        %v2541 = vunpack.c.l.b16 %v871
        %v2542 = vunpack.c.h.b16 %v871
        %v2543 = vunpack.c.l.b16 %v872
        %v2544 = vunpack.c.h.b16 %v872
        %v2545 = vunpack.c.l.b16 %v873
        %v2546 = vunpack.c.h.b16 %v873
        %v2547 = vunpack.c.l.b16 %v874
        %v2548 = vunpack.c.h.b16 %v874
        %v2549 = vunpack.c.l.b16 %v875
        %v2550 = vunpack.c.h.b16 %v875
        %v2551 = vunpack.c.l.b16 %v876
        %v2552 = vunpack.c.h.b16 %v876
        %v2553 = vunpack.c.l.b16 %v877
        %v2554 = vunpack.c.h.b16 %v877
        %v2555 = vunpack.c.l.b16 %v878
        %v2556 = vunpack.c.h.b16 %v878
        %v2557 = vunpack.c.l.b16 %v879
        %v2558 = vunpack.c.h.b16 %v879
        %v2559 = vunpack.c.l.b16 %v880
        %v2560 = vunpack.c.h.b16 %v880
        %v2561 = vunpack.c.l.b16 %v881
        %v2562 = vunpack.c.h.b16 %v881
        %v2563 = vunpack.c.l.b16 %v882
        %v2564 = vunpack.c.h.b16 %v882
        %v2565 = vunpack.c.l.b16 %v883
        %v2566 = vunpack.c.h.b16 %v883
        %v2567 = vunpack.c.l.b16 %v884
        %v2568 = vunpack.c.h.b16 %v884
        %v2569 = vunpack.c.l.b16 %v885
        %v2570 = vunpack.c.h.b16 %v885
        %v2571 = vunpack.c.l.b16 %v886
        %v2572 = vunpack.c.h.b16 %v886
        %v2573 = vunpack.c.l.b16 %v887
        %v2574 = vunpack.c.h.b16 %v887
        %v2575 = vunpack.c.l.b16 %v888
        %v2576 = vunpack.c.h.b16 %v888
        %v2577 = vunpack.c.l.b16 %v889
        %v2578 = vunpack.c.h.b16 %v889
        %v2579 = vunpack.c.l.b16 %v890
        %v2580 = vunpack.c.h.b16 %v890
        %v2581 = vunpack.c.l.b16 %v891
        %v2582 = vunpack.c.h.b16 %v891
        %v2583 = vunpack.c.l.b16 %v892
        %v2584 = vunpack.c.h.b16 %v892
        %v2585 = vunpack.c.l.b16 %v893
        %v2586 = vunpack.c.h.b16 %v893
        %v2587 = vunpack.c.l.b16 %v894
        %v2588 = vunpack.c.h.b16 %v894
        %v2589 = vunpack.c.l.b16 %v895
        %v2590 = vunpack.c.h.b16 %v895
        %v2591 = vunpack.c.l.b16 %v896
        %v2592 = vunpack.c.h.b16 %v896
        %v2593 = vunpack.c.l.b16 %v897
        %v2594 = vunpack.c.h.b16 %v897
        %v2595 = vunpack.c.l.b16 %v898
        %v2596 = vunpack.c.h.b16 %v898
        %v2597 = vunpack.c.l.b16 %v899
        %v2598 = vunpack.c.h.b16 %v899
        %v2599 = vunpack.c.l.b16 %v900
        %v2600 = vunpack.c.h.b16 %v900
        %v2601 = vunpack.c.l.b16 %v901
        %v2602 = vunpack.c.h.b16 %v901
        %v2603 = vunpack.c.l.b16 %v902
        %v2604 = vunpack.c.h.b16 %v902
        %v2605 = vunpack.c.l.b16 %v903
        %v2606 = vunpack.c.h.b16 %v903
        %v2607 = vunpack.c.l.b16 %v904
        %v2608 = vunpack.c.h.b16 %v904
        %v2609 = vunpack.c.l.b16 %v905
        %v2610 = vunpack.c.h.b16 %v905
        %v2611 = vunpack.c.l.b16 %v906
        %v2612 = vunpack.c.h.b16 %v906
        %v2613 = vunpack.c.l.b16 %v907
        %v2614 = vunpack.c.h.b16 %v907
        %v2615 = vunpack.c.l.b16 %v908
        %v2616 = vunpack.c.h.b16 %v908
        %v2617 = vunpack.c.l.b16 %v909
        %v2618 = vunpack.c.h.b16 %v909
        %v2619 = vunpack.c.l.b16 %v910
        %v2620 = vunpack.c.h.b16 %v910
        %v2621 = vpack.c.b16 %v1709, %v1481
        %v2622 = vpack.c.b16 %v1710, %v1482
        %v2623 = vpack.c.b16 %v1711, %v1483
        %v2624 = vpack.c.b16 %v1712, %v1484
        %v2625 = vpack.c.b16 %v1713, %v1485
        %v2626 = vpack.c.b16 %v1714, %v1486
        %v2627 = vpack.c.b16 %v1715, %v1487
        %v2628 = vpack.c.b16 %v1716, %v1488
        %v2629 = vpack.c.b16 %v1717, %v1489
        %v2630 = vpack.c.b16 %v1718, %v1490
        %v2631 = vpack.c.b16 %v1719, %v1491
        %v2632 = vpack.c.b16 %v1720, %v1492
        %v2633 = vpack.c.b16 %v1721, %v1493
        %v2634 = vpack.c.b16 %v1722, %v1494
        %v2635 = vpack.c.b16 %v1723, %v1495
        %v2636 = vpack.c.b16 %v1724, %v1496
        %v2637 = vpack.c.b16 %v1725, %v1497
        %v2638 = vpack.c.b16 %v1726, %v1498
        %v2639 = vpack.c.b16 %v1727, %v1499
        %v2640 = vpack.c.b16 %v1728, %v1500
        %v2641 = vpack.c.b16 %v1729, %v1501
        %v2642 = vpack.c.b16 %v1730, %v1502
        %v2643 = vpack.c.b16 %v1731, %v1503
        %v2644 = vpack.c.b16 %v1732, %v1504
        %v2645 = vpack.c.b16 %v1733, %v1505
        %v2646 = vpack.c.b16 %v1734, %v1506
        %v2647 = vpack.c.b16 %v1735, %v1507
        %v2648 = vpack.c.b16 %v1736, %v1508
        %v2649 = vpack.c.b16 %v1737, %v1509
        %v2650 = vpack.c.b16 %v1738, %v1510
        %v2651 = vpack.c.b16 %v1739, %v1511
        %v2652 = vpack.c.b16 %v1740, %v1512
        %v2653 = vpack.c.b16 %v1741, %v1513
        %v2654 = vpack.c.b16 %v1742, %v1514
        %v2655 = vpack.c.b16 %v1743, %v1515
        %v2656 = vpack.c.b16 %v1744, %v1516
        %v2657 = vpack.c.b16 %v1745, %v1517
        %v2658 = vpack.c.b16 %v1746, %v1518
        %v2659 = vpack.c.b16 %v1747, %v1519
        %v2660 = vpack.c.b16 %v1748, %v1520
        %v2661 = vpack.c.b16 %v1749, %v1521
        %v2662 = vpack.c.b16 %v1750, %v1522
        %v2663 = vpack.c.b16 %v1751, %v1523
        %v2664 = vpack.c.b16 %v1752, %v1524
        %v2665 = vpack.c.b16 %v1753, %v1525
        %v2666 = vpack.c.b16 %v1754, %v1526
        %v2667 = vpack.c.b16 %v1755, %v1527
        %v2668 = vpack.c.b16 %v1756, %v1528
        %v2669 = vpack.c.b16 %v1757, %v1529
        %v2670 = vpack.c.b16 %v1758, %v1530
        %v2671 = vpack.c.b16 %v1759, %v1531
        %v2672 = vpack.c.b16 %v1760, %v1532
        %v2673 = vpack.c.b16 %v1761, %v1533
        %v2674 = vpack.c.b16 %v1762, %v1534
        %v2675 = vpack.c.b16 %v1763, %v1535
        %v2676 = vpack.c.b16 %v1764, %v1536
        %v2677 = vpack.c.b16 %v1765, %v1537
        %v2678 = vpack.c.b16 %v1766, %v1538
        %v2679 = vpack.c.b16 %v1767, %v1539
        %v2680 = vpack.c.b16 %v1768, %v1540
        %v2681 = vpack.c.b16 %v1769, %v1541
        %v2682 = vpack.c.b16 %v1770, %v1542
        %v2683 = vpack.c.b16 %v1771, %v1543
        %v2684 = vpack.c.b16 %v1772, %v1544
        %v2685 = vpack.c.b16 %v1773, %v1545
        %v2686 = vpack.c.b16 %v1774, %v1546
        %v2687 = vpack.c.b16 %v1775, %v1547
        %v2688 = vpack.c.b16 %v1776, %v1548
        %v2689 = vpack.c.b16 %v1777, %v1549
        %v2690 = vpack.c.b16 %v1778, %v1550
        %v2691 = vpack.c.b16 %v1779, %v1551
        %v2692 = vpack.c.b16 %v1780, %v1552
        %v2693 = vpack.c.b16 %v1781, %v1553
        %v2694 = vpack.c.b16 %v1782, %v1554
        %v2695 = vpack.c.b16 %v1783, %v1555
        %v2696 = vpack.c.b16 %v1784, %v1556
        %v2697 = vpack.c.b16 %v1785, %v1557
        %v2698 = vpack.c.b16 %v1786, %v1558
        %v2699 = vpack.c.b16 %v1787, %v1559
        %v2700 = vpack.c.b16 %v1788, %v1560
        %v2701 = vpack.c.b16 %v1789, %v1561
        %v2702 = vpack.c.b16 %v1790, %v1562
        %v2703 = vpack.c.b16 %v1791, %v1563
        %v2704 = vpack.c.b16 %v1792, %v1564
        %v2705 = vpack.c.b16 %v1793, %v1565
        %v2706 = vpack.c.b16 %v1794, %v1566
        %v2707 = vpack.c.b16 %v1795, %v1567
        %v2708 = vpack.c.b16 %v1796, %v1568
        %v2709 = vpack.c.b16 %v1797, %v1569
        %v2710 = vpack.c.b16 %v1798, %v1570
        %v2711 = vpack.c.b16 %v1799, %v1571
        %v2712 = vpack.c.b16 %v1800, %v1572
        %v2713 = vpack.c.b16 %v1801, %v1573
        %v2714 = vpack.c.b16 %v1802, %v1574
        %v2715 = vpack.c.b16 %v1803, %v1575
        %v2716 = vpack.c.b16 %v1804, %v1576
        %v2717 = vpack.c.b16 %v1805, %v1577
        %v2718 = vpack.c.b16 %v1806, %v1578
        %v2719 = vpack.c.b16 %v1807, %v1579
        %v2720 = vpack.c.b16 %v1808, %v1580
        %v2721 = vpack.c.b16 %v1809, %v1581
        %v2722 = vpack.c.b16 %v1810, %v1582
        %v2723 = vpack.c.b16 %v1811, %v1583
        %v2724 = vpack.c.b16 %v1812, %v1584
        %v2725 = vpack.c.b16 %v1813, %v1585
        %v2726 = vpack.c.b16 %v1814, %v1586
        %v2727 = vpack.c.b16 %v1815, %v1587
        %v2728 = vpack.c.b16 %v1816, %v1588
        %v2729 = vpack.c.b16 %v1817, %v1589
        %v2730 = vpack.c.b16 %v1818, %v1590
        %v2731 = vpack.c.b16 %v1819, %v1591
        %v2732 = vpack.c.b16 %v1820, %v1592
        %v2733 = vpack.c.b16 %v1821, %v1593
        %v2734 = vpack.c.b16 %v1822, %v1594
        %v2735 = vpack.c.b16 %v1823, %v1595
        %v2736 = vpack.c.b16 %v1824, %v1596
        %v2737 = vpack.c.b16 %v1825, %v1597
        %v2738 = vpack.c.b16 %v1826, %v1598
        %v2739 = vpack.c.b16 %v1827, %v1599
        %v2740 = vpack.c.b16 %v1828, %v1600
        %v2741 = vpack.c.b16 %v1829, %v1601
        %v2742 = vpack.c.b16 %v1830, %v1602
        %v2743 = vpack.c.b16 %v1831, %v1603
        %v2744 = vpack.c.b16 %v1832, %v1604
        %v2745 = vpack.c.b16 %v1833, %v1605
        %v2746 = vpack.c.b16 %v1834, %v1606
        %v2747 = vpack.c.b16 %v1835, %v1607
        %v2748 = vpack.c.b16 %v1836, %v1608
        %v2749 = vpack.c.b16 %v1837, %v1609
        %v2750 = vpack.c.b16 %v1838, %v1610
        %v2751 = vpack.c.b16 %v1839, %v1611
        %v2752 = vpack.c.b16 %v1840, %v1612
        %v2753 = vpack.c.b16 %v1841, %v1613
        %v2754 = vpack.c.b16 %v1842, %v1614
        %v2755 = vpack.c.b16 %v1843, %v1615
        %v2756 = vpack.c.b16 %v1844, %v1616
        %v2757 = vpack.c.b16 %v1845, %v1617
        %v2758 = vpack.c.b16 %v1846, %v1618
        %v2759 = vpack.c.b16 %v1847, %v1619
        %v2760 = vpack.c.b16 %v1848, %v1620
        %v2761 = vpack.c.b16 %v1849, %v1621
        %v2762 = vpack.c.b16 %v1850, %v1622
        %v2763 = vpack.c.b16 %v1851, %v1623
        %v2764 = vpack.c.b16 %v1852, %v1624
        %v2765 = vpack.c.b16 %v1853, %v1625
        %v2766 = vpack.c.b16 %v1854, %v1626
        %v2767 = vpack.c.b16 %v1855, %v1627
        %v2768 = vpack.c.b16 %v1856, %v1628
        %v2769 = vpack.c.b16 %v1857, %v1629
        %v2770 = vpack.c.b16 %v1858, %v1630
        %v2771 = vpack.c.b16 %v1859, %v1631
        %v2772 = vpack.c.b16 %v1860, %v1632
        %v2773 = vpack.c.b16 %v1861, %v1633
        %v2774 = vpack.c.b16 %v1862, %v1634
        %v2775 = vpack.c.b16 %v1863, %v1635
        %v2776 = vpack.c.b16 %v1864, %v1636
        %v2777 = vpack.c.b16 %v1865, %v1637
        %v2778 = vpack.c.b16 %v1866, %v1638
        %v2779 = vpack.c.b16 %v1867, %v1639
        %v2780 = vpack.c.b16 %v1868, %v1640
        %v2781 = vpack.c.b16 %v1869, %v1641
        %v2782 = vpack.c.b16 %v1870, %v1642
        %v2783 = vpack.c.b16 %v1871, %v1643
        %v2784 = vpack.c.b16 %v1872, %v1644
        %v2785 = vpack.c.b16 %v1873, %v1645
        %v2786 = vpack.c.b16 %v1874, %v1646
        %v2787 = vpack.c.b16 %v1875, %v1647
        %v2788 = vpack.c.b16 %v1876, %v1648
        %v2789 = vpack.c.b16 %v1877, %v1649
        %v2790 = vpack.c.b16 %v1878, %v1650
        %v2791 = vpack.c.b16 %v1879, %v1651
        %v2792 = vpack.c.b16 %v1880, %v1652
        %v2793 = vpack.c.b16 %v1881, %v1653
        %v2794 = vpack.c.b16 %v1882, %v1654
        %v2795 = vpack.c.b16 %v1883, %v1655
        %v2796 = vpack.c.b16 %v1884, %v1656
        %v2797 = vpack.c.b16 %v1885, %v1657
        %v2798 = vpack.c.b16 %v1886, %v1658
        %v2799 = vpack.c.b16 %v1887, %v1659
        %v2800 = vpack.c.b16 %v1888, %v1660
        %v2801 = vpack.c.b16 %v1889, %v1661
        %v2802 = vpack.c.b16 %v1890, %v1662
        %v2803 = vpack.c.b16 %v1891, %v1663
        %v2804 = vpack.c.b16 %v1892, %v1664
        %v2805 = vpack.c.b16 %v1893, %v1665
        %v2806 = vpack.c.b16 %v1894, %v1666
        %v2807 = vpack.c.b16 %v1895, %v1667
        %v2808 = vpack.c.b16 %v1896, %v1668
        %v2809 = vpack.c.b16 %v1897, %v1669
        %v2810 = vpack.c.b16 %v1898, %v1670
        %v2811 = vpack.c.b16 %v1899, %v1671
        %v2812 = vpack.c.b16 %v1900, %v1672
        %v2813 = vpack.c.b16 %v1901, %v1673
        %v2814 = vpack.c.b16 %v1902, %v1674
        %v2815 = vpack.c.b16 %v1903, %v1675
        %v2816 = vpack.c.b16 %v1904, %v1676
        %v2817 = vpack.c.b16 %v1905, %v1677
        %v2818 = vpack.c.b16 %v1906, %v1678
        %v2819 = vpack.c.b16 %v1907, %v1679
        %v2820 = vpack.c.b16 %v1908, %v1680
        %v2821 = vpack.c.b16 %v1909, %v1681
        %v2822 = vpack.c.b16 %v1910, %v1682
        %v2823 = vpack.c.b16 %v1911, %v1683
        %v2824 = vpack.c.b16 %v1912, %v1684
        %v2825 = vpack.c.b16 %v1913, %v1685
        %v2826 = vpack.c.b16 %v1914, %v1686
        %v2827 = vpack.c.b16 %v1915, %v1687
        %v2828 = vpack.c.b16 %v1916, %v1688
        %v2829 = vpack.c.b16 %v1917, %v1689
        %v2830 = vpack.c.b16 %v1918, %v1690
        %v2831 = vpack.c.b16 %v1919, %v1691
        %v2832 = vpack.c.b16 %v1920, %v1692
        %v2833 = vpack.c.b16 %v1921, %v1693
        %v2834 = vpack.c.b16 %v1922, %v1694
        %v2835 = vpack.c.b16 %v1923, %v1695
        %v2836 = vpack.c.b16 %v1924, %v1696
        %v2837 = vpack.c.b16 %v1925, %v1697
        %v2838 = vpack.c.b16 %v1926, %v1698
        %v2839 = vpack.c.b16 %v1927, %v1699
        %v2840 = vpack.c.b16 %v1928, %v1700
        %v2841 = vpack.c.b16 %v1929, %v1701
        %v2842 = vpack.c.b16 %v1930, %v1702
        %v2843 = vpack.c.b16 %v1931, %v1703
        %v2844 = vpack.c.b16 %v1932, %v1704
        %v2845 = vpack.c.b16 %v1933, %v1705
        %v2846 = vpack.c.b16 %v1934, %v1706
        %v2847 = vpack.c.b16 %v1935, %v1707
        %v2848 = vpack.c.b16 %v1936, %v1708
        %v2849 = vpack.c.b16 %v2165, %v1937
        %v2850 = vpack.c.b16 %v2166, %v1938
        %v2851 = vpack.c.b16 %v2167, %v1939
        %v2852 = vpack.c.b16 %v2168, %v1940
        %v2853 = vpack.c.b16 %v2169, %v1941
        %v2854 = vpack.c.b16 %v2170, %v1942
        %v2855 = vpack.c.b16 %v2171, %v1943
        %v2856 = vpack.c.b16 %v2172, %v1944
        %v2857 = vpack.c.b16 %v2173, %v1945
        %v2858 = vpack.c.b16 %v2174, %v1946
        %v2859 = vpack.c.b16 %v2175, %v1947
        %v2860 = vpack.c.b16 %v2176, %v1948
        %v2861 = vpack.c.b16 %v2177, %v1949
        %v2862 = vpack.c.b16 %v2178, %v1950
        %v2863 = vpack.c.b16 %v2179, %v1951
        %v2864 = vpack.c.b16 %v2180, %v1952
        %v2865 = vpack.c.b16 %v2181, %v1953
        %v2866 = vpack.c.b16 %v2182, %v1954
        %v2867 = vpack.c.b16 %v2183, %v1955
        %v2868 = vpack.c.b16 %v2184, %v1956
        %v2869 = vpack.c.b16 %v2185, %v1957
        %v2870 = vpack.c.b16 %v2186, %v1958
        %v2871 = vpack.c.b16 %v2187, %v1959
        %v2872 = vpack.c.b16 %v2188, %v1960
        %v2873 = vpack.c.b16 %v2189, %v1961
        %v2874 = vpack.c.b16 %v2190, %v1962
        %v2875 = vpack.c.b16 %v2191, %v1963
        %v2876 = vpack.c.b16 %v2192, %v1964
        %v2877 = vpack.c.b16 %v2193, %v1965
        %v2878 = vpack.c.b16 %v2194, %v1966
        %v2879 = vpack.c.b16 %v2195, %v1967
        %v2880 = vpack.c.b16 %v2196, %v1968
        %v2881 = vpack.c.b16 %v2197, %v1969
        %v2882 = vpack.c.b16 %v2198, %v1970
        %v2883 = vpack.c.b16 %v2199, %v1971
        %v2884 = vpack.c.b16 %v2200, %v1972
        %v2885 = vpack.c.b16 %v2201, %v1973
        %v2886 = vpack.c.b16 %v2202, %v1974
        %v2887 = vpack.c.b16 %v2203, %v1975
        %v2888 = vpack.c.b16 %v2204, %v1976
        %v2889 = vpack.c.b16 %v2205, %v1977
        %v2890 = vpack.c.b16 %v2206, %v1978
        %v2891 = vpack.c.b16 %v2207, %v1979
        %v2892 = vpack.c.b16 %v2208, %v1980
        %v2893 = vpack.c.b16 %v2209, %v1981
        %v2894 = vpack.c.b16 %v2210, %v1982
        %v2895 = vpack.c.b16 %v2211, %v1983
        %v2896 = vpack.c.b16 %v2212, %v1984
        %v2897 = vpack.c.b16 %v2213, %v1985
        %v2898 = vpack.c.b16 %v2214, %v1986
        %v2899 = vpack.c.b16 %v2215, %v1987
        %v2900 = vpack.c.b16 %v2216, %v1988
        %v2901 = vpack.c.b16 %v2217, %v1989
        %v2902 = vpack.c.b16 %v2218, %v1990
        %v2903 = vpack.c.b16 %v2219, %v1991
        %v2904 = vpack.c.b16 %v2220, %v1992
        %v2905 = vpack.c.b16 %v2221, %v1993
        %v2906 = vpack.c.b16 %v2222, %v1994
        %v2907 = vpack.c.b16 %v2223, %v1995
        %v2908 = vpack.c.b16 %v2224, %v1996
        %v2909 = vpack.c.b16 %v2225, %v1997
        %v2910 = vpack.c.b16 %v2226, %v1998
        %v2911 = vpack.c.b16 %v2227, %v1999
        %v2912 = vpack.c.b16 %v2228, %v2000
        %v2913 = vpack.c.b16 %v2229, %v2001
        %v2914 = vpack.c.b16 %v2230, %v2002
        %v2915 = vpack.c.b16 %v2231, %v2003
        %v2916 = vpack.c.b16 %v2232, %v2004
        %v2917 = vpack.c.b16 %v2233, %v2005
        %v2918 = vpack.c.b16 %v2234, %v2006
        %v2919 = vpack.c.b16 %v2235, %v2007
        %v2920 = vpack.c.b16 %v2236, %v2008
        %v2921 = vpack.c.b16 %v2237, %v2009
        %v2922 = vpack.c.b16 %v2238, %v2010
        %v2923 = vpack.c.b16 %v2239, %v2011
        %v2924 = vpack.c.b16 %v2240, %v2012
        %v2925 = vpack.c.b16 %v2241, %v2013
        %v2926 = vpack.c.b16 %v2242, %v2014
        %v2927 = vpack.c.b16 %v2243, %v2015
        %v2928 = vpack.c.b16 %v2244, %v2016
        %v2929 = vpack.c.b16 %v2245, %v2017
        %v2930 = vpack.c.b16 %v2246, %v2018
        %v2931 = vpack.c.b16 %v2247, %v2019
        %v2932 = vpack.c.b16 %v2248, %v2020
        %v2933 = vpack.c.b16 %v2249, %v2021
        %v2934 = vpack.c.b16 %v2250, %v2022
        %v2935 = vpack.c.b16 %v2251, %v2023
        %v2936 = vpack.c.b16 %v2252, %v2024
        %v2937 = vpack.c.b16 %v2253, %v2025
        %v2938 = vpack.c.b16 %v2254, %v2026
        %v2939 = vpack.c.b16 %v2255, %v2027
        %v2940 = vpack.c.b16 %v2256, %v2028
        %v2941 = vpack.c.b16 %v2257, %v2029
        %v2942 = vpack.c.b16 %v2258, %v2030
        %v2943 = vpack.c.b16 %v2259, %v2031
        %v2944 = vpack.c.b16 %v2260, %v2032
        %v2945 = vpack.c.b16 %v2261, %v2033
        %v2946 = vpack.c.b16 %v2262, %v2034
        %v2947 = vpack.c.b16 %v2263, %v2035
        %v2948 = vpack.c.b16 %v2264, %v2036
        %v2949 = vpack.c.b16 %v2265, %v2037
        %v2950 = vpack.c.b16 %v2266, %v2038
        %v2951 = vpack.c.b16 %v2267, %v2039
        %v2952 = vpack.c.b16 %v2268, %v2040
        %v2953 = vpack.c.b16 %v2269, %v2041
        %v2954 = vpack.c.b16 %v2270, %v2042
        %v2955 = vpack.c.b16 %v2271, %v2043
        %v2956 = vpack.c.b16 %v2272, %v2044
        %v2957 = vpack.c.b16 %v2273, %v2045
        %v2958 = vpack.c.b16 %v2274, %v2046
        %v2959 = vpack.c.b16 %v2275, %v2047
        %v2960 = vpack.c.b16 %v2276, %v2048
        %v2961 = vpack.c.b16 %v2277, %v2049
        %v2962 = vpack.c.b16 %v2278, %v2050
        %v2963 = vpack.c.b16 %v2279, %v2051
        %v2964 = vpack.c.b16 %v2280, %v2052
        %v2965 = vpack.c.b16 %v2281, %v2053
        %v2966 = vpack.c.b16 %v2282, %v2054
        %v2967 = vpack.c.b16 %v2283, %v2055
        %v2968 = vpack.c.b16 %v2284, %v2056
        %v2969 = vpack.c.b16 %v2285, %v2057
        %v2970 = vpack.c.b16 %v2286, %v2058
        %v2971 = vpack.c.b16 %v2287, %v2059
        %v2972 = vpack.c.b16 %v2288, %v2060
        %v2973 = vpack.c.b16 %v2289, %v2061
        %v2974 = vpack.c.b16 %v2290, %v2062
        %v2975 = vpack.c.b16 %v2291, %v2063
        %v2976 = vpack.c.b16 %v2292, %v2064
        %v2977 = vpack.c.b16 %v2293, %v2065
        %v2978 = vpack.c.b16 %v2294, %v2066
        %v2979 = vpack.c.b16 %v2295, %v2067
        %v2980 = vpack.c.b16 %v2296, %v2068
        %v2981 = vpack.c.b16 %v2297, %v2069
        %v2982 = vpack.c.b16 %v2298, %v2070
        %v2983 = vpack.c.b16 %v2299, %v2071
        %v2984 = vpack.c.b16 %v2300, %v2072
        %v2985 = vpack.c.b16 %v2301, %v2073
        %v2986 = vpack.c.b16 %v2302, %v2074
        %v2987 = vpack.c.b16 %v2303, %v2075
        %v2988 = vpack.c.b16 %v2304, %v2076
        %v2989 = vpack.c.b16 %v2305, %v2077
        %v2990 = vpack.c.b16 %v2306, %v2078
        %v2991 = vpack.c.b16 %v2307, %v2079
        %v2992 = vpack.c.b16 %v2308, %v2080
        %v2993 = vpack.c.b16 %v2309, %v2081
        %v2994 = vpack.c.b16 %v2310, %v2082
        %v2995 = vpack.c.b16 %v2311, %v2083
        %v2996 = vpack.c.b16 %v2312, %v2084
        %v2997 = vpack.c.b16 %v2313, %v2085
        %v2998 = vpack.c.b16 %v2314, %v2086
        %v2999 = vpack.c.b16 %v2315, %v2087
        %v3000 = vpack.c.b16 %v2316, %v2088
        %v3001 = vpack.c.b16 %v2317, %v2089
        %v3002 = vpack.c.b16 %v2318, %v2090
        %v3003 = vpack.c.b16 %v2319, %v2091
        %v3004 = vpack.c.b16 %v2320, %v2092
        %v3005 = vpack.c.b16 %v2321, %v2093
        %v3006 = vpack.c.b16 %v2322, %v2094
        %v3007 = vpack.c.b16 %v2323, %v2095
        %v3008 = vpack.c.b16 %v2324, %v2096
        %v3009 = vpack.c.b16 %v2325, %v2097
        %v3010 = vpack.c.b16 %v2326, %v2098
        %v3011 = vpack.c.b16 %v2327, %v2099
        %v3012 = vpack.c.b16 %v2328, %v2100
        %v3013 = vpack.c.b16 %v2329, %v2101
        %v3014 = vpack.c.b16 %v2330, %v2102
        %v3015 = vpack.c.b16 %v2331, %v2103
        %v3016 = vpack.c.b16 %v2332, %v2104
        %v3017 = vpack.c.b16 %v2333, %v2105
        %v3018 = vpack.c.b16 %v2334, %v2106
        %v3019 = vpack.c.b16 %v2335, %v2107
        %v3020 = vpack.c.b16 %v2336, %v2108
        %v3021 = vpack.c.b16 %v2337, %v2109
        %v3022 = vpack.c.b16 %v2338, %v2110
        %v3023 = vpack.c.b16 %v2339, %v2111
        %v3024 = vpack.c.b16 %v2340, %v2112
        %v3025 = vpack.c.b16 %v2341, %v2113
        %v3026 = vpack.c.b16 %v2342, %v2114
        %v3027 = vpack.c.b16 %v2343, %v2115
        %v3028 = vpack.c.b16 %v2344, %v2116
        %v3029 = vpack.c.b16 %v2345, %v2117
        %v3030 = vpack.c.b16 %v2346, %v2118
        %v3031 = vpack.c.b16 %v2347, %v2119
        %v3032 = vpack.c.b16 %v2348, %v2120
        %v3033 = vpack.c.b16 %v2349, %v2121
        %v3034 = vpack.c.b16 %v2350, %v2122
        %v3035 = vpack.c.b16 %v2351, %v2123
        %v3036 = vpack.c.b16 %v2352, %v2124
        %v3037 = vpack.c.b16 %v2353, %v2125
        %v3038 = vpack.c.b16 %v2354, %v2126
        %v3039 = vpack.c.b16 %v2355, %v2127
        %v3040 = vpack.c.b16 %v2356, %v2128
        %v3041 = vpack.c.b16 %v2357, %v2129
        %v3042 = vpack.c.b16 %v2358, %v2130
        %v3043 = vpack.c.b16 %v2359, %v2131
        %v3044 = vpack.c.b16 %v2360, %v2132
        %v3045 = vpack.c.b16 %v2361, %v2133
        %v3046 = vpack.c.b16 %v2362, %v2134
        %v3047 = vpack.c.b16 %v2363, %v2135
        %v3048 = vpack.c.b16 %v2364, %v2136
        %v3049 = vpack.c.b16 %v2365, %v2137
        %v3050 = vpack.c.b16 %v2366, %v2138
        %v3051 = vpack.c.b16 %v2367, %v2139
        %v3052 = vpack.c.b16 %v2368, %v2140
        %v3053 = vpack.c.b16 %v2369, %v2141
        %v3054 = vpack.c.b16 %v2370, %v2142
        %v3055 = vpack.c.b16 %v2371, %v2143
        %v3056 = vpack.c.b16 %v2372, %v2144
        %v3057 = vpack.c.b16 %v2373, %v2145
        %v3058 = vpack.c.b16 %v2374, %v2146
        %v3059 = vpack.c.b16 %v2375, %v2147
        %v3060 = vpack.c.b16 %v2376, %v2148
        %v3061 = vpack.c.b16 %v2377, %v2149
        %v3062 = vpack.c.b16 %v2378, %v2150
        %v3063 = vpack.c.b16 %v2379, %v2151
        %v3064 = vpack.c.b16 %v2380, %v2152
        %v3065 = vpack.c.b16 %v2381, %v2153
        %v3066 = vpack.c.b16 %v2382, %v2154
        %v3067 = vpack.c.b16 %v2383, %v2155
        %v3068 = vpack.c.b16 %v2384, %v2156
        %v3069 = vpack.c.b16 %v2385, %v2157
        %v3070 = vpack.c.b16 %v2386, %v2158
        %v3071 = vpack.c.b16 %v2387, %v2159
        %v3072 = vpack.c.b16 %v2388, %v2160
        %v3073 = vpack.c.b16 %v2389, %v2161
        %v3074 = vpack.c.b16 %v2390, %v2162
        %v3075 = vpack.c.b16 %v2391, %v2163
        %v3076 = vpack.c.b16 %v2392, %v2164
        %v3077 = vpack.c.b16 %v2393, %v2393
        %v3078 = vpack.c.b16 %v2394, %v2394
        %v3079 = vpack.c.b16 %v2395, %v2395
        %v3080 = vpack.c.b16 %v2396, %v2396
        %v3081 = vpack.c.b16 %v2397, %v2397
        %v3082 = vpack.c.b16 %v2398, %v2398
        %v3083 = vpack.c.b16 %v2399, %v2399
        %v3084 = vpack.c.b16 %v2400, %v2400
        %v3085 = vpack.c.b16 %v2401, %v2401
        %v3086 = vpack.c.b16 %v2402, %v2402
        %v3087 = vpack.c.b16 %v2403, %v2403
        %v3088 = vpack.c.b16 %v2404, %v2404
        %v3089 = vpack.c.b16 %v2405, %v2405
        %v3090 = vpack.c.b16 %v2406, %v2406
        %v3091 = vpack.c.b16 %v2407, %v2407
        %v3092 = vpack.c.b16 %v2408, %v2408
        %v3093 = vpack.c.b16 %v2409, %v2409
        %v3094 = vpack.c.b16 %v2410, %v2410
        %v3095 = vpack.c.b16 %v2411, %v2411
        %v3096 = vpack.c.b16 %v2412, %v2412
        %v3097 = vpack.c.b16 %v2413, %v2413
        %v3098 = vpack.c.b16 %v2414, %v2414
        %v3099 = vpack.c.b16 %v2415, %v2415
        %v3100 = vpack.c.b16 %v2416, %v2416
        %v3101 = vpack.c.b16 %v2417, %v2417
        %v3102 = vpack.c.b16 %v2418, %v2418
        %v3103 = vpack.c.b16 %v2419, %v2419
        %v3104 = vpack.c.b16 %v2420, %v2420
        %v3105 = vpack.c.b16 %v2421, %v2421
        %v3106 = vpack.c.b16 %v2422, %v2422
        %v3107 = vpack.c.b16 %v2423, %v2423
        %v3108 = vpack.c.b16 %v2424, %v2424
        %v3109 = vpack.c.b16 %v2425, %v2425
        %v3110 = vpack.c.b16 %v2426, %v2426
        %v3111 = vpack.c.b16 %v2427, %v2427
        %v3112 = vpack.c.b16 %v2428, %v2428
        %v3113 = vpack.c.b16 %v2429, %v2429
        %v3114 = vpack.c.b16 %v2430, %v2430
        %v3115 = vpack.c.b16 %v2431, %v2431
        %v3116 = vpack.c.b16 %v2432, %v2432
        %v3117 = vpack.c.b16 %v2433, %v2433
        %v3118 = vpack.c.b16 %v2434, %v2434
        %v3119 = vpack.c.b16 %v2435, %v2435
        %v3120 = vpack.c.b16 %v2436, %v2436
        %v3121 = vpack.c.b16 %v2437, %v2437
        %v3122 = vpack.c.b16 %v2438, %v2438
        %v3123 = vpack.c.b16 %v2439, %v2439
        %v3124 = vpack.c.b16 %v2440, %v2440
        %v3125 = vpack.c.b16 %v2441, %v2441
        %v3126 = vpack.c.b16 %v2442, %v2442
        %v3127 = vpack.c.b16 %v2443, %v2443
        %v3128 = vpack.c.b16 %v2444, %v2444
        %v3129 = vpack.c.b16 %v2445, %v2445
        %v3130 = vpack.c.b16 %v2446, %v2446
        %v3131 = vpack.c.b16 %v2447, %v2447
        %v3132 = vpack.c.b16 %v2448, %v2448
        %v3133 = vpack.c.b16 %v2449, %v2449
        %v3134 = vpack.c.b16 %v2450, %v2450
        %v3135 = vpack.c.b16 %v2451, %v2451
        %v3136 = vpack.c.b16 %v2452, %v2452
        %v3137 = vpack.c.b16 %v2453, %v2453
        %v3138 = vpack.c.b16 %v2454, %v2454
        %v3139 = vpack.c.b16 %v2455, %v2455
        %v3140 = vpack.c.b16 %v2456, %v2456
        %v3141 = vpack.c.b16 %v2457, %v2457
        %v3142 = vpack.c.b16 %v2458, %v2458
        %v3143 = vpack.c.b16 %v2459, %v2459
        %v3144 = vpack.c.b16 %v2460, %v2460
        %v3145 = vpack.c.b16 %v2461, %v2461
        %v3146 = vpack.c.b16 %v2462, %v2462
        %v3147 = vpack.c.b16 %v2463, %v2463
        %v3148 = vpack.c.b16 %v2464, %v2464
        %v3149 = vpack.c.b16 %v2465, %v2465
        %v3150 = vpack.c.b16 %v2466, %v2466
        %v3151 = vpack.c.b16 %v2467, %v2467
        %v3152 = vpack.c.b16 %v2468, %v2468
        %v3153 = vpack.c.b16 %v2469, %v2469
        %v3154 = vpack.c.b16 %v2470, %v2470
        %v3155 = vpack.c.b16 %v2471, %v2471
        %v3156 = vpack.c.b16 %v2472, %v2472
        %v3157 = vpack.c.b16 %v2473, %v2473
        %v3158 = vpack.c.b16 %v2474, %v2474
        %v3159 = vpack.c.b16 %v2475, %v2475
        %v3160 = vpack.c.b16 %v2476, %v2476
        %v3161 = vpack.c.b16 %v2477, %v2477
        %v3162 = vpack.c.b16 %v2478, %v2478
        %v3163 = vpack.c.b16 %v2479, %v2479
        %v3164 = vpack.c.b16 %v2480, %v2480
        %v3165 = vpack.c.b16 %v2481, %v2481
        %v3166 = vpack.c.b16 %v2482, %v2482
        %v3167 = vpack.c.b16 %v2483, %v2483
        %v3168 = vpack.c.b16 %v2484, %v2484
        %v3169 = vpack.c.b16 %v2485, %v2485
        %v3170 = vpack.c.b16 %v2486, %v2486
        %v3171 = vpack.c.b16 %v2487, %v2487
        %v3172 = vpack.c.b16 %v2488, %v2488
        %v3173 = vpack.c.b16 %v2489, %v2489
        %v3174 = vpack.c.b16 %v2490, %v2490
        %v3175 = vpack.c.b16 %v2491, %v2491
        %v3176 = vpack.c.b16 %v2492, %v2492
        %v3177 = vpack.c.b16 %v2493, %v2493
        %v3178 = vpack.c.b16 %v2494, %v2494
        %v3179 = vpack.c.b16 %v2495, %v2495
        %v3180 = vpack.c.b16 %v2496, %v2496
        %v3181 = vpack.c.b16 %v2497, %v2497
        %v3182 = vpack.c.b16 %v2498, %v2498
        %v3183 = vpack.c.b16 %v2499, %v2499
        %v3184 = vpack.c.b16 %v2500, %v2500
        %v3185 = vpack.c.b16 %v2501, %v2501
        %v3186 = vpack.c.b16 %v2502, %v2502
        %v3187 = vpack.c.b16 %v2503, %v2503
        %v3188 = vpack.c.b16 %v2504, %v2504
        %v3189 = vpack.c.b16 %v2505, %v2505
        %v3190 = vpack.c.b16 %v2506, %v2506
        %v3191 = vpack.c.b16 %v2507, %v2507
        %v3192 = vpack.c.b16 %v2508, %v2508
        %v3193 = vpack.c.b16 %v2509, %v2509
        %v3194 = vpack.c.b16 %v2510, %v2510
        %v3195 = vpack.c.b16 %v2511, %v2511
        %v3196 = vpack.c.b16 %v2512, %v2512
        %v3197 = vpack.c.b16 %v2513, %v2513
        %v3198 = vpack.c.b16 %v2514, %v2514
        %v3199 = vpack.c.b16 %v2515, %v2515
        %v3200 = vpack.c.b16 %v2516, %v2516
        %v3201 = vpack.c.b16 %v2517, %v2517
        %v3202 = vpack.c.b16 %v2518, %v2518
        %v3203 = vpack.c.b16 %v2519, %v2519
        %v3204 = vpack.c.b16 %v2520, %v2520
        %v3205 = vpack.c.b16 %v2521, %v2521
        %v3206 = vpack.c.b16 %v2522, %v2522
        %v3207 = vpack.c.b16 %v2523, %v2523
        %v3208 = vpack.c.b16 %v2524, %v2524
        %v3209 = vpack.c.b16 %v2525, %v2525
        %v3210 = vpack.c.b16 %v2526, %v2526
        %v3211 = vpack.c.b16 %v2527, %v2527
        %v3212 = vpack.c.b16 %v2528, %v2528
        %v3213 = vpack.c.b16 %v2529, %v2529
        %v3214 = vpack.c.b16 %v2530, %v2530
        %v3215 = vpack.c.b16 %v2531, %v2531
        %v3216 = vpack.c.b16 %v2532, %v2532
        %v3217 = vpack.c.b16 %v2533, %v2533
        %v3218 = vpack.c.b16 %v2534, %v2534
        %v3219 = vpack.c.b16 %v2535, %v2535
        %v3220 = vpack.c.b16 %v2536, %v2536
        %v3221 = vpack.c.b16 %v2537, %v2537
        %v3222 = vpack.c.b16 %v2538, %v2538
        %v3223 = vpack.c.b16 %v2539, %v2539
        %v3224 = vpack.c.b16 %v2540, %v2540
        %v3225 = vpack.c.b16 %v2541, %v2541
        %v3226 = vpack.c.b16 %v2542, %v2542
        %v3227 = vpack.c.b16 %v2543, %v2543
        %v3228 = vpack.c.b16 %v2544, %v2544
        %v3229 = vpack.c.b16 %v2545, %v2545
        %v3230 = vpack.c.b16 %v2546, %v2546
        %v3231 = vpack.c.b16 %v2547, %v2547
        %v3232 = vpack.c.b16 %v2548, %v2548
        %v3233 = vpack.c.b16 %v2549, %v2549
        %v3234 = vpack.c.b16 %v2550, %v2550
        %v3235 = vpack.c.b16 %v2551, %v2551
        %v3236 = vpack.c.b16 %v2552, %v2552
        %v3237 = vpack.c.b16 %v2553, %v2553
        %v3238 = vpack.c.b16 %v2554, %v2554
        %v3239 = vpack.c.b16 %v2555, %v2555
        %v3240 = vpack.c.b16 %v2556, %v2556
        %v3241 = vpack.c.b16 %v2557, %v2557
        %v3242 = vpack.c.b16 %v2558, %v2558
        %v3243 = vpack.c.b16 %v2559, %v2559
        %v3244 = vpack.c.b16 %v2560, %v2560
        %v3245 = vpack.c.b16 %v2561, %v2561
        %v3246 = vpack.c.b16 %v2562, %v2562
        %v3247 = vpack.c.b16 %v2563, %v2563
        %v3248 = vpack.c.b16 %v2564, %v2564
        %v3249 = vpack.c.b16 %v2565, %v2565
        %v3250 = vpack.c.b16 %v2566, %v2566
        %v3251 = vpack.c.b16 %v2567, %v2567
        %v3252 = vpack.c.b16 %v2568, %v2568
        %v3253 = vpack.c.b16 %v2569, %v2569
        %v3254 = vpack.c.b16 %v2570, %v2570
        %v3255 = vpack.c.b16 %v2571, %v2571
        %v3256 = vpack.c.b16 %v2572, %v2572
        %v3257 = vpack.c.b16 %v2573, %v2573
        %v3258 = vpack.c.b16 %v2574, %v2574
        %v3259 = vpack.c.b16 %v2575, %v2575
        %v3260 = vpack.c.b16 %v2576, %v2576
        %v3261 = vpack.c.b16 %v2577, %v2577
        %v3262 = vpack.c.b16 %v2578, %v2578
        %v3263 = vpack.c.b16 %v2579, %v2579
        %v3264 = vpack.c.b16 %v2580, %v2580
        %v3265 = vpack.c.b16 %v2581, %v2581
        %v3266 = vpack.c.b16 %v2582, %v2582
        %v3267 = vpack.c.b16 %v2583, %v2583
        %v3268 = vpack.c.b16 %v2584, %v2584
        %v3269 = vpack.c.b16 %v2585, %v2585
        %v3270 = vpack.c.b16 %v2586, %v2586
        %v3271 = vpack.c.b16 %v2587, %v2587
        %v3272 = vpack.c.b16 %v2588, %v2588
        %v3273 = vpack.c.b16 %v2589, %v2589
        %v3274 = vpack.c.b16 %v2590, %v2590
        %v3275 = vpack.c.b16 %v2591, %v2591
        %v3276 = vpack.c.b16 %v2592, %v2592
        %v3277 = vpack.c.b16 %v2593, %v2593
        %v3278 = vpack.c.b16 %v2594, %v2594
        %v3279 = vpack.c.b16 %v2595, %v2595
        %v3280 = vpack.c.b16 %v2596, %v2596
        %v3281 = vpack.c.b16 %v2597, %v2597
        %v3282 = vpack.c.b16 %v2598, %v2598
        %v3283 = vpack.c.b16 %v2599, %v2599
        %v3284 = vpack.c.b16 %v2600, %v2600
        %v3285 = vpack.c.b16 %v2601, %v2601
        %v3286 = vpack.c.b16 %v2602, %v2602
        %v3287 = vpack.c.b16 %v2603, %v2603
        %v3288 = vpack.c.b16 %v2604, %v2604
        %v3289 = vpack.c.b16 %v2605, %v2605
        %v3290 = vpack.c.b16 %v2606, %v2606
        %v3291 = vpack.c.b16 %v2607, %v2607
        %v3292 = vpack.c.b16 %v2608, %v2608
        %v3293 = vpack.c.b16 %v2609, %v2609
        %v3294 = vpack.c.b16 %v2610, %v2610
        %v3295 = vpack.c.b16 %v2611, %v2611
        %v3296 = vpack.c.b16 %v2612, %v2612
        %v3297 = vpack.c.b16 %v2613, %v2613
        %v3298 = vpack.c.b16 %v2614, %v2614
        %v3299 = vpack.c.b16 %v2615, %v2615
        %v3300 = vpack.c.b16 %v2616, %v2616
        %v3301 = vpack.c.b16 %v2617, %v2617
        %v3302 = vpack.c.b16 %v2618, %v2618
        %v3303 = vpack.c.b16 %v2619, %v2619
        %v3304 = vpack.c.b16 %v2620, %v2620
        %vm3761 = vcmask 269312
        %v3763 = vsel %vm3761, %v340, 0
        %vm3765 = vcmask 1040384
        %v3766 = vsel 0, 4294967295, 65535
        %v3767 = vsel %vm3765, %v3766, 0
        %v3769 = vand.u32 %v3077, %v3767
        %v3772 = vand.u32 %v3078, %v3767
        %v3775 = vand.u32 %v3079, %v3767
        %v3778 = vand.u32 %v3080, %v3767
        %v3781 = vand.u32 %v3081, %v3767
        %v3784 = vand.u32 %v3082, %v3767
        %v3787 = vand.u32 %v3083, %v3767
        %v3790 = vand.u32 %v3084, %v3767
        %v3793 = vand.u32 %v3085, %v3767
        %v3796 = vand.u32 %v3086, %v3767
        %v3799 = vand.u32 %v3087, %v3767
        %v3802 = vand.u32 %v3088, %v3767
        %v3805 = vand.u32 %v3089, %v3767
        %v3808 = vand.u32 %v3090, %v3767
        %v3811 = vand.u32 %v3091, %v3767
        %v3814 = vand.u32 %v3092, %v3767
        %v3817 = vand.u32 %v3093, %v3767
        %v3820 = vand.u32 %v3094, %v3767
        %v3823 = vand.u32 %v3095, %v3767
        %v3826 = vand.u32 %v3096, %v3767
        %v3829 = vand.u32 %v3097, %v3767
        %v3832 = vand.u32 %v3098, %v3767
        %v3835 = vand.u32 %v3099, %v3767
        %v3838 = vand.u32 %v3100, %v3767
        %v3841 = vand.u32 %v3101, %v3767
        %v3844 = vand.u32 %v3102, %v3767
        %v3847 = vand.u32 %v3103, %v3767
        %v3850 = vand.u32 %v3104, %v3767
        %v3853 = vand.u32 %v3105, %v3767
        %v3856 = vand.u32 %v3106, %v3767
        %v3859 = vand.u32 %v3107, %v3767
        %v3862 = vand.u32 %v3108, %v3767
        %v3865 = vand.u32 %v3109, %v3767
        %v3868 = vand.u32 %v3110, %v3767
        %v3871 = vand.u32 %v3111, %v3767
        %v3874 = vand.u32 %v3112, %v3767
        %v3877 = vand.u32 %v3113, %v3767
        %v3880 = vand.u32 %v3114, %v3767
        %v3883 = vand.u32 %v3115, %v3767
        %v3886 = vand.u32 %v3116, %v3767
        %v3889 = vand.u32 %v3117, %v3767
        %v3892 = vand.u32 %v3118, %v3767
        %v3895 = vand.u32 %v3119, %v3767
        %v3898 = vand.u32 %v3120, %v3767
        %v3901 = vand.u32 %v3121, %v3767
        %v3904 = vand.u32 %v3122, %v3767
        %v3907 = vand.u32 %v3123, %v3767
        %v3910 = vand.u32 %v3124, %v3767
        %v3913 = vand.u32 %v3125, %v3767
        %v3916 = vand.u32 %v3126, %v3767
        %v3919 = vand.u32 %v3127, %v3767
        %v3922 = vand.u32 %v3128, %v3767
        %v3925 = vand.u32 %v3129, %v3767
        %v3928 = vand.u32 %v3130, %v3767
        %v3931 = vand.u32 %v3131, %v3767
        %v3934 = vand.u32 %v3132, %v3767
        %v3937 = vand.u32 %v3133, %v3767
        %v3940 = vand.u32 %v3134, %v3767
        %v3943 = vand.u32 %v3135, %v3767
        %v3946 = vand.u32 %v3136, %v3767
        %v3949 = vand.u32 %v3137, %v3767
        %v3952 = vand.u32 %v3138, %v3767
        %v3955 = vand.u32 %v3139, %v3767
        %v3958 = vand.u32 %v3140, %v3767
        %v3961 = vand.u32 %v3141, %v3767
        %v3964 = vand.u32 %v3142, %v3767
        %v3967 = vand.u32 %v3143, %v3767
        %v3970 = vand.u32 %v3144, %v3767
        %v3973 = vand.u32 %v3145, %v3767
        %v3976 = vand.u32 %v3146, %v3767
        %v3979 = vand.u32 %v3147, %v3767
        %v3982 = vand.u32 %v3148, %v3767
        %v3985 = vand.u32 %v3149, %v3767
        %v3988 = vand.u32 %v3150, %v3767
        %v3991 = vand.u32 %v3151, %v3767
        %v3994 = vand.u32 %v3152, %v3767
        %v3997 = vand.u32 %v3153, %v3767
        %v4000 = vand.u32 %v3154, %v3767
        %v4003 = vand.u32 %v3155, %v3767
        %v4006 = vand.u32 %v3156, %v3767
        %v4009 = vand.u32 %v3157, %v3767
        %v4012 = vand.u32 %v3158, %v3767
        %v4015 = vand.u32 %v3159, %v3767
        %v4018 = vand.u32 %v3160, %v3767
        %v4021 = vand.u32 %v3161, %v3767
        %v4024 = vand.u32 %v3162, %v3767
        %v4027 = vand.u32 %v3163, %v3767
        %v4030 = vand.u32 %v3164, %v3767
        %v4033 = vand.u32 %v3165, %v3767
        %v4036 = vand.u32 %v3166, %v3767
        %v4039 = vand.u32 %v3167, %v3767
        %v4042 = vand.u32 %v3168, %v3767
        %v4045 = vand.u32 %v3169, %v3767
        %v4048 = vand.u32 %v3170, %v3767
        %v4051 = vand.u32 %v3171, %v3767
        %v4054 = vand.u32 %v3172, %v3767
        %v4057 = vand.u32 %v3173, %v3767
        %v4060 = vand.u32 %v3174, %v3767
        %v4063 = vand.u32 %v3175, %v3767
        %v4066 = vand.u32 %v3176, %v3767
        %v4069 = vand.u32 %v3177, %v3767
        %v4072 = vand.u32 %v3178, %v3767
        %v4075 = vand.u32 %v3179, %v3767
        %v4078 = vand.u32 %v3180, %v3767
        %v4081 = vand.u32 %v3181, %v3767
        %v4084 = vand.u32 %v3182, %v3767
        %v4087 = vand.u32 %v3183, %v3767
        %v4090 = vand.u32 %v3184, %v3767
        %v4093 = vand.u32 %v3185, %v3767
        %v4096 = vand.u32 %v3186, %v3767
        %v4099 = vand.u32 %v3187, %v3767
        %v4102 = vand.u32 %v3188, %v3767
        %v4105 = vand.u32 %v3189, %v3767
        %v4108 = vand.u32 %v3190, %v3767
        %v4111 = vand.u32 %v3191, %v3767
        %v4114 = vand.u32 %v3192, %v3767
        %v4117 = vand.u32 %v3193, %v3767
        %v4120 = vand.u32 %v3194, %v3767
        %v4123 = vand.u32 %v3195, %v3767
        %v4126 = vand.u32 %v3196, %v3767
        %v4129 = vand.u32 %v3197, %v3767
        %v4132 = vand.u32 %v3198, %v3767
        %v4135 = vand.u32 %v3199, %v3767
        %v4138 = vand.u32 %v3200, %v3767
        %v4141 = vand.u32 %v3201, %v3767
        %v4144 = vand.u32 %v3202, %v3767
        %v4147 = vand.u32 %v3203, %v3767
        %v4150 = vand.u32 %v3204, %v3767
        %v4153 = vand.u32 %v3205, %v3767
        %v4156 = vand.u32 %v3206, %v3767
        %v4159 = vand.u32 %v3207, %v3767
        %v4162 = vand.u32 %v3208, %v3767
        %v4165 = vand.u32 %v3209, %v3767
        %v4168 = vand.u32 %v3210, %v3767
        %v4171 = vand.u32 %v3211, %v3767
        %v4174 = vand.u32 %v3212, %v3767
        %v4177 = vand.u32 %v3213, %v3767
        %v4180 = vand.u32 %v3214, %v3767
        %v4183 = vand.u32 %v3215, %v3767
        %v4186 = vand.u32 %v3216, %v3767
        %v4189 = vand.u32 %v3217, %v3767
        %v4192 = vand.u32 %v3218, %v3767
        %v4195 = vand.u32 %v3219, %v3767
        %v4198 = vand.u32 %v3220, %v3767
        %v4201 = vand.u32 %v3221, %v3767
        %v4204 = vand.u32 %v3222, %v3767
        %v4207 = vand.u32 %v3223, %v3767
        %v4210 = vand.u32 %v3224, %v3767
        %v4213 = vand.u32 %v3225, %v3767
        %v4216 = vand.u32 %v3226, %v3767
        %v4219 = vand.u32 %v3227, %v3767
        %v4222 = vand.u32 %v3228, %v3767
        %v4225 = vand.u32 %v3229, %v3767
        %v4228 = vand.u32 %v3230, %v3767
        %v4231 = vand.u32 %v3231, %v3767
        %v4234 = vand.u32 %v3232, %v3767
        %v4237 = vand.u32 %v3233, %v3767
        %v4240 = vand.u32 %v3234, %v3767
        %v4243 = vand.u32 %v3235, %v3767
        %v4246 = vand.u32 %v3236, %v3767
        %v4249 = vand.u32 %v3237, %v3767
        %v4252 = vand.u32 %v3238, %v3767
        %v4255 = vand.u32 %v3239, %v3767
        %v4258 = vand.u32 %v3240, %v3767
        %v4261 = vand.u32 %v3241, %v3767
        %v4264 = vand.u32 %v3242, %v3767
        %v4267 = vand.u32 %v3243, %v3767
        %v4270 = vand.u32 %v3244, %v3767
        %v4273 = vand.u32 %v3245, %v3767
        %v4276 = vand.u32 %v3246, %v3767
        %v4279 = vand.u32 %v3247, %v3767
        %v4282 = vand.u32 %v3248, %v3767
        %v4285 = vand.u32 %v3249, %v3767
        %v4288 = vand.u32 %v3250, %v3767
        %v4291 = vand.u32 %v3251, %v3767
        %v4294 = vand.u32 %v3252, %v3767
        %v4297 = vand.u32 %v3253, %v3767
        %v4300 = vand.u32 %v3254, %v3767
        %v4303 = vand.u32 %v3255, %v3767
        %v4306 = vand.u32 %v3256, %v3767
        %v4309 = vand.u32 %v3257, %v3767
        %v4312 = vand.u32 %v3258, %v3767
        %v4315 = vand.u32 %v3259, %v3767
        %v4318 = vand.u32 %v3260, %v3767
        %v4321 = vand.u32 %v3261, %v3767
        %v4324 = vand.u32 %v3262, %v3767
        %v4327 = vand.u32 %v3263, %v3767
        %v4330 = vand.u32 %v3264, %v3767
        %v4333 = vand.u32 %v3265, %v3767
        %v4336 = vand.u32 %v3266, %v3767
        %v4339 = vand.u32 %v3267, %v3767
        %v4342 = vand.u32 %v3268, %v3767
        %v4345 = vand.u32 %v3269, %v3767
        %v4348 = vand.u32 %v3270, %v3767
        %v4351 = vand.u32 %v3271, %v3767
        %v4354 = vand.u32 %v3272, %v3767
        %v4357 = vand.u32 %v3273, %v3767
        %v4360 = vand.u32 %v3274, %v3767
        %v4363 = vand.u32 %v3275, %v3767
        %v4366 = vand.u32 %v3276, %v3767
        %v4369 = vand.u32 %v3277, %v3767
        %v4372 = vand.u32 %v3278, %v3767
        %v4375 = vand.u32 %v3279, %v3767
        %v4378 = vand.u32 %v3280, %v3767
        %v4381 = vand.u32 %v3281, %v3767
        %v4384 = vand.u32 %v3282, %v3767
        %v4387 = vand.u32 %v3283, %v3767
        %v4390 = vand.u32 %v3284, %v3767
        %v4393 = vand.u32 %v3285, %v3767
        %v4396 = vand.u32 %v3286, %v3767
        %v4399 = vand.u32 %v3287, %v3767
        %v4402 = vand.u32 %v3288, %v3767
        %v4405 = vand.u32 %v3289, %v3767
        %v4408 = vand.u32 %v3290, %v3767
        %v4411 = vand.u32 %v3291, %v3767
        %v4414 = vand.u32 %v3292, %v3767
        %v4417 = vand.u32 %v3293, %v3767
        %v4420 = vand.u32 %v3294, %v3767
        %v4423 = vand.u32 %v3295, %v3767
        %v4426 = vand.u32 %v3296, %v3767
        %v4429 = vand.u32 %v3297, %v3767
        %v4432 = vand.u32 %v3298, %v3767
        %v4435 = vand.u32 %v3299, %v3767
        %v4438 = vand.u32 %v3300, %v3767
        %v4441 = vand.u32 %v3301, %v3767
        %v4444 = vand.u32 %v3302, %v3767
        %v4447 = vand.u32 %v3303, %v3767
        %v4450 = vand.u32 %v3304, %v3767
        %4452 = vmatprep.subr.bf16.mxu0 0
        %4453 = vmatpush1.bf16.msra.mxu0 0
        %4454 = vmatprep.subr.bf16.mxu0 0
        %4455 = vmatpush1.bf16.msra.mxu0 0
        %4456 = vmatprep.subr.bf16.mxu0 0
        %4457 = vmatpush1.bf16.msra.mxu0 0
        %4458 = vmatprep.subr.bf16.mxu0 0
        %4459 = vmatpush1.bf16.msra.mxu0 0
        %4460 = vmatprep.subr.bf16.mxu0 0
        %4461 = vmatpush1.bf16.msra.mxu0 0
        %4462 = vmatprep.subr.bf16.mxu0 %v3772
        %4463 = vmatpush1.bf16.msra.mxu0 %v3769
        %4464 = vmatprep.subr.bf16.mxu0 %v2850
        %4465 = vmatpush1.bf16.msra.mxu0 %v2849
        %4466 = vmatprep.subr.bf16.mxu0 %v2622
        %4467 = vmatpush1.bf16.msra.mxu0 %v2621
        %4468 = vmatprep.subr.bf16.mxu0 0
        %4469 = vmatpush2.bf16.msra.mxu0 0
        %4470 = vmatprep.subr.bf16.mxu0 0
        %4471 = vmatpush2.bf16.msra.mxu0 0
        %4472 = vmatprep.subr.bf16.mxu0 0
        %4473 = vmatpush2.bf16.msra.mxu0 0
        %4474 = vmatprep.subr.bf16.mxu0 0
        %4475 = vmatpush2.bf16.msra.mxu0 0
        %4476 = vmatprep.subr.bf16.mxu0 0
        %4477 = vmatpush2.bf16.msra.mxu0 0
        %4478 = vmatprep.subr.bf16.mxu0 0
        %4479 = vmatpush2.bf16.msra.mxu0 0
        %4480 = vmatprep.subr.bf16.mxu0 0
        %4481 = vmatpush2.bf16.msra.mxu0 0
        %4482 = vmatprep.subr.bf16.mxu0 0
        %4483 = vmatpush2.bf16.msra.mxu0 0
        %4484 = vmatprep.mubr.bf16.mxu0 0
        %4485 = vmatmul.mubr.bf16.gmra.mxu0 %v3763
        %v4486 = vpop.f32.mrf.mxu0
        %v4487 = vadd.f32 0.0, %v4486
        %v4488 = vpop.f32.mrf.mxu0
        %v4489 = vadd.f32 0.0, %v4488
        %v4490 = vpop.f32.mrf.mxu0
        %v4491 = vpop.f32.mrf.mxu0
        %4492 = vdwg.mxu0
        %4493 = vmatprep.subr.bf16.mxu0 0
        %4494 = vmatpush1.bf16.msra.mxu0 0
        %4495 = vmatprep.subr.bf16.mxu0 0
        %4496 = vmatpush1.bf16.msra.mxu0 0
        %4497 = vmatprep.subr.bf16.mxu0 0
        %4498 = vmatpush1.bf16.msra.mxu0 0
        %4499 = vmatprep.subr.bf16.mxu0 0
        %4500 = vmatpush1.bf16.msra.mxu0 0
        %4501 = vmatprep.subr.bf16.mxu0 0
        %4502 = vmatpush1.bf16.msra.mxu0 0
        %4503 = vmatprep.subr.bf16.mxu0 %v3778
        %4504 = vmatpush1.bf16.msra.mxu0 %v3775
        %4505 = vmatprep.subr.bf16.mxu0 %v2852
        %4506 = vmatpush1.bf16.msra.mxu0 %v2851
        %4507 = vmatprep.subr.bf16.mxu0 %v2624
        %4508 = vmatpush1.bf16.msra.mxu0 %v2623
        %4509 = vmatprep.subr.bf16.mxu0 0
        %4510 = vmatpush2.bf16.msra.mxu0 0
        %4511 = vmatprep.subr.bf16.mxu0 0
        %4512 = vmatpush2.bf16.msra.mxu0 0
        %4513 = vmatprep.subr.bf16.mxu0 0
        %4514 = vmatpush2.bf16.msra.mxu0 0
        %4515 = vmatprep.subr.bf16.mxu0 0
        %4516 = vmatpush2.bf16.msra.mxu0 0
        %4517 = vmatprep.subr.bf16.mxu0 0
        %4518 = vmatpush2.bf16.msra.mxu0 0
        %4519 = vmatprep.subr.bf16.mxu0 0
        %4520 = vmatpush2.bf16.msra.mxu0 0
        %4521 = vmatprep.subr.bf16.mxu0 0
        %4522 = vmatpush2.bf16.msra.mxu0 0
        %4523 = vmatprep.subr.bf16.mxu0 0
        %4524 = vmatpush2.bf16.msra.mxu0 0
        %4525 = vmatprep.mubr.bf16.mxu0 0
        %4526 = vmatmul.mubr.bf16.gmra.mxu0 %v3763
        %v4527 = vpop.f32.mrf.mxu0
        %v4528 = vadd.f32 0.0, %v4527
        %v4529 = vpop.f32.mrf.mxu0
        %v4530 = vadd.f32 0.0, %v4529
        %v4531 = vpop.f32.mrf.mxu0
        %v4532 = vpop.f32.mrf.mxu0
        %4533 = vdwg.mxu0
        %4534 = vmatprep.subr.bf16.mxu0 0
        %4535 = vmatpush1.bf16.msra.mxu0 0
        %4536 = vmatprep.subr.bf16.mxu0 0
        %4537 = vmatpush1.bf16.msra.mxu0 0
        %4538 = vmatprep.subr.bf16.mxu0 0
        %4539 = vmatpush1.bf16.msra.mxu0 0
        %4540 = vmatprep.subr.bf16.mxu0 0
        %4541 = vmatpush1.bf16.msra.mxu0 0
        %4542 = vmatprep.subr.bf16.mxu0 0
        %4543 = vmatpush1.bf16.msra.mxu0 0
        %4544 = vmatprep.subr.bf16.mxu0 %v3784
        %4545 = vmatpush1.bf16.msra.mxu0 %v3781
        %4546 = vmatprep.subr.bf16.mxu0 %v2854
        %4547 = vmatpush1.bf16.msra.mxu0 %v2853
        %4548 = vmatprep.subr.bf16.mxu0 %v2626
        %4549 = vmatpush1.bf16.msra.mxu0 %v2625
        %4550 = vmatprep.subr.bf16.mxu0 0
        %4551 = vmatpush2.bf16.msra.mxu0 0
        %4552 = vmatprep.subr.bf16.mxu0 0
        %4553 = vmatpush2.bf16.msra.mxu0 0
        %4554 = vmatprep.subr.bf16.mxu0 0
        %4555 = vmatpush2.bf16.msra.mxu0 0
        %4556 = vmatprep.subr.bf16.mxu0 0
        %4557 = vmatpush2.bf16.msra.mxu0 0
        %4558 = vmatprep.subr.bf16.mxu0 0
        %4559 = vmatpush2.bf16.msra.mxu0 0
        %4560 = vmatprep.subr.bf16.mxu0 0
        %4561 = vmatpush2.bf16.msra.mxu0 0
        %4562 = vmatprep.subr.bf16.mxu0 0
        %4563 = vmatpush2.bf16.msra.mxu0 0
        %4564 = vmatprep.subr.bf16.mxu0 0
        %4565 = vmatpush2.bf16.msra.mxu0 0
        %4566 = vmatprep.mubr.bf16.mxu0 0
        %4567 = vmatmul.mubr.bf16.gmra.mxu0 %v3763
        %v4568 = vpop.f32.mrf.mxu0
        %v4569 = vadd.f32 0.0, %v4568
        %v4570 = vpop.f32.mrf.mxu0
        %v4571 = vadd.f32 0.0, %v4570
        %v4572 = vpop.f32.mrf.mxu0
        %v4573 = vpop.f32.mrf.mxu0
        %4574 = vdwg.mxu0
        %4575 = vmatprep.subr.bf16.mxu0 0
        %4576 = vmatpush1.bf16.msra.mxu0 0
        %4577 = vmatprep.subr.bf16.mxu0 0
        %4578 = vmatpush1.bf16.msra.mxu0 0
        %4579 = vmatprep.subr.bf16.mxu0 0
        %4580 = vmatpush1.bf16.msra.mxu0 0
        %4581 = vmatprep.subr.bf16.mxu0 0
        %4582 = vmatpush1.bf16.msra.mxu0 0
        %4583 = vmatprep.subr.bf16.mxu0 0
        %4584 = vmatpush1.bf16.msra.mxu0 0
        %4585 = vmatprep.subr.bf16.mxu0 %v3790
        %4586 = vmatpush1.bf16.msra.mxu0 %v3787
        %4587 = vmatprep.subr.bf16.mxu0 %v2856
        %4588 = vmatpush1.bf16.msra.mxu0 %v2855
        %4589 = vmatprep.subr.bf16.mxu0 %v2628
        %4590 = vmatpush1.bf16.msra.mxu0 %v2627
        %4591 = vmatprep.subr.bf16.mxu0 0
        %4592 = vmatpush2.bf16.msra.mxu0 0
        %4593 = vmatprep.subr.bf16.mxu0 0
        %4594 = vmatpush2.bf16.msra.mxu0 0
        %4595 = vmatprep.subr.bf16.mxu0 0
        %4596 = vmatpush2.bf16.msra.mxu0 0
        %4597 = vmatprep.subr.bf16.mxu0 0
        %4598 = vmatpush2.bf16.msra.mxu0 0
        %4599 = vmatprep.subr.bf16.mxu0 0
        %4600 = vmatpush2.bf16.msra.mxu0 0
        %4601 = vmatprep.subr.bf16.mxu0 0
        %4602 = vmatpush2.bf16.msra.mxu0 0
        %4603 = vmatprep.subr.bf16.mxu0 0
        %4604 = vmatpush2.bf16.msra.mxu0 0
        %4605 = vmatprep.subr.bf16.mxu0 0
        %4606 = vmatpush2.bf16.msra.mxu0 0
        %4607 = vmatprep.mubr.bf16.mxu0 0
        %4608 = vmatmul.mubr.bf16.gmra.mxu0 %v3763
        %v4609 = vpop.f32.mrf.mxu0
        %v4610 = vadd.f32 0.0, %v4609
        %v4611 = vpop.f32.mrf.mxu0
        %v4612 = vadd.f32 0.0, %v4611
        %v4613 = vpop.f32.mrf.mxu0
        %v4614 = vpop.f32.mrf.mxu0
        %4615 = vdwg.mxu0
        %4616 = vmatprep.subr.bf16.mxu0 0
        %4617 = vmatpush1.bf16.msra.mxu0 0
        %4618 = vmatprep.subr.bf16.mxu0 0
        %4619 = vmatpush1.bf16.msra.mxu0 0
        %4620 = vmatprep.subr.bf16.mxu0 0
        %4621 = vmatpush1.bf16.msra.mxu0 0
        %4622 = vmatprep.subr.bf16.mxu0 0
        %4623 = vmatpush1.bf16.msra.mxu0 0
        %4624 = vmatprep.subr.bf16.mxu0 0
        %4625 = vmatpush1.bf16.msra.mxu0 0
        %4626 = vmatprep.subr.bf16.mxu0 %v3796
        %4627 = vmatpush1.bf16.msra.mxu0 %v3793
        %4628 = vmatprep.subr.bf16.mxu0 %v2858
        %4629 = vmatpush1.bf16.msra.mxu0 %v2857
        %4630 = vmatprep.subr.bf16.mxu0 %v2630
        %4631 = vmatpush1.bf16.msra.mxu0 %v2629
        %4632 = vmatprep.subr.bf16.mxu0 0
        %4633 = vmatpush2.bf16.msra.mxu0 0
        %4634 = vmatprep.subr.bf16.mxu0 0
        %4635 = vmatpush2.bf16.msra.mxu0 0
        %4636 = vmatprep.subr.bf16.mxu0 0
        %4637 = vmatpush2.bf16.msra.mxu0 0
        %4638 = vmatprep.subr.bf16.mxu0 0
        %4639 = vmatpush2.bf16.msra.mxu0 0
        %4640 = vmatprep.subr.bf16.mxu0 0
        %4641 = vmatpush2.bf16.msra.mxu0 0
        %4642 = vmatprep.subr.bf16.mxu0 0
        %4643 = vmatpush2.bf16.msra.mxu0 0
        %4644 = vmatprep.subr.bf16.mxu0 0
        %4645 = vmatpush2.bf16.msra.mxu0 0
        %4646 = vmatprep.subr.bf16.mxu0 0
        %4647 = vmatpush2.bf16.msra.mxu0 0
        %4648 = vmatprep.mubr.bf16.mxu0 0
        %4649 = vmatmul.mubr.bf16.gmra.mxu0 %v3763
        %v4650 = vpop.f32.mrf.mxu0
        %v4651 = vadd.f32 0.0, %v4650
        %v4652 = vpop.f32.mrf.mxu0
        %v4653 = vadd.f32 0.0, %v4652
        %v4654 = vpop.f32.mrf.mxu0
        %v4655 = vpop.f32.mrf.mxu0
        %4656 = vdwg.mxu0
        %4657 = vmatprep.subr.bf16.mxu0 0
        %4658 = vmatpush1.bf16.msra.mxu0 0
        %4659 = vmatprep.subr.bf16.mxu0 0
        %4660 = vmatpush1.bf16.msra.mxu0 0
        %4661 = vmatprep.subr.bf16.mxu0 0
        %4662 = vmatpush1.bf16.msra.mxu0 0
        %4663 = vmatprep.subr.bf16.mxu0 0
        %4664 = vmatpush1.bf16.msra.mxu0 0
        %4665 = vmatprep.subr.bf16.mxu0 0
        %4666 = vmatpush1.bf16.msra.mxu0 0
        %4667 = vmatprep.subr.bf16.mxu0 %v3802
        %4668 = vmatpush1.bf16.msra.mxu0 %v3799
        %4669 = vmatprep.subr.bf16.mxu0 %v2860
        %4670 = vmatpush1.bf16.msra.mxu0 %v2859
        %4671 = vmatprep.subr.bf16.mxu0 %v2632
        %4672 = vmatpush1.bf16.msra.mxu0 %v2631
        %4673 = vmatprep.subr.bf16.mxu0 0
        %4674 = vmatpush2.bf16.msra.mxu0 0
        %4675 = vmatprep.subr.bf16.mxu0 0
        %4676 = vmatpush2.bf16.msra.mxu0 0
        %4677 = vmatprep.subr.bf16.mxu0 0
        %4678 = vmatpush2.bf16.msra.mxu0 0
        %4679 = vmatprep.subr.bf16.mxu0 0
        %4680 = vmatpush2.bf16.msra.mxu0 0
        %4681 = vmatprep.subr.bf16.mxu0 0
        %4682 = vmatpush2.bf16.msra.mxu0 0
        %4683 = vmatprep.subr.bf16.mxu0 0
        %4684 = vmatpush2.bf16.msra.mxu0 0
        %4685 = vmatprep.subr.bf16.mxu0 0
        %4686 = vmatpush2.bf16.msra.mxu0 0
        %4687 = vmatprep.subr.bf16.mxu0 0
        %4688 = vmatpush2.bf16.msra.mxu0 0
        %4689 = vmatprep.mubr.bf16.mxu0 0
        %4690 = vmatmul.mubr.bf16.gmra.mxu0 %v3763
        %v4691 = vpop.f32.mrf.mxu0
        %v4692 = vadd.f32 0.0, %v4691
        %v4693 = vpop.f32.mrf.mxu0
        %v4694 = vadd.f32 0.0, %v4693
        %v4695 = vpop.f32.mrf.mxu0
        %v4696 = vpop.f32.mrf.mxu0
        %4697 = vdwg.mxu0
        %4698 = vmatprep.subr.bf16.mxu0 0
        %4699 = vmatpush1.bf16.msra.mxu0 0
        %4700 = vmatprep.subr.bf16.mxu0 0
        %4701 = vmatpush1.bf16.msra.mxu0 0
        %4702 = vmatprep.subr.bf16.mxu0 0
        %4703 = vmatpush1.bf16.msra.mxu0 0
        %4704 = vmatprep.subr.bf16.mxu0 0
        %4705 = vmatpush1.bf16.msra.mxu0 0
        %4706 = vmatprep.subr.bf16.mxu0 0
        %4707 = vmatpush1.bf16.msra.mxu0 0
        %4708 = vmatprep.subr.bf16.mxu0 %v3808
        %4709 = vmatpush1.bf16.msra.mxu0 %v3805
        %4710 = vmatprep.subr.bf16.mxu0 %v2862
        %4711 = vmatpush1.bf16.msra.mxu0 %v2861
        %4712 = vmatprep.subr.bf16.mxu0 %v2634
        %4713 = vmatpush1.bf16.msra.mxu0 %v2633
        %4714 = vmatprep.subr.bf16.mxu0 0
        %4715 = vmatpush2.bf16.msra.mxu0 0
        %4716 = vmatprep.subr.bf16.mxu0 0
        %4717 = vmatpush2.bf16.msra.mxu0 0
        %4718 = vmatprep.subr.bf16.mxu0 0
        %4719 = vmatpush2.bf16.msra.mxu0 0
        %4720 = vmatprep.subr.bf16.mxu0 0
        %4721 = vmatpush2.bf16.msra.mxu0 0
        %4722 = vmatprep.subr.bf16.mxu0 0
        %4723 = vmatpush2.bf16.msra.mxu0 0
        %4724 = vmatprep.subr.bf16.mxu0 0
        %4725 = vmatpush2.bf16.msra.mxu0 0
        %4726 = vmatprep.subr.bf16.mxu0 0
        %4727 = vmatpush2.bf16.msra.mxu0 0
        %4728 = vmatprep.subr.bf16.mxu0 0
        %4729 = vmatpush2.bf16.msra.mxu0 0
        %4730 = vmatprep.mubr.bf16.mxu0 0
        %4731 = vmatmul.mubr.bf16.gmra.mxu0 %v3763
        %v4732 = vpop.f32.mrf.mxu0
        %v4733 = vadd.f32 0.0, %v4732
        %v4734 = vpop.f32.mrf.mxu0
        %v4735 = vadd.f32 0.0, %v4734
        %v4736 = vpop.f32.mrf.mxu0
        %v4737 = vpop.f32.mrf.mxu0
        %4738 = vdwg.mxu0
        %4739 = vmatprep.subr.bf16.mxu0 0
        %4740 = vmatpush1.bf16.msra.mxu0 0
        %4741 = vmatprep.subr.bf16.mxu0 0
        %4742 = vmatpush1.bf16.msra.mxu0 0
        %4743 = vmatprep.subr.bf16.mxu0 0
        %4744 = vmatpush1.bf16.msra.mxu0 0
        %4745 = vmatprep.subr.bf16.mxu0 0
        %4746 = vmatpush1.bf16.msra.mxu0 0
        %4747 = vmatprep.subr.bf16.mxu0 0
        %4748 = vmatpush1.bf16.msra.mxu0 0
        %4749 = vmatprep.subr.bf16.mxu0 %v3814
        %4750 = vmatpush1.bf16.msra.mxu0 %v3811
        %4751 = vmatprep.subr.bf16.mxu0 %v2864
        %4752 = vmatpush1.bf16.msra.mxu0 %v2863
        %4753 = vmatprep.subr.bf16.mxu0 %v2636
        %4754 = vmatpush1.bf16.msra.mxu0 %v2635
        %4755 = vmatprep.subr.bf16.mxu0 0
        %4756 = vmatpush2.bf16.msra.mxu0 0
        %4757 = vmatprep.subr.bf16.mxu0 0
        %4758 = vmatpush2.bf16.msra.mxu0 0
        %4759 = vmatprep.subr.bf16.mxu0 0
        %4760 = vmatpush2.bf16.msra.mxu0 0
        %4761 = vmatprep.subr.bf16.mxu0 0
        %4762 = vmatpush2.bf16.msra.mxu0 0
        %4763 = vmatprep.subr.bf16.mxu0 0
        %4764 = vmatpush2.bf16.msra.mxu0 0
        %4765 = vmatprep.subr.bf16.mxu0 0
        %4766 = vmatpush2.bf16.msra.mxu0 0
        %4767 = vmatprep.subr.bf16.mxu0 0
        %4768 = vmatpush2.bf16.msra.mxu0 0
        %4769 = vmatprep.subr.bf16.mxu0 0
        %4770 = vmatpush2.bf16.msra.mxu0 0
        %4771 = vmatprep.mubr.bf16.mxu0 0
        %4772 = vmatmul.mubr.bf16.gmra.mxu0 %v3763
        %v4773 = vpop.f32.mrf.mxu0
        %v4774 = vadd.f32 0.0, %v4773
        %v4775 = vpop.f32.mrf.mxu0
        %v4776 = vadd.f32 0.0, %v4775
        %v4777 = vpop.f32.mrf.mxu0
        %v4778 = vpop.f32.mrf.mxu0
        %4779 = vdwg.mxu0
        %4780 = vmatprep.subr.bf16.mxu0 0
        %4781 = vmatpush1.bf16.msra.mxu0 0
        %4782 = vmatprep.subr.bf16.mxu0 0
        %4783 = vmatpush1.bf16.msra.mxu0 0
        %4784 = vmatprep.subr.bf16.mxu0 0
        %4785 = vmatpush1.bf16.msra.mxu0 0
        %4786 = vmatprep.subr.bf16.mxu0 0
        %4787 = vmatpush1.bf16.msra.mxu0 0
        %4788 = vmatprep.subr.bf16.mxu0 0
        %4789 = vmatpush1.bf16.msra.mxu0 0
        %4790 = vmatprep.subr.bf16.mxu0 %v3820
        %4791 = vmatpush1.bf16.msra.mxu0 %v3817
        %4792 = vmatprep.subr.bf16.mxu0 %v2866
        %4793 = vmatpush1.bf16.msra.mxu0 %v2865
        %4794 = vmatprep.subr.bf16.mxu0 %v2638
        %4795 = vmatpush1.bf16.msra.mxu0 %v2637
        %4796 = vmatprep.subr.bf16.mxu0 0
        %4797 = vmatpush2.bf16.msra.mxu0 0
        %4798 = vmatprep.subr.bf16.mxu0 0
        %4799 = vmatpush2.bf16.msra.mxu0 0
        %4800 = vmatprep.subr.bf16.mxu0 0
        %4801 = vmatpush2.bf16.msra.mxu0 0
        %4802 = vmatprep.subr.bf16.mxu0 0
        %4803 = vmatpush2.bf16.msra.mxu0 0
        %4804 = vmatprep.subr.bf16.mxu0 0
        %4805 = vmatpush2.bf16.msra.mxu0 0
        %4806 = vmatprep.subr.bf16.mxu0 0
        %4807 = vmatpush2.bf16.msra.mxu0 0
        %4808 = vmatprep.subr.bf16.mxu0 0
        %4809 = vmatpush2.bf16.msra.mxu0 0
        %4810 = vmatprep.subr.bf16.mxu0 0
        %4811 = vmatpush2.bf16.msra.mxu0 0
        %4812 = vmatprep.mubr.bf16.mxu0 0
        %4813 = vmatmul.mubr.bf16.gmra.mxu0 %v3763
        %v4814 = vpop.f32.mrf.mxu0
        %v4815 = vadd.f32 0.0, %v4814
        %v4816 = vpop.f32.mrf.mxu0
        %v4817 = vadd.f32 0.0, %v4816
        %v4818 = vpop.f32.mrf.mxu0
        %v4819 = vpop.f32.mrf.mxu0
        %4820 = vdwg.mxu0
        %4821 = vmatprep.subr.bf16.mxu0 0
        %4822 = vmatpush1.bf16.msra.mxu0 0
        %4823 = vmatprep.subr.bf16.mxu0 0
        %4824 = vmatpush1.bf16.msra.mxu0 0
        %4825 = vmatprep.subr.bf16.mxu0 0
        %4826 = vmatpush1.bf16.msra.mxu0 0
        %4827 = vmatprep.subr.bf16.mxu0 0
        %4828 = vmatpush1.bf16.msra.mxu0 0
        %4829 = vmatprep.subr.bf16.mxu0 0
        %4830 = vmatpush1.bf16.msra.mxu0 0
        %4831 = vmatprep.subr.bf16.mxu0 %v3826
        %4832 = vmatpush1.bf16.msra.mxu0 %v3823
        %4833 = vmatprep.subr.bf16.mxu0 %v2868
        %4834 = vmatpush1.bf16.msra.mxu0 %v2867
        %4835 = vmatprep.subr.bf16.mxu0 %v2640
        %4836 = vmatpush1.bf16.msra.mxu0 %v2639
        %4837 = vmatprep.subr.bf16.mxu0 0
        %4838 = vmatpush2.bf16.msra.mxu0 0
        %4839 = vmatprep.subr.bf16.mxu0 0
        %4840 = vmatpush2.bf16.msra.mxu0 0
        %4841 = vmatprep.subr.bf16.mxu0 0
        %4842 = vmatpush2.bf16.msra.mxu0 0
        %4843 = vmatprep.subr.bf16.mxu0 0
        %4844 = vmatpush2.bf16.msra.mxu0 0
        %4845 = vmatprep.subr.bf16.mxu0 0
        %4846 = vmatpush2.bf16.msra.mxu0 0
        %4847 = vmatprep.subr.bf16.mxu0 0
        %4848 = vmatpush2.bf16.msra.mxu0 0
        %4849 = vmatprep.subr.bf16.mxu0 0
        %4850 = vmatpush2.bf16.msra.mxu0 0
        %4851 = vmatprep.subr.bf16.mxu0 0
        %4852 = vmatpush2.bf16.msra.mxu0 0
        %4853 = vmatprep.mubr.bf16.mxu0 0
        %4854 = vmatmul.mubr.bf16.gmra.mxu0 %v3763
        %v4855 = vpop.f32.mrf.mxu0
        %v4856 = vadd.f32 0.0, %v4855
        %v4857 = vpop.f32.mrf.mxu0
        %v4858 = vadd.f32 0.0, %v4857
        %v4859 = vpop.f32.mrf.mxu0
        %v4860 = vpop.f32.mrf.mxu0
        %4861 = vdwg.mxu0
        %4862 = vmatprep.subr.bf16.mxu0 0
        %4863 = vmatpush1.bf16.msra.mxu0 0
        %4864 = vmatprep.subr.bf16.mxu0 0
        %4865 = vmatpush1.bf16.msra.mxu0 0
        %4866 = vmatprep.subr.bf16.mxu0 0
        %4867 = vmatpush1.bf16.msra.mxu0 0
        %4868 = vmatprep.subr.bf16.mxu0 0
        %4869 = vmatpush1.bf16.msra.mxu0 0
        %4870 = vmatprep.subr.bf16.mxu0 0
        %4871 = vmatpush1.bf16.msra.mxu0 0
        %4872 = vmatprep.subr.bf16.mxu0 %v3832
        %4873 = vmatpush1.bf16.msra.mxu0 %v3829
        %4874 = vmatprep.subr.bf16.mxu0 %v2870
        %4875 = vmatpush1.bf16.msra.mxu0 %v2869
        %4876 = vmatprep.subr.bf16.mxu0 %v2642
        %4877 = vmatpush1.bf16.msra.mxu0 %v2641
        %4878 = vmatprep.subr.bf16.mxu0 0
        %4879 = vmatpush2.bf16.msra.mxu0 0
        %4880 = vmatprep.subr.bf16.mxu0 0
        %4881 = vmatpush2.bf16.msra.mxu0 0
        %4882 = vmatprep.subr.bf16.mxu0 0
        %4883 = vmatpush2.bf16.msra.mxu0 0
        %4884 = vmatprep.subr.bf16.mxu0 0
        %4885 = vmatpush2.bf16.msra.mxu0 0
        %4886 = vmatprep.subr.bf16.mxu0 0
        %4887 = vmatpush2.bf16.msra.mxu0 0
        %4888 = vmatprep.subr.bf16.mxu0 0
        %4889 = vmatpush2.bf16.msra.mxu0 0
        %4890 = vmatprep.subr.bf16.mxu0 0
        %4891 = vmatpush2.bf16.msra.mxu0 0
        %4892 = vmatprep.subr.bf16.mxu0 0
        %4893 = vmatpush2.bf16.msra.mxu0 0
        %4894 = vmatprep.mubr.bf16.mxu0 0
        %4895 = vmatmul.mubr.bf16.gmra.mxu0 %v3763
        %v4896 = vpop.f32.mrf.mxu0
        %v4897 = vadd.f32 0.0, %v4896
        %v4898 = vpop.f32.mrf.mxu0
        %v4899 = vadd.f32 0.0, %v4898
        %v4900 = vpop.f32.mrf.mxu0
        %v4901 = vpop.f32.mrf.mxu0
        %4902 = vdwg.mxu0
        %4903 = vmatprep.subr.bf16.mxu0 0
        %4904 = vmatpush1.bf16.msra.mxu0 0
        %4905 = vmatprep.subr.bf16.mxu0 0
        %4906 = vmatpush1.bf16.msra.mxu0 0
        %4907 = vmatprep.subr.bf16.mxu0 0
        %4908 = vmatpush1.bf16.msra.mxu0 0
        %4909 = vmatprep.subr.bf16.mxu0 0
        %4910 = vmatpush1.bf16.msra.mxu0 0
        %4911 = vmatprep.subr.bf16.mxu0 0
        %4912 = vmatpush1.bf16.msra.mxu0 0
        %4913 = vmatprep.subr.bf16.mxu0 %v3838
        %4914 = vmatpush1.bf16.msra.mxu0 %v3835
        %4915 = vmatprep.subr.bf16.mxu0 %v2872
        %4916 = vmatpush1.bf16.msra.mxu0 %v2871
        %4917 = vmatprep.subr.bf16.mxu0 %v2644
        %4918 = vmatpush1.bf16.msra.mxu0 %v2643
        %4919 = vmatprep.subr.bf16.mxu0 0
        %4920 = vmatpush2.bf16.msra.mxu0 0
        %4921 = vmatprep.subr.bf16.mxu0 0
        %4922 = vmatpush2.bf16.msra.mxu0 0
        %4923 = vmatprep.subr.bf16.mxu0 0
        %4924 = vmatpush2.bf16.msra.mxu0 0
        %4925 = vmatprep.subr.bf16.mxu0 0
        %4926 = vmatpush2.bf16.msra.mxu0 0
        %4927 = vmatprep.subr.bf16.mxu0 0
        %4928 = vmatpush2.bf16.msra.mxu0 0
        %4929 = vmatprep.subr.bf16.mxu0 0
        %4930 = vmatpush2.bf16.msra.mxu0 0
        %4931 = vmatprep.subr.bf16.mxu0 0
        %4932 = vmatpush2.bf16.msra.mxu0 0
        %4933 = vmatprep.subr.bf16.mxu0 0
        %4934 = vmatpush2.bf16.msra.mxu0 0
        %4935 = vmatprep.mubr.bf16.mxu0 0
        %4936 = vmatmul.mubr.bf16.gmra.mxu0 %v3763
        %v4937 = vpop.f32.mrf.mxu0
        %v4938 = vadd.f32 0.0, %v4937
        %v4939 = vpop.f32.mrf.mxu0
        %v4940 = vadd.f32 0.0, %v4939
        %v4941 = vpop.f32.mrf.mxu0
        %v4942 = vpop.f32.mrf.mxu0
        %4943 = vdwg.mxu0
        %4944 = vmatprep.subr.bf16.mxu0 0
        %4945 = vmatpush1.bf16.msra.mxu0 0
        %4946 = vmatprep.subr.bf16.mxu0 0
        %4947 = vmatpush1.bf16.msra.mxu0 0
        %4948 = vmatprep.subr.bf16.mxu0 0
        %4949 = vmatpush1.bf16.msra.mxu0 0
        %4950 = vmatprep.subr.bf16.mxu0 0
        %4951 = vmatpush1.bf16.msra.mxu0 0
        %4952 = vmatprep.subr.bf16.mxu0 0
        %4953 = vmatpush1.bf16.msra.mxu0 0
        %4954 = vmatprep.subr.bf16.mxu0 %v3844
        %4955 = vmatpush1.bf16.msra.mxu0 %v3841
        %4956 = vmatprep.subr.bf16.mxu0 %v2874
        %4957 = vmatpush1.bf16.msra.mxu0 %v2873
        %4958 = vmatprep.subr.bf16.mxu0 %v2646
        %4959 = vmatpush1.bf16.msra.mxu0 %v2645
        %4960 = vmatprep.subr.bf16.mxu0 0
        %4961 = vmatpush2.bf16.msra.mxu0 0
        %4962 = vmatprep.subr.bf16.mxu0 0
        %4963 = vmatpush2.bf16.msra.mxu0 0
        %4964 = vmatprep.subr.bf16.mxu0 0
        %4965 = vmatpush2.bf16.msra.mxu0 0
        %4966 = vmatprep.subr.bf16.mxu0 0
        %4967 = vmatpush2.bf16.msra.mxu0 0
        %4968 = vmatprep.subr.bf16.mxu0 0
        %4969 = vmatpush2.bf16.msra.mxu0 0
        %4970 = vmatprep.subr.bf16.mxu0 0
        %4971 = vmatpush2.bf16.msra.mxu0 0
        %4972 = vmatprep.subr.bf16.mxu0 0
        %4973 = vmatpush2.bf16.msra.mxu0 0
        %4974 = vmatprep.subr.bf16.mxu0 0
        %4975 = vmatpush2.bf16.msra.mxu0 0
        %4976 = vmatprep.mubr.bf16.mxu0 0
        %4977 = vmatmul.mubr.bf16.gmra.mxu0 %v3763
        %v4978 = vpop.f32.mrf.mxu0
        %v4979 = vadd.f32 0.0, %v4978
        %v4980 = vpop.f32.mrf.mxu0
        %v4981 = vadd.f32 0.0, %v4980
        %v4982 = vpop.f32.mrf.mxu0
        %v4983 = vpop.f32.mrf.mxu0
        %4984 = vdwg.mxu0
        %4985 = vmatprep.subr.bf16.mxu0 0
        %4986 = vmatpush1.bf16.msra.mxu0 0
        %4987 = vmatprep.subr.bf16.mxu0 0
        %4988 = vmatpush1.bf16.msra.mxu0 0
        %4989 = vmatprep.subr.bf16.mxu0 0
        %4990 = vmatpush1.bf16.msra.mxu0 0
        %4991 = vmatprep.subr.bf16.mxu0 0
        %4992 = vmatpush1.bf16.msra.mxu0 0
        %4993 = vmatprep.subr.bf16.mxu0 0
        %4994 = vmatpush1.bf16.msra.mxu0 0
        %4995 = vmatprep.subr.bf16.mxu0 %v3850
        %4996 = vmatpush1.bf16.msra.mxu0 %v3847
        %4997 = vmatprep.subr.bf16.mxu0 %v2876
        %4998 = vmatpush1.bf16.msra.mxu0 %v2875
        %4999 = vmatprep.subr.bf16.mxu0 %v2648
        %5000 = vmatpush1.bf16.msra.mxu0 %v2647
        %5001 = vmatprep.subr.bf16.mxu0 0
        %5002 = vmatpush2.bf16.msra.mxu0 0
        %5003 = vmatprep.subr.bf16.mxu0 0
        %5004 = vmatpush2.bf16.msra.mxu0 0
        %5005 = vmatprep.subr.bf16.mxu0 0
        %5006 = vmatpush2.bf16.msra.mxu0 0
        %5007 = vmatprep.subr.bf16.mxu0 0
        %5008 = vmatpush2.bf16.msra.mxu0 0
        %5009 = vmatprep.subr.bf16.mxu0 0
        %5010 = vmatpush2.bf16.msra.mxu0 0
        %5011 = vmatprep.subr.bf16.mxu0 0
        %5012 = vmatpush2.bf16.msra.mxu0 0
        %5013 = vmatprep.subr.bf16.mxu0 0
        %5014 = vmatpush2.bf16.msra.mxu0 0
        %5015 = vmatprep.subr.bf16.mxu0 0
        %5016 = vmatpush2.bf16.msra.mxu0 0
        %5017 = vmatprep.mubr.bf16.mxu0 0
        %5018 = vmatmul.mubr.bf16.gmra.mxu0 %v3763
        %v5019 = vpop.f32.mrf.mxu0
        %v5020 = vadd.f32 0.0, %v5019
        %v5021 = vpop.f32.mrf.mxu0
        %v5022 = vadd.f32 0.0, %v5021
        %v5023 = vpop.f32.mrf.mxu0
        %v5024 = vpop.f32.mrf.mxu0
        %5025 = vdwg.mxu0
        %5026 = vmatprep.subr.bf16.mxu0 0
        %5027 = vmatpush1.bf16.msra.mxu0 0
        %5028 = vmatprep.subr.bf16.mxu0 0
        %5029 = vmatpush1.bf16.msra.mxu0 0
        %5030 = vmatprep.subr.bf16.mxu0 0
        %5031 = vmatpush1.bf16.msra.mxu0 0
        %5032 = vmatprep.subr.bf16.mxu0 0
        %5033 = vmatpush1.bf16.msra.mxu0 0
        %5034 = vmatprep.subr.bf16.mxu0 0
        %5035 = vmatpush1.bf16.msra.mxu0 0
        %5036 = vmatprep.subr.bf16.mxu0 %v3856
        %5037 = vmatpush1.bf16.msra.mxu0 %v3853
        %5038 = vmatprep.subr.bf16.mxu0 %v2878
        %5039 = vmatpush1.bf16.msra.mxu0 %v2877
        %5040 = vmatprep.subr.bf16.mxu0 %v2650
        %5041 = vmatpush1.bf16.msra.mxu0 %v2649
        %5042 = vmatprep.subr.bf16.mxu0 0
        %5043 = vmatpush2.bf16.msra.mxu0 0
        %5044 = vmatprep.subr.bf16.mxu0 0
        %5045 = vmatpush2.bf16.msra.mxu0 0
        %5046 = vmatprep.subr.bf16.mxu0 0
        %5047 = vmatpush2.bf16.msra.mxu0 0
        %5048 = vmatprep.subr.bf16.mxu0 0
        %5049 = vmatpush2.bf16.msra.mxu0 0
        %5050 = vmatprep.subr.bf16.mxu0 0
        %5051 = vmatpush2.bf16.msra.mxu0 0
        %5052 = vmatprep.subr.bf16.mxu0 0
        %5053 = vmatpush2.bf16.msra.mxu0 0
        %5054 = vmatprep.subr.bf16.mxu0 0
        %5055 = vmatpush2.bf16.msra.mxu0 0
        %5056 = vmatprep.subr.bf16.mxu0 0
        %5057 = vmatpush2.bf16.msra.mxu0 0
        %5058 = vmatprep.mubr.bf16.mxu0 0
        %5059 = vmatmul.mubr.bf16.gmra.mxu0 %v3763
        %v5060 = vpop.f32.mrf.mxu0
        %v5061 = vadd.f32 0.0, %v5060
        %v5062 = vpop.f32.mrf.mxu0
        %v5063 = vadd.f32 0.0, %v5062
        %v5064 = vpop.f32.mrf.mxu0
        %v5065 = vpop.f32.mrf.mxu0
        %5066 = vdwg.mxu0
        %5067 = vmatprep.subr.bf16.mxu0 0
        %5068 = vmatpush1.bf16.msra.mxu0 0
        %5069 = vmatprep.subr.bf16.mxu0 0
        %5070 = vmatpush1.bf16.msra.mxu0 0
        %5071 = vmatprep.subr.bf16.mxu0 0
        %5072 = vmatpush1.bf16.msra.mxu0 0
        %5073 = vmatprep.subr.bf16.mxu0 0
        %5074 = vmatpush1.bf16.msra.mxu0 0
        %5075 = vmatprep.subr.bf16.mxu0 0
        %5076 = vmatpush1.bf16.msra.mxu0 0
        %5077 = vmatprep.subr.bf16.mxu0 %v3862
        %5078 = vmatpush1.bf16.msra.mxu0 %v3859
        %5079 = vmatprep.subr.bf16.mxu0 %v2880
        %5080 = vmatpush1.bf16.msra.mxu0 %v2879
        %5081 = vmatprep.subr.bf16.mxu0 %v2652
        %5082 = vmatpush1.bf16.msra.mxu0 %v2651
        %5083 = vmatprep.subr.bf16.mxu0 0
        %5084 = vmatpush2.bf16.msra.mxu0 0
        %5085 = vmatprep.subr.bf16.mxu0 0
        %5086 = vmatpush2.bf16.msra.mxu0 0
        %5087 = vmatprep.subr.bf16.mxu0 0
        %5088 = vmatpush2.bf16.msra.mxu0 0
        %5089 = vmatprep.subr.bf16.mxu0 0
        %5090 = vmatpush2.bf16.msra.mxu0 0
        %5091 = vmatprep.subr.bf16.mxu0 0
        %5092 = vmatpush2.bf16.msra.mxu0 0
        %5093 = vmatprep.subr.bf16.mxu0 0
        %5094 = vmatpush2.bf16.msra.mxu0 0
        %5095 = vmatprep.subr.bf16.mxu0 0
        %5096 = vmatpush2.bf16.msra.mxu0 0
        %5097 = vmatprep.subr.bf16.mxu0 0
        %5098 = vmatpush2.bf16.msra.mxu0 0
        %5099 = vmatprep.mubr.bf16.mxu0 0
        %5100 = vmatmul.mubr.bf16.gmra.mxu0 %v3763
        %v5101 = vpop.f32.mrf.mxu0
        %v5102 = vadd.f32 0.0, %v5101
        %v5103 = vpop.f32.mrf.mxu0
        %v5104 = vadd.f32 0.0, %v5103
        %v5105 = vpop.f32.mrf.mxu0
        %v5106 = vpop.f32.mrf.mxu0
        %5107 = vdwg.mxu0
        %5108 = vmatprep.subr.bf16.mxu0 0
        %5109 = vmatpush1.bf16.msra.mxu0 0
        %5110 = vmatprep.subr.bf16.mxu0 0
        %5111 = vmatpush1.bf16.msra.mxu0 0
        %5112 = vmatprep.subr.bf16.mxu0 0
        %5113 = vmatpush1.bf16.msra.mxu0 0
        %5114 = vmatprep.subr.bf16.mxu0 0
        %5115 = vmatpush1.bf16.msra.mxu0 0
        %5116 = vmatprep.subr.bf16.mxu0 0
        %5117 = vmatpush1.bf16.msra.mxu0 0
        %5118 = vmatprep.subr.bf16.mxu0 %v3868
        %5119 = vmatpush1.bf16.msra.mxu0 %v3865
        %5120 = vmatprep.subr.bf16.mxu0 %v2882
        %5121 = vmatpush1.bf16.msra.mxu0 %v2881
        %5122 = vmatprep.subr.bf16.mxu0 %v2654
        %5123 = vmatpush1.bf16.msra.mxu0 %v2653
        %5124 = vmatprep.subr.bf16.mxu0 0
        %5125 = vmatpush2.bf16.msra.mxu0 0
        %5126 = vmatprep.subr.bf16.mxu0 0
        %5127 = vmatpush2.bf16.msra.mxu0 0
        %5128 = vmatprep.subr.bf16.mxu0 0
        %5129 = vmatpush2.bf16.msra.mxu0 0
        %5130 = vmatprep.subr.bf16.mxu0 0
        %5131 = vmatpush2.bf16.msra.mxu0 0
        %5132 = vmatprep.subr.bf16.mxu0 0
        %5133 = vmatpush2.bf16.msra.mxu0 0
        %5134 = vmatprep.subr.bf16.mxu0 0
        %5135 = vmatpush2.bf16.msra.mxu0 0
        %5136 = vmatprep.subr.bf16.mxu0 0
        %5137 = vmatpush2.bf16.msra.mxu0 0
        %5138 = vmatprep.subr.bf16.mxu0 0
        %5139 = vmatpush2.bf16.msra.mxu0 0
        %5140 = vmatprep.mubr.bf16.mxu0 0
        %5141 = vmatmul.mubr.bf16.gmra.mxu0 %v3763
        %v5142 = vpop.f32.mrf.mxu0
        %v5143 = vadd.f32 0.0, %v5142
        %v5144 = vpop.f32.mrf.mxu0
        %v5145 = vadd.f32 0.0, %v5144
        %v5146 = vpop.f32.mrf.mxu0
        %v5147 = vpop.f32.mrf.mxu0
        %5148 = vdwg.mxu0
        %5149 = vmatprep.subr.bf16.mxu0 0
        %5150 = vmatpush1.bf16.msra.mxu0 0
        %5151 = vmatprep.subr.bf16.mxu0 0
        %5152 = vmatpush1.bf16.msra.mxu0 0
        %5153 = vmatprep.subr.bf16.mxu0 0
        %5154 = vmatpush1.bf16.msra.mxu0 0
        %5155 = vmatprep.subr.bf16.mxu0 0
        %5156 = vmatpush1.bf16.msra.mxu0 0
        %5157 = vmatprep.subr.bf16.mxu0 0
        %5158 = vmatpush1.bf16.msra.mxu0 0
        %5159 = vmatprep.subr.bf16.mxu0 %v3874
        %5160 = vmatpush1.bf16.msra.mxu0 %v3871
        %5161 = vmatprep.subr.bf16.mxu0 %v2884
        %5162 = vmatpush1.bf16.msra.mxu0 %v2883
        %5163 = vmatprep.subr.bf16.mxu0 %v2656
        %5164 = vmatpush1.bf16.msra.mxu0 %v2655
        %5165 = vmatprep.subr.bf16.mxu0 0
        %5166 = vmatpush2.bf16.msra.mxu0 0
        %5167 = vmatprep.subr.bf16.mxu0 0
        %5168 = vmatpush2.bf16.msra.mxu0 0
        %5169 = vmatprep.subr.bf16.mxu0 0
        %5170 = vmatpush2.bf16.msra.mxu0 0
        %5171 = vmatprep.subr.bf16.mxu0 0
        %5172 = vmatpush2.bf16.msra.mxu0 0
        %5173 = vmatprep.subr.bf16.mxu0 0
        %5174 = vmatpush2.bf16.msra.mxu0 0
        %5175 = vmatprep.subr.bf16.mxu0 0
        %5176 = vmatpush2.bf16.msra.mxu0 0
        %5177 = vmatprep.subr.bf16.mxu0 0
        %5178 = vmatpush2.bf16.msra.mxu0 0
        %5179 = vmatprep.subr.bf16.mxu0 0
        %5180 = vmatpush2.bf16.msra.mxu0 0
        %5181 = vmatprep.mubr.bf16.mxu0 0
        %5182 = vmatmul.mubr.bf16.gmra.mxu0 %v3763
        %v5183 = vpop.f32.mrf.mxu0
        %v5184 = vadd.f32 0.0, %v5183
        %v5185 = vpop.f32.mrf.mxu0
        %v5186 = vadd.f32 0.0, %v5185
        %v5187 = vpop.f32.mrf.mxu0
        %v5188 = vpop.f32.mrf.mxu0
        %5189 = vdwg.mxu0
        %5190 = vmatprep.subr.bf16.mxu0 0
        %5191 = vmatpush1.bf16.msra.mxu0 0
        %5192 = vmatprep.subr.bf16.mxu0 0
        %5193 = vmatpush1.bf16.msra.mxu0 0
        %5194 = vmatprep.subr.bf16.mxu0 0
        %5195 = vmatpush1.bf16.msra.mxu0 0
        %5196 = vmatprep.subr.bf16.mxu0 0
        %5197 = vmatpush1.bf16.msra.mxu0 0
        %5198 = vmatprep.subr.bf16.mxu0 0
        %5199 = vmatpush1.bf16.msra.mxu0 0
        %5200 = vmatprep.subr.bf16.mxu0 %v3880
        %5201 = vmatpush1.bf16.msra.mxu0 %v3877
        %5202 = vmatprep.subr.bf16.mxu0 %v2886
        %5203 = vmatpush1.bf16.msra.mxu0 %v2885
        %5204 = vmatprep.subr.bf16.mxu0 %v2658
        %5205 = vmatpush1.bf16.msra.mxu0 %v2657
        %5206 = vmatprep.subr.bf16.mxu0 0
        %5207 = vmatpush2.bf16.msra.mxu0 0
        %5208 = vmatprep.subr.bf16.mxu0 0
        %5209 = vmatpush2.bf16.msra.mxu0 0
        %5210 = vmatprep.subr.bf16.mxu0 0
        %5211 = vmatpush2.bf16.msra.mxu0 0
        %5212 = vmatprep.subr.bf16.mxu0 0
        %5213 = vmatpush2.bf16.msra.mxu0 0
        %5214 = vmatprep.subr.bf16.mxu0 0
        %5215 = vmatpush2.bf16.msra.mxu0 0
        %5216 = vmatprep.subr.bf16.mxu0 0
        %5217 = vmatpush2.bf16.msra.mxu0 0
        %5218 = vmatprep.subr.bf16.mxu0 0
        %5219 = vmatpush2.bf16.msra.mxu0 0
        %5220 = vmatprep.subr.bf16.mxu0 0
        %5221 = vmatpush2.bf16.msra.mxu0 0
        %5222 = vmatprep.mubr.bf16.mxu0 0
        %5223 = vmatmul.mubr.bf16.gmra.mxu0 %v3763
        %v5224 = vpop.f32.mrf.mxu0
        %v5225 = vadd.f32 0.0, %v5224
        %v5226 = vpop.f32.mrf.mxu0
        %v5227 = vadd.f32 0.0, %v5226
        %v5228 = vpop.f32.mrf.mxu0
        %v5229 = vpop.f32.mrf.mxu0
        %5230 = vdwg.mxu0
        %5231 = vmatprep.subr.bf16.mxu0 0
        %5232 = vmatpush1.bf16.msra.mxu0 0
        %5233 = vmatprep.subr.bf16.mxu0 0
        %5234 = vmatpush1.bf16.msra.mxu0 0
        %5235 = vmatprep.subr.bf16.mxu0 0
        %5236 = vmatpush1.bf16.msra.mxu0 0
        %5237 = vmatprep.subr.bf16.mxu0 0
        %5238 = vmatpush1.bf16.msra.mxu0 0
        %5239 = vmatprep.subr.bf16.mxu0 0
        %5240 = vmatpush1.bf16.msra.mxu0 0
        %5241 = vmatprep.subr.bf16.mxu0 %v3886
        %5242 = vmatpush1.bf16.msra.mxu0 %v3883
        %5243 = vmatprep.subr.bf16.mxu0 %v2888
        %5244 = vmatpush1.bf16.msra.mxu0 %v2887
        %5245 = vmatprep.subr.bf16.mxu0 %v2660
        %5246 = vmatpush1.bf16.msra.mxu0 %v2659
        %5247 = vmatprep.subr.bf16.mxu0 0
        %5248 = vmatpush2.bf16.msra.mxu0 0
        %5249 = vmatprep.subr.bf16.mxu0 0
        %5250 = vmatpush2.bf16.msra.mxu0 0
        %5251 = vmatprep.subr.bf16.mxu0 0
        %5252 = vmatpush2.bf16.msra.mxu0 0
        %5253 = vmatprep.subr.bf16.mxu0 0
        %5254 = vmatpush2.bf16.msra.mxu0 0
        %5255 = vmatprep.subr.bf16.mxu0 0
        %5256 = vmatpush2.bf16.msra.mxu0 0
        %5257 = vmatprep.subr.bf16.mxu0 0
        %5258 = vmatpush2.bf16.msra.mxu0 0
        %5259 = vmatprep.subr.bf16.mxu0 0
        %5260 = vmatpush2.bf16.msra.mxu0 0
        %5261 = vmatprep.subr.bf16.mxu0 0
        %5262 = vmatpush2.bf16.msra.mxu0 0
        %5263 = vmatprep.mubr.bf16.mxu0 0
        %5264 = vmatmul.mubr.bf16.gmra.mxu0 %v3763
        %v5265 = vpop.f32.mrf.mxu0
        %v5266 = vadd.f32 0.0, %v5265
        %v5267 = vpop.f32.mrf.mxu0
        %v5268 = vadd.f32 0.0, %v5267
        %v5269 = vpop.f32.mrf.mxu0
        %v5270 = vpop.f32.mrf.mxu0
        %5271 = vdwg.mxu0
        %5272 = vmatprep.subr.bf16.mxu0 0
        %5273 = vmatpush1.bf16.msra.mxu0 0
        %5274 = vmatprep.subr.bf16.mxu0 0
        %5275 = vmatpush1.bf16.msra.mxu0 0
        %5276 = vmatprep.subr.bf16.mxu0 0
        %5277 = vmatpush1.bf16.msra.mxu0 0
        %5278 = vmatprep.subr.bf16.mxu0 0
        %5279 = vmatpush1.bf16.msra.mxu0 0
        %5280 = vmatprep.subr.bf16.mxu0 0
        %5281 = vmatpush1.bf16.msra.mxu0 0
        %5282 = vmatprep.subr.bf16.mxu0 %v3892
        %5283 = vmatpush1.bf16.msra.mxu0 %v3889
        %5284 = vmatprep.subr.bf16.mxu0 %v2890
        %5285 = vmatpush1.bf16.msra.mxu0 %v2889
        %5286 = vmatprep.subr.bf16.mxu0 %v2662
        %5287 = vmatpush1.bf16.msra.mxu0 %v2661
        %5288 = vmatprep.subr.bf16.mxu0 0
        %5289 = vmatpush2.bf16.msra.mxu0 0
        %5290 = vmatprep.subr.bf16.mxu0 0
        %5291 = vmatpush2.bf16.msra.mxu0 0
        %5292 = vmatprep.subr.bf16.mxu0 0
        %5293 = vmatpush2.bf16.msra.mxu0 0
        %5294 = vmatprep.subr.bf16.mxu0 0
        %5295 = vmatpush2.bf16.msra.mxu0 0
        %5296 = vmatprep.subr.bf16.mxu0 0
        %5297 = vmatpush2.bf16.msra.mxu0 0
        %5298 = vmatprep.subr.bf16.mxu0 0
        %5299 = vmatpush2.bf16.msra.mxu0 0
        %5300 = vmatprep.subr.bf16.mxu0 0
        %5301 = vmatpush2.bf16.msra.mxu0 0
        %5302 = vmatprep.subr.bf16.mxu0 0
        %5303 = vmatpush2.bf16.msra.mxu0 0
        %5304 = vmatprep.mubr.bf16.mxu0 0
        %5305 = vmatmul.mubr.bf16.gmra.mxu0 %v3763
        %v5306 = vpop.f32.mrf.mxu0
        %v5307 = vadd.f32 0.0, %v5306
        %v5308 = vpop.f32.mrf.mxu0
        %v5309 = vadd.f32 0.0, %v5308
        %v5310 = vpop.f32.mrf.mxu0
        %v5311 = vpop.f32.mrf.mxu0
        %5312 = vdwg.mxu0
        %5313 = vmatprep.subr.bf16.mxu0 0
        %5314 = vmatpush1.bf16.msra.mxu0 0
        %5315 = vmatprep.subr.bf16.mxu0 0
        %5316 = vmatpush1.bf16.msra.mxu0 0
        %5317 = vmatprep.subr.bf16.mxu0 0
        %5318 = vmatpush1.bf16.msra.mxu0 0
        %5319 = vmatprep.subr.bf16.mxu0 0
        %5320 = vmatpush1.bf16.msra.mxu0 0
        %5321 = vmatprep.subr.bf16.mxu0 0
        %5322 = vmatpush1.bf16.msra.mxu0 0
        %5323 = vmatprep.subr.bf16.mxu0 %v3898
        %5324 = vmatpush1.bf16.msra.mxu0 %v3895
        %5325 = vmatprep.subr.bf16.mxu0 %v2892
        %5326 = vmatpush1.bf16.msra.mxu0 %v2891
        %5327 = vmatprep.subr.bf16.mxu0 %v2664
        %5328 = vmatpush1.bf16.msra.mxu0 %v2663
        %5329 = vmatprep.subr.bf16.mxu0 0
        %5330 = vmatpush2.bf16.msra.mxu0 0
        %5331 = vmatprep.subr.bf16.mxu0 0
        %5332 = vmatpush2.bf16.msra.mxu0 0
        %5333 = vmatprep.subr.bf16.mxu0 0
        %5334 = vmatpush2.bf16.msra.mxu0 0
        %5335 = vmatprep.subr.bf16.mxu0 0
        %5336 = vmatpush2.bf16.msra.mxu0 0
        %5337 = vmatprep.subr.bf16.mxu0 0
        %5338 = vmatpush2.bf16.msra.mxu0 0
        %5339 = vmatprep.subr.bf16.mxu0 0
        %5340 = vmatpush2.bf16.msra.mxu0 0
        %5341 = vmatprep.subr.bf16.mxu0 0
        %5342 = vmatpush2.bf16.msra.mxu0 0
        %5343 = vmatprep.subr.bf16.mxu0 0
        %5344 = vmatpush2.bf16.msra.mxu0 0
        %5345 = vmatprep.mubr.bf16.mxu0 0
        %5346 = vmatmul.mubr.bf16.gmra.mxu0 %v3763
        %v5347 = vpop.f32.mrf.mxu0
        %v5348 = vadd.f32 0.0, %v5347
        %v5349 = vpop.f32.mrf.mxu0
        %v5350 = vadd.f32 0.0, %v5349
        %v5351 = vpop.f32.mrf.mxu0
        %v5352 = vpop.f32.mrf.mxu0
        %5353 = vdwg.mxu0
        %5354 = vmatprep.subr.bf16.mxu0 0
        %5355 = vmatpush1.bf16.msra.mxu0 0
        %5356 = vmatprep.subr.bf16.mxu0 0
        %5357 = vmatpush1.bf16.msra.mxu0 0
        %5358 = vmatprep.subr.bf16.mxu0 0
        %5359 = vmatpush1.bf16.msra.mxu0 0
        %5360 = vmatprep.subr.bf16.mxu0 0
        %5361 = vmatpush1.bf16.msra.mxu0 0
        %5362 = vmatprep.subr.bf16.mxu0 0
        %5363 = vmatpush1.bf16.msra.mxu0 0
        %5364 = vmatprep.subr.bf16.mxu0 %v3904
        %5365 = vmatpush1.bf16.msra.mxu0 %v3901
        %5366 = vmatprep.subr.bf16.mxu0 %v2894
        %5367 = vmatpush1.bf16.msra.mxu0 %v2893
        %5368 = vmatprep.subr.bf16.mxu0 %v2666
        %5369 = vmatpush1.bf16.msra.mxu0 %v2665
        %5370 = vmatprep.subr.bf16.mxu0 0
        %5371 = vmatpush2.bf16.msra.mxu0 0
        %5372 = vmatprep.subr.bf16.mxu0 0
        %5373 = vmatpush2.bf16.msra.mxu0 0
        %5374 = vmatprep.subr.bf16.mxu0 0
        %5375 = vmatpush2.bf16.msra.mxu0 0
        %5376 = vmatprep.subr.bf16.mxu0 0
        %5377 = vmatpush2.bf16.msra.mxu0 0
        %5378 = vmatprep.subr.bf16.mxu0 0
        %5379 = vmatpush2.bf16.msra.mxu0 0
        %5380 = vmatprep.subr.bf16.mxu0 0
        %5381 = vmatpush2.bf16.msra.mxu0 0
        %5382 = vmatprep.subr.bf16.mxu0 0
        %5383 = vmatpush2.bf16.msra.mxu0 0
        %5384 = vmatprep.subr.bf16.mxu0 0
        %5385 = vmatpush2.bf16.msra.mxu0 0
        %5386 = vmatprep.mubr.bf16.mxu0 0
        %5387 = vmatmul.mubr.bf16.gmra.mxu0 %v3763
        %v5388 = vpop.f32.mrf.mxu0
        %v5389 = vadd.f32 0.0, %v5388
        %v5390 = vpop.f32.mrf.mxu0
        %v5391 = vadd.f32 0.0, %v5390
        %v5392 = vpop.f32.mrf.mxu0
        %v5393 = vpop.f32.mrf.mxu0
        %5394 = vdwg.mxu0
        %5395 = vmatprep.subr.bf16.mxu0 0
        %5396 = vmatpush1.bf16.msra.mxu0 0
        %5397 = vmatprep.subr.bf16.mxu0 0
        %5398 = vmatpush1.bf16.msra.mxu0 0
        %5399 = vmatprep.subr.bf16.mxu0 0
        %5400 = vmatpush1.bf16.msra.mxu0 0
        %5401 = vmatprep.subr.bf16.mxu0 0
        %5402 = vmatpush1.bf16.msra.mxu0 0
        %5403 = vmatprep.subr.bf16.mxu0 0
        %5404 = vmatpush1.bf16.msra.mxu0 0
        %5405 = vmatprep.subr.bf16.mxu0 %v3910
        %5406 = vmatpush1.bf16.msra.mxu0 %v3907
        %5407 = vmatprep.subr.bf16.mxu0 %v2896
        %5408 = vmatpush1.bf16.msra.mxu0 %v2895
        %5409 = vmatprep.subr.bf16.mxu0 %v2668
        %5410 = vmatpush1.bf16.msra.mxu0 %v2667
        %5411 = vmatprep.subr.bf16.mxu0 0
        %5412 = vmatpush2.bf16.msra.mxu0 0
        %5413 = vmatprep.subr.bf16.mxu0 0
        %5414 = vmatpush2.bf16.msra.mxu0 0
        %5415 = vmatprep.subr.bf16.mxu0 0
        %5416 = vmatpush2.bf16.msra.mxu0 0
        %5417 = vmatprep.subr.bf16.mxu0 0
        %5418 = vmatpush2.bf16.msra.mxu0 0
        %5419 = vmatprep.subr.bf16.mxu0 0
        %5420 = vmatpush2.bf16.msra.mxu0 0
        %5421 = vmatprep.subr.bf16.mxu0 0
        %5422 = vmatpush2.bf16.msra.mxu0 0
        %5423 = vmatprep.subr.bf16.mxu0 0
        %5424 = vmatpush2.bf16.msra.mxu0 0
        %5425 = vmatprep.subr.bf16.mxu0 0
        %5426 = vmatpush2.bf16.msra.mxu0 0
        %5427 = vmatprep.mubr.bf16.mxu0 0
        %5428 = vmatmul.mubr.bf16.gmra.mxu0 %v3763
        %v5429 = vpop.f32.mrf.mxu0
        %v5430 = vadd.f32 0.0, %v5429
        %v5431 = vpop.f32.mrf.mxu0
        %v5432 = vadd.f32 0.0, %v5431
        %v5433 = vpop.f32.mrf.mxu0
        %v5434 = vpop.f32.mrf.mxu0
        %5435 = vdwg.mxu0
        %5436 = vmatprep.subr.bf16.mxu0 0
        %5437 = vmatpush1.bf16.msra.mxu0 0
        %5438 = vmatprep.subr.bf16.mxu0 0
        %5439 = vmatpush1.bf16.msra.mxu0 0
        %5440 = vmatprep.subr.bf16.mxu0 0
        %5441 = vmatpush1.bf16.msra.mxu0 0
        %5442 = vmatprep.subr.bf16.mxu0 0
        %5443 = vmatpush1.bf16.msra.mxu0 0
        %5444 = vmatprep.subr.bf16.mxu0 0
        %5445 = vmatpush1.bf16.msra.mxu0 0
        %5446 = vmatprep.subr.bf16.mxu0 %v3916
        %5447 = vmatpush1.bf16.msra.mxu0 %v3913
        %5448 = vmatprep.subr.bf16.mxu0 %v2898
        %5449 = vmatpush1.bf16.msra.mxu0 %v2897
        %5450 = vmatprep.subr.bf16.mxu0 %v2670
        %5451 = vmatpush1.bf16.msra.mxu0 %v2669
        %5452 = vmatprep.subr.bf16.mxu0 0
        %5453 = vmatpush2.bf16.msra.mxu0 0
        %5454 = vmatprep.subr.bf16.mxu0 0
        %5455 = vmatpush2.bf16.msra.mxu0 0
        %5456 = vmatprep.subr.bf16.mxu0 0
        %5457 = vmatpush2.bf16.msra.mxu0 0
        %5458 = vmatprep.subr.bf16.mxu0 0
        %5459 = vmatpush2.bf16.msra.mxu0 0
        %5460 = vmatprep.subr.bf16.mxu0 0
        %5461 = vmatpush2.bf16.msra.mxu0 0
        %5462 = vmatprep.subr.bf16.mxu0 0
        %5463 = vmatpush2.bf16.msra.mxu0 0
        %5464 = vmatprep.subr.bf16.mxu0 0
        %5465 = vmatpush2.bf16.msra.mxu0 0
        %5466 = vmatprep.subr.bf16.mxu0 0
        %5467 = vmatpush2.bf16.msra.mxu0 0
        %5468 = vmatprep.mubr.bf16.mxu0 0
        %5469 = vmatmul.mubr.bf16.gmra.mxu0 %v3763
        %v5470 = vpop.f32.mrf.mxu0
        %v5471 = vadd.f32 0.0, %v5470
        %v5472 = vpop.f32.mrf.mxu0
        %v5473 = vadd.f32 0.0, %v5472
        %v5474 = vpop.f32.mrf.mxu0
        %v5475 = vpop.f32.mrf.mxu0
        %5476 = vdwg.mxu0
        %5477 = vmatprep.subr.bf16.mxu0 0
        %5478 = vmatpush1.bf16.msra.mxu0 0
        %5479 = vmatprep.subr.bf16.mxu0 0
        %5480 = vmatpush1.bf16.msra.mxu0 0
        %5481 = vmatprep.subr.bf16.mxu0 0
        %5482 = vmatpush1.bf16.msra.mxu0 0
        %5483 = vmatprep.subr.bf16.mxu0 0
        %5484 = vmatpush1.bf16.msra.mxu0 0
        %5485 = vmatprep.subr.bf16.mxu0 0
        %5486 = vmatpush1.bf16.msra.mxu0 0
        %5487 = vmatprep.subr.bf16.mxu0 %v3922
        %5488 = vmatpush1.bf16.msra.mxu0 %v3919
        %5489 = vmatprep.subr.bf16.mxu0 %v2900
        %5490 = vmatpush1.bf16.msra.mxu0 %v2899
        %5491 = vmatprep.subr.bf16.mxu0 %v2672
        %5492 = vmatpush1.bf16.msra.mxu0 %v2671
        %5493 = vmatprep.subr.bf16.mxu0 0
        %5494 = vmatpush2.bf16.msra.mxu0 0
        %5495 = vmatprep.subr.bf16.mxu0 0
        %5496 = vmatpush2.bf16.msra.mxu0 0
        %5497 = vmatprep.subr.bf16.mxu0 0
        %5498 = vmatpush2.bf16.msra.mxu0 0
        %5499 = vmatprep.subr.bf16.mxu0 0
        %5500 = vmatpush2.bf16.msra.mxu0 0
        %5501 = vmatprep.subr.bf16.mxu0 0
        %5502 = vmatpush2.bf16.msra.mxu0 0
        %5503 = vmatprep.subr.bf16.mxu0 0
        %5504 = vmatpush2.bf16.msra.mxu0 0
        %5505 = vmatprep.subr.bf16.mxu0 0
        %5506 = vmatpush2.bf16.msra.mxu0 0
        %5507 = vmatprep.subr.bf16.mxu0 0
        %5508 = vmatpush2.bf16.msra.mxu0 0
        %5509 = vmatprep.mubr.bf16.mxu0 0
        %5510 = vmatmul.mubr.bf16.gmra.mxu0 %v3763
        %v5511 = vpop.f32.mrf.mxu0
        %v5512 = vadd.f32 0.0, %v5511
        %v5513 = vpop.f32.mrf.mxu0
        %v5514 = vadd.f32 0.0, %v5513
        %v5515 = vpop.f32.mrf.mxu0
        %v5516 = vpop.f32.mrf.mxu0
        %5517 = vdwg.mxu0
        %5518 = vmatprep.subr.bf16.mxu0 0
        %5519 = vmatpush1.bf16.msra.mxu0 0
        %5520 = vmatprep.subr.bf16.mxu0 0
        %5521 = vmatpush1.bf16.msra.mxu0 0
        %5522 = vmatprep.subr.bf16.mxu0 0
        %5523 = vmatpush1.bf16.msra.mxu0 0
        %5524 = vmatprep.subr.bf16.mxu0 0
        %5525 = vmatpush1.bf16.msra.mxu0 0
        %5526 = vmatprep.subr.bf16.mxu0 0
        %5527 = vmatpush1.bf16.msra.mxu0 0
        %5528 = vmatprep.subr.bf16.mxu0 %v3928
        %5529 = vmatpush1.bf16.msra.mxu0 %v3925
        %5530 = vmatprep.subr.bf16.mxu0 %v2902
        %5531 = vmatpush1.bf16.msra.mxu0 %v2901
        %5532 = vmatprep.subr.bf16.mxu0 %v2674
        %5533 = vmatpush1.bf16.msra.mxu0 %v2673
        %5534 = vmatprep.subr.bf16.mxu0 0
        %5535 = vmatpush2.bf16.msra.mxu0 0
        %5536 = vmatprep.subr.bf16.mxu0 0
        %5537 = vmatpush2.bf16.msra.mxu0 0
        %5538 = vmatprep.subr.bf16.mxu0 0
        %5539 = vmatpush2.bf16.msra.mxu0 0
        %5540 = vmatprep.subr.bf16.mxu0 0
        %5541 = vmatpush2.bf16.msra.mxu0 0
        %5542 = vmatprep.subr.bf16.mxu0 0
        %5543 = vmatpush2.bf16.msra.mxu0 0
        %5544 = vmatprep.subr.bf16.mxu0 0
        %5545 = vmatpush2.bf16.msra.mxu0 0
        %5546 = vmatprep.subr.bf16.mxu0 0
        %5547 = vmatpush2.bf16.msra.mxu0 0
        %5548 = vmatprep.subr.bf16.mxu0 0
        %5549 = vmatpush2.bf16.msra.mxu0 0
        %5550 = vmatprep.mubr.bf16.mxu0 0
        %5551 = vmatmul.mubr.bf16.gmra.mxu0 %v3763
        %v5552 = vpop.f32.mrf.mxu0
        %v5553 = vadd.f32 0.0, %v5552
        %v5554 = vpop.f32.mrf.mxu0
        %v5555 = vadd.f32 0.0, %v5554
        %v5556 = vpop.f32.mrf.mxu0
        %v5557 = vpop.f32.mrf.mxu0
        %5558 = vdwg.mxu0
        %5559 = vmatprep.subr.bf16.mxu0 0
        %5560 = vmatpush1.bf16.msra.mxu0 0
        %5561 = vmatprep.subr.bf16.mxu0 0
        %5562 = vmatpush1.bf16.msra.mxu0 0
        %5563 = vmatprep.subr.bf16.mxu0 0
        %5564 = vmatpush1.bf16.msra.mxu0 0
        %5565 = vmatprep.subr.bf16.mxu0 0
        %5566 = vmatpush1.bf16.msra.mxu0 0
        %5567 = vmatprep.subr.bf16.mxu0 0
        %5568 = vmatpush1.bf16.msra.mxu0 0
        %5569 = vmatprep.subr.bf16.mxu0 %v3934
        %5570 = vmatpush1.bf16.msra.mxu0 %v3931
        %5571 = vmatprep.subr.bf16.mxu0 %v2904
        %5572 = vmatpush1.bf16.msra.mxu0 %v2903
        %5573 = vmatprep.subr.bf16.mxu0 %v2676
        %5574 = vmatpush1.bf16.msra.mxu0 %v2675
        %5575 = vmatprep.subr.bf16.mxu0 0
        %5576 = vmatpush2.bf16.msra.mxu0 0
        %5577 = vmatprep.subr.bf16.mxu0 0
        %5578 = vmatpush2.bf16.msra.mxu0 0
        %5579 = vmatprep.subr.bf16.mxu0 0
        %5580 = vmatpush2.bf16.msra.mxu0 0
        %5581 = vmatprep.subr.bf16.mxu0 0
        %5582 = vmatpush2.bf16.msra.mxu0 0
        %5583 = vmatprep.subr.bf16.mxu0 0
        %5584 = vmatpush2.bf16.msra.mxu0 0
        %5585 = vmatprep.subr.bf16.mxu0 0
        %5586 = vmatpush2.bf16.msra.mxu0 0
        %5587 = vmatprep.subr.bf16.mxu0 0
        %5588 = vmatpush2.bf16.msra.mxu0 0
        %5589 = vmatprep.subr.bf16.mxu0 0
        %5590 = vmatpush2.bf16.msra.mxu0 0
        %5591 = vmatprep.mubr.bf16.mxu0 0
        %5592 = vmatmul.mubr.bf16.gmra.mxu0 %v3763
        %v5593 = vpop.f32.mrf.mxu0
        %v5594 = vadd.f32 0.0, %v5593
        %v5595 = vpop.f32.mrf.mxu0
        %v5596 = vadd.f32 0.0, %v5595
        %v5597 = vpop.f32.mrf.mxu0
        %v5598 = vpop.f32.mrf.mxu0
        %5599 = vdwg.mxu0
        %5600 = vmatprep.subr.bf16.mxu0 0
        %5601 = vmatpush1.bf16.msra.mxu0 0
        %5602 = vmatprep.subr.bf16.mxu0 0
        %5603 = vmatpush1.bf16.msra.mxu0 0
        %5604 = vmatprep.subr.bf16.mxu0 0
        %5605 = vmatpush1.bf16.msra.mxu0 0
        %5606 = vmatprep.subr.bf16.mxu0 0
        %5607 = vmatpush1.bf16.msra.mxu0 0
        %5608 = vmatprep.subr.bf16.mxu0 0
        %5609 = vmatpush1.bf16.msra.mxu0 0
        %5610 = vmatprep.subr.bf16.mxu0 %v3940
        %5611 = vmatpush1.bf16.msra.mxu0 %v3937
        %5612 = vmatprep.subr.bf16.mxu0 %v2906
        %5613 = vmatpush1.bf16.msra.mxu0 %v2905
        %5614 = vmatprep.subr.bf16.mxu0 %v2678
        %5615 = vmatpush1.bf16.msra.mxu0 %v2677
        %5616 = vmatprep.subr.bf16.mxu0 0
        %5617 = vmatpush2.bf16.msra.mxu0 0
        %5618 = vmatprep.subr.bf16.mxu0 0
        %5619 = vmatpush2.bf16.msra.mxu0 0
        %5620 = vmatprep.subr.bf16.mxu0 0
        %5621 = vmatpush2.bf16.msra.mxu0 0
        %5622 = vmatprep.subr.bf16.mxu0 0
        %5623 = vmatpush2.bf16.msra.mxu0 0
        %5624 = vmatprep.subr.bf16.mxu0 0
        %5625 = vmatpush2.bf16.msra.mxu0 0
        %5626 = vmatprep.subr.bf16.mxu0 0
        %5627 = vmatpush2.bf16.msra.mxu0 0
        %5628 = vmatprep.subr.bf16.mxu0 0
        %5629 = vmatpush2.bf16.msra.mxu0 0
        %5630 = vmatprep.subr.bf16.mxu0 0
        %5631 = vmatpush2.bf16.msra.mxu0 0
        %5632 = vmatprep.mubr.bf16.mxu0 0
        %5633 = vmatmul.mubr.bf16.gmra.mxu0 %v3763
        %v5634 = vpop.f32.mrf.mxu0
        %v5635 = vadd.f32 0.0, %v5634
        %v5636 = vpop.f32.mrf.mxu0
        %v5637 = vadd.f32 0.0, %v5636
        %v5638 = vpop.f32.mrf.mxu0
        %v5639 = vpop.f32.mrf.mxu0
        %5640 = vdwg.mxu0
        %5641 = vmatprep.subr.bf16.mxu0 0
        %5642 = vmatpush1.bf16.msra.mxu0 0
        %5643 = vmatprep.subr.bf16.mxu0 0
        %5644 = vmatpush1.bf16.msra.mxu0 0
        %5645 = vmatprep.subr.bf16.mxu0 0
        %5646 = vmatpush1.bf16.msra.mxu0 0
        %5647 = vmatprep.subr.bf16.mxu0 0
        %5648 = vmatpush1.bf16.msra.mxu0 0
        %5649 = vmatprep.subr.bf16.mxu0 0
        %5650 = vmatpush1.bf16.msra.mxu0 0
        %5651 = vmatprep.subr.bf16.mxu0 %v3946
        %5652 = vmatpush1.bf16.msra.mxu0 %v3943
        %5653 = vmatprep.subr.bf16.mxu0 %v2908
        %5654 = vmatpush1.bf16.msra.mxu0 %v2907
        %5655 = vmatprep.subr.bf16.mxu0 %v2680
        %5656 = vmatpush1.bf16.msra.mxu0 %v2679
        %5657 = vmatprep.subr.bf16.mxu0 0
        %5658 = vmatpush2.bf16.msra.mxu0 0
        %5659 = vmatprep.subr.bf16.mxu0 0
        %5660 = vmatpush2.bf16.msra.mxu0 0
        %5661 = vmatprep.subr.bf16.mxu0 0
        %5662 = vmatpush2.bf16.msra.mxu0 0
        %5663 = vmatprep.subr.bf16.mxu0 0
        %5664 = vmatpush2.bf16.msra.mxu0 0
        %5665 = vmatprep.subr.bf16.mxu0 0
        %5666 = vmatpush2.bf16.msra.mxu0 0
        %5667 = vmatprep.subr.bf16.mxu0 0
        %5668 = vmatpush2.bf16.msra.mxu0 0
        %5669 = vmatprep.subr.bf16.mxu0 0
        %5670 = vmatpush2.bf16.msra.mxu0 0
        %5671 = vmatprep.subr.bf16.mxu0 0
        %5672 = vmatpush2.bf16.msra.mxu0 0
        %5673 = vmatprep.mubr.bf16.mxu0 0
        %5674 = vmatmul.mubr.bf16.gmra.mxu0 %v3763
        %v5675 = vpop.f32.mrf.mxu0
        %v5676 = vadd.f32 0.0, %v5675
        %v5677 = vpop.f32.mrf.mxu0
        %v5678 = vadd.f32 0.0, %v5677
        %v5679 = vpop.f32.mrf.mxu0
        %v5680 = vpop.f32.mrf.mxu0
        %5681 = vdwg.mxu0
        %5682 = vmatprep.subr.bf16.mxu0 0
        %5683 = vmatpush1.bf16.msra.mxu0 0
        %5684 = vmatprep.subr.bf16.mxu0 0
        %5685 = vmatpush1.bf16.msra.mxu0 0
        %5686 = vmatprep.subr.bf16.mxu0 0
        %5687 = vmatpush1.bf16.msra.mxu0 0
        %5688 = vmatprep.subr.bf16.mxu0 0
        %5689 = vmatpush1.bf16.msra.mxu0 0
        %5690 = vmatprep.subr.bf16.mxu0 0
        %5691 = vmatpush1.bf16.msra.mxu0 0
        %5692 = vmatprep.subr.bf16.mxu0 %v3952
        %5693 = vmatpush1.bf16.msra.mxu0 %v3949
        %5694 = vmatprep.subr.bf16.mxu0 %v2910
        %5695 = vmatpush1.bf16.msra.mxu0 %v2909
        %5696 = vmatprep.subr.bf16.mxu0 %v2682
        %5697 = vmatpush1.bf16.msra.mxu0 %v2681
        %5698 = vmatprep.subr.bf16.mxu0 0
        %5699 = vmatpush2.bf16.msra.mxu0 0
        %5700 = vmatprep.subr.bf16.mxu0 0
        %5701 = vmatpush2.bf16.msra.mxu0 0
        %5702 = vmatprep.subr.bf16.mxu0 0
        %5703 = vmatpush2.bf16.msra.mxu0 0
        %5704 = vmatprep.subr.bf16.mxu0 0
        %5705 = vmatpush2.bf16.msra.mxu0 0
        %5706 = vmatprep.subr.bf16.mxu0 0
        %5707 = vmatpush2.bf16.msra.mxu0 0
        %5708 = vmatprep.subr.bf16.mxu0 0
        %5709 = vmatpush2.bf16.msra.mxu0 0
        %5710 = vmatprep.subr.bf16.mxu0 0
        %5711 = vmatpush2.bf16.msra.mxu0 0
        %5712 = vmatprep.subr.bf16.mxu0 0
        %5713 = vmatpush2.bf16.msra.mxu0 0
        %5714 = vmatprep.mubr.bf16.mxu0 0
        %5715 = vmatmul.mubr.bf16.gmra.mxu0 %v3763
        %v5716 = vpop.f32.mrf.mxu0
        %v5717 = vadd.f32 0.0, %v5716
        %v5718 = vpop.f32.mrf.mxu0
        %v5719 = vadd.f32 0.0, %v5718
        %v5720 = vpop.f32.mrf.mxu0
        %v5721 = vpop.f32.mrf.mxu0
        %5722 = vdwg.mxu0
        %5723 = vmatprep.subr.bf16.mxu0 0
        %5724 = vmatpush1.bf16.msra.mxu0 0
        %5725 = vmatprep.subr.bf16.mxu0 0
        %5726 = vmatpush1.bf16.msra.mxu0 0
        %5727 = vmatprep.subr.bf16.mxu0 0
        %5728 = vmatpush1.bf16.msra.mxu0 0
        %5729 = vmatprep.subr.bf16.mxu0 0
        %5730 = vmatpush1.bf16.msra.mxu0 0
        %5731 = vmatprep.subr.bf16.mxu0 0
        %5732 = vmatpush1.bf16.msra.mxu0 0
        %5733 = vmatprep.subr.bf16.mxu0 %v3958
        %5734 = vmatpush1.bf16.msra.mxu0 %v3955
        %5735 = vmatprep.subr.bf16.mxu0 %v2912
        %5736 = vmatpush1.bf16.msra.mxu0 %v2911
        %5737 = vmatprep.subr.bf16.mxu0 %v2684
        %5738 = vmatpush1.bf16.msra.mxu0 %v2683
        %5739 = vmatprep.subr.bf16.mxu0 0
        %5740 = vmatpush2.bf16.msra.mxu0 0
        %5741 = vmatprep.subr.bf16.mxu0 0
        %5742 = vmatpush2.bf16.msra.mxu0 0
        %5743 = vmatprep.subr.bf16.mxu0 0
        %5744 = vmatpush2.bf16.msra.mxu0 0
        %5745 = vmatprep.subr.bf16.mxu0 0
        %5746 = vmatpush2.bf16.msra.mxu0 0
        %5747 = vmatprep.subr.bf16.mxu0 0
        %5748 = vmatpush2.bf16.msra.mxu0 0
        %5749 = vmatprep.subr.bf16.mxu0 0
        %5750 = vmatpush2.bf16.msra.mxu0 0
        %5751 = vmatprep.subr.bf16.mxu0 0
        %5752 = vmatpush2.bf16.msra.mxu0 0
        %5753 = vmatprep.subr.bf16.mxu0 0
        %5754 = vmatpush2.bf16.msra.mxu0 0
        %5755 = vmatprep.mubr.bf16.mxu0 0
        %5756 = vmatmul.mubr.bf16.gmra.mxu0 %v3763
        %v5757 = vpop.f32.mrf.mxu0
        %v5758 = vadd.f32 0.0, %v5757
        %v5759 = vpop.f32.mrf.mxu0
        %v5760 = vadd.f32 0.0, %v5759
        %v5761 = vpop.f32.mrf.mxu0
        %v5762 = vpop.f32.mrf.mxu0
        %5763 = vdwg.mxu0
        %5764 = vmatprep.subr.bf16.mxu0 0
        %5765 = vmatpush1.bf16.msra.mxu0 0
        %5766 = vmatprep.subr.bf16.mxu0 0
        %5767 = vmatpush1.bf16.msra.mxu0 0
        %5768 = vmatprep.subr.bf16.mxu0 0
        %5769 = vmatpush1.bf16.msra.mxu0 0
        %5770 = vmatprep.subr.bf16.mxu0 0
        %5771 = vmatpush1.bf16.msra.mxu0 0
        %5772 = vmatprep.subr.bf16.mxu0 0
        %5773 = vmatpush1.bf16.msra.mxu0 0
        %5774 = vmatprep.subr.bf16.mxu0 %v3964
        %5775 = vmatpush1.bf16.msra.mxu0 %v3961
        %5776 = vmatprep.subr.bf16.mxu0 %v2914
        %5777 = vmatpush1.bf16.msra.mxu0 %v2913
        %5778 = vmatprep.subr.bf16.mxu0 %v2686
        %5779 = vmatpush1.bf16.msra.mxu0 %v2685
        %5780 = vmatprep.subr.bf16.mxu0 0
        %5781 = vmatpush2.bf16.msra.mxu0 0
        %5782 = vmatprep.subr.bf16.mxu0 0
        %5783 = vmatpush2.bf16.msra.mxu0 0
        %5784 = vmatprep.subr.bf16.mxu0 0
        %5785 = vmatpush2.bf16.msra.mxu0 0
        %5786 = vmatprep.subr.bf16.mxu0 0
        %5787 = vmatpush2.bf16.msra.mxu0 0
        %5788 = vmatprep.subr.bf16.mxu0 0
        %5789 = vmatpush2.bf16.msra.mxu0 0
        %5790 = vmatprep.subr.bf16.mxu0 0
        %5791 = vmatpush2.bf16.msra.mxu0 0
        %5792 = vmatprep.subr.bf16.mxu0 0
        %5793 = vmatpush2.bf16.msra.mxu0 0
        %5794 = vmatprep.subr.bf16.mxu0 0
        %5795 = vmatpush2.bf16.msra.mxu0 0
        %5796 = vmatprep.mubr.bf16.mxu0 0
        %5797 = vmatmul.mubr.bf16.gmra.mxu0 %v3763
        %v5798 = vpop.f32.mrf.mxu0
        %v5799 = vadd.f32 0.0, %v5798
        %v5800 = vpop.f32.mrf.mxu0
        %v5801 = vadd.f32 0.0, %v5800
        %v5802 = vpop.f32.mrf.mxu0
        %v5803 = vpop.f32.mrf.mxu0
        %5804 = vdwg.mxu0
        %5805 = vmatprep.subr.bf16.mxu0 0
        %5806 = vmatpush1.bf16.msra.mxu0 0
        %5807 = vmatprep.subr.bf16.mxu0 0
        %5808 = vmatpush1.bf16.msra.mxu0 0
        %5809 = vmatprep.subr.bf16.mxu0 0
        %5810 = vmatpush1.bf16.msra.mxu0 0
        %5811 = vmatprep.subr.bf16.mxu0 0
        %5812 = vmatpush1.bf16.msra.mxu0 0
        %5813 = vmatprep.subr.bf16.mxu0 0
        %5814 = vmatpush1.bf16.msra.mxu0 0
        %5815 = vmatprep.subr.bf16.mxu0 %v3970
        %5816 = vmatpush1.bf16.msra.mxu0 %v3967
        %5817 = vmatprep.subr.bf16.mxu0 %v2916
        %5818 = vmatpush1.bf16.msra.mxu0 %v2915
        %5819 = vmatprep.subr.bf16.mxu0 %v2688
        %5820 = vmatpush1.bf16.msra.mxu0 %v2687
        %5821 = vmatprep.subr.bf16.mxu0 0
        %5822 = vmatpush2.bf16.msra.mxu0 0
        %5823 = vmatprep.subr.bf16.mxu0 0
        %5824 = vmatpush2.bf16.msra.mxu0 0
        %5825 = vmatprep.subr.bf16.mxu0 0
        %5826 = vmatpush2.bf16.msra.mxu0 0
        %5827 = vmatprep.subr.bf16.mxu0 0
        %5828 = vmatpush2.bf16.msra.mxu0 0
        %5829 = vmatprep.subr.bf16.mxu0 0
        %5830 = vmatpush2.bf16.msra.mxu0 0
        %5831 = vmatprep.subr.bf16.mxu0 0
        %5832 = vmatpush2.bf16.msra.mxu0 0
        %5833 = vmatprep.subr.bf16.mxu0 0
        %5834 = vmatpush2.bf16.msra.mxu0 0
        %5835 = vmatprep.subr.bf16.mxu0 0
        %5836 = vmatpush2.bf16.msra.mxu0 0
        %5837 = vmatprep.mubr.bf16.mxu0 0
        %5838 = vmatmul.mubr.bf16.gmra.mxu0 %v3763
        %v5839 = vpop.f32.mrf.mxu0
        %v5840 = vadd.f32 0.0, %v5839
        %v5841 = vpop.f32.mrf.mxu0
        %v5842 = vadd.f32 0.0, %v5841
        %v5843 = vpop.f32.mrf.mxu0
        %v5844 = vpop.f32.mrf.mxu0
        %5845 = vdwg.mxu0
        %5846 = vmatprep.subr.bf16.mxu0 0
        %5847 = vmatpush1.bf16.msra.mxu0 0
        %5848 = vmatprep.subr.bf16.mxu0 0
        %5849 = vmatpush1.bf16.msra.mxu0 0
        %5850 = vmatprep.subr.bf16.mxu0 0
        %5851 = vmatpush1.bf16.msra.mxu0 0
        %5852 = vmatprep.subr.bf16.mxu0 0
        %5853 = vmatpush1.bf16.msra.mxu0 0
        %5854 = vmatprep.subr.bf16.mxu0 0
        %5855 = vmatpush1.bf16.msra.mxu0 0
        %5856 = vmatprep.subr.bf16.mxu0 %v3976
        %5857 = vmatpush1.bf16.msra.mxu0 %v3973
        %5858 = vmatprep.subr.bf16.mxu0 %v2918
        %5859 = vmatpush1.bf16.msra.mxu0 %v2917
        %5860 = vmatprep.subr.bf16.mxu0 %v2690
        %5861 = vmatpush1.bf16.msra.mxu0 %v2689
        %5862 = vmatprep.subr.bf16.mxu0 0
        %5863 = vmatpush2.bf16.msra.mxu0 0
        %5864 = vmatprep.subr.bf16.mxu0 0
        %5865 = vmatpush2.bf16.msra.mxu0 0
        %5866 = vmatprep.subr.bf16.mxu0 0
        %5867 = vmatpush2.bf16.msra.mxu0 0
        %5868 = vmatprep.subr.bf16.mxu0 0
        %5869 = vmatpush2.bf16.msra.mxu0 0
        %5870 = vmatprep.subr.bf16.mxu0 0
        %5871 = vmatpush2.bf16.msra.mxu0 0
        %5872 = vmatprep.subr.bf16.mxu0 0
        %5873 = vmatpush2.bf16.msra.mxu0 0
        %5874 = vmatprep.subr.bf16.mxu0 0
        %5875 = vmatpush2.bf16.msra.mxu0 0
        %5876 = vmatprep.subr.bf16.mxu0 0
        %5877 = vmatpush2.bf16.msra.mxu0 0
        %5878 = vmatprep.mubr.bf16.mxu0 0
        %5879 = vmatmul.mubr.bf16.gmra.mxu0 %v3763
        %v5880 = vpop.f32.mrf.mxu0
        %v5881 = vadd.f32 0.0, %v5880
        %v5882 = vpop.f32.mrf.mxu0
        %v5883 = vadd.f32 0.0, %v5882
        %v5884 = vpop.f32.mrf.mxu0
        %v5885 = vpop.f32.mrf.mxu0
        %5886 = vdwg.mxu0
        %5887 = vmatprep.subr.bf16.mxu0 0
        %5888 = vmatpush1.bf16.msra.mxu0 0
        %5889 = vmatprep.subr.bf16.mxu0 0
        %5890 = vmatpush1.bf16.msra.mxu0 0
        %5891 = vmatprep.subr.bf16.mxu0 0
        %5892 = vmatpush1.bf16.msra.mxu0 0
        %5893 = vmatprep.subr.bf16.mxu0 0
        %5894 = vmatpush1.bf16.msra.mxu0 0
        %5895 = vmatprep.subr.bf16.mxu0 0
        %5896 = vmatpush1.bf16.msra.mxu0 0
        %5897 = vmatprep.subr.bf16.mxu0 %v3982
        %5898 = vmatpush1.bf16.msra.mxu0 %v3979
        %5899 = vmatprep.subr.bf16.mxu0 %v2920
        %5900 = vmatpush1.bf16.msra.mxu0 %v2919
        %5901 = vmatprep.subr.bf16.mxu0 %v2692
        %5902 = vmatpush1.bf16.msra.mxu0 %v2691
        %5903 = vmatprep.subr.bf16.mxu0 0
        %5904 = vmatpush2.bf16.msra.mxu0 0
        %5905 = vmatprep.subr.bf16.mxu0 0
        %5906 = vmatpush2.bf16.msra.mxu0 0
        %5907 = vmatprep.subr.bf16.mxu0 0
        %5908 = vmatpush2.bf16.msra.mxu0 0
        %5909 = vmatprep.subr.bf16.mxu0 0
        %5910 = vmatpush2.bf16.msra.mxu0 0
        %5911 = vmatprep.subr.bf16.mxu0 0
        %5912 = vmatpush2.bf16.msra.mxu0 0
        %5913 = vmatprep.subr.bf16.mxu0 0
        %5914 = vmatpush2.bf16.msra.mxu0 0
        %5915 = vmatprep.subr.bf16.mxu0 0
        %5916 = vmatpush2.bf16.msra.mxu0 0
        %5917 = vmatprep.subr.bf16.mxu0 0
        %5918 = vmatpush2.bf16.msra.mxu0 0
        %5919 = vmatprep.mubr.bf16.mxu0 0
        %5920 = vmatmul.mubr.bf16.gmra.mxu0 %v3763
        %v5921 = vpop.f32.mrf.mxu0
        %v5922 = vadd.f32 0.0, %v5921
        %v5923 = vpop.f32.mrf.mxu0
        %v5924 = vadd.f32 0.0, %v5923
        %v5925 = vpop.f32.mrf.mxu0
        %v5926 = vpop.f32.mrf.mxu0
        %5927 = vdwg.mxu0
        %5928 = vmatprep.subr.bf16.mxu0 0
        %5929 = vmatpush1.bf16.msra.mxu0 0
        %5930 = vmatprep.subr.bf16.mxu0 0
        %5931 = vmatpush1.bf16.msra.mxu0 0
        %5932 = vmatprep.subr.bf16.mxu0 0
        %5933 = vmatpush1.bf16.msra.mxu0 0
        %5934 = vmatprep.subr.bf16.mxu0 0
        %5935 = vmatpush1.bf16.msra.mxu0 0
        %5936 = vmatprep.subr.bf16.mxu0 0
        %5937 = vmatpush1.bf16.msra.mxu0 0
        %5938 = vmatprep.subr.bf16.mxu0 %v3988
        %5939 = vmatpush1.bf16.msra.mxu0 %v3985
        %5940 = vmatprep.subr.bf16.mxu0 %v2922
        %5941 = vmatpush1.bf16.msra.mxu0 %v2921
        %5942 = vmatprep.subr.bf16.mxu0 %v2694
        %5943 = vmatpush1.bf16.msra.mxu0 %v2693
        %5944 = vmatprep.subr.bf16.mxu0 0
        %5945 = vmatpush2.bf16.msra.mxu0 0
        %5946 = vmatprep.subr.bf16.mxu0 0
        %5947 = vmatpush2.bf16.msra.mxu0 0
        %5948 = vmatprep.subr.bf16.mxu0 0
        %5949 = vmatpush2.bf16.msra.mxu0 0
        %5950 = vmatprep.subr.bf16.mxu0 0
        %5951 = vmatpush2.bf16.msra.mxu0 0
        %5952 = vmatprep.subr.bf16.mxu0 0
        %5953 = vmatpush2.bf16.msra.mxu0 0
        %5954 = vmatprep.subr.bf16.mxu0 0
        %5955 = vmatpush2.bf16.msra.mxu0 0
        %5956 = vmatprep.subr.bf16.mxu0 0
        %5957 = vmatpush2.bf16.msra.mxu0 0
        %5958 = vmatprep.subr.bf16.mxu0 0
        %5959 = vmatpush2.bf16.msra.mxu0 0
        %5960 = vmatprep.mubr.bf16.mxu0 0
        %5961 = vmatmul.mubr.bf16.gmra.mxu0 %v3763
        %v5962 = vpop.f32.mrf.mxu0
        %v5963 = vadd.f32 0.0, %v5962
        %v5964 = vpop.f32.mrf.mxu0
        %v5965 = vadd.f32 0.0, %v5964
        %v5966 = vpop.f32.mrf.mxu0
        %v5967 = vpop.f32.mrf.mxu0
        %5968 = vdwg.mxu0
        %5969 = vmatprep.subr.bf16.mxu0 0
        %5970 = vmatpush1.bf16.msra.mxu0 0
        %5971 = vmatprep.subr.bf16.mxu0 0
        %5972 = vmatpush1.bf16.msra.mxu0 0
        %5973 = vmatprep.subr.bf16.mxu0 0
        %5974 = vmatpush1.bf16.msra.mxu0 0
        %5975 = vmatprep.subr.bf16.mxu0 0
        %5976 = vmatpush1.bf16.msra.mxu0 0
        %5977 = vmatprep.subr.bf16.mxu0 0
        %5978 = vmatpush1.bf16.msra.mxu0 0
        %5979 = vmatprep.subr.bf16.mxu0 %v3994
        %5980 = vmatpush1.bf16.msra.mxu0 %v3991
        %5981 = vmatprep.subr.bf16.mxu0 %v2924
        %5982 = vmatpush1.bf16.msra.mxu0 %v2923
        %5983 = vmatprep.subr.bf16.mxu0 %v2696
        %5984 = vmatpush1.bf16.msra.mxu0 %v2695
        %5985 = vmatprep.subr.bf16.mxu0 0
        %5986 = vmatpush2.bf16.msra.mxu0 0
        %5987 = vmatprep.subr.bf16.mxu0 0
        %5988 = vmatpush2.bf16.msra.mxu0 0
        %5989 = vmatprep.subr.bf16.mxu0 0
        %5990 = vmatpush2.bf16.msra.mxu0 0
        %5991 = vmatprep.subr.bf16.mxu0 0
        %5992 = vmatpush2.bf16.msra.mxu0 0
        %5993 = vmatprep.subr.bf16.mxu0 0
        %5994 = vmatpush2.bf16.msra.mxu0 0
        %5995 = vmatprep.subr.bf16.mxu0 0
        %5996 = vmatpush2.bf16.msra.mxu0 0
        %5997 = vmatprep.subr.bf16.mxu0 0
        %5998 = vmatpush2.bf16.msra.mxu0 0
        %5999 = vmatprep.subr.bf16.mxu0 0
        %6000 = vmatpush2.bf16.msra.mxu0 0
        %6001 = vmatprep.mubr.bf16.mxu0 0
        %6002 = vmatmul.mubr.bf16.gmra.mxu0 %v3763
        %v6003 = vpop.f32.mrf.mxu0
        %v6004 = vadd.f32 0.0, %v6003
        %v6005 = vpop.f32.mrf.mxu0
        %v6006 = vadd.f32 0.0, %v6005
        %v6007 = vpop.f32.mrf.mxu0
        %v6008 = vpop.f32.mrf.mxu0
        %6009 = vdwg.mxu0
        %6010 = vmatprep.subr.bf16.mxu0 0
        %6011 = vmatpush1.bf16.msra.mxu0 0
        %6012 = vmatprep.subr.bf16.mxu0 0
        %6013 = vmatpush1.bf16.msra.mxu0 0
        %6014 = vmatprep.subr.bf16.mxu0 0
        %6015 = vmatpush1.bf16.msra.mxu0 0
        %6016 = vmatprep.subr.bf16.mxu0 0
        %6017 = vmatpush1.bf16.msra.mxu0 0
        %6018 = vmatprep.subr.bf16.mxu0 0
        %6019 = vmatpush1.bf16.msra.mxu0 0
        %6020 = vmatprep.subr.bf16.mxu0 %v4000
        %6021 = vmatpush1.bf16.msra.mxu0 %v3997
        %6022 = vmatprep.subr.bf16.mxu0 %v2926
        %6023 = vmatpush1.bf16.msra.mxu0 %v2925
        %6024 = vmatprep.subr.bf16.mxu0 %v2698
        %6025 = vmatpush1.bf16.msra.mxu0 %v2697
        %6026 = vmatprep.subr.bf16.mxu0 0
        %6027 = vmatpush2.bf16.msra.mxu0 0
        %6028 = vmatprep.subr.bf16.mxu0 0
        %6029 = vmatpush2.bf16.msra.mxu0 0
        %6030 = vmatprep.subr.bf16.mxu0 0
        %6031 = vmatpush2.bf16.msra.mxu0 0
        %6032 = vmatprep.subr.bf16.mxu0 0
        %6033 = vmatpush2.bf16.msra.mxu0 0
        %6034 = vmatprep.subr.bf16.mxu0 0
        %6035 = vmatpush2.bf16.msra.mxu0 0
        %6036 = vmatprep.subr.bf16.mxu0 0
        %6037 = vmatpush2.bf16.msra.mxu0 0
        %6038 = vmatprep.subr.bf16.mxu0 0
        %6039 = vmatpush2.bf16.msra.mxu0 0
        %6040 = vmatprep.subr.bf16.mxu0 0
        %6041 = vmatpush2.bf16.msra.mxu0 0
        %6042 = vmatprep.mubr.bf16.mxu0 0
        %6043 = vmatmul.mubr.bf16.gmra.mxu0 %v3763
        %v6044 = vpop.f32.mrf.mxu0
        %v6045 = vadd.f32 0.0, %v6044
        %v6046 = vpop.f32.mrf.mxu0
        %v6047 = vadd.f32 0.0, %v6046
        %v6048 = vpop.f32.mrf.mxu0
        %v6049 = vpop.f32.mrf.mxu0
        %6050 = vdwg.mxu0
        %6051 = vmatprep.subr.bf16.mxu0 0
        %6052 = vmatpush1.bf16.msra.mxu0 0
        %6053 = vmatprep.subr.bf16.mxu0 0
        %6054 = vmatpush1.bf16.msra.mxu0 0
        %6055 = vmatprep.subr.bf16.mxu0 0
        %6056 = vmatpush1.bf16.msra.mxu0 0
        %6057 = vmatprep.subr.bf16.mxu0 0
        %6058 = vmatpush1.bf16.msra.mxu0 0
        %6059 = vmatprep.subr.bf16.mxu0 0
        %6060 = vmatpush1.bf16.msra.mxu0 0
        %6061 = vmatprep.subr.bf16.mxu0 %v4006
        %6062 = vmatpush1.bf16.msra.mxu0 %v4003
        %6063 = vmatprep.subr.bf16.mxu0 %v2928
        %6064 = vmatpush1.bf16.msra.mxu0 %v2927
        %6065 = vmatprep.subr.bf16.mxu0 %v2700
        %6066 = vmatpush1.bf16.msra.mxu0 %v2699
        %6067 = vmatprep.subr.bf16.mxu0 0
        %6068 = vmatpush2.bf16.msra.mxu0 0
        %6069 = vmatprep.subr.bf16.mxu0 0
        %6070 = vmatpush2.bf16.msra.mxu0 0
        %6071 = vmatprep.subr.bf16.mxu0 0
        %6072 = vmatpush2.bf16.msra.mxu0 0
        %6073 = vmatprep.subr.bf16.mxu0 0
        %6074 = vmatpush2.bf16.msra.mxu0 0
        %6075 = vmatprep.subr.bf16.mxu0 0
        %6076 = vmatpush2.bf16.msra.mxu0 0
        %6077 = vmatprep.subr.bf16.mxu0 0
        %6078 = vmatpush2.bf16.msra.mxu0 0
        %6079 = vmatprep.subr.bf16.mxu0 0
        %6080 = vmatpush2.bf16.msra.mxu0 0
        %6081 = vmatprep.subr.bf16.mxu0 0
        %6082 = vmatpush2.bf16.msra.mxu0 0
        %6083 = vmatprep.mubr.bf16.mxu0 0
        %6084 = vmatmul.mubr.bf16.gmra.mxu0 %v3763
        %v6085 = vpop.f32.mrf.mxu0
        %v6086 = vadd.f32 0.0, %v6085
        %v6087 = vpop.f32.mrf.mxu0
        %v6088 = vadd.f32 0.0, %v6087
        %v6089 = vpop.f32.mrf.mxu0
        %v6090 = vpop.f32.mrf.mxu0
        %6091 = vdwg.mxu0
        %6092 = vmatprep.subr.bf16.mxu0 0
        %6093 = vmatpush1.bf16.msra.mxu0 0
        %6094 = vmatprep.subr.bf16.mxu0 0
        %6095 = vmatpush1.bf16.msra.mxu0 0
        %6096 = vmatprep.subr.bf16.mxu0 0
        %6097 = vmatpush1.bf16.msra.mxu0 0
        %6098 = vmatprep.subr.bf16.mxu0 0
        %6099 = vmatpush1.bf16.msra.mxu0 0
        %6100 = vmatprep.subr.bf16.mxu0 0
        %6101 = vmatpush1.bf16.msra.mxu0 0
        %6102 = vmatprep.subr.bf16.mxu0 %v4012
        %6103 = vmatpush1.bf16.msra.mxu0 %v4009
        %6104 = vmatprep.subr.bf16.mxu0 %v2930
        %6105 = vmatpush1.bf16.msra.mxu0 %v2929
        %6106 = vmatprep.subr.bf16.mxu0 %v2702
        %6107 = vmatpush1.bf16.msra.mxu0 %v2701
        %6108 = vmatprep.subr.bf16.mxu0 0
        %6109 = vmatpush2.bf16.msra.mxu0 0
        %6110 = vmatprep.subr.bf16.mxu0 0
        %6111 = vmatpush2.bf16.msra.mxu0 0
        %6112 = vmatprep.subr.bf16.mxu0 0
        %6113 = vmatpush2.bf16.msra.mxu0 0
        %6114 = vmatprep.subr.bf16.mxu0 0
        %6115 = vmatpush2.bf16.msra.mxu0 0
        %6116 = vmatprep.subr.bf16.mxu0 0
        %6117 = vmatpush2.bf16.msra.mxu0 0
        %6118 = vmatprep.subr.bf16.mxu0 0
        %6119 = vmatpush2.bf16.msra.mxu0 0
        %6120 = vmatprep.subr.bf16.mxu0 0
        %6121 = vmatpush2.bf16.msra.mxu0 0
        %6122 = vmatprep.subr.bf16.mxu0 0
        %6123 = vmatpush2.bf16.msra.mxu0 0
        %6124 = vmatprep.mubr.bf16.mxu0 0
        %6125 = vmatmul.mubr.bf16.gmra.mxu0 %v3763
        %v6126 = vpop.f32.mrf.mxu0
        %v6127 = vadd.f32 0.0, %v6126
        %v6128 = vpop.f32.mrf.mxu0
        %v6129 = vadd.f32 0.0, %v6128
        %v6130 = vpop.f32.mrf.mxu0
        %v6131 = vpop.f32.mrf.mxu0
        %6132 = vdwg.mxu0
        %6133 = vmatprep.subr.bf16.mxu0 0
        %6134 = vmatpush1.bf16.msra.mxu0 0
        %6135 = vmatprep.subr.bf16.mxu0 0
        %6136 = vmatpush1.bf16.msra.mxu0 0
        %6137 = vmatprep.subr.bf16.mxu0 0
        %6138 = vmatpush1.bf16.msra.mxu0 0
        %6139 = vmatprep.subr.bf16.mxu0 0
        %6140 = vmatpush1.bf16.msra.mxu0 0
        %6141 = vmatprep.subr.bf16.mxu0 0
        %6142 = vmatpush1.bf16.msra.mxu0 0
        %6143 = vmatprep.subr.bf16.mxu0 %v4018
        %6144 = vmatpush1.bf16.msra.mxu0 %v4015
        %6145 = vmatprep.subr.bf16.mxu0 %v2932
        %6146 = vmatpush1.bf16.msra.mxu0 %v2931
        %6147 = vmatprep.subr.bf16.mxu0 %v2704
        %6148 = vmatpush1.bf16.msra.mxu0 %v2703
        %6149 = vmatprep.subr.bf16.mxu0 0
        %6150 = vmatpush2.bf16.msra.mxu0 0
        %6151 = vmatprep.subr.bf16.mxu0 0
        %6152 = vmatpush2.bf16.msra.mxu0 0
        %6153 = vmatprep.subr.bf16.mxu0 0
        %6154 = vmatpush2.bf16.msra.mxu0 0
        %6155 = vmatprep.subr.bf16.mxu0 0
        %6156 = vmatpush2.bf16.msra.mxu0 0
        %6157 = vmatprep.subr.bf16.mxu0 0
        %6158 = vmatpush2.bf16.msra.mxu0 0
        %6159 = vmatprep.subr.bf16.mxu0 0
        %6160 = vmatpush2.bf16.msra.mxu0 0
        %6161 = vmatprep.subr.bf16.mxu0 0
        %6162 = vmatpush2.bf16.msra.mxu0 0
        %6163 = vmatprep.subr.bf16.mxu0 0
        %6164 = vmatpush2.bf16.msra.mxu0 0
        %6165 = vmatprep.mubr.bf16.mxu0 0
        %6166 = vmatmul.mubr.bf16.gmra.mxu0 %v3763
        %v6167 = vpop.f32.mrf.mxu0
        %v6168 = vadd.f32 0.0, %v6167
        %v6169 = vpop.f32.mrf.mxu0
        %v6170 = vadd.f32 0.0, %v6169
        %v6171 = vpop.f32.mrf.mxu0
        %v6172 = vpop.f32.mrf.mxu0
        %6173 = vdwg.mxu0
        %6174 = vmatprep.subr.bf16.mxu0 0
        %6175 = vmatpush1.bf16.msra.mxu0 0
        %6176 = vmatprep.subr.bf16.mxu0 0
        %6177 = vmatpush1.bf16.msra.mxu0 0
        %6178 = vmatprep.subr.bf16.mxu0 0
        %6179 = vmatpush1.bf16.msra.mxu0 0
        %6180 = vmatprep.subr.bf16.mxu0 0
        %6181 = vmatpush1.bf16.msra.mxu0 0
        %6182 = vmatprep.subr.bf16.mxu0 0
        %6183 = vmatpush1.bf16.msra.mxu0 0
        %6184 = vmatprep.subr.bf16.mxu0 %v4024
        %6185 = vmatpush1.bf16.msra.mxu0 %v4021
        %6186 = vmatprep.subr.bf16.mxu0 %v2934
        %6187 = vmatpush1.bf16.msra.mxu0 %v2933
        %6188 = vmatprep.subr.bf16.mxu0 %v2706
        %6189 = vmatpush1.bf16.msra.mxu0 %v2705
        %6190 = vmatprep.subr.bf16.mxu0 0
        %6191 = vmatpush2.bf16.msra.mxu0 0
        %6192 = vmatprep.subr.bf16.mxu0 0
        %6193 = vmatpush2.bf16.msra.mxu0 0
        %6194 = vmatprep.subr.bf16.mxu0 0
        %6195 = vmatpush2.bf16.msra.mxu0 0
        %6196 = vmatprep.subr.bf16.mxu0 0
        %6197 = vmatpush2.bf16.msra.mxu0 0
        %6198 = vmatprep.subr.bf16.mxu0 0
        %6199 = vmatpush2.bf16.msra.mxu0 0
        %6200 = vmatprep.subr.bf16.mxu0 0
        %6201 = vmatpush2.bf16.msra.mxu0 0
        %6202 = vmatprep.subr.bf16.mxu0 0
        %6203 = vmatpush2.bf16.msra.mxu0 0
        %6204 = vmatprep.subr.bf16.mxu0 0
        %6205 = vmatpush2.bf16.msra.mxu0 0
        %6206 = vmatprep.mubr.bf16.mxu0 0
        %6207 = vmatmul.mubr.bf16.gmra.mxu0 %v3763
        %v6208 = vpop.f32.mrf.mxu0
        %v6209 = vadd.f32 0.0, %v6208
        %v6210 = vpop.f32.mrf.mxu0
        %v6211 = vadd.f32 0.0, %v6210
        %v6212 = vpop.f32.mrf.mxu0
        %v6213 = vpop.f32.mrf.mxu0
        %6214 = vdwg.mxu0
        %6215 = vmatprep.subr.bf16.mxu0 0
        %6216 = vmatpush1.bf16.msra.mxu0 0
        %6217 = vmatprep.subr.bf16.mxu0 0
        %6218 = vmatpush1.bf16.msra.mxu0 0
        %6219 = vmatprep.subr.bf16.mxu0 0
        %6220 = vmatpush1.bf16.msra.mxu0 0
        %6221 = vmatprep.subr.bf16.mxu0 0
        %6222 = vmatpush1.bf16.msra.mxu0 0
        %6223 = vmatprep.subr.bf16.mxu0 0
        %6224 = vmatpush1.bf16.msra.mxu0 0
        %6225 = vmatprep.subr.bf16.mxu0 %v4030
        %6226 = vmatpush1.bf16.msra.mxu0 %v4027
        %6227 = vmatprep.subr.bf16.mxu0 %v2936
        %6228 = vmatpush1.bf16.msra.mxu0 %v2935
        %6229 = vmatprep.subr.bf16.mxu0 %v2708
        %6230 = vmatpush1.bf16.msra.mxu0 %v2707
        %6231 = vmatprep.subr.bf16.mxu0 0
        %6232 = vmatpush2.bf16.msra.mxu0 0
        %6233 = vmatprep.subr.bf16.mxu0 0
        %6234 = vmatpush2.bf16.msra.mxu0 0
        %6235 = vmatprep.subr.bf16.mxu0 0
        %6236 = vmatpush2.bf16.msra.mxu0 0
        %6237 = vmatprep.subr.bf16.mxu0 0
        %6238 = vmatpush2.bf16.msra.mxu0 0
        %6239 = vmatprep.subr.bf16.mxu0 0
        %6240 = vmatpush2.bf16.msra.mxu0 0
        %6241 = vmatprep.subr.bf16.mxu0 0
        %6242 = vmatpush2.bf16.msra.mxu0 0
        %6243 = vmatprep.subr.bf16.mxu0 0
        %6244 = vmatpush2.bf16.msra.mxu0 0
        %6245 = vmatprep.subr.bf16.mxu0 0
        %6246 = vmatpush2.bf16.msra.mxu0 0
        %6247 = vmatprep.mubr.bf16.mxu0 0
        %6248 = vmatmul.mubr.bf16.gmra.mxu0 %v3763
        %v6249 = vpop.f32.mrf.mxu0
        %v6250 = vadd.f32 0.0, %v6249
        %v6251 = vpop.f32.mrf.mxu0
        %v6252 = vadd.f32 0.0, %v6251
        %v6253 = vpop.f32.mrf.mxu0
        %v6254 = vpop.f32.mrf.mxu0
        %6255 = vdwg.mxu0
        %6256 = vmatprep.subr.bf16.mxu0 0
        %6257 = vmatpush1.bf16.msra.mxu0 0
        %6258 = vmatprep.subr.bf16.mxu0 0
        %6259 = vmatpush1.bf16.msra.mxu0 0
        %6260 = vmatprep.subr.bf16.mxu0 0
        %6261 = vmatpush1.bf16.msra.mxu0 0
        %6262 = vmatprep.subr.bf16.mxu0 0
        %6263 = vmatpush1.bf16.msra.mxu0 0
        %6264 = vmatprep.subr.bf16.mxu0 0
        %6265 = vmatpush1.bf16.msra.mxu0 0
        %6266 = vmatprep.subr.bf16.mxu0 %v4036
        %6267 = vmatpush1.bf16.msra.mxu0 %v4033
        %6268 = vmatprep.subr.bf16.mxu0 %v2938
        %6269 = vmatpush1.bf16.msra.mxu0 %v2937
        %6270 = vmatprep.subr.bf16.mxu0 %v2710
        %6271 = vmatpush1.bf16.msra.mxu0 %v2709
        %6272 = vmatprep.subr.bf16.mxu0 0
        %6273 = vmatpush2.bf16.msra.mxu0 0
        %6274 = vmatprep.subr.bf16.mxu0 0
        %6275 = vmatpush2.bf16.msra.mxu0 0
        %6276 = vmatprep.subr.bf16.mxu0 0
        %6277 = vmatpush2.bf16.msra.mxu0 0
        %6278 = vmatprep.subr.bf16.mxu0 0
        %6279 = vmatpush2.bf16.msra.mxu0 0
        %6280 = vmatprep.subr.bf16.mxu0 0
        %6281 = vmatpush2.bf16.msra.mxu0 0
        %6282 = vmatprep.subr.bf16.mxu0 0
        %6283 = vmatpush2.bf16.msra.mxu0 0
        %6284 = vmatprep.subr.bf16.mxu0 0
        %6285 = vmatpush2.bf16.msra.mxu0 0
        %6286 = vmatprep.subr.bf16.mxu0 0
        %6287 = vmatpush2.bf16.msra.mxu0 0
        %6288 = vmatprep.mubr.bf16.mxu0 0
        %6289 = vmatmul.mubr.bf16.gmra.mxu0 %v3763
        %v6290 = vpop.f32.mrf.mxu0
        %v6291 = vadd.f32 0.0, %v6290
        %v6292 = vpop.f32.mrf.mxu0
        %v6293 = vadd.f32 0.0, %v6292
        %v6294 = vpop.f32.mrf.mxu0
        %v6295 = vpop.f32.mrf.mxu0
        %6296 = vdwg.mxu0
        %6297 = vmatprep.subr.bf16.mxu0 0
        %6298 = vmatpush1.bf16.msra.mxu0 0
        %6299 = vmatprep.subr.bf16.mxu0 0
        %6300 = vmatpush1.bf16.msra.mxu0 0
        %6301 = vmatprep.subr.bf16.mxu0 0
        %6302 = vmatpush1.bf16.msra.mxu0 0
        %6303 = vmatprep.subr.bf16.mxu0 0
        %6304 = vmatpush1.bf16.msra.mxu0 0
        %6305 = vmatprep.subr.bf16.mxu0 0
        %6306 = vmatpush1.bf16.msra.mxu0 0
        %6307 = vmatprep.subr.bf16.mxu0 %v4042
        %6308 = vmatpush1.bf16.msra.mxu0 %v4039
        %6309 = vmatprep.subr.bf16.mxu0 %v2940
        %6310 = vmatpush1.bf16.msra.mxu0 %v2939
        %6311 = vmatprep.subr.bf16.mxu0 %v2712
        %6312 = vmatpush1.bf16.msra.mxu0 %v2711
        %6313 = vmatprep.subr.bf16.mxu0 0
        %6314 = vmatpush2.bf16.msra.mxu0 0
        %6315 = vmatprep.subr.bf16.mxu0 0
        %6316 = vmatpush2.bf16.msra.mxu0 0
        %6317 = vmatprep.subr.bf16.mxu0 0
        %6318 = vmatpush2.bf16.msra.mxu0 0
        %6319 = vmatprep.subr.bf16.mxu0 0
        %6320 = vmatpush2.bf16.msra.mxu0 0
        %6321 = vmatprep.subr.bf16.mxu0 0
        %6322 = vmatpush2.bf16.msra.mxu0 0
        %6323 = vmatprep.subr.bf16.mxu0 0
        %6324 = vmatpush2.bf16.msra.mxu0 0
        %6325 = vmatprep.subr.bf16.mxu0 0
        %6326 = vmatpush2.bf16.msra.mxu0 0
        %6327 = vmatprep.subr.bf16.mxu0 0
        %6328 = vmatpush2.bf16.msra.mxu0 0
        %6329 = vmatprep.mubr.bf16.mxu0 0
        %6330 = vmatmul.mubr.bf16.gmra.mxu0 %v3763
        %v6331 = vpop.f32.mrf.mxu0
        %v6332 = vadd.f32 0.0, %v6331
        %v6333 = vpop.f32.mrf.mxu0
        %v6334 = vadd.f32 0.0, %v6333
        %v6335 = vpop.f32.mrf.mxu0
        %v6336 = vpop.f32.mrf.mxu0
        %6337 = vdwg.mxu0
        %6338 = vmatprep.subr.bf16.mxu0 0
        %6339 = vmatpush1.bf16.msra.mxu0 0
        %6340 = vmatprep.subr.bf16.mxu0 0
        %6341 = vmatpush1.bf16.msra.mxu0 0
        %6342 = vmatprep.subr.bf16.mxu0 0
        %6343 = vmatpush1.bf16.msra.mxu0 0
        %6344 = vmatprep.subr.bf16.mxu0 0
        %6345 = vmatpush1.bf16.msra.mxu0 0
        %6346 = vmatprep.subr.bf16.mxu0 0
        %6347 = vmatpush1.bf16.msra.mxu0 0
        %6348 = vmatprep.subr.bf16.mxu0 %v4048
        %6349 = vmatpush1.bf16.msra.mxu0 %v4045
        %6350 = vmatprep.subr.bf16.mxu0 %v2942
        %6351 = vmatpush1.bf16.msra.mxu0 %v2941
        %6352 = vmatprep.subr.bf16.mxu0 %v2714
        %6353 = vmatpush1.bf16.msra.mxu0 %v2713
        %6354 = vmatprep.subr.bf16.mxu0 0
        %6355 = vmatpush2.bf16.msra.mxu0 0
        %6356 = vmatprep.subr.bf16.mxu0 0
        %6357 = vmatpush2.bf16.msra.mxu0 0
        %6358 = vmatprep.subr.bf16.mxu0 0
        %6359 = vmatpush2.bf16.msra.mxu0 0
        %6360 = vmatprep.subr.bf16.mxu0 0
        %6361 = vmatpush2.bf16.msra.mxu0 0
        %6362 = vmatprep.subr.bf16.mxu0 0
        %6363 = vmatpush2.bf16.msra.mxu0 0
        %6364 = vmatprep.subr.bf16.mxu0 0
        %6365 = vmatpush2.bf16.msra.mxu0 0
        %6366 = vmatprep.subr.bf16.mxu0 0
        %6367 = vmatpush2.bf16.msra.mxu0 0
        %6368 = vmatprep.subr.bf16.mxu0 0
        %6369 = vmatpush2.bf16.msra.mxu0 0
        %6370 = vmatprep.mubr.bf16.mxu0 0
        %6371 = vmatmul.mubr.bf16.gmra.mxu0 %v3763
        %v6372 = vpop.f32.mrf.mxu0
        %v6373 = vadd.f32 0.0, %v6372
        %v6374 = vpop.f32.mrf.mxu0
        %v6375 = vadd.f32 0.0, %v6374
        %v6376 = vpop.f32.mrf.mxu0
        %v6377 = vpop.f32.mrf.mxu0
        %6378 = vdwg.mxu0
        %6379 = vmatprep.subr.bf16.mxu0 0
        %6380 = vmatpush1.bf16.msra.mxu0 0
        %6381 = vmatprep.subr.bf16.mxu0 0
        %6382 = vmatpush1.bf16.msra.mxu0 0
        %6383 = vmatprep.subr.bf16.mxu0 0
        %6384 = vmatpush1.bf16.msra.mxu0 0
        %6385 = vmatprep.subr.bf16.mxu0 0
        %6386 = vmatpush1.bf16.msra.mxu0 0
        %6387 = vmatprep.subr.bf16.mxu0 0
        %6388 = vmatpush1.bf16.msra.mxu0 0
        %6389 = vmatprep.subr.bf16.mxu0 %v4054
        %6390 = vmatpush1.bf16.msra.mxu0 %v4051
        %6391 = vmatprep.subr.bf16.mxu0 %v2944
        %6392 = vmatpush1.bf16.msra.mxu0 %v2943
        %6393 = vmatprep.subr.bf16.mxu0 %v2716
        %6394 = vmatpush1.bf16.msra.mxu0 %v2715
        %6395 = vmatprep.subr.bf16.mxu0 0
        %6396 = vmatpush2.bf16.msra.mxu0 0
        %6397 = vmatprep.subr.bf16.mxu0 0
        %6398 = vmatpush2.bf16.msra.mxu0 0
        %6399 = vmatprep.subr.bf16.mxu0 0
        %6400 = vmatpush2.bf16.msra.mxu0 0
        %6401 = vmatprep.subr.bf16.mxu0 0
        %6402 = vmatpush2.bf16.msra.mxu0 0
        %6403 = vmatprep.subr.bf16.mxu0 0
        %6404 = vmatpush2.bf16.msra.mxu0 0
        %6405 = vmatprep.subr.bf16.mxu0 0
        %6406 = vmatpush2.bf16.msra.mxu0 0
        %6407 = vmatprep.subr.bf16.mxu0 0
        %6408 = vmatpush2.bf16.msra.mxu0 0
        %6409 = vmatprep.subr.bf16.mxu0 0
        %6410 = vmatpush2.bf16.msra.mxu0 0
        %6411 = vmatprep.mubr.bf16.mxu0 0
        %6412 = vmatmul.mubr.bf16.gmra.mxu0 %v3763
        %v6413 = vpop.f32.mrf.mxu0
        %v6414 = vadd.f32 0.0, %v6413
        %v6415 = vpop.f32.mrf.mxu0
        %v6416 = vadd.f32 0.0, %v6415
        %v6417 = vpop.f32.mrf.mxu0
        %v6418 = vpop.f32.mrf.mxu0
        %6419 = vdwg.mxu0
        %6420 = vmatprep.subr.bf16.mxu0 0
        %6421 = vmatpush1.bf16.msra.mxu0 0
        %6422 = vmatprep.subr.bf16.mxu0 0
        %6423 = vmatpush1.bf16.msra.mxu0 0
        %6424 = vmatprep.subr.bf16.mxu0 0
        %6425 = vmatpush1.bf16.msra.mxu0 0
        %6426 = vmatprep.subr.bf16.mxu0 0
        %6427 = vmatpush1.bf16.msra.mxu0 0
        %6428 = vmatprep.subr.bf16.mxu0 0
        %6429 = vmatpush1.bf16.msra.mxu0 0
        %6430 = vmatprep.subr.bf16.mxu0 %v4060
        %6431 = vmatpush1.bf16.msra.mxu0 %v4057
        %6432 = vmatprep.subr.bf16.mxu0 %v2946
        %6433 = vmatpush1.bf16.msra.mxu0 %v2945
        %6434 = vmatprep.subr.bf16.mxu0 %v2718
        %6435 = vmatpush1.bf16.msra.mxu0 %v2717
        %6436 = vmatprep.subr.bf16.mxu0 0
        %6437 = vmatpush2.bf16.msra.mxu0 0
        %6438 = vmatprep.subr.bf16.mxu0 0
        %6439 = vmatpush2.bf16.msra.mxu0 0
        %6440 = vmatprep.subr.bf16.mxu0 0
        %6441 = vmatpush2.bf16.msra.mxu0 0
        %6442 = vmatprep.subr.bf16.mxu0 0
        %6443 = vmatpush2.bf16.msra.mxu0 0
        %6444 = vmatprep.subr.bf16.mxu0 0
        %6445 = vmatpush2.bf16.msra.mxu0 0
        %6446 = vmatprep.subr.bf16.mxu0 0
        %6447 = vmatpush2.bf16.msra.mxu0 0
        %6448 = vmatprep.subr.bf16.mxu0 0
        %6449 = vmatpush2.bf16.msra.mxu0 0
        %6450 = vmatprep.subr.bf16.mxu0 0
        %6451 = vmatpush2.bf16.msra.mxu0 0
        %6452 = vmatprep.mubr.bf16.mxu0 0
        %6453 = vmatmul.mubr.bf16.gmra.mxu0 %v3763
        %v6454 = vpop.f32.mrf.mxu0
        %v6455 = vadd.f32 0.0, %v6454
        %v6456 = vpop.f32.mrf.mxu0
        %v6457 = vadd.f32 0.0, %v6456
        %v6458 = vpop.f32.mrf.mxu0
        %v6459 = vpop.f32.mrf.mxu0
        %6460 = vdwg.mxu0
        %6461 = vmatprep.subr.bf16.mxu0 0
        %6462 = vmatpush1.bf16.msra.mxu0 0
        %6463 = vmatprep.subr.bf16.mxu0 0
        %6464 = vmatpush1.bf16.msra.mxu0 0
        %6465 = vmatprep.subr.bf16.mxu0 0
        %6466 = vmatpush1.bf16.msra.mxu0 0
        %6467 = vmatprep.subr.bf16.mxu0 0
        %6468 = vmatpush1.bf16.msra.mxu0 0
        %6469 = vmatprep.subr.bf16.mxu0 0
        %6470 = vmatpush1.bf16.msra.mxu0 0
        %6471 = vmatprep.subr.bf16.mxu0 %v4066
        %6472 = vmatpush1.bf16.msra.mxu0 %v4063
        %6473 = vmatprep.subr.bf16.mxu0 %v2948
        %6474 = vmatpush1.bf16.msra.mxu0 %v2947
        %6475 = vmatprep.subr.bf16.mxu0 %v2720
        %6476 = vmatpush1.bf16.msra.mxu0 %v2719
        %6477 = vmatprep.subr.bf16.mxu0 0
        %6478 = vmatpush2.bf16.msra.mxu0 0
        %6479 = vmatprep.subr.bf16.mxu0 0
        %6480 = vmatpush2.bf16.msra.mxu0 0
        %6481 = vmatprep.subr.bf16.mxu0 0
        %6482 = vmatpush2.bf16.msra.mxu0 0
        %6483 = vmatprep.subr.bf16.mxu0 0
        %6484 = vmatpush2.bf16.msra.mxu0 0
        %6485 = vmatprep.subr.bf16.mxu0 0
        %6486 = vmatpush2.bf16.msra.mxu0 0
        %6487 = vmatprep.subr.bf16.mxu0 0
        %6488 = vmatpush2.bf16.msra.mxu0 0
        %6489 = vmatprep.subr.bf16.mxu0 0
        %6490 = vmatpush2.bf16.msra.mxu0 0
        %6491 = vmatprep.subr.bf16.mxu0 0
        %6492 = vmatpush2.bf16.msra.mxu0 0
        %6493 = vmatprep.mubr.bf16.mxu0 0
        %6494 = vmatmul.mubr.bf16.gmra.mxu0 %v3763
        %v6495 = vpop.f32.mrf.mxu0
        %v6496 = vadd.f32 0.0, %v6495
        %v6497 = vpop.f32.mrf.mxu0
        %v6498 = vadd.f32 0.0, %v6497
        %v6499 = vpop.f32.mrf.mxu0
        %v6500 = vpop.f32.mrf.mxu0
        %6501 = vdwg.mxu0
        %6502 = vmatprep.subr.bf16.mxu0 0
        %6503 = vmatpush1.bf16.msra.mxu0 0
        %6504 = vmatprep.subr.bf16.mxu0 0
        %6505 = vmatpush1.bf16.msra.mxu0 0
        %6506 = vmatprep.subr.bf16.mxu0 0
        %6507 = vmatpush1.bf16.msra.mxu0 0
        %6508 = vmatprep.subr.bf16.mxu0 0
        %6509 = vmatpush1.bf16.msra.mxu0 0
        %6510 = vmatprep.subr.bf16.mxu0 0
        %6511 = vmatpush1.bf16.msra.mxu0 0
        %6512 = vmatprep.subr.bf16.mxu0 %v4072
        %6513 = vmatpush1.bf16.msra.mxu0 %v4069
        %6514 = vmatprep.subr.bf16.mxu0 %v2950
        %6515 = vmatpush1.bf16.msra.mxu0 %v2949
        %6516 = vmatprep.subr.bf16.mxu0 %v2722
        %6517 = vmatpush1.bf16.msra.mxu0 %v2721
        %6518 = vmatprep.subr.bf16.mxu0 0
        %6519 = vmatpush2.bf16.msra.mxu0 0
        %6520 = vmatprep.subr.bf16.mxu0 0
        %6521 = vmatpush2.bf16.msra.mxu0 0
        %6522 = vmatprep.subr.bf16.mxu0 0
        %6523 = vmatpush2.bf16.msra.mxu0 0
        %6524 = vmatprep.subr.bf16.mxu0 0
        %6525 = vmatpush2.bf16.msra.mxu0 0
        %6526 = vmatprep.subr.bf16.mxu0 0
        %6527 = vmatpush2.bf16.msra.mxu0 0
        %6528 = vmatprep.subr.bf16.mxu0 0
        %6529 = vmatpush2.bf16.msra.mxu0 0
        %6530 = vmatprep.subr.bf16.mxu0 0
        %6531 = vmatpush2.bf16.msra.mxu0 0
        %6532 = vmatprep.subr.bf16.mxu0 0
        %6533 = vmatpush2.bf16.msra.mxu0 0
        %6534 = vmatprep.mubr.bf16.mxu0 0
        %6535 = vmatmul.mubr.bf16.gmra.mxu0 %v3763
        %v6536 = vpop.f32.mrf.mxu0
        %v6537 = vadd.f32 0.0, %v6536
        %v6538 = vpop.f32.mrf.mxu0
        %v6539 = vadd.f32 0.0, %v6538
        %v6540 = vpop.f32.mrf.mxu0
        %v6541 = vpop.f32.mrf.mxu0
        %6542 = vdwg.mxu0
        %6543 = vmatprep.subr.bf16.mxu0 0
        %6544 = vmatpush1.bf16.msra.mxu0 0
        %6545 = vmatprep.subr.bf16.mxu0 0
        %6546 = vmatpush1.bf16.msra.mxu0 0
        %6547 = vmatprep.subr.bf16.mxu0 0
        %6548 = vmatpush1.bf16.msra.mxu0 0
        %6549 = vmatprep.subr.bf16.mxu0 0
        %6550 = vmatpush1.bf16.msra.mxu0 0
        %6551 = vmatprep.subr.bf16.mxu0 0
        %6552 = vmatpush1.bf16.msra.mxu0 0
        %6553 = vmatprep.subr.bf16.mxu0 %v4078
        %6554 = vmatpush1.bf16.msra.mxu0 %v4075
        %6555 = vmatprep.subr.bf16.mxu0 %v2952
        %6556 = vmatpush1.bf16.msra.mxu0 %v2951
        %6557 = vmatprep.subr.bf16.mxu0 %v2724
        %6558 = vmatpush1.bf16.msra.mxu0 %v2723
        %6559 = vmatprep.subr.bf16.mxu0 0
        %6560 = vmatpush2.bf16.msra.mxu0 0
        %6561 = vmatprep.subr.bf16.mxu0 0
        %6562 = vmatpush2.bf16.msra.mxu0 0
        %6563 = vmatprep.subr.bf16.mxu0 0
        %6564 = vmatpush2.bf16.msra.mxu0 0
        %6565 = vmatprep.subr.bf16.mxu0 0
        %6566 = vmatpush2.bf16.msra.mxu0 0
        %6567 = vmatprep.subr.bf16.mxu0 0
        %6568 = vmatpush2.bf16.msra.mxu0 0
        %6569 = vmatprep.subr.bf16.mxu0 0
        %6570 = vmatpush2.bf16.msra.mxu0 0
        %6571 = vmatprep.subr.bf16.mxu0 0
        %6572 = vmatpush2.bf16.msra.mxu0 0
        %6573 = vmatprep.subr.bf16.mxu0 0
        %6574 = vmatpush2.bf16.msra.mxu0 0
        %6575 = vmatprep.mubr.bf16.mxu0 0
        %6576 = vmatmul.mubr.bf16.gmra.mxu0 %v3763
        %v6577 = vpop.f32.mrf.mxu0
        %v6578 = vadd.f32 0.0, %v6577
        %v6579 = vpop.f32.mrf.mxu0
        %v6580 = vadd.f32 0.0, %v6579
        %v6581 = vpop.f32.mrf.mxu0
        %v6582 = vpop.f32.mrf.mxu0
        %6583 = vdwg.mxu0
        %6584 = vmatprep.subr.bf16.mxu0 0
        %6585 = vmatpush1.bf16.msra.mxu0 0
        %6586 = vmatprep.subr.bf16.mxu0 0
        %6587 = vmatpush1.bf16.msra.mxu0 0
        %6588 = vmatprep.subr.bf16.mxu0 0
        %6589 = vmatpush1.bf16.msra.mxu0 0
        %6590 = vmatprep.subr.bf16.mxu0 0
        %6591 = vmatpush1.bf16.msra.mxu0 0
        %6592 = vmatprep.subr.bf16.mxu0 0
        %6593 = vmatpush1.bf16.msra.mxu0 0
        %6594 = vmatprep.subr.bf16.mxu0 %v4084
        %6595 = vmatpush1.bf16.msra.mxu0 %v4081
        %6596 = vmatprep.subr.bf16.mxu0 %v2954
        %6597 = vmatpush1.bf16.msra.mxu0 %v2953
        %6598 = vmatprep.subr.bf16.mxu0 %v2726
        %6599 = vmatpush1.bf16.msra.mxu0 %v2725
        %6600 = vmatprep.subr.bf16.mxu0 0
        %6601 = vmatpush2.bf16.msra.mxu0 0
        %6602 = vmatprep.subr.bf16.mxu0 0
        %6603 = vmatpush2.bf16.msra.mxu0 0
        %6604 = vmatprep.subr.bf16.mxu0 0
        %6605 = vmatpush2.bf16.msra.mxu0 0
        %6606 = vmatprep.subr.bf16.mxu0 0
        %6607 = vmatpush2.bf16.msra.mxu0 0
        %6608 = vmatprep.subr.bf16.mxu0 0
        %6609 = vmatpush2.bf16.msra.mxu0 0
        %6610 = vmatprep.subr.bf16.mxu0 0
        %6611 = vmatpush2.bf16.msra.mxu0 0
        %6612 = vmatprep.subr.bf16.mxu0 0
        %6613 = vmatpush2.bf16.msra.mxu0 0
        %6614 = vmatprep.subr.bf16.mxu0 0
        %6615 = vmatpush2.bf16.msra.mxu0 0
        %6616 = vmatprep.mubr.bf16.mxu0 0
        %6617 = vmatmul.mubr.bf16.gmra.mxu0 %v3763
        %v6618 = vpop.f32.mrf.mxu0
        %v6619 = vadd.f32 0.0, %v6618
        %v6620 = vpop.f32.mrf.mxu0
        %v6621 = vadd.f32 0.0, %v6620
        %v6622 = vpop.f32.mrf.mxu0
        %v6623 = vpop.f32.mrf.mxu0
        %6624 = vdwg.mxu0
        %6625 = vmatprep.subr.bf16.mxu0 0
        %6626 = vmatpush1.bf16.msra.mxu0 0
        %6627 = vmatprep.subr.bf16.mxu0 0
        %6628 = vmatpush1.bf16.msra.mxu0 0
        %6629 = vmatprep.subr.bf16.mxu0 0
        %6630 = vmatpush1.bf16.msra.mxu0 0
        %6631 = vmatprep.subr.bf16.mxu0 0
        %6632 = vmatpush1.bf16.msra.mxu0 0
        %6633 = vmatprep.subr.bf16.mxu0 0
        %6634 = vmatpush1.bf16.msra.mxu0 0
        %6635 = vmatprep.subr.bf16.mxu0 %v4090
        %6636 = vmatpush1.bf16.msra.mxu0 %v4087
        %6637 = vmatprep.subr.bf16.mxu0 %v2956
        %6638 = vmatpush1.bf16.msra.mxu0 %v2955
        %6639 = vmatprep.subr.bf16.mxu0 %v2728
        %6640 = vmatpush1.bf16.msra.mxu0 %v2727
        %6641 = vmatprep.subr.bf16.mxu0 0
        %6642 = vmatpush2.bf16.msra.mxu0 0
        %6643 = vmatprep.subr.bf16.mxu0 0
        %6644 = vmatpush2.bf16.msra.mxu0 0
        %6645 = vmatprep.subr.bf16.mxu0 0
        %6646 = vmatpush2.bf16.msra.mxu0 0
        %6647 = vmatprep.subr.bf16.mxu0 0
        %6648 = vmatpush2.bf16.msra.mxu0 0
        %6649 = vmatprep.subr.bf16.mxu0 0
        %6650 = vmatpush2.bf16.msra.mxu0 0
        %6651 = vmatprep.subr.bf16.mxu0 0
        %6652 = vmatpush2.bf16.msra.mxu0 0
        %6653 = vmatprep.subr.bf16.mxu0 0
        %6654 = vmatpush2.bf16.msra.mxu0 0
        %6655 = vmatprep.subr.bf16.mxu0 0
        %6656 = vmatpush2.bf16.msra.mxu0 0
        %6657 = vmatprep.mubr.bf16.mxu0 0
        %6658 = vmatmul.mubr.bf16.gmra.mxu0 %v3763
        %v6659 = vpop.f32.mrf.mxu0
        %v6660 = vadd.f32 0.0, %v6659
        %v6661 = vpop.f32.mrf.mxu0
        %v6662 = vadd.f32 0.0, %v6661
        %v6663 = vpop.f32.mrf.mxu0
        %v6664 = vpop.f32.mrf.mxu0
        %6665 = vdwg.mxu0
        %6666 = vmatprep.subr.bf16.mxu0 0
        %6667 = vmatpush1.bf16.msra.mxu0 0
        %6668 = vmatprep.subr.bf16.mxu0 0
        %6669 = vmatpush1.bf16.msra.mxu0 0
        %6670 = vmatprep.subr.bf16.mxu0 0
        %6671 = vmatpush1.bf16.msra.mxu0 0
        %6672 = vmatprep.subr.bf16.mxu0 0
        %6673 = vmatpush1.bf16.msra.mxu0 0
        %6674 = vmatprep.subr.bf16.mxu0 0
        %6675 = vmatpush1.bf16.msra.mxu0 0
        %6676 = vmatprep.subr.bf16.mxu0 %v4096
        %6677 = vmatpush1.bf16.msra.mxu0 %v4093
        %6678 = vmatprep.subr.bf16.mxu0 %v2958
        %6679 = vmatpush1.bf16.msra.mxu0 %v2957
        %6680 = vmatprep.subr.bf16.mxu0 %v2730
        %6681 = vmatpush1.bf16.msra.mxu0 %v2729
        %6682 = vmatprep.subr.bf16.mxu0 0
        %6683 = vmatpush2.bf16.msra.mxu0 0
        %6684 = vmatprep.subr.bf16.mxu0 0
        %6685 = vmatpush2.bf16.msra.mxu0 0
        %6686 = vmatprep.subr.bf16.mxu0 0
        %6687 = vmatpush2.bf16.msra.mxu0 0
        %6688 = vmatprep.subr.bf16.mxu0 0
        %6689 = vmatpush2.bf16.msra.mxu0 0
        %6690 = vmatprep.subr.bf16.mxu0 0
        %6691 = vmatpush2.bf16.msra.mxu0 0
        %6692 = vmatprep.subr.bf16.mxu0 0
        %6693 = vmatpush2.bf16.msra.mxu0 0
        %6694 = vmatprep.subr.bf16.mxu0 0
        %6695 = vmatpush2.bf16.msra.mxu0 0
        %6696 = vmatprep.subr.bf16.mxu0 0
        %6697 = vmatpush2.bf16.msra.mxu0 0
        %6698 = vmatprep.mubr.bf16.mxu0 0
        %6699 = vmatmul.mubr.bf16.gmra.mxu0 %v3763
        %v6700 = vpop.f32.mrf.mxu0
        %v6701 = vadd.f32 0.0, %v6700
        %v6702 = vpop.f32.mrf.mxu0
        %v6703 = vadd.f32 0.0, %v6702
        %v6704 = vpop.f32.mrf.mxu0
        %v6705 = vpop.f32.mrf.mxu0
        %6706 = vdwg.mxu0
        %6707 = vmatprep.subr.bf16.mxu0 0
        %6708 = vmatpush1.bf16.msra.mxu0 0
        %6709 = vmatprep.subr.bf16.mxu0 0
        %6710 = vmatpush1.bf16.msra.mxu0 0
        %6711 = vmatprep.subr.bf16.mxu0 0
        %6712 = vmatpush1.bf16.msra.mxu0 0
        %6713 = vmatprep.subr.bf16.mxu0 0
        %6714 = vmatpush1.bf16.msra.mxu0 0
        %6715 = vmatprep.subr.bf16.mxu0 0
        %6716 = vmatpush1.bf16.msra.mxu0 0
        %6717 = vmatprep.subr.bf16.mxu0 %v4102
        %6718 = vmatpush1.bf16.msra.mxu0 %v4099
        %6719 = vmatprep.subr.bf16.mxu0 %v2960
        %6720 = vmatpush1.bf16.msra.mxu0 %v2959
        %6721 = vmatprep.subr.bf16.mxu0 %v2732
        %6722 = vmatpush1.bf16.msra.mxu0 %v2731
        %6723 = vmatprep.subr.bf16.mxu0 0
        %6724 = vmatpush2.bf16.msra.mxu0 0
        %6725 = vmatprep.subr.bf16.mxu0 0
        %6726 = vmatpush2.bf16.msra.mxu0 0
        %6727 = vmatprep.subr.bf16.mxu0 0
        %6728 = vmatpush2.bf16.msra.mxu0 0
        %6729 = vmatprep.subr.bf16.mxu0 0
        %6730 = vmatpush2.bf16.msra.mxu0 0
        %6731 = vmatprep.subr.bf16.mxu0 0
        %6732 = vmatpush2.bf16.msra.mxu0 0
        %6733 = vmatprep.subr.bf16.mxu0 0
        %6734 = vmatpush2.bf16.msra.mxu0 0
        %6735 = vmatprep.subr.bf16.mxu0 0
        %6736 = vmatpush2.bf16.msra.mxu0 0
        %6737 = vmatprep.subr.bf16.mxu0 0
        %6738 = vmatpush2.bf16.msra.mxu0 0
        %6739 = vmatprep.mubr.bf16.mxu0 0
        %6740 = vmatmul.mubr.bf16.gmra.mxu0 %v3763
        %v6741 = vpop.f32.mrf.mxu0
        %v6742 = vadd.f32 0.0, %v6741
        %v6743 = vpop.f32.mrf.mxu0
        %v6744 = vadd.f32 0.0, %v6743
        %v6745 = vpop.f32.mrf.mxu0
        %v6746 = vpop.f32.mrf.mxu0
        %6747 = vdwg.mxu0
        %6748 = vmatprep.subr.bf16.mxu0 0
        %6749 = vmatpush1.bf16.msra.mxu0 0
        %6750 = vmatprep.subr.bf16.mxu0 0
        %6751 = vmatpush1.bf16.msra.mxu0 0
        %6752 = vmatprep.subr.bf16.mxu0 0
        %6753 = vmatpush1.bf16.msra.mxu0 0
        %6754 = vmatprep.subr.bf16.mxu0 0
        %6755 = vmatpush1.bf16.msra.mxu0 0
        %6756 = vmatprep.subr.bf16.mxu0 0
        %6757 = vmatpush1.bf16.msra.mxu0 0
        %6758 = vmatprep.subr.bf16.mxu0 %v4108
        %6759 = vmatpush1.bf16.msra.mxu0 %v4105
        %6760 = vmatprep.subr.bf16.mxu0 %v2962
        %6761 = vmatpush1.bf16.msra.mxu0 %v2961
        %6762 = vmatprep.subr.bf16.mxu0 %v2734
        %6763 = vmatpush1.bf16.msra.mxu0 %v2733
        %6764 = vmatprep.subr.bf16.mxu0 0
        %6765 = vmatpush2.bf16.msra.mxu0 0
        %6766 = vmatprep.subr.bf16.mxu0 0
        %6767 = vmatpush2.bf16.msra.mxu0 0
        %6768 = vmatprep.subr.bf16.mxu0 0
        %6769 = vmatpush2.bf16.msra.mxu0 0
        %6770 = vmatprep.subr.bf16.mxu0 0
        %6771 = vmatpush2.bf16.msra.mxu0 0
        %6772 = vmatprep.subr.bf16.mxu0 0
        %6773 = vmatpush2.bf16.msra.mxu0 0
        %6774 = vmatprep.subr.bf16.mxu0 0
        %6775 = vmatpush2.bf16.msra.mxu0 0
        %6776 = vmatprep.subr.bf16.mxu0 0
        %6777 = vmatpush2.bf16.msra.mxu0 0
        %6778 = vmatprep.subr.bf16.mxu0 0
        %6779 = vmatpush2.bf16.msra.mxu0 0
        %6780 = vmatprep.mubr.bf16.mxu0 0
        %6781 = vmatmul.mubr.bf16.gmra.mxu0 %v3763
        %v6782 = vpop.f32.mrf.mxu0
        %v6783 = vadd.f32 0.0, %v6782
        %v6784 = vpop.f32.mrf.mxu0
        %v6785 = vadd.f32 0.0, %v6784
        %v6786 = vpop.f32.mrf.mxu0
        %v6787 = vpop.f32.mrf.mxu0
        %6788 = vdwg.mxu0
        %6789 = vmatprep.subr.bf16.mxu0 0
        %6790 = vmatpush1.bf16.msra.mxu0 0
        %6791 = vmatprep.subr.bf16.mxu0 0
        %6792 = vmatpush1.bf16.msra.mxu0 0
        %6793 = vmatprep.subr.bf16.mxu0 0
        %6794 = vmatpush1.bf16.msra.mxu0 0
        %6795 = vmatprep.subr.bf16.mxu0 0
        %6796 = vmatpush1.bf16.msra.mxu0 0
        %6797 = vmatprep.subr.bf16.mxu0 0
        %6798 = vmatpush1.bf16.msra.mxu0 0
        %6799 = vmatprep.subr.bf16.mxu0 %v4114
        %6800 = vmatpush1.bf16.msra.mxu0 %v4111
        %6801 = vmatprep.subr.bf16.mxu0 %v2964
        %6802 = vmatpush1.bf16.msra.mxu0 %v2963
        %6803 = vmatprep.subr.bf16.mxu0 %v2736
        %6804 = vmatpush1.bf16.msra.mxu0 %v2735
        %6805 = vmatprep.subr.bf16.mxu0 0
        %6806 = vmatpush2.bf16.msra.mxu0 0
        %6807 = vmatprep.subr.bf16.mxu0 0
        %6808 = vmatpush2.bf16.msra.mxu0 0
        %6809 = vmatprep.subr.bf16.mxu0 0
        %6810 = vmatpush2.bf16.msra.mxu0 0
        %6811 = vmatprep.subr.bf16.mxu0 0
        %6812 = vmatpush2.bf16.msra.mxu0 0
        %6813 = vmatprep.subr.bf16.mxu0 0
        %6814 = vmatpush2.bf16.msra.mxu0 0
        %6815 = vmatprep.subr.bf16.mxu0 0
        %6816 = vmatpush2.bf16.msra.mxu0 0
        %6817 = vmatprep.subr.bf16.mxu0 0
        %6818 = vmatpush2.bf16.msra.mxu0 0
        %6819 = vmatprep.subr.bf16.mxu0 0
        %6820 = vmatpush2.bf16.msra.mxu0 0
        %6821 = vmatprep.mubr.bf16.mxu0 0
        %6822 = vmatmul.mubr.bf16.gmra.mxu0 %v3763
        %v6823 = vpop.f32.mrf.mxu0
        %v6824 = vadd.f32 0.0, %v6823
        %v6825 = vpop.f32.mrf.mxu0
        %v6826 = vadd.f32 0.0, %v6825
        %v6827 = vpop.f32.mrf.mxu0
        %v6828 = vpop.f32.mrf.mxu0
        %6829 = vdwg.mxu0
        %6830 = vmatprep.subr.bf16.mxu0 0
        %6831 = vmatpush1.bf16.msra.mxu0 0
        %6832 = vmatprep.subr.bf16.mxu0 0
        %6833 = vmatpush1.bf16.msra.mxu0 0
        %6834 = vmatprep.subr.bf16.mxu0 0
        %6835 = vmatpush1.bf16.msra.mxu0 0
        %6836 = vmatprep.subr.bf16.mxu0 0
        %6837 = vmatpush1.bf16.msra.mxu0 0
        %6838 = vmatprep.subr.bf16.mxu0 0
        %6839 = vmatpush1.bf16.msra.mxu0 0
        %6840 = vmatprep.subr.bf16.mxu0 %v4120
        %6841 = vmatpush1.bf16.msra.mxu0 %v4117
        %6842 = vmatprep.subr.bf16.mxu0 %v2966
        %6843 = vmatpush1.bf16.msra.mxu0 %v2965
        %6844 = vmatprep.subr.bf16.mxu0 %v2738
        %6845 = vmatpush1.bf16.msra.mxu0 %v2737
        %6846 = vmatprep.subr.bf16.mxu0 0
        %6847 = vmatpush2.bf16.msra.mxu0 0
        %6848 = vmatprep.subr.bf16.mxu0 0
        %6849 = vmatpush2.bf16.msra.mxu0 0
        %6850 = vmatprep.subr.bf16.mxu0 0
        %6851 = vmatpush2.bf16.msra.mxu0 0
        %6852 = vmatprep.subr.bf16.mxu0 0
        %6853 = vmatpush2.bf16.msra.mxu0 0
        %6854 = vmatprep.subr.bf16.mxu0 0
        %6855 = vmatpush2.bf16.msra.mxu0 0
        %6856 = vmatprep.subr.bf16.mxu0 0
        %6857 = vmatpush2.bf16.msra.mxu0 0
        %6858 = vmatprep.subr.bf16.mxu0 0
        %6859 = vmatpush2.bf16.msra.mxu0 0
        %6860 = vmatprep.subr.bf16.mxu0 0
        %6861 = vmatpush2.bf16.msra.mxu0 0
        %6862 = vmatprep.mubr.bf16.mxu0 0
        %6863 = vmatmul.mubr.bf16.gmra.mxu0 %v3763
        %v6864 = vpop.f32.mrf.mxu0
        %v6865 = vadd.f32 0.0, %v6864
        %v6866 = vpop.f32.mrf.mxu0
        %v6867 = vadd.f32 0.0, %v6866
        %v6868 = vpop.f32.mrf.mxu0
        %v6869 = vpop.f32.mrf.mxu0
        %6870 = vdwg.mxu0
        %6871 = vmatprep.subr.bf16.mxu0 0
        %6872 = vmatpush1.bf16.msra.mxu0 0
        %6873 = vmatprep.subr.bf16.mxu0 0
        %6874 = vmatpush1.bf16.msra.mxu0 0
        %6875 = vmatprep.subr.bf16.mxu0 0
        %6876 = vmatpush1.bf16.msra.mxu0 0
        %6877 = vmatprep.subr.bf16.mxu0 0
        %6878 = vmatpush1.bf16.msra.mxu0 0
        %6879 = vmatprep.subr.bf16.mxu0 0
        %6880 = vmatpush1.bf16.msra.mxu0 0
        %6881 = vmatprep.subr.bf16.mxu0 %v4126
        %6882 = vmatpush1.bf16.msra.mxu0 %v4123
        %6883 = vmatprep.subr.bf16.mxu0 %v2968
        %6884 = vmatpush1.bf16.msra.mxu0 %v2967
        %6885 = vmatprep.subr.bf16.mxu0 %v2740
        %6886 = vmatpush1.bf16.msra.mxu0 %v2739
        %6887 = vmatprep.subr.bf16.mxu0 0
        %6888 = vmatpush2.bf16.msra.mxu0 0
        %6889 = vmatprep.subr.bf16.mxu0 0
        %6890 = vmatpush2.bf16.msra.mxu0 0
        %6891 = vmatprep.subr.bf16.mxu0 0
        %6892 = vmatpush2.bf16.msra.mxu0 0
        %6893 = vmatprep.subr.bf16.mxu0 0
        %6894 = vmatpush2.bf16.msra.mxu0 0
        %6895 = vmatprep.subr.bf16.mxu0 0
        %6896 = vmatpush2.bf16.msra.mxu0 0
        %6897 = vmatprep.subr.bf16.mxu0 0
        %6898 = vmatpush2.bf16.msra.mxu0 0
        %6899 = vmatprep.subr.bf16.mxu0 0
        %6900 = vmatpush2.bf16.msra.mxu0 0
        %6901 = vmatprep.subr.bf16.mxu0 0
        %6902 = vmatpush2.bf16.msra.mxu0 0
        %6903 = vmatprep.mubr.bf16.mxu0 0
        %6904 = vmatmul.mubr.bf16.gmra.mxu0 %v3763
        %v6905 = vpop.f32.mrf.mxu0
        %v6906 = vadd.f32 0.0, %v6905
        %v6907 = vpop.f32.mrf.mxu0
        %v6908 = vadd.f32 0.0, %v6907
        %v6909 = vpop.f32.mrf.mxu0
        %v6910 = vpop.f32.mrf.mxu0
        %6911 = vdwg.mxu0
        %6912 = vmatprep.subr.bf16.mxu0 0
        %6913 = vmatpush1.bf16.msra.mxu0 0
        %6914 = vmatprep.subr.bf16.mxu0 0
        %6915 = vmatpush1.bf16.msra.mxu0 0
        %6916 = vmatprep.subr.bf16.mxu0 0
        %6917 = vmatpush1.bf16.msra.mxu0 0
        %6918 = vmatprep.subr.bf16.mxu0 0
        %6919 = vmatpush1.bf16.msra.mxu0 0
        %6920 = vmatprep.subr.bf16.mxu0 0
        %6921 = vmatpush1.bf16.msra.mxu0 0
        %6922 = vmatprep.subr.bf16.mxu0 %v4132
        %6923 = vmatpush1.bf16.msra.mxu0 %v4129
        %6924 = vmatprep.subr.bf16.mxu0 %v2970
        %6925 = vmatpush1.bf16.msra.mxu0 %v2969
        %6926 = vmatprep.subr.bf16.mxu0 %v2742
        %6927 = vmatpush1.bf16.msra.mxu0 %v2741
        %6928 = vmatprep.subr.bf16.mxu0 0
        %6929 = vmatpush2.bf16.msra.mxu0 0
        %6930 = vmatprep.subr.bf16.mxu0 0
        %6931 = vmatpush2.bf16.msra.mxu0 0
        %6932 = vmatprep.subr.bf16.mxu0 0
        %6933 = vmatpush2.bf16.msra.mxu0 0
        %6934 = vmatprep.subr.bf16.mxu0 0
        %6935 = vmatpush2.bf16.msra.mxu0 0
        %6936 = vmatprep.subr.bf16.mxu0 0
        %6937 = vmatpush2.bf16.msra.mxu0 0
        %6938 = vmatprep.subr.bf16.mxu0 0
        %6939 = vmatpush2.bf16.msra.mxu0 0
        %6940 = vmatprep.subr.bf16.mxu0 0
        %6941 = vmatpush2.bf16.msra.mxu0 0
        %6942 = vmatprep.subr.bf16.mxu0 0
        %6943 = vmatpush2.bf16.msra.mxu0 0
        %6944 = vmatprep.mubr.bf16.mxu0 0
        %6945 = vmatmul.mubr.bf16.gmra.mxu0 %v3763
        %v6946 = vpop.f32.mrf.mxu0
        %v6947 = vadd.f32 0.0, %v6946
        %v6948 = vpop.f32.mrf.mxu0
        %v6949 = vadd.f32 0.0, %v6948
        %v6950 = vpop.f32.mrf.mxu0
        %v6951 = vpop.f32.mrf.mxu0
        %6952 = vdwg.mxu0
        %6953 = vmatprep.subr.bf16.mxu0 0
        %6954 = vmatpush1.bf16.msra.mxu0 0
        %6955 = vmatprep.subr.bf16.mxu0 0
        %6956 = vmatpush1.bf16.msra.mxu0 0
        %6957 = vmatprep.subr.bf16.mxu0 0
        %6958 = vmatpush1.bf16.msra.mxu0 0
        %6959 = vmatprep.subr.bf16.mxu0 0
        %6960 = vmatpush1.bf16.msra.mxu0 0
        %6961 = vmatprep.subr.bf16.mxu0 0
        %6962 = vmatpush1.bf16.msra.mxu0 0
        %6963 = vmatprep.subr.bf16.mxu0 %v4138
        %6964 = vmatpush1.bf16.msra.mxu0 %v4135
        %6965 = vmatprep.subr.bf16.mxu0 %v2972
        %6966 = vmatpush1.bf16.msra.mxu0 %v2971
        %6967 = vmatprep.subr.bf16.mxu0 %v2744
        %6968 = vmatpush1.bf16.msra.mxu0 %v2743
        %6969 = vmatprep.subr.bf16.mxu0 0
        %6970 = vmatpush2.bf16.msra.mxu0 0
        %6971 = vmatprep.subr.bf16.mxu0 0
        %6972 = vmatpush2.bf16.msra.mxu0 0
        %6973 = vmatprep.subr.bf16.mxu0 0
        %6974 = vmatpush2.bf16.msra.mxu0 0
        %6975 = vmatprep.subr.bf16.mxu0 0
        %6976 = vmatpush2.bf16.msra.mxu0 0
        %6977 = vmatprep.subr.bf16.mxu0 0
        %6978 = vmatpush2.bf16.msra.mxu0 0
        %6979 = vmatprep.subr.bf16.mxu0 0
        %6980 = vmatpush2.bf16.msra.mxu0 0
        %6981 = vmatprep.subr.bf16.mxu0 0
        %6982 = vmatpush2.bf16.msra.mxu0 0
        %6983 = vmatprep.subr.bf16.mxu0 0
        %6984 = vmatpush2.bf16.msra.mxu0 0
        %6985 = vmatprep.mubr.bf16.mxu0 0
        %6986 = vmatmul.mubr.bf16.gmra.mxu0 %v3763
        %v6987 = vpop.f32.mrf.mxu0
        %v6988 = vadd.f32 0.0, %v6987
        %v6989 = vpop.f32.mrf.mxu0
        %v6990 = vadd.f32 0.0, %v6989
        %v6991 = vpop.f32.mrf.mxu0
        %v6992 = vpop.f32.mrf.mxu0
        %6993 = vdwg.mxu0
        %6994 = vmatprep.subr.bf16.mxu0 0
        %6995 = vmatpush1.bf16.msra.mxu0 0
        %6996 = vmatprep.subr.bf16.mxu0 0
        %6997 = vmatpush1.bf16.msra.mxu0 0
        %6998 = vmatprep.subr.bf16.mxu0 0
        %6999 = vmatpush1.bf16.msra.mxu0 0
        %7000 = vmatprep.subr.bf16.mxu0 0
        %7001 = vmatpush1.bf16.msra.mxu0 0
        %7002 = vmatprep.subr.bf16.mxu0 0
        %7003 = vmatpush1.bf16.msra.mxu0 0
        %7004 = vmatprep.subr.bf16.mxu0 %v4144
        %7005 = vmatpush1.bf16.msra.mxu0 %v4141
        %7006 = vmatprep.subr.bf16.mxu0 %v2974
        %7007 = vmatpush1.bf16.msra.mxu0 %v2973
        %7008 = vmatprep.subr.bf16.mxu0 %v2746
        %7009 = vmatpush1.bf16.msra.mxu0 %v2745
        %7010 = vmatprep.subr.bf16.mxu0 0
        %7011 = vmatpush2.bf16.msra.mxu0 0
        %7012 = vmatprep.subr.bf16.mxu0 0
        %7013 = vmatpush2.bf16.msra.mxu0 0
        %7014 = vmatprep.subr.bf16.mxu0 0
        %7015 = vmatpush2.bf16.msra.mxu0 0
        %7016 = vmatprep.subr.bf16.mxu0 0
        %7017 = vmatpush2.bf16.msra.mxu0 0
        %7018 = vmatprep.subr.bf16.mxu0 0
        %7019 = vmatpush2.bf16.msra.mxu0 0
        %7020 = vmatprep.subr.bf16.mxu0 0
        %7021 = vmatpush2.bf16.msra.mxu0 0
        %7022 = vmatprep.subr.bf16.mxu0 0
        %7023 = vmatpush2.bf16.msra.mxu0 0
        %7024 = vmatprep.subr.bf16.mxu0 0
        %7025 = vmatpush2.bf16.msra.mxu0 0
        %7026 = vmatprep.mubr.bf16.mxu0 0
        %7027 = vmatmul.mubr.bf16.gmra.mxu0 %v3763
        %v7028 = vpop.f32.mrf.mxu0
        %v7029 = vadd.f32 0.0, %v7028
        %v7030 = vpop.f32.mrf.mxu0
        %v7031 = vadd.f32 0.0, %v7030
        %v7032 = vpop.f32.mrf.mxu0
        %v7033 = vpop.f32.mrf.mxu0
        %7034 = vdwg.mxu0
        %7035 = vmatprep.subr.bf16.mxu0 0
        %7036 = vmatpush1.bf16.msra.mxu0 0
        %7037 = vmatprep.subr.bf16.mxu0 0
        %7038 = vmatpush1.bf16.msra.mxu0 0
        %7039 = vmatprep.subr.bf16.mxu0 0
        %7040 = vmatpush1.bf16.msra.mxu0 0
        %7041 = vmatprep.subr.bf16.mxu0 0
        %7042 = vmatpush1.bf16.msra.mxu0 0
        %7043 = vmatprep.subr.bf16.mxu0 0
        %7044 = vmatpush1.bf16.msra.mxu0 0
        %7045 = vmatprep.subr.bf16.mxu0 %v4150
        %7046 = vmatpush1.bf16.msra.mxu0 %v4147
        %7047 = vmatprep.subr.bf16.mxu0 %v2976
        %7048 = vmatpush1.bf16.msra.mxu0 %v2975
        %7049 = vmatprep.subr.bf16.mxu0 %v2748
        %7050 = vmatpush1.bf16.msra.mxu0 %v2747
        %7051 = vmatprep.subr.bf16.mxu0 0
        %7052 = vmatpush2.bf16.msra.mxu0 0
        %7053 = vmatprep.subr.bf16.mxu0 0
        %7054 = vmatpush2.bf16.msra.mxu0 0
        %7055 = vmatprep.subr.bf16.mxu0 0
        %7056 = vmatpush2.bf16.msra.mxu0 0
        %7057 = vmatprep.subr.bf16.mxu0 0
        %7058 = vmatpush2.bf16.msra.mxu0 0
        %7059 = vmatprep.subr.bf16.mxu0 0
        %7060 = vmatpush2.bf16.msra.mxu0 0
        %7061 = vmatprep.subr.bf16.mxu0 0
        %7062 = vmatpush2.bf16.msra.mxu0 0
        %7063 = vmatprep.subr.bf16.mxu0 0
        %7064 = vmatpush2.bf16.msra.mxu0 0
        %7065 = vmatprep.subr.bf16.mxu0 0
        %7066 = vmatpush2.bf16.msra.mxu0 0
        %7067 = vmatprep.mubr.bf16.mxu0 0
        %7068 = vmatmul.mubr.bf16.gmra.mxu0 %v3763
        %v7069 = vpop.f32.mrf.mxu0
        %v7070 = vadd.f32 0.0, %v7069
        %v7071 = vpop.f32.mrf.mxu0
        %v7072 = vadd.f32 0.0, %v7071
        %v7073 = vpop.f32.mrf.mxu0
        %v7074 = vpop.f32.mrf.mxu0
        %7075 = vdwg.mxu0
        %7076 = vmatprep.subr.bf16.mxu0 0
        %7077 = vmatpush1.bf16.msra.mxu0 0
        %7078 = vmatprep.subr.bf16.mxu0 0
        %7079 = vmatpush1.bf16.msra.mxu0 0
        %7080 = vmatprep.subr.bf16.mxu0 0
        %7081 = vmatpush1.bf16.msra.mxu0 0
        %7082 = vmatprep.subr.bf16.mxu0 0
        %7083 = vmatpush1.bf16.msra.mxu0 0
        %7084 = vmatprep.subr.bf16.mxu0 0
        %7085 = vmatpush1.bf16.msra.mxu0 0
        %7086 = vmatprep.subr.bf16.mxu0 %v4156
        %7087 = vmatpush1.bf16.msra.mxu0 %v4153
        %7088 = vmatprep.subr.bf16.mxu0 %v2978
        %7089 = vmatpush1.bf16.msra.mxu0 %v2977
        %7090 = vmatprep.subr.bf16.mxu0 %v2750
        %7091 = vmatpush1.bf16.msra.mxu0 %v2749
        %7092 = vmatprep.subr.bf16.mxu0 0
        %7093 = vmatpush2.bf16.msra.mxu0 0
        %7094 = vmatprep.subr.bf16.mxu0 0
        %7095 = vmatpush2.bf16.msra.mxu0 0
        %7096 = vmatprep.subr.bf16.mxu0 0
        %7097 = vmatpush2.bf16.msra.mxu0 0
        %7098 = vmatprep.subr.bf16.mxu0 0
        %7099 = vmatpush2.bf16.msra.mxu0 0
        %7100 = vmatprep.subr.bf16.mxu0 0
        %7101 = vmatpush2.bf16.msra.mxu0 0
        %7102 = vmatprep.subr.bf16.mxu0 0
        %7103 = vmatpush2.bf16.msra.mxu0 0
        %7104 = vmatprep.subr.bf16.mxu0 0
        %7105 = vmatpush2.bf16.msra.mxu0 0
        %7106 = vmatprep.subr.bf16.mxu0 0
        %7107 = vmatpush2.bf16.msra.mxu0 0
        %7108 = vmatprep.mubr.bf16.mxu0 0
        %7109 = vmatmul.mubr.bf16.gmra.mxu0 %v3763
        %v7110 = vpop.f32.mrf.mxu0
        %v7111 = vadd.f32 0.0, %v7110
        %v7112 = vpop.f32.mrf.mxu0
        %v7113 = vadd.f32 0.0, %v7112
        %v7114 = vpop.f32.mrf.mxu0
        %v7115 = vpop.f32.mrf.mxu0
        %7116 = vdwg.mxu0
        %7117 = vmatprep.subr.bf16.mxu0 0
        %7118 = vmatpush1.bf16.msra.mxu0 0
        %7119 = vmatprep.subr.bf16.mxu0 0
        %7120 = vmatpush1.bf16.msra.mxu0 0
        %7121 = vmatprep.subr.bf16.mxu0 0
        %7122 = vmatpush1.bf16.msra.mxu0 0
        %7123 = vmatprep.subr.bf16.mxu0 0
        %7124 = vmatpush1.bf16.msra.mxu0 0
        %7125 = vmatprep.subr.bf16.mxu0 0
        %7126 = vmatpush1.bf16.msra.mxu0 0
        %7127 = vmatprep.subr.bf16.mxu0 %v4162
        %7128 = vmatpush1.bf16.msra.mxu0 %v4159
        %7129 = vmatprep.subr.bf16.mxu0 %v2980
        %7130 = vmatpush1.bf16.msra.mxu0 %v2979
        %7131 = vmatprep.subr.bf16.mxu0 %v2752
        %7132 = vmatpush1.bf16.msra.mxu0 %v2751
        %7133 = vmatprep.subr.bf16.mxu0 0
        %7134 = vmatpush2.bf16.msra.mxu0 0
        %7135 = vmatprep.subr.bf16.mxu0 0
        %7136 = vmatpush2.bf16.msra.mxu0 0
        %7137 = vmatprep.subr.bf16.mxu0 0
        %7138 = vmatpush2.bf16.msra.mxu0 0
        %7139 = vmatprep.subr.bf16.mxu0 0
        %7140 = vmatpush2.bf16.msra.mxu0 0
        %7141 = vmatprep.subr.bf16.mxu0 0
        %7142 = vmatpush2.bf16.msra.mxu0 0
        %7143 = vmatprep.subr.bf16.mxu0 0
        %7144 = vmatpush2.bf16.msra.mxu0 0
        %7145 = vmatprep.subr.bf16.mxu0 0
        %7146 = vmatpush2.bf16.msra.mxu0 0
        %7147 = vmatprep.subr.bf16.mxu0 0
        %7148 = vmatpush2.bf16.msra.mxu0 0
        %7149 = vmatprep.mubr.bf16.mxu0 0
        %7150 = vmatmul.mubr.bf16.gmra.mxu0 %v3763
        %v7151 = vpop.f32.mrf.mxu0
        %v7152 = vadd.f32 0.0, %v7151
        %v7153 = vpop.f32.mrf.mxu0
        %v7154 = vadd.f32 0.0, %v7153
        %v7155 = vpop.f32.mrf.mxu0
        %v7156 = vpop.f32.mrf.mxu0
        %7157 = vdwg.mxu0
        %7158 = vmatprep.subr.bf16.mxu0 0
        %7159 = vmatpush1.bf16.msra.mxu0 0
        %7160 = vmatprep.subr.bf16.mxu0 0
        %7161 = vmatpush1.bf16.msra.mxu0 0
        %7162 = vmatprep.subr.bf16.mxu0 0
        %7163 = vmatpush1.bf16.msra.mxu0 0
        %7164 = vmatprep.subr.bf16.mxu0 0
        %7165 = vmatpush1.bf16.msra.mxu0 0
        %7166 = vmatprep.subr.bf16.mxu0 0
        %7167 = vmatpush1.bf16.msra.mxu0 0
        %7168 = vmatprep.subr.bf16.mxu0 %v4168
        %7169 = vmatpush1.bf16.msra.mxu0 %v4165
        %7170 = vmatprep.subr.bf16.mxu0 %v2982
        %7171 = vmatpush1.bf16.msra.mxu0 %v2981
        %7172 = vmatprep.subr.bf16.mxu0 %v2754
        %7173 = vmatpush1.bf16.msra.mxu0 %v2753
        %7174 = vmatprep.subr.bf16.mxu0 0
        %7175 = vmatpush2.bf16.msra.mxu0 0
        %7176 = vmatprep.subr.bf16.mxu0 0
        %7177 = vmatpush2.bf16.msra.mxu0 0
        %7178 = vmatprep.subr.bf16.mxu0 0
        %7179 = vmatpush2.bf16.msra.mxu0 0
        %7180 = vmatprep.subr.bf16.mxu0 0
        %7181 = vmatpush2.bf16.msra.mxu0 0
        %7182 = vmatprep.subr.bf16.mxu0 0
        %7183 = vmatpush2.bf16.msra.mxu0 0
        %7184 = vmatprep.subr.bf16.mxu0 0
        %7185 = vmatpush2.bf16.msra.mxu0 0
        %7186 = vmatprep.subr.bf16.mxu0 0
        %7187 = vmatpush2.bf16.msra.mxu0 0
        %7188 = vmatprep.subr.bf16.mxu0 0
        %7189 = vmatpush2.bf16.msra.mxu0 0
        %7190 = vmatprep.mubr.bf16.mxu0 0
        %7191 = vmatmul.mubr.bf16.gmra.mxu0 %v3763
        %v7192 = vpop.f32.mrf.mxu0
        %v7193 = vadd.f32 0.0, %v7192
        %v7194 = vpop.f32.mrf.mxu0
        %v7195 = vadd.f32 0.0, %v7194
        %v7196 = vpop.f32.mrf.mxu0
        %v7197 = vpop.f32.mrf.mxu0
        %7198 = vdwg.mxu0
        %7199 = vmatprep.subr.bf16.mxu0 0
        %7200 = vmatpush1.bf16.msra.mxu0 0
        %7201 = vmatprep.subr.bf16.mxu0 0
        %7202 = vmatpush1.bf16.msra.mxu0 0
        %7203 = vmatprep.subr.bf16.mxu0 0
        %7204 = vmatpush1.bf16.msra.mxu0 0
        %7205 = vmatprep.subr.bf16.mxu0 0
        %7206 = vmatpush1.bf16.msra.mxu0 0
        %7207 = vmatprep.subr.bf16.mxu0 0
        %7208 = vmatpush1.bf16.msra.mxu0 0
        %7209 = vmatprep.subr.bf16.mxu0 %v4174
        %7210 = vmatpush1.bf16.msra.mxu0 %v4171
        %7211 = vmatprep.subr.bf16.mxu0 %v2984
        %7212 = vmatpush1.bf16.msra.mxu0 %v2983
        %7213 = vmatprep.subr.bf16.mxu0 %v2756
        %7214 = vmatpush1.bf16.msra.mxu0 %v2755
        %7215 = vmatprep.subr.bf16.mxu0 0
        %7216 = vmatpush2.bf16.msra.mxu0 0
        %7217 = vmatprep.subr.bf16.mxu0 0
        %7218 = vmatpush2.bf16.msra.mxu0 0
        %7219 = vmatprep.subr.bf16.mxu0 0
        %7220 = vmatpush2.bf16.msra.mxu0 0
        %7221 = vmatprep.subr.bf16.mxu0 0
        %7222 = vmatpush2.bf16.msra.mxu0 0
        %7223 = vmatprep.subr.bf16.mxu0 0
        %7224 = vmatpush2.bf16.msra.mxu0 0
        %7225 = vmatprep.subr.bf16.mxu0 0
        %7226 = vmatpush2.bf16.msra.mxu0 0
        %7227 = vmatprep.subr.bf16.mxu0 0
        %7228 = vmatpush2.bf16.msra.mxu0 0
        %7229 = vmatprep.subr.bf16.mxu0 0
        %7230 = vmatpush2.bf16.msra.mxu0 0
        %7231 = vmatprep.mubr.bf16.mxu0 0
        %7232 = vmatmul.mubr.bf16.gmra.mxu0 %v3763
        %v7233 = vpop.f32.mrf.mxu0
        %v7234 = vadd.f32 0.0, %v7233
        %v7235 = vpop.f32.mrf.mxu0
        %v7236 = vadd.f32 0.0, %v7235
        %v7237 = vpop.f32.mrf.mxu0
        %v7238 = vpop.f32.mrf.mxu0
        %7239 = vdwg.mxu0
        %7240 = vmatprep.subr.bf16.mxu0 0
        %7241 = vmatpush1.bf16.msra.mxu0 0
        %7242 = vmatprep.subr.bf16.mxu0 0
        %7243 = vmatpush1.bf16.msra.mxu0 0
        %7244 = vmatprep.subr.bf16.mxu0 0
        %7245 = vmatpush1.bf16.msra.mxu0 0
        %7246 = vmatprep.subr.bf16.mxu0 0
        %7247 = vmatpush1.bf16.msra.mxu0 0
        %7248 = vmatprep.subr.bf16.mxu0 0
        %7249 = vmatpush1.bf16.msra.mxu0 0
        %7250 = vmatprep.subr.bf16.mxu0 %v4180
        %7251 = vmatpush1.bf16.msra.mxu0 %v4177
        %7252 = vmatprep.subr.bf16.mxu0 %v2986
        %7253 = vmatpush1.bf16.msra.mxu0 %v2985
        %7254 = vmatprep.subr.bf16.mxu0 %v2758
        %7255 = vmatpush1.bf16.msra.mxu0 %v2757
        %7256 = vmatprep.subr.bf16.mxu0 0
        %7257 = vmatpush2.bf16.msra.mxu0 0
        %7258 = vmatprep.subr.bf16.mxu0 0
        %7259 = vmatpush2.bf16.msra.mxu0 0
        %7260 = vmatprep.subr.bf16.mxu0 0
        %7261 = vmatpush2.bf16.msra.mxu0 0
        %7262 = vmatprep.subr.bf16.mxu0 0
        %7263 = vmatpush2.bf16.msra.mxu0 0
        %7264 = vmatprep.subr.bf16.mxu0 0
        %7265 = vmatpush2.bf16.msra.mxu0 0
        %7266 = vmatprep.subr.bf16.mxu0 0
        %7267 = vmatpush2.bf16.msra.mxu0 0
        %7268 = vmatprep.subr.bf16.mxu0 0
        %7269 = vmatpush2.bf16.msra.mxu0 0
        %7270 = vmatprep.subr.bf16.mxu0 0
        %7271 = vmatpush2.bf16.msra.mxu0 0
        %7272 = vmatprep.mubr.bf16.mxu0 0
        %7273 = vmatmul.mubr.bf16.gmra.mxu0 %v3763
        %v7274 = vpop.f32.mrf.mxu0
        %v7275 = vadd.f32 0.0, %v7274
        %v7276 = vpop.f32.mrf.mxu0
        %v7277 = vadd.f32 0.0, %v7276
        %v7278 = vpop.f32.mrf.mxu0
        %v7279 = vpop.f32.mrf.mxu0
        %7280 = vdwg.mxu0
        %7281 = vmatprep.subr.bf16.mxu0 0
        %7282 = vmatpush1.bf16.msra.mxu0 0
        %7283 = vmatprep.subr.bf16.mxu0 0
        %7284 = vmatpush1.bf16.msra.mxu0 0
        %7285 = vmatprep.subr.bf16.mxu0 0
        %7286 = vmatpush1.bf16.msra.mxu0 0
        %7287 = vmatprep.subr.bf16.mxu0 0
        %7288 = vmatpush1.bf16.msra.mxu0 0
        %7289 = vmatprep.subr.bf16.mxu0 0
        %7290 = vmatpush1.bf16.msra.mxu0 0
        %7291 = vmatprep.subr.bf16.mxu0 %v4186
        %7292 = vmatpush1.bf16.msra.mxu0 %v4183
        %7293 = vmatprep.subr.bf16.mxu0 %v2988
        %7294 = vmatpush1.bf16.msra.mxu0 %v2987
        %7295 = vmatprep.subr.bf16.mxu0 %v2760
        %7296 = vmatpush1.bf16.msra.mxu0 %v2759
        %7297 = vmatprep.subr.bf16.mxu0 0
        %7298 = vmatpush2.bf16.msra.mxu0 0
        %7299 = vmatprep.subr.bf16.mxu0 0
        %7300 = vmatpush2.bf16.msra.mxu0 0
        %7301 = vmatprep.subr.bf16.mxu0 0
        %7302 = vmatpush2.bf16.msra.mxu0 0
        %7303 = vmatprep.subr.bf16.mxu0 0
        %7304 = vmatpush2.bf16.msra.mxu0 0
        %7305 = vmatprep.subr.bf16.mxu0 0
        %7306 = vmatpush2.bf16.msra.mxu0 0
        %7307 = vmatprep.subr.bf16.mxu0 0
        %7308 = vmatpush2.bf16.msra.mxu0 0
        %7309 = vmatprep.subr.bf16.mxu0 0
        %7310 = vmatpush2.bf16.msra.mxu0 0
        %7311 = vmatprep.subr.bf16.mxu0 0
        %7312 = vmatpush2.bf16.msra.mxu0 0
        %7313 = vmatprep.mubr.bf16.mxu0 0
        %7314 = vmatmul.mubr.bf16.gmra.mxu0 %v3763
        %v7315 = vpop.f32.mrf.mxu0
        %v7316 = vadd.f32 0.0, %v7315
        %v7317 = vpop.f32.mrf.mxu0
        %v7318 = vadd.f32 0.0, %v7317
        %v7319 = vpop.f32.mrf.mxu0
        %v7320 = vpop.f32.mrf.mxu0
        %7321 = vdwg.mxu0
        %7322 = vmatprep.subr.bf16.mxu0 0
        %7323 = vmatpush1.bf16.msra.mxu0 0
        %7324 = vmatprep.subr.bf16.mxu0 0
        %7325 = vmatpush1.bf16.msra.mxu0 0
        %7326 = vmatprep.subr.bf16.mxu0 0
        %7327 = vmatpush1.bf16.msra.mxu0 0
        %7328 = vmatprep.subr.bf16.mxu0 0
        %7329 = vmatpush1.bf16.msra.mxu0 0
        %7330 = vmatprep.subr.bf16.mxu0 0
        %7331 = vmatpush1.bf16.msra.mxu0 0
        %7332 = vmatprep.subr.bf16.mxu0 %v4192
        %7333 = vmatpush1.bf16.msra.mxu0 %v4189
        %7334 = vmatprep.subr.bf16.mxu0 %v2990
        %7335 = vmatpush1.bf16.msra.mxu0 %v2989
        %7336 = vmatprep.subr.bf16.mxu0 %v2762
        %7337 = vmatpush1.bf16.msra.mxu0 %v2761
        %7338 = vmatprep.subr.bf16.mxu0 0
        %7339 = vmatpush2.bf16.msra.mxu0 0
        %7340 = vmatprep.subr.bf16.mxu0 0
        %7341 = vmatpush2.bf16.msra.mxu0 0
        %7342 = vmatprep.subr.bf16.mxu0 0
        %7343 = vmatpush2.bf16.msra.mxu0 0
        %7344 = vmatprep.subr.bf16.mxu0 0
        %7345 = vmatpush2.bf16.msra.mxu0 0
        %7346 = vmatprep.subr.bf16.mxu0 0
        %7347 = vmatpush2.bf16.msra.mxu0 0
        %7348 = vmatprep.subr.bf16.mxu0 0
        %7349 = vmatpush2.bf16.msra.mxu0 0
        %7350 = vmatprep.subr.bf16.mxu0 0
        %7351 = vmatpush2.bf16.msra.mxu0 0
        %7352 = vmatprep.subr.bf16.mxu0 0
        %7353 = vmatpush2.bf16.msra.mxu0 0
        %7354 = vmatprep.mubr.bf16.mxu0 0
        %7355 = vmatmul.mubr.bf16.gmra.mxu0 %v3763
        %v7356 = vpop.f32.mrf.mxu0
        %v7357 = vadd.f32 0.0, %v7356
        %v7358 = vpop.f32.mrf.mxu0
        %v7359 = vadd.f32 0.0, %v7358
        %v7360 = vpop.f32.mrf.mxu0
        %v7361 = vpop.f32.mrf.mxu0
        %7362 = vdwg.mxu0
        %7363 = vmatprep.subr.bf16.mxu0 0
        %7364 = vmatpush1.bf16.msra.mxu0 0
        %7365 = vmatprep.subr.bf16.mxu0 0
        %7366 = vmatpush1.bf16.msra.mxu0 0
        %7367 = vmatprep.subr.bf16.mxu0 0
        %7368 = vmatpush1.bf16.msra.mxu0 0
        %7369 = vmatprep.subr.bf16.mxu0 0
        %7370 = vmatpush1.bf16.msra.mxu0 0
        %7371 = vmatprep.subr.bf16.mxu0 0
        %7372 = vmatpush1.bf16.msra.mxu0 0
        %7373 = vmatprep.subr.bf16.mxu0 %v4198
        %7374 = vmatpush1.bf16.msra.mxu0 %v4195
        %7375 = vmatprep.subr.bf16.mxu0 %v2992
        %7376 = vmatpush1.bf16.msra.mxu0 %v2991
        %7377 = vmatprep.subr.bf16.mxu0 %v2764
        %7378 = vmatpush1.bf16.msra.mxu0 %v2763
        %7379 = vmatprep.subr.bf16.mxu0 0
        %7380 = vmatpush2.bf16.msra.mxu0 0
        %7381 = vmatprep.subr.bf16.mxu0 0
        %7382 = vmatpush2.bf16.msra.mxu0 0
        %7383 = vmatprep.subr.bf16.mxu0 0
        %7384 = vmatpush2.bf16.msra.mxu0 0
        %7385 = vmatprep.subr.bf16.mxu0 0
        %7386 = vmatpush2.bf16.msra.mxu0 0
        %7387 = vmatprep.subr.bf16.mxu0 0
        %7388 = vmatpush2.bf16.msra.mxu0 0
        %7389 = vmatprep.subr.bf16.mxu0 0
        %7390 = vmatpush2.bf16.msra.mxu0 0
        %7391 = vmatprep.subr.bf16.mxu0 0
        %7392 = vmatpush2.bf16.msra.mxu0 0
        %7393 = vmatprep.subr.bf16.mxu0 0
        %7394 = vmatpush2.bf16.msra.mxu0 0
        %7395 = vmatprep.mubr.bf16.mxu0 0
        %7396 = vmatmul.mubr.bf16.gmra.mxu0 %v3763
        %v7397 = vpop.f32.mrf.mxu0
        %v7398 = vadd.f32 0.0, %v7397
        %v7399 = vpop.f32.mrf.mxu0
        %v7400 = vadd.f32 0.0, %v7399
        %v7401 = vpop.f32.mrf.mxu0
        %v7402 = vpop.f32.mrf.mxu0
        %7403 = vdwg.mxu0
        %7404 = vmatprep.subr.bf16.mxu0 0
        %7405 = vmatpush1.bf16.msra.mxu0 0
        %7406 = vmatprep.subr.bf16.mxu0 0
        %7407 = vmatpush1.bf16.msra.mxu0 0
        %7408 = vmatprep.subr.bf16.mxu0 0
        %7409 = vmatpush1.bf16.msra.mxu0 0
        %7410 = vmatprep.subr.bf16.mxu0 0
        %7411 = vmatpush1.bf16.msra.mxu0 0
        %7412 = vmatprep.subr.bf16.mxu0 0
        %7413 = vmatpush1.bf16.msra.mxu0 0
        %7414 = vmatprep.subr.bf16.mxu0 %v4204
        %7415 = vmatpush1.bf16.msra.mxu0 %v4201
        %7416 = vmatprep.subr.bf16.mxu0 %v2994
        %7417 = vmatpush1.bf16.msra.mxu0 %v2993
        %7418 = vmatprep.subr.bf16.mxu0 %v2766
        %7419 = vmatpush1.bf16.msra.mxu0 %v2765
        %7420 = vmatprep.subr.bf16.mxu0 0
        %7421 = vmatpush2.bf16.msra.mxu0 0
        %7422 = vmatprep.subr.bf16.mxu0 0
        %7423 = vmatpush2.bf16.msra.mxu0 0
        %7424 = vmatprep.subr.bf16.mxu0 0
        %7425 = vmatpush2.bf16.msra.mxu0 0
        %7426 = vmatprep.subr.bf16.mxu0 0
        %7427 = vmatpush2.bf16.msra.mxu0 0
        %7428 = vmatprep.subr.bf16.mxu0 0
        %7429 = vmatpush2.bf16.msra.mxu0 0
        %7430 = vmatprep.subr.bf16.mxu0 0
        %7431 = vmatpush2.bf16.msra.mxu0 0
        %7432 = vmatprep.subr.bf16.mxu0 0
        %7433 = vmatpush2.bf16.msra.mxu0 0
        %7434 = vmatprep.subr.bf16.mxu0 0
        %7435 = vmatpush2.bf16.msra.mxu0 0
        %7436 = vmatprep.mubr.bf16.mxu0 0
        %7437 = vmatmul.mubr.bf16.gmra.mxu0 %v3763
        %v7438 = vpop.f32.mrf.mxu0
        %v7439 = vadd.f32 0.0, %v7438
        %v7440 = vpop.f32.mrf.mxu0
        %v7441 = vadd.f32 0.0, %v7440
        %v7442 = vpop.f32.mrf.mxu0
        %v7443 = vpop.f32.mrf.mxu0
        %7444 = vdwg.mxu0
        %7445 = vmatprep.subr.bf16.mxu0 0
        %7446 = vmatpush1.bf16.msra.mxu0 0
        %7447 = vmatprep.subr.bf16.mxu0 0
        %7448 = vmatpush1.bf16.msra.mxu0 0
        %7449 = vmatprep.subr.bf16.mxu0 0
        %7450 = vmatpush1.bf16.msra.mxu0 0
        %7451 = vmatprep.subr.bf16.mxu0 0
        %7452 = vmatpush1.bf16.msra.mxu0 0
        %7453 = vmatprep.subr.bf16.mxu0 0
        %7454 = vmatpush1.bf16.msra.mxu0 0
        %7455 = vmatprep.subr.bf16.mxu0 %v4210
        %7456 = vmatpush1.bf16.msra.mxu0 %v4207
        %7457 = vmatprep.subr.bf16.mxu0 %v2996
        %7458 = vmatpush1.bf16.msra.mxu0 %v2995
        %7459 = vmatprep.subr.bf16.mxu0 %v2768
        %7460 = vmatpush1.bf16.msra.mxu0 %v2767
        %7461 = vmatprep.subr.bf16.mxu0 0
        %7462 = vmatpush2.bf16.msra.mxu0 0
        %7463 = vmatprep.subr.bf16.mxu0 0
        %7464 = vmatpush2.bf16.msra.mxu0 0
        %7465 = vmatprep.subr.bf16.mxu0 0
        %7466 = vmatpush2.bf16.msra.mxu0 0
        %7467 = vmatprep.subr.bf16.mxu0 0
        %7468 = vmatpush2.bf16.msra.mxu0 0
        %7469 = vmatprep.subr.bf16.mxu0 0
        %7470 = vmatpush2.bf16.msra.mxu0 0
        %7471 = vmatprep.subr.bf16.mxu0 0
        %7472 = vmatpush2.bf16.msra.mxu0 0
        %7473 = vmatprep.subr.bf16.mxu0 0
        %7474 = vmatpush2.bf16.msra.mxu0 0
        %7475 = vmatprep.subr.bf16.mxu0 0
        %7476 = vmatpush2.bf16.msra.mxu0 0
        %7477 = vmatprep.mubr.bf16.mxu0 0
        %7478 = vmatmul.mubr.bf16.gmra.mxu0 %v3763
        %v7479 = vpop.f32.mrf.mxu0
        %v7480 = vadd.f32 0.0, %v7479
        %v7481 = vpop.f32.mrf.mxu0
        %v7482 = vadd.f32 0.0, %v7481
        %v7483 = vpop.f32.mrf.mxu0
        %v7484 = vpop.f32.mrf.mxu0
        %7485 = vdwg.mxu0
        %7486 = vmatprep.subr.bf16.mxu0 0
        %7487 = vmatpush1.bf16.msra.mxu0 0
        %7488 = vmatprep.subr.bf16.mxu0 0
        %7489 = vmatpush1.bf16.msra.mxu0 0
        %7490 = vmatprep.subr.bf16.mxu0 0
        %7491 = vmatpush1.bf16.msra.mxu0 0
        %7492 = vmatprep.subr.bf16.mxu0 0
        %7493 = vmatpush1.bf16.msra.mxu0 0
        %7494 = vmatprep.subr.bf16.mxu0 0
        %7495 = vmatpush1.bf16.msra.mxu0 0
        %7496 = vmatprep.subr.bf16.mxu0 %v4216
        %7497 = vmatpush1.bf16.msra.mxu0 %v4213
        %7498 = vmatprep.subr.bf16.mxu0 %v2998
        %7499 = vmatpush1.bf16.msra.mxu0 %v2997
        %7500 = vmatprep.subr.bf16.mxu0 %v2770
        %7501 = vmatpush1.bf16.msra.mxu0 %v2769
        %7502 = vmatprep.subr.bf16.mxu0 0
        %7503 = vmatpush2.bf16.msra.mxu0 0
        %7504 = vmatprep.subr.bf16.mxu0 0
        %7505 = vmatpush2.bf16.msra.mxu0 0
        %7506 = vmatprep.subr.bf16.mxu0 0
        %7507 = vmatpush2.bf16.msra.mxu0 0
        %7508 = vmatprep.subr.bf16.mxu0 0
        %7509 = vmatpush2.bf16.msra.mxu0 0
        %7510 = vmatprep.subr.bf16.mxu0 0
        %7511 = vmatpush2.bf16.msra.mxu0 0
        %7512 = vmatprep.subr.bf16.mxu0 0
        %7513 = vmatpush2.bf16.msra.mxu0 0
        %7514 = vmatprep.subr.bf16.mxu0 0
        %7515 = vmatpush2.bf16.msra.mxu0 0
        %7516 = vmatprep.subr.bf16.mxu0 0
        %7517 = vmatpush2.bf16.msra.mxu0 0
        %7518 = vmatprep.mubr.bf16.mxu0 0
        %7519 = vmatmul.mubr.bf16.gmra.mxu0 %v3763
        %v7520 = vpop.f32.mrf.mxu0
        %v7521 = vadd.f32 0.0, %v7520
        %v7522 = vpop.f32.mrf.mxu0
        %v7523 = vadd.f32 0.0, %v7522
        %v7524 = vpop.f32.mrf.mxu0
        %v7525 = vpop.f32.mrf.mxu0
        %7526 = vdwg.mxu0
        %7527 = vmatprep.subr.bf16.mxu0 0
        %7528 = vmatpush1.bf16.msra.mxu0 0
        %7529 = vmatprep.subr.bf16.mxu0 0
        %7530 = vmatpush1.bf16.msra.mxu0 0
        %7531 = vmatprep.subr.bf16.mxu0 0
        %7532 = vmatpush1.bf16.msra.mxu0 0
        %7533 = vmatprep.subr.bf16.mxu0 0
        %7534 = vmatpush1.bf16.msra.mxu0 0
        %7535 = vmatprep.subr.bf16.mxu0 0
        %7536 = vmatpush1.bf16.msra.mxu0 0
        %7537 = vmatprep.subr.bf16.mxu0 %v4222
        %7538 = vmatpush1.bf16.msra.mxu0 %v4219
        %7539 = vmatprep.subr.bf16.mxu0 %v3000
        %7540 = vmatpush1.bf16.msra.mxu0 %v2999
        %7541 = vmatprep.subr.bf16.mxu0 %v2772
        %7542 = vmatpush1.bf16.msra.mxu0 %v2771
        %7543 = vmatprep.subr.bf16.mxu0 0
        %7544 = vmatpush2.bf16.msra.mxu0 0
        %7545 = vmatprep.subr.bf16.mxu0 0
        %7546 = vmatpush2.bf16.msra.mxu0 0
        %7547 = vmatprep.subr.bf16.mxu0 0
        %7548 = vmatpush2.bf16.msra.mxu0 0
        %7549 = vmatprep.subr.bf16.mxu0 0
        %7550 = vmatpush2.bf16.msra.mxu0 0
        %7551 = vmatprep.subr.bf16.mxu0 0
        %7552 = vmatpush2.bf16.msra.mxu0 0
        %7553 = vmatprep.subr.bf16.mxu0 0
        %7554 = vmatpush2.bf16.msra.mxu0 0
        %7555 = vmatprep.subr.bf16.mxu0 0
        %7556 = vmatpush2.bf16.msra.mxu0 0
        %7557 = vmatprep.subr.bf16.mxu0 0
        %7558 = vmatpush2.bf16.msra.mxu0 0
        %7559 = vmatprep.mubr.bf16.mxu0 0
        %7560 = vmatmul.mubr.bf16.gmra.mxu0 %v3763
        %v7561 = vpop.f32.mrf.mxu0
        %v7562 = vadd.f32 0.0, %v7561
        %v7563 = vpop.f32.mrf.mxu0
        %v7564 = vadd.f32 0.0, %v7563
        %v7565 = vpop.f32.mrf.mxu0
        %v7566 = vpop.f32.mrf.mxu0
        %7567 = vdwg.mxu0
        %7568 = vmatprep.subr.bf16.mxu0 0
        %7569 = vmatpush1.bf16.msra.mxu0 0
        %7570 = vmatprep.subr.bf16.mxu0 0
        %7571 = vmatpush1.bf16.msra.mxu0 0
        %7572 = vmatprep.subr.bf16.mxu0 0
        %7573 = vmatpush1.bf16.msra.mxu0 0
        %7574 = vmatprep.subr.bf16.mxu0 0
        %7575 = vmatpush1.bf16.msra.mxu0 0
        %7576 = vmatprep.subr.bf16.mxu0 0
        %7577 = vmatpush1.bf16.msra.mxu0 0
        %7578 = vmatprep.subr.bf16.mxu0 %v4228
        %7579 = vmatpush1.bf16.msra.mxu0 %v4225
        %7580 = vmatprep.subr.bf16.mxu0 %v3002
        %7581 = vmatpush1.bf16.msra.mxu0 %v3001
        %7582 = vmatprep.subr.bf16.mxu0 %v2774
        %7583 = vmatpush1.bf16.msra.mxu0 %v2773
        %7584 = vmatprep.subr.bf16.mxu0 0
        %7585 = vmatpush2.bf16.msra.mxu0 0
        %7586 = vmatprep.subr.bf16.mxu0 0
        %7587 = vmatpush2.bf16.msra.mxu0 0
        %7588 = vmatprep.subr.bf16.mxu0 0
        %7589 = vmatpush2.bf16.msra.mxu0 0
        %7590 = vmatprep.subr.bf16.mxu0 0
        %7591 = vmatpush2.bf16.msra.mxu0 0
        %7592 = vmatprep.subr.bf16.mxu0 0
        %7593 = vmatpush2.bf16.msra.mxu0 0
        %7594 = vmatprep.subr.bf16.mxu0 0
        %7595 = vmatpush2.bf16.msra.mxu0 0
        %7596 = vmatprep.subr.bf16.mxu0 0
        %7597 = vmatpush2.bf16.msra.mxu0 0
        %7598 = vmatprep.subr.bf16.mxu0 0
        %7599 = vmatpush2.bf16.msra.mxu0 0
        %7600 = vmatprep.mubr.bf16.mxu0 0
        %7601 = vmatmul.mubr.bf16.gmra.mxu0 %v3763
        %v7602 = vpop.f32.mrf.mxu0
        %v7603 = vadd.f32 0.0, %v7602
        %v7604 = vpop.f32.mrf.mxu0
        %v7605 = vadd.f32 0.0, %v7604
        %v7606 = vpop.f32.mrf.mxu0
        %v7607 = vpop.f32.mrf.mxu0
        %7608 = vdwg.mxu0
        %7609 = vmatprep.subr.bf16.mxu0 0
        %7610 = vmatpush1.bf16.msra.mxu0 0
        %7611 = vmatprep.subr.bf16.mxu0 0
        %7612 = vmatpush1.bf16.msra.mxu0 0
        %7613 = vmatprep.subr.bf16.mxu0 0
        %7614 = vmatpush1.bf16.msra.mxu0 0
        %7615 = vmatprep.subr.bf16.mxu0 0
        %7616 = vmatpush1.bf16.msra.mxu0 0
        %7617 = vmatprep.subr.bf16.mxu0 0
        %7618 = vmatpush1.bf16.msra.mxu0 0
        %7619 = vmatprep.subr.bf16.mxu0 %v4234
        %7620 = vmatpush1.bf16.msra.mxu0 %v4231
        %7621 = vmatprep.subr.bf16.mxu0 %v3004
        %7622 = vmatpush1.bf16.msra.mxu0 %v3003
        %7623 = vmatprep.subr.bf16.mxu0 %v2776
        %7624 = vmatpush1.bf16.msra.mxu0 %v2775
        %7625 = vmatprep.subr.bf16.mxu0 0
        %7626 = vmatpush2.bf16.msra.mxu0 0
        %7627 = vmatprep.subr.bf16.mxu0 0
        %7628 = vmatpush2.bf16.msra.mxu0 0
        %7629 = vmatprep.subr.bf16.mxu0 0
        %7630 = vmatpush2.bf16.msra.mxu0 0
        %7631 = vmatprep.subr.bf16.mxu0 0
        %7632 = vmatpush2.bf16.msra.mxu0 0
        %7633 = vmatprep.subr.bf16.mxu0 0
        %7634 = vmatpush2.bf16.msra.mxu0 0
        %7635 = vmatprep.subr.bf16.mxu0 0
        %7636 = vmatpush2.bf16.msra.mxu0 0
        %7637 = vmatprep.subr.bf16.mxu0 0
        %7638 = vmatpush2.bf16.msra.mxu0 0
        %7639 = vmatprep.subr.bf16.mxu0 0
        %7640 = vmatpush2.bf16.msra.mxu0 0
        %7641 = vmatprep.mubr.bf16.mxu0 0
        %7642 = vmatmul.mubr.bf16.gmra.mxu0 %v3763
        %v7643 = vpop.f32.mrf.mxu0
        %v7644 = vadd.f32 0.0, %v7643
        %v7645 = vpop.f32.mrf.mxu0
        %v7646 = vadd.f32 0.0, %v7645
        %v7647 = vpop.f32.mrf.mxu0
        %v7648 = vpop.f32.mrf.mxu0
        %7649 = vdwg.mxu0
        %7650 = vmatprep.subr.bf16.mxu0 0
        %7651 = vmatpush1.bf16.msra.mxu0 0
        %7652 = vmatprep.subr.bf16.mxu0 0
        %7653 = vmatpush1.bf16.msra.mxu0 0
        %7654 = vmatprep.subr.bf16.mxu0 0
        %7655 = vmatpush1.bf16.msra.mxu0 0
        %7656 = vmatprep.subr.bf16.mxu0 0
        %7657 = vmatpush1.bf16.msra.mxu0 0
        %7658 = vmatprep.subr.bf16.mxu0 0
        %7659 = vmatpush1.bf16.msra.mxu0 0
        %7660 = vmatprep.subr.bf16.mxu0 %v4240
        %7661 = vmatpush1.bf16.msra.mxu0 %v4237
        %7662 = vmatprep.subr.bf16.mxu0 %v3006
        %7663 = vmatpush1.bf16.msra.mxu0 %v3005
        %7664 = vmatprep.subr.bf16.mxu0 %v2778
        %7665 = vmatpush1.bf16.msra.mxu0 %v2777
        %7666 = vmatprep.subr.bf16.mxu0 0
        %7667 = vmatpush2.bf16.msra.mxu0 0
        %7668 = vmatprep.subr.bf16.mxu0 0
        %7669 = vmatpush2.bf16.msra.mxu0 0
        %7670 = vmatprep.subr.bf16.mxu0 0
        %7671 = vmatpush2.bf16.msra.mxu0 0
        %7672 = vmatprep.subr.bf16.mxu0 0
        %7673 = vmatpush2.bf16.msra.mxu0 0
        %7674 = vmatprep.subr.bf16.mxu0 0
        %7675 = vmatpush2.bf16.msra.mxu0 0
        %7676 = vmatprep.subr.bf16.mxu0 0
        %7677 = vmatpush2.bf16.msra.mxu0 0
        %7678 = vmatprep.subr.bf16.mxu0 0
        %7679 = vmatpush2.bf16.msra.mxu0 0
        %7680 = vmatprep.subr.bf16.mxu0 0
        %7681 = vmatpush2.bf16.msra.mxu0 0
        %7682 = vmatprep.mubr.bf16.mxu0 0
        %7683 = vmatmul.mubr.bf16.gmra.mxu0 %v3763
        %v7684 = vpop.f32.mrf.mxu0
        %v7685 = vadd.f32 0.0, %v7684
        %v7686 = vpop.f32.mrf.mxu0
        %v7687 = vadd.f32 0.0, %v7686
        %v7688 = vpop.f32.mrf.mxu0
        %v7689 = vpop.f32.mrf.mxu0
        %7690 = vdwg.mxu0
        %7691 = vmatprep.subr.bf16.mxu0 0
        %7692 = vmatpush1.bf16.msra.mxu0 0
        %7693 = vmatprep.subr.bf16.mxu0 0
        %7694 = vmatpush1.bf16.msra.mxu0 0
        %7695 = vmatprep.subr.bf16.mxu0 0
        %7696 = vmatpush1.bf16.msra.mxu0 0
        %7697 = vmatprep.subr.bf16.mxu0 0
        %7698 = vmatpush1.bf16.msra.mxu0 0
        %7699 = vmatprep.subr.bf16.mxu0 0
        %7700 = vmatpush1.bf16.msra.mxu0 0
        %7701 = vmatprep.subr.bf16.mxu0 %v4246
        %7702 = vmatpush1.bf16.msra.mxu0 %v4243
        %7703 = vmatprep.subr.bf16.mxu0 %v3008
        %7704 = vmatpush1.bf16.msra.mxu0 %v3007
        %7705 = vmatprep.subr.bf16.mxu0 %v2780
        %7706 = vmatpush1.bf16.msra.mxu0 %v2779
        %7707 = vmatprep.subr.bf16.mxu0 0
        %7708 = vmatpush2.bf16.msra.mxu0 0
        %7709 = vmatprep.subr.bf16.mxu0 0
        %7710 = vmatpush2.bf16.msra.mxu0 0
        %7711 = vmatprep.subr.bf16.mxu0 0
        %7712 = vmatpush2.bf16.msra.mxu0 0
        %7713 = vmatprep.subr.bf16.mxu0 0
        %7714 = vmatpush2.bf16.msra.mxu0 0
        %7715 = vmatprep.subr.bf16.mxu0 0
        %7716 = vmatpush2.bf16.msra.mxu0 0
        %7717 = vmatprep.subr.bf16.mxu0 0
        %7718 = vmatpush2.bf16.msra.mxu0 0
        %7719 = vmatprep.subr.bf16.mxu0 0
        %7720 = vmatpush2.bf16.msra.mxu0 0
        %7721 = vmatprep.subr.bf16.mxu0 0
        %7722 = vmatpush2.bf16.msra.mxu0 0
        %7723 = vmatprep.mubr.bf16.mxu0 0
        %7724 = vmatmul.mubr.bf16.gmra.mxu0 %v3763
        %v7725 = vpop.f32.mrf.mxu0
        %v7726 = vadd.f32 0.0, %v7725
        %v7727 = vpop.f32.mrf.mxu0
        %v7728 = vadd.f32 0.0, %v7727
        %v7729 = vpop.f32.mrf.mxu0
        %v7730 = vpop.f32.mrf.mxu0
        %7731 = vdwg.mxu0
        %7732 = vmatprep.subr.bf16.mxu0 0
        %7733 = vmatpush1.bf16.msra.mxu0 0
        %7734 = vmatprep.subr.bf16.mxu0 0
        %7735 = vmatpush1.bf16.msra.mxu0 0
        %7736 = vmatprep.subr.bf16.mxu0 0
        %7737 = vmatpush1.bf16.msra.mxu0 0
        %7738 = vmatprep.subr.bf16.mxu0 0
        %7739 = vmatpush1.bf16.msra.mxu0 0
        %7740 = vmatprep.subr.bf16.mxu0 0
        %7741 = vmatpush1.bf16.msra.mxu0 0
        %7742 = vmatprep.subr.bf16.mxu0 %v4252
        %7743 = vmatpush1.bf16.msra.mxu0 %v4249
        %7744 = vmatprep.subr.bf16.mxu0 %v3010
        %7745 = vmatpush1.bf16.msra.mxu0 %v3009
        %7746 = vmatprep.subr.bf16.mxu0 %v2782
        %7747 = vmatpush1.bf16.msra.mxu0 %v2781
        %7748 = vmatprep.subr.bf16.mxu0 0
        %7749 = vmatpush2.bf16.msra.mxu0 0
        %7750 = vmatprep.subr.bf16.mxu0 0
        %7751 = vmatpush2.bf16.msra.mxu0 0
        %7752 = vmatprep.subr.bf16.mxu0 0
        %7753 = vmatpush2.bf16.msra.mxu0 0
        %7754 = vmatprep.subr.bf16.mxu0 0
        %7755 = vmatpush2.bf16.msra.mxu0 0
        %7756 = vmatprep.subr.bf16.mxu0 0
        %7757 = vmatpush2.bf16.msra.mxu0 0
        %7758 = vmatprep.subr.bf16.mxu0 0
        %7759 = vmatpush2.bf16.msra.mxu0 0
        %7760 = vmatprep.subr.bf16.mxu0 0
        %7761 = vmatpush2.bf16.msra.mxu0 0
        %7762 = vmatprep.subr.bf16.mxu0 0
        %7763 = vmatpush2.bf16.msra.mxu0 0
        %7764 = vmatprep.mubr.bf16.mxu0 0
        %7765 = vmatmul.mubr.bf16.gmra.mxu0 %v3763
        %v7766 = vpop.f32.mrf.mxu0
        %v7767 = vadd.f32 0.0, %v7766
        %v7768 = vpop.f32.mrf.mxu0
        %v7769 = vadd.f32 0.0, %v7768
        %v7770 = vpop.f32.mrf.mxu0
        %v7771 = vpop.f32.mrf.mxu0
        %7772 = vdwg.mxu0
        %7773 = vmatprep.subr.bf16.mxu0 0
        %7774 = vmatpush1.bf16.msra.mxu0 0
        %7775 = vmatprep.subr.bf16.mxu0 0
        %7776 = vmatpush1.bf16.msra.mxu0 0
        %7777 = vmatprep.subr.bf16.mxu0 0
        %7778 = vmatpush1.bf16.msra.mxu0 0
        %7779 = vmatprep.subr.bf16.mxu0 0
        %7780 = vmatpush1.bf16.msra.mxu0 0
        %7781 = vmatprep.subr.bf16.mxu0 0
        %7782 = vmatpush1.bf16.msra.mxu0 0
        %7783 = vmatprep.subr.bf16.mxu0 %v4258
        %7784 = vmatpush1.bf16.msra.mxu0 %v4255
        %7785 = vmatprep.subr.bf16.mxu0 %v3012
        %7786 = vmatpush1.bf16.msra.mxu0 %v3011
        %7787 = vmatprep.subr.bf16.mxu0 %v2784
        %7788 = vmatpush1.bf16.msra.mxu0 %v2783
        %7789 = vmatprep.subr.bf16.mxu0 0
        %7790 = vmatpush2.bf16.msra.mxu0 0
        %7791 = vmatprep.subr.bf16.mxu0 0
        %7792 = vmatpush2.bf16.msra.mxu0 0
        %7793 = vmatprep.subr.bf16.mxu0 0
        %7794 = vmatpush2.bf16.msra.mxu0 0
        %7795 = vmatprep.subr.bf16.mxu0 0
        %7796 = vmatpush2.bf16.msra.mxu0 0
        %7797 = vmatprep.subr.bf16.mxu0 0
        %7798 = vmatpush2.bf16.msra.mxu0 0
        %7799 = vmatprep.subr.bf16.mxu0 0
        %7800 = vmatpush2.bf16.msra.mxu0 0
        %7801 = vmatprep.subr.bf16.mxu0 0
        %7802 = vmatpush2.bf16.msra.mxu0 0
        %7803 = vmatprep.subr.bf16.mxu0 0
        %7804 = vmatpush2.bf16.msra.mxu0 0
        %7805 = vmatprep.mubr.bf16.mxu0 0
        %7806 = vmatmul.mubr.bf16.gmra.mxu0 %v3763
        %v7807 = vpop.f32.mrf.mxu0
        %v7808 = vadd.f32 0.0, %v7807
        %v7809 = vpop.f32.mrf.mxu0
        %v7810 = vadd.f32 0.0, %v7809
        %v7811 = vpop.f32.mrf.mxu0
        %v7812 = vpop.f32.mrf.mxu0
        %7813 = vdwg.mxu0
        %7814 = vmatprep.subr.bf16.mxu0 0
        %7815 = vmatpush1.bf16.msra.mxu0 0
        %7816 = vmatprep.subr.bf16.mxu0 0
        %7817 = vmatpush1.bf16.msra.mxu0 0
        %7818 = vmatprep.subr.bf16.mxu0 0
        %7819 = vmatpush1.bf16.msra.mxu0 0
        %7820 = vmatprep.subr.bf16.mxu0 0
        %7821 = vmatpush1.bf16.msra.mxu0 0
        %7822 = vmatprep.subr.bf16.mxu0 0
        %7823 = vmatpush1.bf16.msra.mxu0 0
        %7824 = vmatprep.subr.bf16.mxu0 %v4264
        %7825 = vmatpush1.bf16.msra.mxu0 %v4261
        %7826 = vmatprep.subr.bf16.mxu0 %v3014
        %7827 = vmatpush1.bf16.msra.mxu0 %v3013
        %7828 = vmatprep.subr.bf16.mxu0 %v2786
        %7829 = vmatpush1.bf16.msra.mxu0 %v2785
        %7830 = vmatprep.subr.bf16.mxu0 0
        %7831 = vmatpush2.bf16.msra.mxu0 0
        %7832 = vmatprep.subr.bf16.mxu0 0
        %7833 = vmatpush2.bf16.msra.mxu0 0
        %7834 = vmatprep.subr.bf16.mxu0 0
        %7835 = vmatpush2.bf16.msra.mxu0 0
        %7836 = vmatprep.subr.bf16.mxu0 0
        %7837 = vmatpush2.bf16.msra.mxu0 0
        %7838 = vmatprep.subr.bf16.mxu0 0
        %7839 = vmatpush2.bf16.msra.mxu0 0
        %7840 = vmatprep.subr.bf16.mxu0 0
        %7841 = vmatpush2.bf16.msra.mxu0 0
        %7842 = vmatprep.subr.bf16.mxu0 0
        %7843 = vmatpush2.bf16.msra.mxu0 0
        %7844 = vmatprep.subr.bf16.mxu0 0
        %7845 = vmatpush2.bf16.msra.mxu0 0
        %7846 = vmatprep.mubr.bf16.mxu0 0
        %7847 = vmatmul.mubr.bf16.gmra.mxu0 %v3763
        %v7848 = vpop.f32.mrf.mxu0
        %v7849 = vadd.f32 0.0, %v7848
        %v7850 = vpop.f32.mrf.mxu0
        %v7851 = vadd.f32 0.0, %v7850
        %v7852 = vpop.f32.mrf.mxu0
        %v7853 = vpop.f32.mrf.mxu0
        %7854 = vdwg.mxu0
        %7855 = vmatprep.subr.bf16.mxu0 0
        %7856 = vmatpush1.bf16.msra.mxu0 0
        %7857 = vmatprep.subr.bf16.mxu0 0
        %7858 = vmatpush1.bf16.msra.mxu0 0
        %7859 = vmatprep.subr.bf16.mxu0 0
        %7860 = vmatpush1.bf16.msra.mxu0 0
        %7861 = vmatprep.subr.bf16.mxu0 0
        %7862 = vmatpush1.bf16.msra.mxu0 0
        %7863 = vmatprep.subr.bf16.mxu0 0
        %7864 = vmatpush1.bf16.msra.mxu0 0
        %7865 = vmatprep.subr.bf16.mxu0 %v4270
        %7866 = vmatpush1.bf16.msra.mxu0 %v4267
        %7867 = vmatprep.subr.bf16.mxu0 %v3016
        %7868 = vmatpush1.bf16.msra.mxu0 %v3015
        %7869 = vmatprep.subr.bf16.mxu0 %v2788
        %7870 = vmatpush1.bf16.msra.mxu0 %v2787
        %7871 = vmatprep.subr.bf16.mxu0 0
        %7872 = vmatpush2.bf16.msra.mxu0 0
        %7873 = vmatprep.subr.bf16.mxu0 0
        %7874 = vmatpush2.bf16.msra.mxu0 0
        %7875 = vmatprep.subr.bf16.mxu0 0
        %7876 = vmatpush2.bf16.msra.mxu0 0
        %7877 = vmatprep.subr.bf16.mxu0 0
        %7878 = vmatpush2.bf16.msra.mxu0 0
        %7879 = vmatprep.subr.bf16.mxu0 0
        %7880 = vmatpush2.bf16.msra.mxu0 0
        %7881 = vmatprep.subr.bf16.mxu0 0
        %7882 = vmatpush2.bf16.msra.mxu0 0
        %7883 = vmatprep.subr.bf16.mxu0 0
        %7884 = vmatpush2.bf16.msra.mxu0 0
        %7885 = vmatprep.subr.bf16.mxu0 0
        %7886 = vmatpush2.bf16.msra.mxu0 0
        %7887 = vmatprep.mubr.bf16.mxu0 0
        %7888 = vmatmul.mubr.bf16.gmra.mxu0 %v3763
        %v7889 = vpop.f32.mrf.mxu0
        %v7890 = vadd.f32 0.0, %v7889
        %v7891 = vpop.f32.mrf.mxu0
        %v7892 = vadd.f32 0.0, %v7891
        %v7893 = vpop.f32.mrf.mxu0
        %v7894 = vpop.f32.mrf.mxu0
        %7895 = vdwg.mxu0
        %7896 = vmatprep.subr.bf16.mxu0 0
        %7897 = vmatpush1.bf16.msra.mxu0 0
        %7898 = vmatprep.subr.bf16.mxu0 0
        %7899 = vmatpush1.bf16.msra.mxu0 0
        %7900 = vmatprep.subr.bf16.mxu0 0
        %7901 = vmatpush1.bf16.msra.mxu0 0
        %7902 = vmatprep.subr.bf16.mxu0 0
        %7903 = vmatpush1.bf16.msra.mxu0 0
        %7904 = vmatprep.subr.bf16.mxu0 0
        %7905 = vmatpush1.bf16.msra.mxu0 0
        %7906 = vmatprep.subr.bf16.mxu0 %v4276
        %7907 = vmatpush1.bf16.msra.mxu0 %v4273
        %7908 = vmatprep.subr.bf16.mxu0 %v3018
        %7909 = vmatpush1.bf16.msra.mxu0 %v3017
        %7910 = vmatprep.subr.bf16.mxu0 %v2790
        %7911 = vmatpush1.bf16.msra.mxu0 %v2789
        %7912 = vmatprep.subr.bf16.mxu0 0
        %7913 = vmatpush2.bf16.msra.mxu0 0
        %7914 = vmatprep.subr.bf16.mxu0 0
        %7915 = vmatpush2.bf16.msra.mxu0 0
        %7916 = vmatprep.subr.bf16.mxu0 0
        %7917 = vmatpush2.bf16.msra.mxu0 0
        %7918 = vmatprep.subr.bf16.mxu0 0
        %7919 = vmatpush2.bf16.msra.mxu0 0
        %7920 = vmatprep.subr.bf16.mxu0 0
        %7921 = vmatpush2.bf16.msra.mxu0 0
        %7922 = vmatprep.subr.bf16.mxu0 0
        %7923 = vmatpush2.bf16.msra.mxu0 0
        %7924 = vmatprep.subr.bf16.mxu0 0
        %7925 = vmatpush2.bf16.msra.mxu0 0
        %7926 = vmatprep.subr.bf16.mxu0 0
        %7927 = vmatpush2.bf16.msra.mxu0 0
        %7928 = vmatprep.mubr.bf16.mxu0 0
        %7929 = vmatmul.mubr.bf16.gmra.mxu0 %v3763
        %v7930 = vpop.f32.mrf.mxu0
        %v7931 = vadd.f32 0.0, %v7930
        %v7932 = vpop.f32.mrf.mxu0
        %v7933 = vadd.f32 0.0, %v7932
        %v7934 = vpop.f32.mrf.mxu0
        %v7935 = vpop.f32.mrf.mxu0
        %7936 = vdwg.mxu0
        %7937 = vmatprep.subr.bf16.mxu0 0
        %7938 = vmatpush1.bf16.msra.mxu0 0
        %7939 = vmatprep.subr.bf16.mxu0 0
        %7940 = vmatpush1.bf16.msra.mxu0 0
        %7941 = vmatprep.subr.bf16.mxu0 0
        %7942 = vmatpush1.bf16.msra.mxu0 0
        %7943 = vmatprep.subr.bf16.mxu0 0
        %7944 = vmatpush1.bf16.msra.mxu0 0
        %7945 = vmatprep.subr.bf16.mxu0 0
        %7946 = vmatpush1.bf16.msra.mxu0 0
        %7947 = vmatprep.subr.bf16.mxu0 %v4282
        %7948 = vmatpush1.bf16.msra.mxu0 %v4279
        %7949 = vmatprep.subr.bf16.mxu0 %v3020
        %7950 = vmatpush1.bf16.msra.mxu0 %v3019
        %7951 = vmatprep.subr.bf16.mxu0 %v2792
        %7952 = vmatpush1.bf16.msra.mxu0 %v2791
        %7953 = vmatprep.subr.bf16.mxu0 0
        %7954 = vmatpush2.bf16.msra.mxu0 0
        %7955 = vmatprep.subr.bf16.mxu0 0
        %7956 = vmatpush2.bf16.msra.mxu0 0
        %7957 = vmatprep.subr.bf16.mxu0 0
        %7958 = vmatpush2.bf16.msra.mxu0 0
        %7959 = vmatprep.subr.bf16.mxu0 0
        %7960 = vmatpush2.bf16.msra.mxu0 0
        %7961 = vmatprep.subr.bf16.mxu0 0
        %7962 = vmatpush2.bf16.msra.mxu0 0
        %7963 = vmatprep.subr.bf16.mxu0 0
        %7964 = vmatpush2.bf16.msra.mxu0 0
        %7965 = vmatprep.subr.bf16.mxu0 0
        %7966 = vmatpush2.bf16.msra.mxu0 0
        %7967 = vmatprep.subr.bf16.mxu0 0
        %7968 = vmatpush2.bf16.msra.mxu0 0
        %7969 = vmatprep.mubr.bf16.mxu0 0
        %7970 = vmatmul.mubr.bf16.gmra.mxu0 %v3763
        %v7971 = vpop.f32.mrf.mxu0
        %v7972 = vadd.f32 0.0, %v7971
        %v7973 = vpop.f32.mrf.mxu0
        %v7974 = vadd.f32 0.0, %v7973
        %v7975 = vpop.f32.mrf.mxu0
        %v7976 = vpop.f32.mrf.mxu0
        %7977 = vdwg.mxu0
        %7978 = vmatprep.subr.bf16.mxu0 0
        %7979 = vmatpush1.bf16.msra.mxu0 0
        %7980 = vmatprep.subr.bf16.mxu0 0
        %7981 = vmatpush1.bf16.msra.mxu0 0
        %7982 = vmatprep.subr.bf16.mxu0 0
        %7983 = vmatpush1.bf16.msra.mxu0 0
        %7984 = vmatprep.subr.bf16.mxu0 0
        %7985 = vmatpush1.bf16.msra.mxu0 0
        %7986 = vmatprep.subr.bf16.mxu0 0
        %7987 = vmatpush1.bf16.msra.mxu0 0
        %7988 = vmatprep.subr.bf16.mxu0 %v4288
        %7989 = vmatpush1.bf16.msra.mxu0 %v4285
        %7990 = vmatprep.subr.bf16.mxu0 %v3022
        %7991 = vmatpush1.bf16.msra.mxu0 %v3021
        %7992 = vmatprep.subr.bf16.mxu0 %v2794
        %7993 = vmatpush1.bf16.msra.mxu0 %v2793
        %7994 = vmatprep.subr.bf16.mxu0 0
        %7995 = vmatpush2.bf16.msra.mxu0 0
        %7996 = vmatprep.subr.bf16.mxu0 0
        %7997 = vmatpush2.bf16.msra.mxu0 0
        %7998 = vmatprep.subr.bf16.mxu0 0
        %7999 = vmatpush2.bf16.msra.mxu0 0
        %8000 = vmatprep.subr.bf16.mxu0 0
        %8001 = vmatpush2.bf16.msra.mxu0 0
        %8002 = vmatprep.subr.bf16.mxu0 0
        %8003 = vmatpush2.bf16.msra.mxu0 0
        %8004 = vmatprep.subr.bf16.mxu0 0
        %8005 = vmatpush2.bf16.msra.mxu0 0
        %8006 = vmatprep.subr.bf16.mxu0 0
        %8007 = vmatpush2.bf16.msra.mxu0 0
        %8008 = vmatprep.subr.bf16.mxu0 0
        %8009 = vmatpush2.bf16.msra.mxu0 0
        %8010 = vmatprep.mubr.bf16.mxu0 0
        %8011 = vmatmul.mubr.bf16.gmra.mxu0 %v3763
        %v8012 = vpop.f32.mrf.mxu0
        %v8013 = vadd.f32 0.0, %v8012
        %v8014 = vpop.f32.mrf.mxu0
        %v8015 = vadd.f32 0.0, %v8014
        %v8016 = vpop.f32.mrf.mxu0
        %v8017 = vpop.f32.mrf.mxu0
        %8018 = vdwg.mxu0
        %8019 = vmatprep.subr.bf16.mxu0 0
        %8020 = vmatpush1.bf16.msra.mxu0 0
        %8021 = vmatprep.subr.bf16.mxu0 0
        %8022 = vmatpush1.bf16.msra.mxu0 0
        %8023 = vmatprep.subr.bf16.mxu0 0
        %8024 = vmatpush1.bf16.msra.mxu0 0
        %8025 = vmatprep.subr.bf16.mxu0 0
        %8026 = vmatpush1.bf16.msra.mxu0 0
        %8027 = vmatprep.subr.bf16.mxu0 0
        %8028 = vmatpush1.bf16.msra.mxu0 0
        %8029 = vmatprep.subr.bf16.mxu0 %v4294
        %8030 = vmatpush1.bf16.msra.mxu0 %v4291
        %8031 = vmatprep.subr.bf16.mxu0 %v3024
        %8032 = vmatpush1.bf16.msra.mxu0 %v3023
        %8033 = vmatprep.subr.bf16.mxu0 %v2796
        %8034 = vmatpush1.bf16.msra.mxu0 %v2795
        %8035 = vmatprep.subr.bf16.mxu0 0
        %8036 = vmatpush2.bf16.msra.mxu0 0
        %8037 = vmatprep.subr.bf16.mxu0 0
        %8038 = vmatpush2.bf16.msra.mxu0 0
        %8039 = vmatprep.subr.bf16.mxu0 0
        %8040 = vmatpush2.bf16.msra.mxu0 0
        %8041 = vmatprep.subr.bf16.mxu0 0
        %8042 = vmatpush2.bf16.msra.mxu0 0
        %8043 = vmatprep.subr.bf16.mxu0 0
        %8044 = vmatpush2.bf16.msra.mxu0 0
        %8045 = vmatprep.subr.bf16.mxu0 0
        %8046 = vmatpush2.bf16.msra.mxu0 0
        %8047 = vmatprep.subr.bf16.mxu0 0
        %8048 = vmatpush2.bf16.msra.mxu0 0
        %8049 = vmatprep.subr.bf16.mxu0 0
        %8050 = vmatpush2.bf16.msra.mxu0 0
        %8051 = vmatprep.mubr.bf16.mxu0 0
        %8052 = vmatmul.mubr.bf16.gmra.mxu0 %v3763
        %v8053 = vpop.f32.mrf.mxu0
        %v8054 = vadd.f32 0.0, %v8053
        %v8055 = vpop.f32.mrf.mxu0
        %v8056 = vadd.f32 0.0, %v8055
        %v8057 = vpop.f32.mrf.mxu0
        %v8058 = vpop.f32.mrf.mxu0
        %8059 = vdwg.mxu0
        %8060 = vmatprep.subr.bf16.mxu0 0
        %8061 = vmatpush1.bf16.msra.mxu0 0
        %8062 = vmatprep.subr.bf16.mxu0 0
        %8063 = vmatpush1.bf16.msra.mxu0 0
        %8064 = vmatprep.subr.bf16.mxu0 0
        %8065 = vmatpush1.bf16.msra.mxu0 0
        %8066 = vmatprep.subr.bf16.mxu0 0
        %8067 = vmatpush1.bf16.msra.mxu0 0
        %8068 = vmatprep.subr.bf16.mxu0 0
        %8069 = vmatpush1.bf16.msra.mxu0 0
        %8070 = vmatprep.subr.bf16.mxu0 %v4300
        %8071 = vmatpush1.bf16.msra.mxu0 %v4297
        %8072 = vmatprep.subr.bf16.mxu0 %v3026
        %8073 = vmatpush1.bf16.msra.mxu0 %v3025
        %8074 = vmatprep.subr.bf16.mxu0 %v2798
        %8075 = vmatpush1.bf16.msra.mxu0 %v2797
        %8076 = vmatprep.subr.bf16.mxu0 0
        %8077 = vmatpush2.bf16.msra.mxu0 0
        %8078 = vmatprep.subr.bf16.mxu0 0
        %8079 = vmatpush2.bf16.msra.mxu0 0
        %8080 = vmatprep.subr.bf16.mxu0 0
        %8081 = vmatpush2.bf16.msra.mxu0 0
        %8082 = vmatprep.subr.bf16.mxu0 0
        %8083 = vmatpush2.bf16.msra.mxu0 0
        %8084 = vmatprep.subr.bf16.mxu0 0
        %8085 = vmatpush2.bf16.msra.mxu0 0
        %8086 = vmatprep.subr.bf16.mxu0 0
        %8087 = vmatpush2.bf16.msra.mxu0 0
        %8088 = vmatprep.subr.bf16.mxu0 0
        %8089 = vmatpush2.bf16.msra.mxu0 0
        %8090 = vmatprep.subr.bf16.mxu0 0
        %8091 = vmatpush2.bf16.msra.mxu0 0
        %8092 = vmatprep.mubr.bf16.mxu0 0
        %8093 = vmatmul.mubr.bf16.gmra.mxu0 %v3763
        %v8094 = vpop.f32.mrf.mxu0
        %v8095 = vadd.f32 0.0, %v8094
        %v8096 = vpop.f32.mrf.mxu0
        %v8097 = vadd.f32 0.0, %v8096
        %v8098 = vpop.f32.mrf.mxu0
        %v8099 = vpop.f32.mrf.mxu0
        %8100 = vdwg.mxu0
        %8101 = vmatprep.subr.bf16.mxu0 0
        %8102 = vmatpush1.bf16.msra.mxu0 0
        %8103 = vmatprep.subr.bf16.mxu0 0
        %8104 = vmatpush1.bf16.msra.mxu0 0
        %8105 = vmatprep.subr.bf16.mxu0 0
        %8106 = vmatpush1.bf16.msra.mxu0 0
        %8107 = vmatprep.subr.bf16.mxu0 0
        %8108 = vmatpush1.bf16.msra.mxu0 0
        %8109 = vmatprep.subr.bf16.mxu0 0
        %8110 = vmatpush1.bf16.msra.mxu0 0
        %8111 = vmatprep.subr.bf16.mxu0 %v4306
        %8112 = vmatpush1.bf16.msra.mxu0 %v4303
        %8113 = vmatprep.subr.bf16.mxu0 %v3028
        %8114 = vmatpush1.bf16.msra.mxu0 %v3027
        %8115 = vmatprep.subr.bf16.mxu0 %v2800
        %8116 = vmatpush1.bf16.msra.mxu0 %v2799
        %8117 = vmatprep.subr.bf16.mxu0 0
        %8118 = vmatpush2.bf16.msra.mxu0 0
        %8119 = vmatprep.subr.bf16.mxu0 0
        %8120 = vmatpush2.bf16.msra.mxu0 0
        %8121 = vmatprep.subr.bf16.mxu0 0
        %8122 = vmatpush2.bf16.msra.mxu0 0
        %8123 = vmatprep.subr.bf16.mxu0 0
        %8124 = vmatpush2.bf16.msra.mxu0 0
        %8125 = vmatprep.subr.bf16.mxu0 0
        %8126 = vmatpush2.bf16.msra.mxu0 0
        %8127 = vmatprep.subr.bf16.mxu0 0
        %8128 = vmatpush2.bf16.msra.mxu0 0
        %8129 = vmatprep.subr.bf16.mxu0 0
        %8130 = vmatpush2.bf16.msra.mxu0 0
        %8131 = vmatprep.subr.bf16.mxu0 0
        %8132 = vmatpush2.bf16.msra.mxu0 0
        %8133 = vmatprep.mubr.bf16.mxu0 0
        %8134 = vmatmul.mubr.bf16.gmra.mxu0 %v3763
        %v8135 = vpop.f32.mrf.mxu0
        %v8136 = vadd.f32 0.0, %v8135
        %v8137 = vpop.f32.mrf.mxu0
        %v8138 = vadd.f32 0.0, %v8137
        %v8139 = vpop.f32.mrf.mxu0
        %v8140 = vpop.f32.mrf.mxu0
        %8141 = vdwg.mxu0
        %8142 = vmatprep.subr.bf16.mxu0 0
        %8143 = vmatpush1.bf16.msra.mxu0 0
        %8144 = vmatprep.subr.bf16.mxu0 0
        %8145 = vmatpush1.bf16.msra.mxu0 0
        %8146 = vmatprep.subr.bf16.mxu0 0
        %8147 = vmatpush1.bf16.msra.mxu0 0
        %8148 = vmatprep.subr.bf16.mxu0 0
        %8149 = vmatpush1.bf16.msra.mxu0 0
        %8150 = vmatprep.subr.bf16.mxu0 0
        %8151 = vmatpush1.bf16.msra.mxu0 0
        %8152 = vmatprep.subr.bf16.mxu0 %v4312
        %8153 = vmatpush1.bf16.msra.mxu0 %v4309
        %8154 = vmatprep.subr.bf16.mxu0 %v3030
        %8155 = vmatpush1.bf16.msra.mxu0 %v3029
        %8156 = vmatprep.subr.bf16.mxu0 %v2802
        %8157 = vmatpush1.bf16.msra.mxu0 %v2801
        %8158 = vmatprep.subr.bf16.mxu0 0
        %8159 = vmatpush2.bf16.msra.mxu0 0
        %8160 = vmatprep.subr.bf16.mxu0 0
        %8161 = vmatpush2.bf16.msra.mxu0 0
        %8162 = vmatprep.subr.bf16.mxu0 0
        %8163 = vmatpush2.bf16.msra.mxu0 0
        %8164 = vmatprep.subr.bf16.mxu0 0
        %8165 = vmatpush2.bf16.msra.mxu0 0
        %8166 = vmatprep.subr.bf16.mxu0 0
        %8167 = vmatpush2.bf16.msra.mxu0 0
        %8168 = vmatprep.subr.bf16.mxu0 0
        %8169 = vmatpush2.bf16.msra.mxu0 0
        %8170 = vmatprep.subr.bf16.mxu0 0
        %8171 = vmatpush2.bf16.msra.mxu0 0
        %8172 = vmatprep.subr.bf16.mxu0 0
        %8173 = vmatpush2.bf16.msra.mxu0 0
        %8174 = vmatprep.mubr.bf16.mxu0 0
        %8175 = vmatmul.mubr.bf16.gmra.mxu0 %v3763
        %v8176 = vpop.f32.mrf.mxu0
        %v8177 = vadd.f32 0.0, %v8176
        %v8178 = vpop.f32.mrf.mxu0
        %v8179 = vadd.f32 0.0, %v8178
        %v8180 = vpop.f32.mrf.mxu0
        %v8181 = vpop.f32.mrf.mxu0
        %8182 = vdwg.mxu0
        %8183 = vmatprep.subr.bf16.mxu0 0
        %8184 = vmatpush1.bf16.msra.mxu0 0
        %8185 = vmatprep.subr.bf16.mxu0 0
        %8186 = vmatpush1.bf16.msra.mxu0 0
        %8187 = vmatprep.subr.bf16.mxu0 0
        %8188 = vmatpush1.bf16.msra.mxu0 0
        %8189 = vmatprep.subr.bf16.mxu0 0
        %8190 = vmatpush1.bf16.msra.mxu0 0
        %8191 = vmatprep.subr.bf16.mxu0 0
        %8192 = vmatpush1.bf16.msra.mxu0 0
        %8193 = vmatprep.subr.bf16.mxu0 %v4318
        %8194 = vmatpush1.bf16.msra.mxu0 %v4315
        %8195 = vmatprep.subr.bf16.mxu0 %v3032
        %8196 = vmatpush1.bf16.msra.mxu0 %v3031
        %8197 = vmatprep.subr.bf16.mxu0 %v2804
        %8198 = vmatpush1.bf16.msra.mxu0 %v2803
        %8199 = vmatprep.subr.bf16.mxu0 0
        %8200 = vmatpush2.bf16.msra.mxu0 0
        %8201 = vmatprep.subr.bf16.mxu0 0
        %8202 = vmatpush2.bf16.msra.mxu0 0
        %8203 = vmatprep.subr.bf16.mxu0 0
        %8204 = vmatpush2.bf16.msra.mxu0 0
        %8205 = vmatprep.subr.bf16.mxu0 0
        %8206 = vmatpush2.bf16.msra.mxu0 0
        %8207 = vmatprep.subr.bf16.mxu0 0
        %8208 = vmatpush2.bf16.msra.mxu0 0
        %8209 = vmatprep.subr.bf16.mxu0 0
        %8210 = vmatpush2.bf16.msra.mxu0 0
        %8211 = vmatprep.subr.bf16.mxu0 0
        %8212 = vmatpush2.bf16.msra.mxu0 0
        %8213 = vmatprep.subr.bf16.mxu0 0
        %8214 = vmatpush2.bf16.msra.mxu0 0
        %8215 = vmatprep.mubr.bf16.mxu0 0
        %8216 = vmatmul.mubr.bf16.gmra.mxu0 %v3763
        %v8217 = vpop.f32.mrf.mxu0
        %v8218 = vadd.f32 0.0, %v8217
        %v8219 = vpop.f32.mrf.mxu0
        %v8220 = vadd.f32 0.0, %v8219
        %v8221 = vpop.f32.mrf.mxu0
        %v8222 = vpop.f32.mrf.mxu0
        %8223 = vdwg.mxu0
        %8224 = vmatprep.subr.bf16.mxu0 0
        %8225 = vmatpush1.bf16.msra.mxu0 0
        %8226 = vmatprep.subr.bf16.mxu0 0
        %8227 = vmatpush1.bf16.msra.mxu0 0
        %8228 = vmatprep.subr.bf16.mxu0 0
        %8229 = vmatpush1.bf16.msra.mxu0 0
        %8230 = vmatprep.subr.bf16.mxu0 0
        %8231 = vmatpush1.bf16.msra.mxu0 0
        %8232 = vmatprep.subr.bf16.mxu0 0
        %8233 = vmatpush1.bf16.msra.mxu0 0
        %8234 = vmatprep.subr.bf16.mxu0 %v4324
        %8235 = vmatpush1.bf16.msra.mxu0 %v4321
        %8236 = vmatprep.subr.bf16.mxu0 %v3034
        %8237 = vmatpush1.bf16.msra.mxu0 %v3033
        %8238 = vmatprep.subr.bf16.mxu0 %v2806
        %8239 = vmatpush1.bf16.msra.mxu0 %v2805
        %8240 = vmatprep.subr.bf16.mxu0 0
        %8241 = vmatpush2.bf16.msra.mxu0 0
        %8242 = vmatprep.subr.bf16.mxu0 0
        %8243 = vmatpush2.bf16.msra.mxu0 0
        %8244 = vmatprep.subr.bf16.mxu0 0
        %8245 = vmatpush2.bf16.msra.mxu0 0
        %8246 = vmatprep.subr.bf16.mxu0 0
        %8247 = vmatpush2.bf16.msra.mxu0 0
        %8248 = vmatprep.subr.bf16.mxu0 0
        %8249 = vmatpush2.bf16.msra.mxu0 0
        %8250 = vmatprep.subr.bf16.mxu0 0
        %8251 = vmatpush2.bf16.msra.mxu0 0
        %8252 = vmatprep.subr.bf16.mxu0 0
        %8253 = vmatpush2.bf16.msra.mxu0 0
        %8254 = vmatprep.subr.bf16.mxu0 0
        %8255 = vmatpush2.bf16.msra.mxu0 0
        %8256 = vmatprep.mubr.bf16.mxu0 0
        %8257 = vmatmul.mubr.bf16.gmra.mxu0 %v3763
        %v8258 = vpop.f32.mrf.mxu0
        %v8259 = vadd.f32 0.0, %v8258
        %v8260 = vpop.f32.mrf.mxu0
        %v8261 = vadd.f32 0.0, %v8260
        %v8262 = vpop.f32.mrf.mxu0
        %v8263 = vpop.f32.mrf.mxu0
        %8264 = vdwg.mxu0
        %8265 = vmatprep.subr.bf16.mxu0 0
        %8266 = vmatpush1.bf16.msra.mxu0 0
        %8267 = vmatprep.subr.bf16.mxu0 0
        %8268 = vmatpush1.bf16.msra.mxu0 0
        %8269 = vmatprep.subr.bf16.mxu0 0
        %8270 = vmatpush1.bf16.msra.mxu0 0
        %8271 = vmatprep.subr.bf16.mxu0 0
        %8272 = vmatpush1.bf16.msra.mxu0 0
        %8273 = vmatprep.subr.bf16.mxu0 0
        %8274 = vmatpush1.bf16.msra.mxu0 0
        %8275 = vmatprep.subr.bf16.mxu0 %v4330
        %8276 = vmatpush1.bf16.msra.mxu0 %v4327
        %8277 = vmatprep.subr.bf16.mxu0 %v3036
        %8278 = vmatpush1.bf16.msra.mxu0 %v3035
        %8279 = vmatprep.subr.bf16.mxu0 %v2808
        %8280 = vmatpush1.bf16.msra.mxu0 %v2807
        %8281 = vmatprep.subr.bf16.mxu0 0
        %8282 = vmatpush2.bf16.msra.mxu0 0
        %8283 = vmatprep.subr.bf16.mxu0 0
        %8284 = vmatpush2.bf16.msra.mxu0 0
        %8285 = vmatprep.subr.bf16.mxu0 0
        %8286 = vmatpush2.bf16.msra.mxu0 0
        %8287 = vmatprep.subr.bf16.mxu0 0
        %8288 = vmatpush2.bf16.msra.mxu0 0
        %8289 = vmatprep.subr.bf16.mxu0 0
        %8290 = vmatpush2.bf16.msra.mxu0 0
        %8291 = vmatprep.subr.bf16.mxu0 0
        %8292 = vmatpush2.bf16.msra.mxu0 0
        %8293 = vmatprep.subr.bf16.mxu0 0
        %8294 = vmatpush2.bf16.msra.mxu0 0
        %8295 = vmatprep.subr.bf16.mxu0 0
        %8296 = vmatpush2.bf16.msra.mxu0 0
        %8297 = vmatprep.mubr.bf16.mxu0 0
        %8298 = vmatmul.mubr.bf16.gmra.mxu0 %v3763
        %v8299 = vpop.f32.mrf.mxu0
        %v8300 = vadd.f32 0.0, %v8299
        %v8301 = vpop.f32.mrf.mxu0
        %v8302 = vadd.f32 0.0, %v8301
        %v8303 = vpop.f32.mrf.mxu0
        %v8304 = vpop.f32.mrf.mxu0
        %8305 = vdwg.mxu0
        %8306 = vmatprep.subr.bf16.mxu0 0
        %8307 = vmatpush1.bf16.msra.mxu0 0
        %8308 = vmatprep.subr.bf16.mxu0 0
        %8309 = vmatpush1.bf16.msra.mxu0 0
        %8310 = vmatprep.subr.bf16.mxu0 0
        %8311 = vmatpush1.bf16.msra.mxu0 0
        %8312 = vmatprep.subr.bf16.mxu0 0
        %8313 = vmatpush1.bf16.msra.mxu0 0
        %8314 = vmatprep.subr.bf16.mxu0 0
        %8315 = vmatpush1.bf16.msra.mxu0 0
        %8316 = vmatprep.subr.bf16.mxu0 %v4336
        %8317 = vmatpush1.bf16.msra.mxu0 %v4333
        %8318 = vmatprep.subr.bf16.mxu0 %v3038
        %8319 = vmatpush1.bf16.msra.mxu0 %v3037
        %8320 = vmatprep.subr.bf16.mxu0 %v2810
        %8321 = vmatpush1.bf16.msra.mxu0 %v2809
        %8322 = vmatprep.subr.bf16.mxu0 0
        %8323 = vmatpush2.bf16.msra.mxu0 0
        %8324 = vmatprep.subr.bf16.mxu0 0
        %8325 = vmatpush2.bf16.msra.mxu0 0
        %8326 = vmatprep.subr.bf16.mxu0 0
        %8327 = vmatpush2.bf16.msra.mxu0 0
        %8328 = vmatprep.subr.bf16.mxu0 0
        %8329 = vmatpush2.bf16.msra.mxu0 0
        %8330 = vmatprep.subr.bf16.mxu0 0
        %8331 = vmatpush2.bf16.msra.mxu0 0
        %8332 = vmatprep.subr.bf16.mxu0 0
        %8333 = vmatpush2.bf16.msra.mxu0 0
        %8334 = vmatprep.subr.bf16.mxu0 0
        %8335 = vmatpush2.bf16.msra.mxu0 0
        %8336 = vmatprep.subr.bf16.mxu0 0
        %8337 = vmatpush2.bf16.msra.mxu0 0
        %8338 = vmatprep.mubr.bf16.mxu0 0
        %8339 = vmatmul.mubr.bf16.gmra.mxu0 %v3763
        %v8340 = vpop.f32.mrf.mxu0
        %v8341 = vadd.f32 0.0, %v8340
        %v8342 = vpop.f32.mrf.mxu0
        %v8343 = vadd.f32 0.0, %v8342
        %v8344 = vpop.f32.mrf.mxu0
        %v8345 = vpop.f32.mrf.mxu0
        %8346 = vdwg.mxu0
        %8347 = vmatprep.subr.bf16.mxu0 0
        %8348 = vmatpush1.bf16.msra.mxu0 0
        %8349 = vmatprep.subr.bf16.mxu0 0
        %8350 = vmatpush1.bf16.msra.mxu0 0
        %8351 = vmatprep.subr.bf16.mxu0 0
        %8352 = vmatpush1.bf16.msra.mxu0 0
        %8353 = vmatprep.subr.bf16.mxu0 0
        %8354 = vmatpush1.bf16.msra.mxu0 0
        %8355 = vmatprep.subr.bf16.mxu0 0
        %8356 = vmatpush1.bf16.msra.mxu0 0
        %8357 = vmatprep.subr.bf16.mxu0 %v4342
        %8358 = vmatpush1.bf16.msra.mxu0 %v4339
        %8359 = vmatprep.subr.bf16.mxu0 %v3040
        %8360 = vmatpush1.bf16.msra.mxu0 %v3039
        %8361 = vmatprep.subr.bf16.mxu0 %v2812
        %8362 = vmatpush1.bf16.msra.mxu0 %v2811
        %8363 = vmatprep.subr.bf16.mxu0 0
        %8364 = vmatpush2.bf16.msra.mxu0 0
        %8365 = vmatprep.subr.bf16.mxu0 0
        %8366 = vmatpush2.bf16.msra.mxu0 0
        %8367 = vmatprep.subr.bf16.mxu0 0
        %8368 = vmatpush2.bf16.msra.mxu0 0
        %8369 = vmatprep.subr.bf16.mxu0 0
        %8370 = vmatpush2.bf16.msra.mxu0 0
        %8371 = vmatprep.subr.bf16.mxu0 0
        %8372 = vmatpush2.bf16.msra.mxu0 0
        %8373 = vmatprep.subr.bf16.mxu0 0
        %8374 = vmatpush2.bf16.msra.mxu0 0
        %8375 = vmatprep.subr.bf16.mxu0 0
        %8376 = vmatpush2.bf16.msra.mxu0 0
        %8377 = vmatprep.subr.bf16.mxu0 0
        %8378 = vmatpush2.bf16.msra.mxu0 0
        %8379 = vmatprep.mubr.bf16.mxu0 0
        %8380 = vmatmul.mubr.bf16.gmra.mxu0 %v3763
        %v8381 = vpop.f32.mrf.mxu0
        %v8382 = vadd.f32 0.0, %v8381
        %v8383 = vpop.f32.mrf.mxu0
        %v8384 = vadd.f32 0.0, %v8383
        %v8385 = vpop.f32.mrf.mxu0
        %v8386 = vpop.f32.mrf.mxu0
        %8387 = vdwg.mxu0
        %8388 = vmatprep.subr.bf16.mxu0 0
        %8389 = vmatpush1.bf16.msra.mxu0 0
        %8390 = vmatprep.subr.bf16.mxu0 0
        %8391 = vmatpush1.bf16.msra.mxu0 0
        %8392 = vmatprep.subr.bf16.mxu0 0
        %8393 = vmatpush1.bf16.msra.mxu0 0
        %8394 = vmatprep.subr.bf16.mxu0 0
        %8395 = vmatpush1.bf16.msra.mxu0 0
        %8396 = vmatprep.subr.bf16.mxu0 0
        %8397 = vmatpush1.bf16.msra.mxu0 0
        %8398 = vmatprep.subr.bf16.mxu0 %v4348
        %8399 = vmatpush1.bf16.msra.mxu0 %v4345
        %8400 = vmatprep.subr.bf16.mxu0 %v3042
        %8401 = vmatpush1.bf16.msra.mxu0 %v3041
        %8402 = vmatprep.subr.bf16.mxu0 %v2814
        %8403 = vmatpush1.bf16.msra.mxu0 %v2813
        %8404 = vmatprep.subr.bf16.mxu0 0
        %8405 = vmatpush2.bf16.msra.mxu0 0
        %8406 = vmatprep.subr.bf16.mxu0 0
        %8407 = vmatpush2.bf16.msra.mxu0 0
        %8408 = vmatprep.subr.bf16.mxu0 0
        %8409 = vmatpush2.bf16.msra.mxu0 0
        %8410 = vmatprep.subr.bf16.mxu0 0
        %8411 = vmatpush2.bf16.msra.mxu0 0
        %8412 = vmatprep.subr.bf16.mxu0 0
        %8413 = vmatpush2.bf16.msra.mxu0 0
        %8414 = vmatprep.subr.bf16.mxu0 0
        %8415 = vmatpush2.bf16.msra.mxu0 0
        %8416 = vmatprep.subr.bf16.mxu0 0
        %8417 = vmatpush2.bf16.msra.mxu0 0
        %8418 = vmatprep.subr.bf16.mxu0 0
        %8419 = vmatpush2.bf16.msra.mxu0 0
        %8420 = vmatprep.mubr.bf16.mxu0 0
        %8421 = vmatmul.mubr.bf16.gmra.mxu0 %v3763
        %v8422 = vpop.f32.mrf.mxu0
        %v8423 = vadd.f32 0.0, %v8422
        %v8424 = vpop.f32.mrf.mxu0
        %v8425 = vadd.f32 0.0, %v8424
        %v8426 = vpop.f32.mrf.mxu0
        %v8427 = vpop.f32.mrf.mxu0
        %8428 = vdwg.mxu0
        %8429 = vmatprep.subr.bf16.mxu0 0
        %8430 = vmatpush1.bf16.msra.mxu0 0
        %8431 = vmatprep.subr.bf16.mxu0 0
        %8432 = vmatpush1.bf16.msra.mxu0 0
        %8433 = vmatprep.subr.bf16.mxu0 0
        %8434 = vmatpush1.bf16.msra.mxu0 0
        %8435 = vmatprep.subr.bf16.mxu0 0
        %8436 = vmatpush1.bf16.msra.mxu0 0
        %8437 = vmatprep.subr.bf16.mxu0 0
        %8438 = vmatpush1.bf16.msra.mxu0 0
        %8439 = vmatprep.subr.bf16.mxu0 %v4354
        %8440 = vmatpush1.bf16.msra.mxu0 %v4351
        %8441 = vmatprep.subr.bf16.mxu0 %v3044
        %8442 = vmatpush1.bf16.msra.mxu0 %v3043
        %8443 = vmatprep.subr.bf16.mxu0 %v2816
        %8444 = vmatpush1.bf16.msra.mxu0 %v2815
        %8445 = vmatprep.subr.bf16.mxu0 0
        %8446 = vmatpush2.bf16.msra.mxu0 0
        %8447 = vmatprep.subr.bf16.mxu0 0
        %8448 = vmatpush2.bf16.msra.mxu0 0
        %8449 = vmatprep.subr.bf16.mxu0 0
        %8450 = vmatpush2.bf16.msra.mxu0 0
        %8451 = vmatprep.subr.bf16.mxu0 0
        %8452 = vmatpush2.bf16.msra.mxu0 0
        %8453 = vmatprep.subr.bf16.mxu0 0
        %8454 = vmatpush2.bf16.msra.mxu0 0
        %8455 = vmatprep.subr.bf16.mxu0 0
        %8456 = vmatpush2.bf16.msra.mxu0 0
        %8457 = vmatprep.subr.bf16.mxu0 0
        %8458 = vmatpush2.bf16.msra.mxu0 0
        %8459 = vmatprep.subr.bf16.mxu0 0
        %8460 = vmatpush2.bf16.msra.mxu0 0
        %8461 = vmatprep.mubr.bf16.mxu0 0
        %8462 = vmatmul.mubr.bf16.gmra.mxu0 %v3763
        %v8463 = vpop.f32.mrf.mxu0
        %v8464 = vadd.f32 0.0, %v8463
        %v8465 = vpop.f32.mrf.mxu0
        %v8466 = vadd.f32 0.0, %v8465
        %v8467 = vpop.f32.mrf.mxu0
        %v8468 = vpop.f32.mrf.mxu0
        %8469 = vdwg.mxu0
        %8470 = vmatprep.subr.bf16.mxu0 0
        %8471 = vmatpush1.bf16.msra.mxu0 0
        %8472 = vmatprep.subr.bf16.mxu0 0
        %8473 = vmatpush1.bf16.msra.mxu0 0
        %8474 = vmatprep.subr.bf16.mxu0 0
        %8475 = vmatpush1.bf16.msra.mxu0 0
        %8476 = vmatprep.subr.bf16.mxu0 0
        %8477 = vmatpush1.bf16.msra.mxu0 0
        %8478 = vmatprep.subr.bf16.mxu0 0
        %8479 = vmatpush1.bf16.msra.mxu0 0
        %8480 = vmatprep.subr.bf16.mxu0 %v4360
        %8481 = vmatpush1.bf16.msra.mxu0 %v4357
        %8482 = vmatprep.subr.bf16.mxu0 %v3046
        %8483 = vmatpush1.bf16.msra.mxu0 %v3045
        %8484 = vmatprep.subr.bf16.mxu0 %v2818
        %8485 = vmatpush1.bf16.msra.mxu0 %v2817
        %8486 = vmatprep.subr.bf16.mxu0 0
        %8487 = vmatpush2.bf16.msra.mxu0 0
        %8488 = vmatprep.subr.bf16.mxu0 0
        %8489 = vmatpush2.bf16.msra.mxu0 0
        %8490 = vmatprep.subr.bf16.mxu0 0
        %8491 = vmatpush2.bf16.msra.mxu0 0
        %8492 = vmatprep.subr.bf16.mxu0 0
        %8493 = vmatpush2.bf16.msra.mxu0 0
        %8494 = vmatprep.subr.bf16.mxu0 0
        %8495 = vmatpush2.bf16.msra.mxu0 0
        %8496 = vmatprep.subr.bf16.mxu0 0
        %8497 = vmatpush2.bf16.msra.mxu0 0
        %8498 = vmatprep.subr.bf16.mxu0 0
        %8499 = vmatpush2.bf16.msra.mxu0 0
        %8500 = vmatprep.subr.bf16.mxu0 0
        %8501 = vmatpush2.bf16.msra.mxu0 0
        %8502 = vmatprep.mubr.bf16.mxu0 0
        %8503 = vmatmul.mubr.bf16.gmra.mxu0 %v3763
        %v8504 = vpop.f32.mrf.mxu0
        %v8505 = vadd.f32 0.0, %v8504
        %v8506 = vpop.f32.mrf.mxu0
        %v8507 = vadd.f32 0.0, %v8506
        %v8508 = vpop.f32.mrf.mxu0
        %v8509 = vpop.f32.mrf.mxu0
        %8510 = vdwg.mxu0
        %8511 = vmatprep.subr.bf16.mxu0 0
        %8512 = vmatpush1.bf16.msra.mxu0 0
        %8513 = vmatprep.subr.bf16.mxu0 0
        %8514 = vmatpush1.bf16.msra.mxu0 0
        %8515 = vmatprep.subr.bf16.mxu0 0
        %8516 = vmatpush1.bf16.msra.mxu0 0
        %8517 = vmatprep.subr.bf16.mxu0 0
        %8518 = vmatpush1.bf16.msra.mxu0 0
        %8519 = vmatprep.subr.bf16.mxu0 0
        %8520 = vmatpush1.bf16.msra.mxu0 0
        %8521 = vmatprep.subr.bf16.mxu0 %v4366
        %8522 = vmatpush1.bf16.msra.mxu0 %v4363
        %8523 = vmatprep.subr.bf16.mxu0 %v3048
        %8524 = vmatpush1.bf16.msra.mxu0 %v3047
        %8525 = vmatprep.subr.bf16.mxu0 %v2820
        %8526 = vmatpush1.bf16.msra.mxu0 %v2819
        %8527 = vmatprep.subr.bf16.mxu0 0
        %8528 = vmatpush2.bf16.msra.mxu0 0
        %8529 = vmatprep.subr.bf16.mxu0 0
        %8530 = vmatpush2.bf16.msra.mxu0 0
        %8531 = vmatprep.subr.bf16.mxu0 0
        %8532 = vmatpush2.bf16.msra.mxu0 0
        %8533 = vmatprep.subr.bf16.mxu0 0
        %8534 = vmatpush2.bf16.msra.mxu0 0
        %8535 = vmatprep.subr.bf16.mxu0 0
        %8536 = vmatpush2.bf16.msra.mxu0 0
        %8537 = vmatprep.subr.bf16.mxu0 0
        %8538 = vmatpush2.bf16.msra.mxu0 0
        %8539 = vmatprep.subr.bf16.mxu0 0
        %8540 = vmatpush2.bf16.msra.mxu0 0
        %8541 = vmatprep.subr.bf16.mxu0 0
        %8542 = vmatpush2.bf16.msra.mxu0 0
        %8543 = vmatprep.mubr.bf16.mxu0 0
        %8544 = vmatmul.mubr.bf16.gmra.mxu0 %v3763
        %v8545 = vpop.f32.mrf.mxu0
        %v8546 = vadd.f32 0.0, %v8545
        %v8547 = vpop.f32.mrf.mxu0
        %v8548 = vadd.f32 0.0, %v8547
        %v8549 = vpop.f32.mrf.mxu0
        %v8550 = vpop.f32.mrf.mxu0
        %8551 = vdwg.mxu0
        %8552 = vmatprep.subr.bf16.mxu0 0
        %8553 = vmatpush1.bf16.msra.mxu0 0
        %8554 = vmatprep.subr.bf16.mxu0 0
        %8555 = vmatpush1.bf16.msra.mxu0 0
        %8556 = vmatprep.subr.bf16.mxu0 0
        %8557 = vmatpush1.bf16.msra.mxu0 0
        %8558 = vmatprep.subr.bf16.mxu0 0
        %8559 = vmatpush1.bf16.msra.mxu0 0
        %8560 = vmatprep.subr.bf16.mxu0 0
        %8561 = vmatpush1.bf16.msra.mxu0 0
        %8562 = vmatprep.subr.bf16.mxu0 %v4372
        %8563 = vmatpush1.bf16.msra.mxu0 %v4369
        %8564 = vmatprep.subr.bf16.mxu0 %v3050
        %8565 = vmatpush1.bf16.msra.mxu0 %v3049
        %8566 = vmatprep.subr.bf16.mxu0 %v2822
        %8567 = vmatpush1.bf16.msra.mxu0 %v2821
        %8568 = vmatprep.subr.bf16.mxu0 0
        %8569 = vmatpush2.bf16.msra.mxu0 0
        %8570 = vmatprep.subr.bf16.mxu0 0
        %8571 = vmatpush2.bf16.msra.mxu0 0
        %8572 = vmatprep.subr.bf16.mxu0 0
        %8573 = vmatpush2.bf16.msra.mxu0 0
        %8574 = vmatprep.subr.bf16.mxu0 0
        %8575 = vmatpush2.bf16.msra.mxu0 0
        %8576 = vmatprep.subr.bf16.mxu0 0
        %8577 = vmatpush2.bf16.msra.mxu0 0
        %8578 = vmatprep.subr.bf16.mxu0 0
        %8579 = vmatpush2.bf16.msra.mxu0 0
        %8580 = vmatprep.subr.bf16.mxu0 0
        %8581 = vmatpush2.bf16.msra.mxu0 0
        %8582 = vmatprep.subr.bf16.mxu0 0
        %8583 = vmatpush2.bf16.msra.mxu0 0
        %8584 = vmatprep.mubr.bf16.mxu0 0
        %8585 = vmatmul.mubr.bf16.gmra.mxu0 %v3763
        %v8586 = vpop.f32.mrf.mxu0
        %v8587 = vadd.f32 0.0, %v8586
        %v8588 = vpop.f32.mrf.mxu0
        %v8589 = vadd.f32 0.0, %v8588
        %v8590 = vpop.f32.mrf.mxu0
        %v8591 = vpop.f32.mrf.mxu0
        %8592 = vdwg.mxu0
        %8593 = vmatprep.subr.bf16.mxu0 0
        %8594 = vmatpush1.bf16.msra.mxu0 0
        %8595 = vmatprep.subr.bf16.mxu0 0
        %8596 = vmatpush1.bf16.msra.mxu0 0
        %8597 = vmatprep.subr.bf16.mxu0 0
        %8598 = vmatpush1.bf16.msra.mxu0 0
        %8599 = vmatprep.subr.bf16.mxu0 0
        %8600 = vmatpush1.bf16.msra.mxu0 0
        %8601 = vmatprep.subr.bf16.mxu0 0
        %8602 = vmatpush1.bf16.msra.mxu0 0
        %8603 = vmatprep.subr.bf16.mxu0 %v4378
        %8604 = vmatpush1.bf16.msra.mxu0 %v4375
        %8605 = vmatprep.subr.bf16.mxu0 %v3052
        %8606 = vmatpush1.bf16.msra.mxu0 %v3051
        %8607 = vmatprep.subr.bf16.mxu0 %v2824
        %8608 = vmatpush1.bf16.msra.mxu0 %v2823
        %8609 = vmatprep.subr.bf16.mxu0 0
        %8610 = vmatpush2.bf16.msra.mxu0 0
        %8611 = vmatprep.subr.bf16.mxu0 0
        %8612 = vmatpush2.bf16.msra.mxu0 0
        %8613 = vmatprep.subr.bf16.mxu0 0
        %8614 = vmatpush2.bf16.msra.mxu0 0
        %8615 = vmatprep.subr.bf16.mxu0 0
        %8616 = vmatpush2.bf16.msra.mxu0 0
        %8617 = vmatprep.subr.bf16.mxu0 0
        %8618 = vmatpush2.bf16.msra.mxu0 0
        %8619 = vmatprep.subr.bf16.mxu0 0
        %8620 = vmatpush2.bf16.msra.mxu0 0
        %8621 = vmatprep.subr.bf16.mxu0 0
        %8622 = vmatpush2.bf16.msra.mxu0 0
        %8623 = vmatprep.subr.bf16.mxu0 0
        %8624 = vmatpush2.bf16.msra.mxu0 0
        %8625 = vmatprep.mubr.bf16.mxu0 0
        %8626 = vmatmul.mubr.bf16.gmra.mxu0 %v3763
        %v8627 = vpop.f32.mrf.mxu0
        %v8628 = vadd.f32 0.0, %v8627
        %v8629 = vpop.f32.mrf.mxu0
        %v8630 = vadd.f32 0.0, %v8629
        %v8631 = vpop.f32.mrf.mxu0
        %v8632 = vpop.f32.mrf.mxu0
        %8633 = vdwg.mxu0
        %8634 = vmatprep.subr.bf16.mxu0 0
        %8635 = vmatpush1.bf16.msra.mxu0 0
        %8636 = vmatprep.subr.bf16.mxu0 0
        %8637 = vmatpush1.bf16.msra.mxu0 0
        %8638 = vmatprep.subr.bf16.mxu0 0
        %8639 = vmatpush1.bf16.msra.mxu0 0
        %8640 = vmatprep.subr.bf16.mxu0 0
        %8641 = vmatpush1.bf16.msra.mxu0 0
        %8642 = vmatprep.subr.bf16.mxu0 0
        %8643 = vmatpush1.bf16.msra.mxu0 0
        %8644 = vmatprep.subr.bf16.mxu0 %v4384
        %8645 = vmatpush1.bf16.msra.mxu0 %v4381
        %8646 = vmatprep.subr.bf16.mxu0 %v3054
        %8647 = vmatpush1.bf16.msra.mxu0 %v3053
        %8648 = vmatprep.subr.bf16.mxu0 %v2826
        %8649 = vmatpush1.bf16.msra.mxu0 %v2825
        %8650 = vmatprep.subr.bf16.mxu0 0
        %8651 = vmatpush2.bf16.msra.mxu0 0
        %8652 = vmatprep.subr.bf16.mxu0 0
        %8653 = vmatpush2.bf16.msra.mxu0 0
        %8654 = vmatprep.subr.bf16.mxu0 0
        %8655 = vmatpush2.bf16.msra.mxu0 0
        %8656 = vmatprep.subr.bf16.mxu0 0
        %8657 = vmatpush2.bf16.msra.mxu0 0
        %8658 = vmatprep.subr.bf16.mxu0 0
        %8659 = vmatpush2.bf16.msra.mxu0 0
        %8660 = vmatprep.subr.bf16.mxu0 0
        %8661 = vmatpush2.bf16.msra.mxu0 0
        %8662 = vmatprep.subr.bf16.mxu0 0
        %8663 = vmatpush2.bf16.msra.mxu0 0
        %8664 = vmatprep.subr.bf16.mxu0 0
        %8665 = vmatpush2.bf16.msra.mxu0 0
        %8666 = vmatprep.mubr.bf16.mxu0 0
        %8667 = vmatmul.mubr.bf16.gmra.mxu0 %v3763
        %v8668 = vpop.f32.mrf.mxu0
        %v8669 = vadd.f32 0.0, %v8668
        %v8670 = vpop.f32.mrf.mxu0
        %v8671 = vadd.f32 0.0, %v8670
        %v8672 = vpop.f32.mrf.mxu0
        %v8673 = vpop.f32.mrf.mxu0
        %8674 = vdwg.mxu0
        %8675 = vmatprep.subr.bf16.mxu0 0
        %8676 = vmatpush1.bf16.msra.mxu0 0
        %8677 = vmatprep.subr.bf16.mxu0 0
        %8678 = vmatpush1.bf16.msra.mxu0 0
        %8679 = vmatprep.subr.bf16.mxu0 0
        %8680 = vmatpush1.bf16.msra.mxu0 0
        %8681 = vmatprep.subr.bf16.mxu0 0
        %8682 = vmatpush1.bf16.msra.mxu0 0
        %8683 = vmatprep.subr.bf16.mxu0 0
        %8684 = vmatpush1.bf16.msra.mxu0 0
        %8685 = vmatprep.subr.bf16.mxu0 %v4390
        %8686 = vmatpush1.bf16.msra.mxu0 %v4387
        %8687 = vmatprep.subr.bf16.mxu0 %v3056
        %8688 = vmatpush1.bf16.msra.mxu0 %v3055
        %8689 = vmatprep.subr.bf16.mxu0 %v2828
        %8690 = vmatpush1.bf16.msra.mxu0 %v2827
        %8691 = vmatprep.subr.bf16.mxu0 0
        %8692 = vmatpush2.bf16.msra.mxu0 0
        %8693 = vmatprep.subr.bf16.mxu0 0
        %8694 = vmatpush2.bf16.msra.mxu0 0
        %8695 = vmatprep.subr.bf16.mxu0 0
        %8696 = vmatpush2.bf16.msra.mxu0 0
        %8697 = vmatprep.subr.bf16.mxu0 0
        %8698 = vmatpush2.bf16.msra.mxu0 0
        %8699 = vmatprep.subr.bf16.mxu0 0
        %8700 = vmatpush2.bf16.msra.mxu0 0
        %8701 = vmatprep.subr.bf16.mxu0 0
        %8702 = vmatpush2.bf16.msra.mxu0 0
        %8703 = vmatprep.subr.bf16.mxu0 0
        %8704 = vmatpush2.bf16.msra.mxu0 0
        %8705 = vmatprep.subr.bf16.mxu0 0
        %8706 = vmatpush2.bf16.msra.mxu0 0
        %8707 = vmatprep.mubr.bf16.mxu0 0
        %8708 = vmatmul.mubr.bf16.gmra.mxu0 %v3763
        %v8709 = vpop.f32.mrf.mxu0
        %v8710 = vadd.f32 0.0, %v8709
        %v8711 = vpop.f32.mrf.mxu0
        %v8712 = vadd.f32 0.0, %v8711
        %v8713 = vpop.f32.mrf.mxu0
        %v8714 = vpop.f32.mrf.mxu0
        %8715 = vdwg.mxu0
        %8716 = vmatprep.subr.bf16.mxu0 0
        %8717 = vmatpush1.bf16.msra.mxu0 0
        %8718 = vmatprep.subr.bf16.mxu0 0
        %8719 = vmatpush1.bf16.msra.mxu0 0
        %8720 = vmatprep.subr.bf16.mxu0 0
        %8721 = vmatpush1.bf16.msra.mxu0 0
        %8722 = vmatprep.subr.bf16.mxu0 0
        %8723 = vmatpush1.bf16.msra.mxu0 0
        %8724 = vmatprep.subr.bf16.mxu0 0
        %8725 = vmatpush1.bf16.msra.mxu0 0
        %8726 = vmatprep.subr.bf16.mxu0 %v4396
        %8727 = vmatpush1.bf16.msra.mxu0 %v4393
        %8728 = vmatprep.subr.bf16.mxu0 %v3058
        %8729 = vmatpush1.bf16.msra.mxu0 %v3057
        %8730 = vmatprep.subr.bf16.mxu0 %v2830
        %8731 = vmatpush1.bf16.msra.mxu0 %v2829
        %8732 = vmatprep.subr.bf16.mxu0 0
        %8733 = vmatpush2.bf16.msra.mxu0 0
        %8734 = vmatprep.subr.bf16.mxu0 0
        %8735 = vmatpush2.bf16.msra.mxu0 0
        %8736 = vmatprep.subr.bf16.mxu0 0
        %8737 = vmatpush2.bf16.msra.mxu0 0
        %8738 = vmatprep.subr.bf16.mxu0 0
        %8739 = vmatpush2.bf16.msra.mxu0 0
        %8740 = vmatprep.subr.bf16.mxu0 0
        %8741 = vmatpush2.bf16.msra.mxu0 0
        %8742 = vmatprep.subr.bf16.mxu0 0
        %8743 = vmatpush2.bf16.msra.mxu0 0
        %8744 = vmatprep.subr.bf16.mxu0 0
        %8745 = vmatpush2.bf16.msra.mxu0 0
        %8746 = vmatprep.subr.bf16.mxu0 0
        %8747 = vmatpush2.bf16.msra.mxu0 0
        %8748 = vmatprep.mubr.bf16.mxu0 0
        %8749 = vmatmul.mubr.bf16.gmra.mxu0 %v3763
        %v8750 = vpop.f32.mrf.mxu0
        %v8751 = vadd.f32 0.0, %v8750
        %v8752 = vpop.f32.mrf.mxu0
        %v8753 = vadd.f32 0.0, %v8752
        %v8754 = vpop.f32.mrf.mxu0
        %v8755 = vpop.f32.mrf.mxu0
        %8756 = vdwg.mxu0
        %8757 = vmatprep.subr.bf16.mxu0 0
        %8758 = vmatpush1.bf16.msra.mxu0 0
        %8759 = vmatprep.subr.bf16.mxu0 0
        %8760 = vmatpush1.bf16.msra.mxu0 0
        %8761 = vmatprep.subr.bf16.mxu0 0
        %8762 = vmatpush1.bf16.msra.mxu0 0
        %8763 = vmatprep.subr.bf16.mxu0 0
        %8764 = vmatpush1.bf16.msra.mxu0 0
        %8765 = vmatprep.subr.bf16.mxu0 0
        %8766 = vmatpush1.bf16.msra.mxu0 0
        %8767 = vmatprep.subr.bf16.mxu0 %v4402
        %8768 = vmatpush1.bf16.msra.mxu0 %v4399
        %8769 = vmatprep.subr.bf16.mxu0 %v3060
        %8770 = vmatpush1.bf16.msra.mxu0 %v3059
        %8771 = vmatprep.subr.bf16.mxu0 %v2832
        %8772 = vmatpush1.bf16.msra.mxu0 %v2831
        %8773 = vmatprep.subr.bf16.mxu0 0
        %8774 = vmatpush2.bf16.msra.mxu0 0
        %8775 = vmatprep.subr.bf16.mxu0 0
        %8776 = vmatpush2.bf16.msra.mxu0 0
        %8777 = vmatprep.subr.bf16.mxu0 0
        %8778 = vmatpush2.bf16.msra.mxu0 0
        %8779 = vmatprep.subr.bf16.mxu0 0
        %8780 = vmatpush2.bf16.msra.mxu0 0
        %8781 = vmatprep.subr.bf16.mxu0 0
        %8782 = vmatpush2.bf16.msra.mxu0 0
        %8783 = vmatprep.subr.bf16.mxu0 0
        %8784 = vmatpush2.bf16.msra.mxu0 0
        %8785 = vmatprep.subr.bf16.mxu0 0
        %8786 = vmatpush2.bf16.msra.mxu0 0
        %8787 = vmatprep.subr.bf16.mxu0 0
        %8788 = vmatpush2.bf16.msra.mxu0 0
        %8789 = vmatprep.mubr.bf16.mxu0 0
        %8790 = vmatmul.mubr.bf16.gmra.mxu0 %v3763
        %v8791 = vpop.f32.mrf.mxu0
        %v8792 = vadd.f32 0.0, %v8791
        %v8793 = vpop.f32.mrf.mxu0
        %v8794 = vadd.f32 0.0, %v8793
        %v8795 = vpop.f32.mrf.mxu0
        %v8796 = vpop.f32.mrf.mxu0
        %8797 = vdwg.mxu0
        %8798 = vmatprep.subr.bf16.mxu0 0
        %8799 = vmatpush1.bf16.msra.mxu0 0
        %8800 = vmatprep.subr.bf16.mxu0 0
        %8801 = vmatpush1.bf16.msra.mxu0 0
        %8802 = vmatprep.subr.bf16.mxu0 0
        %8803 = vmatpush1.bf16.msra.mxu0 0
        %8804 = vmatprep.subr.bf16.mxu0 0
        %8805 = vmatpush1.bf16.msra.mxu0 0
        %8806 = vmatprep.subr.bf16.mxu0 0
        %8807 = vmatpush1.bf16.msra.mxu0 0
        %8808 = vmatprep.subr.bf16.mxu0 %v4408
        %8809 = vmatpush1.bf16.msra.mxu0 %v4405
        %8810 = vmatprep.subr.bf16.mxu0 %v3062
        %8811 = vmatpush1.bf16.msra.mxu0 %v3061
        %8812 = vmatprep.subr.bf16.mxu0 %v2834
        %8813 = vmatpush1.bf16.msra.mxu0 %v2833
        %8814 = vmatprep.subr.bf16.mxu0 0
        %8815 = vmatpush2.bf16.msra.mxu0 0
        %8816 = vmatprep.subr.bf16.mxu0 0
        %8817 = vmatpush2.bf16.msra.mxu0 0
        %8818 = vmatprep.subr.bf16.mxu0 0
        %8819 = vmatpush2.bf16.msra.mxu0 0
        %8820 = vmatprep.subr.bf16.mxu0 0
        %8821 = vmatpush2.bf16.msra.mxu0 0
        %8822 = vmatprep.subr.bf16.mxu0 0
        %8823 = vmatpush2.bf16.msra.mxu0 0
        %8824 = vmatprep.subr.bf16.mxu0 0
        %8825 = vmatpush2.bf16.msra.mxu0 0
        %8826 = vmatprep.subr.bf16.mxu0 0
        %8827 = vmatpush2.bf16.msra.mxu0 0
        %8828 = vmatprep.subr.bf16.mxu0 0
        %8829 = vmatpush2.bf16.msra.mxu0 0
        %8830 = vmatprep.mubr.bf16.mxu0 0
        %8831 = vmatmul.mubr.bf16.gmra.mxu0 %v3763
        %v8832 = vpop.f32.mrf.mxu0
        %v8833 = vadd.f32 0.0, %v8832
        %v8834 = vpop.f32.mrf.mxu0
        %v8835 = vadd.f32 0.0, %v8834
        %v8836 = vpop.f32.mrf.mxu0
        %v8837 = vpop.f32.mrf.mxu0
        %8838 = vdwg.mxu0
        %8839 = vmatprep.subr.bf16.mxu0 0
        %8840 = vmatpush1.bf16.msra.mxu0 0
        %8841 = vmatprep.subr.bf16.mxu0 0
        %8842 = vmatpush1.bf16.msra.mxu0 0
        %8843 = vmatprep.subr.bf16.mxu0 0
        %8844 = vmatpush1.bf16.msra.mxu0 0
        %8845 = vmatprep.subr.bf16.mxu0 0
        %8846 = vmatpush1.bf16.msra.mxu0 0
        %8847 = vmatprep.subr.bf16.mxu0 0
        %8848 = vmatpush1.bf16.msra.mxu0 0
        %8849 = vmatprep.subr.bf16.mxu0 %v4414
        %8850 = vmatpush1.bf16.msra.mxu0 %v4411
        %8851 = vmatprep.subr.bf16.mxu0 %v3064
        %8852 = vmatpush1.bf16.msra.mxu0 %v3063
        %8853 = vmatprep.subr.bf16.mxu0 %v2836
        %8854 = vmatpush1.bf16.msra.mxu0 %v2835
        %8855 = vmatprep.subr.bf16.mxu0 0
        %8856 = vmatpush2.bf16.msra.mxu0 0
        %8857 = vmatprep.subr.bf16.mxu0 0
        %8858 = vmatpush2.bf16.msra.mxu0 0
        %8859 = vmatprep.subr.bf16.mxu0 0
        %8860 = vmatpush2.bf16.msra.mxu0 0
        %8861 = vmatprep.subr.bf16.mxu0 0
        %8862 = vmatpush2.bf16.msra.mxu0 0
        %8863 = vmatprep.subr.bf16.mxu0 0
        %8864 = vmatpush2.bf16.msra.mxu0 0
        %8865 = vmatprep.subr.bf16.mxu0 0
        %8866 = vmatpush2.bf16.msra.mxu0 0
        %8867 = vmatprep.subr.bf16.mxu0 0
        %8868 = vmatpush2.bf16.msra.mxu0 0
        %8869 = vmatprep.subr.bf16.mxu0 0
        %8870 = vmatpush2.bf16.msra.mxu0 0
        %8871 = vmatprep.mubr.bf16.mxu0 0
        %8872 = vmatmul.mubr.bf16.gmra.mxu0 %v3763
        %v8873 = vpop.f32.mrf.mxu0
        %v8874 = vadd.f32 0.0, %v8873
        %v8875 = vpop.f32.mrf.mxu0
        %v8876 = vadd.f32 0.0, %v8875
        %v8877 = vpop.f32.mrf.mxu0
        %v8878 = vpop.f32.mrf.mxu0
        %8879 = vdwg.mxu0
        %8880 = vmatprep.subr.bf16.mxu0 0
        %8881 = vmatpush1.bf16.msra.mxu0 0
        %8882 = vmatprep.subr.bf16.mxu0 0
        %8883 = vmatpush1.bf16.msra.mxu0 0
        %8884 = vmatprep.subr.bf16.mxu0 0
        %8885 = vmatpush1.bf16.msra.mxu0 0
        %8886 = vmatprep.subr.bf16.mxu0 0
        %8887 = vmatpush1.bf16.msra.mxu0 0
        %8888 = vmatprep.subr.bf16.mxu0 0
        %8889 = vmatpush1.bf16.msra.mxu0 0
        %8890 = vmatprep.subr.bf16.mxu0 %v4420
        %8891 = vmatpush1.bf16.msra.mxu0 %v4417
        %8892 = vmatprep.subr.bf16.mxu0 %v3066
        %8893 = vmatpush1.bf16.msra.mxu0 %v3065
        %8894 = vmatprep.subr.bf16.mxu0 %v2838
        %8895 = vmatpush1.bf16.msra.mxu0 %v2837
        %8896 = vmatprep.subr.bf16.mxu0 0
        %8897 = vmatpush2.bf16.msra.mxu0 0
        %8898 = vmatprep.subr.bf16.mxu0 0
        %8899 = vmatpush2.bf16.msra.mxu0 0
        %8900 = vmatprep.subr.bf16.mxu0 0
        %8901 = vmatpush2.bf16.msra.mxu0 0
        %8902 = vmatprep.subr.bf16.mxu0 0
        %8903 = vmatpush2.bf16.msra.mxu0 0
        %8904 = vmatprep.subr.bf16.mxu0 0
        %8905 = vmatpush2.bf16.msra.mxu0 0
        %8906 = vmatprep.subr.bf16.mxu0 0
        %8907 = vmatpush2.bf16.msra.mxu0 0
        %8908 = vmatprep.subr.bf16.mxu0 0
        %8909 = vmatpush2.bf16.msra.mxu0 0
        %8910 = vmatprep.subr.bf16.mxu0 0
        %8911 = vmatpush2.bf16.msra.mxu0 0
        %8912 = vmatprep.mubr.bf16.mxu0 0
        %8913 = vmatmul.mubr.bf16.gmra.mxu0 %v3763
        %v8914 = vpop.f32.mrf.mxu0
        %v8915 = vadd.f32 0.0, %v8914
        %v8916 = vpop.f32.mrf.mxu0
        %v8917 = vadd.f32 0.0, %v8916
        %v8918 = vpop.f32.mrf.mxu0
        %v8919 = vpop.f32.mrf.mxu0
        %8920 = vdwg.mxu0
        %8921 = vmatprep.subr.bf16.mxu0 0
        %8922 = vmatpush1.bf16.msra.mxu0 0
        %8923 = vmatprep.subr.bf16.mxu0 0
        %8924 = vmatpush1.bf16.msra.mxu0 0
        %8925 = vmatprep.subr.bf16.mxu0 0
        %8926 = vmatpush1.bf16.msra.mxu0 0
        %8927 = vmatprep.subr.bf16.mxu0 0
        %8928 = vmatpush1.bf16.msra.mxu0 0
        %8929 = vmatprep.subr.bf16.mxu0 0
        %8930 = vmatpush1.bf16.msra.mxu0 0
        %8931 = vmatprep.subr.bf16.mxu0 %v4426
        %8932 = vmatpush1.bf16.msra.mxu0 %v4423
        %8933 = vmatprep.subr.bf16.mxu0 %v3068
        %8934 = vmatpush1.bf16.msra.mxu0 %v3067
        %8935 = vmatprep.subr.bf16.mxu0 %v2840
        %8936 = vmatpush1.bf16.msra.mxu0 %v2839
        %8937 = vmatprep.subr.bf16.mxu0 0
        %8938 = vmatpush2.bf16.msra.mxu0 0
        %8939 = vmatprep.subr.bf16.mxu0 0
        %8940 = vmatpush2.bf16.msra.mxu0 0
        %8941 = vmatprep.subr.bf16.mxu0 0
        %8942 = vmatpush2.bf16.msra.mxu0 0
        %8943 = vmatprep.subr.bf16.mxu0 0
        %8944 = vmatpush2.bf16.msra.mxu0 0
        %8945 = vmatprep.subr.bf16.mxu0 0
        %8946 = vmatpush2.bf16.msra.mxu0 0
        %8947 = vmatprep.subr.bf16.mxu0 0
        %8948 = vmatpush2.bf16.msra.mxu0 0
        %8949 = vmatprep.subr.bf16.mxu0 0
        %8950 = vmatpush2.bf16.msra.mxu0 0
        %8951 = vmatprep.subr.bf16.mxu0 0
        %8952 = vmatpush2.bf16.msra.mxu0 0
        %8953 = vmatprep.mubr.bf16.mxu0 0
        %8954 = vmatmul.mubr.bf16.gmra.mxu0 %v3763
        %v8955 = vpop.f32.mrf.mxu0
        %v8956 = vadd.f32 0.0, %v8955
        %v8957 = vpop.f32.mrf.mxu0
        %v8958 = vadd.f32 0.0, %v8957
        %v8959 = vpop.f32.mrf.mxu0
        %v8960 = vpop.f32.mrf.mxu0
        %8961 = vdwg.mxu0
        %8962 = vmatprep.subr.bf16.mxu0 0
        %8963 = vmatpush1.bf16.msra.mxu0 0
        %8964 = vmatprep.subr.bf16.mxu0 0
        %8965 = vmatpush1.bf16.msra.mxu0 0
        %8966 = vmatprep.subr.bf16.mxu0 0
        %8967 = vmatpush1.bf16.msra.mxu0 0
        %8968 = vmatprep.subr.bf16.mxu0 0
        %8969 = vmatpush1.bf16.msra.mxu0 0
        %8970 = vmatprep.subr.bf16.mxu0 0
        %8971 = vmatpush1.bf16.msra.mxu0 0
        %8972 = vmatprep.subr.bf16.mxu0 %v4432
        %8973 = vmatpush1.bf16.msra.mxu0 %v4429
        %8974 = vmatprep.subr.bf16.mxu0 %v3070
        %8975 = vmatpush1.bf16.msra.mxu0 %v3069
        %8976 = vmatprep.subr.bf16.mxu0 %v2842
        %8977 = vmatpush1.bf16.msra.mxu0 %v2841
        %8978 = vmatprep.subr.bf16.mxu0 0
        %8979 = vmatpush2.bf16.msra.mxu0 0
        %8980 = vmatprep.subr.bf16.mxu0 0
        %8981 = vmatpush2.bf16.msra.mxu0 0
        %8982 = vmatprep.subr.bf16.mxu0 0
        %8983 = vmatpush2.bf16.msra.mxu0 0
        %8984 = vmatprep.subr.bf16.mxu0 0
        %8985 = vmatpush2.bf16.msra.mxu0 0
        %8986 = vmatprep.subr.bf16.mxu0 0
        %8987 = vmatpush2.bf16.msra.mxu0 0
        %8988 = vmatprep.subr.bf16.mxu0 0
        %8989 = vmatpush2.bf16.msra.mxu0 0
        %8990 = vmatprep.subr.bf16.mxu0 0
        %8991 = vmatpush2.bf16.msra.mxu0 0
        %8992 = vmatprep.subr.bf16.mxu0 0
        %8993 = vmatpush2.bf16.msra.mxu0 0
        %8994 = vmatprep.mubr.bf16.mxu0 0
        %8995 = vmatmul.mubr.bf16.gmra.mxu0 %v3763
        %v8996 = vpop.f32.mrf.mxu0
        %v8997 = vadd.f32 0.0, %v8996
        %v8998 = vpop.f32.mrf.mxu0
        %v8999 = vadd.f32 0.0, %v8998
        %v9000 = vpop.f32.mrf.mxu0
        %v9001 = vpop.f32.mrf.mxu0
        %9002 = vdwg.mxu0
        %9003 = vmatprep.subr.bf16.mxu0 0
        %9004 = vmatpush1.bf16.msra.mxu0 0
        %9005 = vmatprep.subr.bf16.mxu0 0
        %9006 = vmatpush1.bf16.msra.mxu0 0
        %9007 = vmatprep.subr.bf16.mxu0 0
        %9008 = vmatpush1.bf16.msra.mxu0 0
        %9009 = vmatprep.subr.bf16.mxu0 0
        %9010 = vmatpush1.bf16.msra.mxu0 0
        %9011 = vmatprep.subr.bf16.mxu0 0
        %9012 = vmatpush1.bf16.msra.mxu0 0
        %9013 = vmatprep.subr.bf16.mxu0 %v4438
        %9014 = vmatpush1.bf16.msra.mxu0 %v4435
        %9015 = vmatprep.subr.bf16.mxu0 %v3072
        %9016 = vmatpush1.bf16.msra.mxu0 %v3071
        %9017 = vmatprep.subr.bf16.mxu0 %v2844
        %9018 = vmatpush1.bf16.msra.mxu0 %v2843
        %9019 = vmatprep.subr.bf16.mxu0 0
        %9020 = vmatpush2.bf16.msra.mxu0 0
        %9021 = vmatprep.subr.bf16.mxu0 0
        %9022 = vmatpush2.bf16.msra.mxu0 0
        %9023 = vmatprep.subr.bf16.mxu0 0
        %9024 = vmatpush2.bf16.msra.mxu0 0
        %9025 = vmatprep.subr.bf16.mxu0 0
        %9026 = vmatpush2.bf16.msra.mxu0 0
        %9027 = vmatprep.subr.bf16.mxu0 0
        %9028 = vmatpush2.bf16.msra.mxu0 0
        %9029 = vmatprep.subr.bf16.mxu0 0
        %9030 = vmatpush2.bf16.msra.mxu0 0
        %9031 = vmatprep.subr.bf16.mxu0 0
        %9032 = vmatpush2.bf16.msra.mxu0 0
        %9033 = vmatprep.subr.bf16.mxu0 0
        %9034 = vmatpush2.bf16.msra.mxu0 0
        %9035 = vmatprep.mubr.bf16.mxu0 0
        %9036 = vmatmul.mubr.bf16.gmra.mxu0 %v3763
        %v9037 = vpop.f32.mrf.mxu0
        %v9038 = vadd.f32 0.0, %v9037
        %v9039 = vpop.f32.mrf.mxu0
        %v9040 = vadd.f32 0.0, %v9039
        %v9041 = vpop.f32.mrf.mxu0
        %v9042 = vpop.f32.mrf.mxu0
        %9043 = vdwg.mxu0
        %9044 = vmatprep.subr.bf16.mxu0 0
        %9045 = vmatpush1.bf16.msra.mxu0 0
        %9046 = vmatprep.subr.bf16.mxu0 0
        %9047 = vmatpush1.bf16.msra.mxu0 0
        %9048 = vmatprep.subr.bf16.mxu0 0
        %9049 = vmatpush1.bf16.msra.mxu0 0
        %9050 = vmatprep.subr.bf16.mxu0 0
        %9051 = vmatpush1.bf16.msra.mxu0 0
        %9052 = vmatprep.subr.bf16.mxu0 0
        %9053 = vmatpush1.bf16.msra.mxu0 0
        %9054 = vmatprep.subr.bf16.mxu0 %v4444
        %9055 = vmatpush1.bf16.msra.mxu0 %v4441
        %9056 = vmatprep.subr.bf16.mxu0 %v3074
        %9057 = vmatpush1.bf16.msra.mxu0 %v3073
        %9058 = vmatprep.subr.bf16.mxu0 %v2846
        %9059 = vmatpush1.bf16.msra.mxu0 %v2845
        %9060 = vmatprep.subr.bf16.mxu0 0
        %9061 = vmatpush2.bf16.msra.mxu0 0
        %9062 = vmatprep.subr.bf16.mxu0 0
        %9063 = vmatpush2.bf16.msra.mxu0 0
        %9064 = vmatprep.subr.bf16.mxu0 0
        %9065 = vmatpush2.bf16.msra.mxu0 0
        %9066 = vmatprep.subr.bf16.mxu0 0
        %9067 = vmatpush2.bf16.msra.mxu0 0
        %9068 = vmatprep.subr.bf16.mxu0 0
        %9069 = vmatpush2.bf16.msra.mxu0 0
        %9070 = vmatprep.subr.bf16.mxu0 0
        %9071 = vmatpush2.bf16.msra.mxu0 0
        %9072 = vmatprep.subr.bf16.mxu0 0
        %9073 = vmatpush2.bf16.msra.mxu0 0
        %9074 = vmatprep.subr.bf16.mxu0 0
        %9075 = vmatpush2.bf16.msra.mxu0 0
        %9076 = vmatprep.mubr.bf16.mxu0 0
        %9077 = vmatmul.mubr.bf16.gmra.mxu0 %v3763
        %v9078 = vpop.f32.mrf.mxu0
        %v9079 = vadd.f32 0.0, %v9078
        %v9080 = vpop.f32.mrf.mxu0
        %v9081 = vadd.f32 0.0, %v9080
        %v9082 = vpop.f32.mrf.mxu0
        %v9083 = vpop.f32.mrf.mxu0
        %9084 = vdwg.mxu0
        %9085 = vmatprep.subr.bf16.mxu0 0
        %9086 = vmatpush1.bf16.msra.mxu0 0
        %9087 = vmatprep.subr.bf16.mxu0 0
        %9088 = vmatpush1.bf16.msra.mxu0 0
        %9089 = vmatprep.subr.bf16.mxu0 0
        %9090 = vmatpush1.bf16.msra.mxu0 0
        %9091 = vmatprep.subr.bf16.mxu0 0
        %9092 = vmatpush1.bf16.msra.mxu0 0
        %9093 = vmatprep.subr.bf16.mxu0 0
        %9094 = vmatpush1.bf16.msra.mxu0 0
        %9095 = vmatprep.subr.bf16.mxu0 %v4450
        %9096 = vmatpush1.bf16.msra.mxu0 %v4447
        %9097 = vmatprep.subr.bf16.mxu0 %v3076
        %9098 = vmatpush1.bf16.msra.mxu0 %v3075
        %9099 = vmatprep.subr.bf16.mxu0 %v2848
        %9100 = vmatpush1.bf16.msra.mxu0 %v2847
        %9101 = vmatprep.subr.bf16.mxu0 0
        %9102 = vmatpush2.bf16.msra.mxu0 0
        %9103 = vmatprep.subr.bf16.mxu0 0
        %9104 = vmatpush2.bf16.msra.mxu0 0
        %9105 = vmatprep.subr.bf16.mxu0 0
        %9106 = vmatpush2.bf16.msra.mxu0 0
        %9107 = vmatprep.subr.bf16.mxu0 0
        %9108 = vmatpush2.bf16.msra.mxu0 0
        %9109 = vmatprep.subr.bf16.mxu0 0
        %9110 = vmatpush2.bf16.msra.mxu0 0
        %9111 = vmatprep.subr.bf16.mxu0 0
        %9112 = vmatpush2.bf16.msra.mxu0 0
        %9113 = vmatprep.subr.bf16.mxu0 0
        %9114 = vmatpush2.bf16.msra.mxu0 0
        %9115 = vmatprep.subr.bf16.mxu0 0
        %9116 = vmatpush2.bf16.msra.mxu0 0
        %9117 = vmatprep.mubr.bf16.mxu0 0
        %9118 = vmatmul.mubr.bf16.gmra.mxu0 %v3763
        %v9119 = vpop.f32.mrf.mxu0
        %v9120 = vadd.f32 0.0, %v9119
        %v9121 = vpop.f32.mrf.mxu0
        %v9122 = vadd.f32 0.0, %v9121
        %v9123 = vpop.f32.mrf.mxu0
        %v9124 = vpop.f32.mrf.mxu0
        %9125 = vdwg.mxu0
        %v9354 = vcombine.low %v4487, %v4489
        %v9355 = vcombine.low %v4528, %v4530
        %v9356 = vcombine.low %v4569, %v4571
        %v9357 = vcombine.low %v4610, %v4612
        %v9359 = vunpack.c.l.s4 1966171168
        %v9360 = vunpack.c.0.s8 %v9359
        %v9361 = vlaneseq
        %v9362 = vshrl.u32 %v9361, 7
        %v9363 = vsub.s32 %v9360, %v9362
        %v9364 = vrot.slane %v9354, %v9363
        %v9366 = vunpack.c.l.s4 1966171168
        %v9367 = vunpack.c.0.s8 %v9366
        %v9368 = vlaneseq
        %v9369 = vshrl.u32 %v9368, 7
        %v9370 = vsub.s32 %v9367, %v9369
        %v9371 = vrot.slane %v9355, %v9370
        %v9373 = vunpack.c.l.s4 1966171168
        %v9374 = vunpack.c.0.s8 %v9373
        %v9375 = vlaneseq
        %v9376 = vshrl.u32 %v9375, 7
        %v9377 = vsub.s32 %v9374, %v9376
        %v9378 = vrot.slane %v9356, %v9377
        %v9380 = vunpack.c.l.s4 1966171168
        %v9381 = vunpack.c.0.s8 %v9380
        %v9382 = vlaneseq
        %v9383 = vshrl.u32 %v9382, 7
        %v9384 = vsub.s32 %v9381, %v9383
        %v9385 = vrot.slane %v9357, %v9384
        %v9386 = vcombine.low %v9364, %v9371
        %v9387 = vcombine.low %v9378, %v9385
        %v9389 = vunpack.c.l.s4 1966171168
        %v9390 = vunpack.c.0.s8 %v9389
        %v9391 = vlaneseq
        %v9392 = vshrl.u32 %v9391, 7
        %v9393 = vsub.s32 %v9390, %v9392
        %v9394 = vrot.slane %v9386, %v9393
        %v9396 = vunpack.c.l.s4 1966171168
        %v9397 = vunpack.c.0.s8 %v9396
        %v9398 = vlaneseq
        %v9399 = vshrl.u32 %v9398, 7
        %v9400 = vsub.s32 %v9397, %v9399
        %v9401 = vrot.slane %v9387, %v9400
        %v9402 = vcombine.low %v9394, %v9401
        %v9403 = vcombine.low %v4651, %v4653
        %v9404 = vcombine.low %v4692, %v4694
        %v9405 = vcombine.low %v4733, %v4735
        %v9406 = vcombine.low %v4774, %v4776
        %v9408 = vunpack.c.l.s4 1966171168
        %v9409 = vunpack.c.0.s8 %v9408
        %v9410 = vlaneseq
        %v9411 = vshrl.u32 %v9410, 7
        %v9412 = vsub.s32 %v9409, %v9411
        %v9413 = vrot.slane %v9403, %v9412
        %v9415 = vunpack.c.l.s4 1966171168
        %v9416 = vunpack.c.0.s8 %v9415
        %v9417 = vlaneseq
        %v9418 = vshrl.u32 %v9417, 7
        %v9419 = vsub.s32 %v9416, %v9418
        %v9420 = vrot.slane %v9404, %v9419
        %v9422 = vunpack.c.l.s4 1966171168
        %v9423 = vunpack.c.0.s8 %v9422
        %v9424 = vlaneseq
        %v9425 = vshrl.u32 %v9424, 7
        %v9426 = vsub.s32 %v9423, %v9425
        %v9427 = vrot.slane %v9405, %v9426
        %v9429 = vunpack.c.l.s4 1966171168
        %v9430 = vunpack.c.0.s8 %v9429
        %v9431 = vlaneseq
        %v9432 = vshrl.u32 %v9431, 7
        %v9433 = vsub.s32 %v9430, %v9432
        %v9434 = vrot.slane %v9406, %v9433
        %v9435 = vcombine.low %v9413, %v9420
        %v9436 = vcombine.low %v9427, %v9434
        %v9438 = vunpack.c.l.s4 1966171168
        %v9439 = vunpack.c.0.s8 %v9438
        %v9440 = vlaneseq
        %v9441 = vshrl.u32 %v9440, 7
        %v9442 = vsub.s32 %v9439, %v9441
        %v9443 = vrot.slane %v9435, %v9442
        %v9445 = vunpack.c.l.s4 1966171168
        %v9446 = vunpack.c.0.s8 %v9445
        %v9447 = vlaneseq
        %v9448 = vshrl.u32 %v9447, 7
        %v9449 = vsub.s32 %v9446, %v9448
        %v9450 = vrot.slane %v9436, %v9449
        %v9451 = vcombine.low %v9443, %v9450
        %v9452 = vcombine.low %v4815, %v4817
        %v9453 = vcombine.low %v4856, %v4858
        %v9454 = vcombine.low %v4897, %v4899
        %v9455 = vcombine.low %v4938, %v4940
        %v9457 = vunpack.c.l.s4 1966171168
        %v9458 = vunpack.c.0.s8 %v9457
        %v9459 = vlaneseq
        %v9460 = vshrl.u32 %v9459, 7
        %v9461 = vsub.s32 %v9458, %v9460
        %v9462 = vrot.slane %v9452, %v9461
        %v9464 = vunpack.c.l.s4 1966171168
        %v9465 = vunpack.c.0.s8 %v9464
        %v9466 = vlaneseq
        %v9467 = vshrl.u32 %v9466, 7
        %v9468 = vsub.s32 %v9465, %v9467
        %v9469 = vrot.slane %v9453, %v9468
        %v9471 = vunpack.c.l.s4 1966171168
        %v9472 = vunpack.c.0.s8 %v9471
        %v9473 = vlaneseq
        %v9474 = vshrl.u32 %v9473, 7
        %v9475 = vsub.s32 %v9472, %v9474
        %v9476 = vrot.slane %v9454, %v9475
        %v9478 = vunpack.c.l.s4 1966171168
        %v9479 = vunpack.c.0.s8 %v9478
        %v9480 = vlaneseq
        %v9481 = vshrl.u32 %v9480, 7
        %v9482 = vsub.s32 %v9479, %v9481
        %v9483 = vrot.slane %v9455, %v9482
        %v9484 = vcombine.low %v9462, %v9469
        %v9485 = vcombine.low %v9476, %v9483
        %v9487 = vunpack.c.l.s4 1966171168
        %v9488 = vunpack.c.0.s8 %v9487
        %v9489 = vlaneseq
        %v9490 = vshrl.u32 %v9489, 7
        %v9491 = vsub.s32 %v9488, %v9490
        %v9492 = vrot.slane %v9484, %v9491
        %v9494 = vunpack.c.l.s4 1966171168
        %v9495 = vunpack.c.0.s8 %v9494
        %v9496 = vlaneseq
        %v9497 = vshrl.u32 %v9496, 7
        %v9498 = vsub.s32 %v9495, %v9497
        %v9499 = vrot.slane %v9485, %v9498
        %v9500 = vcombine.low %v9492, %v9499
        %v9501 = vcombine.low %v4979, %v4981
        %v9502 = vcombine.low %v5020, %v5022
        %v9503 = vcombine.low %v5061, %v5063
        %v9504 = vcombine.low %v5102, %v5104
        %v9506 = vunpack.c.l.s4 1966171168
        %v9507 = vunpack.c.0.s8 %v9506
        %v9508 = vlaneseq
        %v9509 = vshrl.u32 %v9508, 7
        %v9510 = vsub.s32 %v9507, %v9509
        %v9511 = vrot.slane %v9501, %v9510
        %v9513 = vunpack.c.l.s4 1966171168
        %v9514 = vunpack.c.0.s8 %v9513
        %v9515 = vlaneseq
        %v9516 = vshrl.u32 %v9515, 7
        %v9517 = vsub.s32 %v9514, %v9516
        %v9518 = vrot.slane %v9502, %v9517
        %v9520 = vunpack.c.l.s4 1966171168
        %v9521 = vunpack.c.0.s8 %v9520
        %v9522 = vlaneseq
        %v9523 = vshrl.u32 %v9522, 7
        %v9524 = vsub.s32 %v9521, %v9523
        %v9525 = vrot.slane %v9503, %v9524
        %v9527 = vunpack.c.l.s4 1966171168
        %v9528 = vunpack.c.0.s8 %v9527
        %v9529 = vlaneseq
        %v9530 = vshrl.u32 %v9529, 7
        %v9531 = vsub.s32 %v9528, %v9530
        %v9532 = vrot.slane %v9504, %v9531
        %v9533 = vcombine.low %v9511, %v9518
        %v9534 = vcombine.low %v9525, %v9532
        %v9536 = vunpack.c.l.s4 1966171168
        %v9537 = vunpack.c.0.s8 %v9536
        %v9538 = vlaneseq
        %v9539 = vshrl.u32 %v9538, 7
        %v9540 = vsub.s32 %v9537, %v9539
        %v9541 = vrot.slane %v9533, %v9540
        %v9543 = vunpack.c.l.s4 1966171168
        %v9544 = vunpack.c.0.s8 %v9543
        %v9545 = vlaneseq
        %v9546 = vshrl.u32 %v9545, 7
        %v9547 = vsub.s32 %v9544, %v9546
        %v9548 = vrot.slane %v9534, %v9547
        %v9549 = vcombine.low %v9541, %v9548
        %v9550 = vcombine.low %v5143, %v5145
        %v9551 = vcombine.low %v5184, %v5186
        %v9552 = vcombine.low %v5225, %v5227
        %v9553 = vcombine.low %v5266, %v5268
        %v9555 = vunpack.c.l.s4 1966171168
        %v9556 = vunpack.c.0.s8 %v9555
        %v9557 = vlaneseq
        %v9558 = vshrl.u32 %v9557, 7
        %v9559 = vsub.s32 %v9556, %v9558
        %v9560 = vrot.slane %v9550, %v9559
        %v9562 = vunpack.c.l.s4 1966171168
        %v9563 = vunpack.c.0.s8 %v9562
        %v9564 = vlaneseq
        %v9565 = vshrl.u32 %v9564, 7
        %v9566 = vsub.s32 %v9563, %v9565
        %v9567 = vrot.slane %v9551, %v9566
        %v9569 = vunpack.c.l.s4 1966171168
        %v9570 = vunpack.c.0.s8 %v9569
        %v9571 = vlaneseq
        %v9572 = vshrl.u32 %v9571, 7
        %v9573 = vsub.s32 %v9570, %v9572
        %v9574 = vrot.slane %v9552, %v9573
        %v9576 = vunpack.c.l.s4 1966171168
        %v9577 = vunpack.c.0.s8 %v9576
        %v9578 = vlaneseq
        %v9579 = vshrl.u32 %v9578, 7
        %v9580 = vsub.s32 %v9577, %v9579
        %v9581 = vrot.slane %v9553, %v9580
        %v9582 = vcombine.low %v9560, %v9567
        %v9583 = vcombine.low %v9574, %v9581
        %v9585 = vunpack.c.l.s4 1966171168
        %v9586 = vunpack.c.0.s8 %v9585
        %v9587 = vlaneseq
        %v9588 = vshrl.u32 %v9587, 7
        %v9589 = vsub.s32 %v9586, %v9588
        %v9590 = vrot.slane %v9582, %v9589
        %v9592 = vunpack.c.l.s4 1966171168
        %v9593 = vunpack.c.0.s8 %v9592
        %v9594 = vlaneseq
        %v9595 = vshrl.u32 %v9594, 7
        %v9596 = vsub.s32 %v9593, %v9595
        %v9597 = vrot.slane %v9583, %v9596
        %v9598 = vcombine.low %v9590, %v9597
        %v9599 = vcombine.low %v5307, %v5309
        %v9600 = vcombine.low %v5348, %v5350
        %v9601 = vcombine.low %v5389, %v5391
        %v9602 = vcombine.low %v5430, %v5432
        %v9604 = vunpack.c.l.s4 1966171168
        %v9605 = vunpack.c.0.s8 %v9604
        %v9606 = vlaneseq
        %v9607 = vshrl.u32 %v9606, 7
        %v9608 = vsub.s32 %v9605, %v9607
        %v9609 = vrot.slane %v9599, %v9608
        %v9611 = vunpack.c.l.s4 1966171168
        %v9612 = vunpack.c.0.s8 %v9611
        %v9613 = vlaneseq
        %v9614 = vshrl.u32 %v9613, 7
        %v9615 = vsub.s32 %v9612, %v9614
        %v9616 = vrot.slane %v9600, %v9615
        %v9618 = vunpack.c.l.s4 1966171168
        %v9619 = vunpack.c.0.s8 %v9618
        %v9620 = vlaneseq
        %v9621 = vshrl.u32 %v9620, 7
        %v9622 = vsub.s32 %v9619, %v9621
        %v9623 = vrot.slane %v9601, %v9622
        %v9625 = vunpack.c.l.s4 1966171168
        %v9626 = vunpack.c.0.s8 %v9625
        %v9627 = vlaneseq
        %v9628 = vshrl.u32 %v9627, 7
        %v9629 = vsub.s32 %v9626, %v9628
        %v9630 = vrot.slane %v9602, %v9629
        %v9631 = vcombine.low %v9609, %v9616
        %v9632 = vcombine.low %v9623, %v9630
        %v9634 = vunpack.c.l.s4 1966171168
        %v9635 = vunpack.c.0.s8 %v9634
        %v9636 = vlaneseq
        %v9637 = vshrl.u32 %v9636, 7
        %v9638 = vsub.s32 %v9635, %v9637
        %v9639 = vrot.slane %v9631, %v9638
        %v9641 = vunpack.c.l.s4 1966171168
        %v9642 = vunpack.c.0.s8 %v9641
        %v9643 = vlaneseq
        %v9644 = vshrl.u32 %v9643, 7
        %v9645 = vsub.s32 %v9642, %v9644
        %v9646 = vrot.slane %v9632, %v9645
        %v9647 = vcombine.low %v9639, %v9646
        %v9648 = vcombine.low %v5471, %v5473
        %v9649 = vcombine.low %v5512, %v5514
        %v9650 = vcombine.low %v5553, %v5555
        %v9651 = vcombine.low %v5594, %v5596
        %v9653 = vunpack.c.l.s4 1966171168
        %v9654 = vunpack.c.0.s8 %v9653
        %v9655 = vlaneseq
        %v9656 = vshrl.u32 %v9655, 7
        %v9657 = vsub.s32 %v9654, %v9656
        %v9658 = vrot.slane %v9648, %v9657
        %v9660 = vunpack.c.l.s4 1966171168
        %v9661 = vunpack.c.0.s8 %v9660
        %v9662 = vlaneseq
        %v9663 = vshrl.u32 %v9662, 7
        %v9664 = vsub.s32 %v9661, %v9663
        %v9665 = vrot.slane %v9649, %v9664
        %v9667 = vunpack.c.l.s4 1966171168
        %v9668 = vunpack.c.0.s8 %v9667
        %v9669 = vlaneseq
        %v9670 = vshrl.u32 %v9669, 7
        %v9671 = vsub.s32 %v9668, %v9670
        %v9672 = vrot.slane %v9650, %v9671
        %v9674 = vunpack.c.l.s4 1966171168
        %v9675 = vunpack.c.0.s8 %v9674
        %v9676 = vlaneseq
        %v9677 = vshrl.u32 %v9676, 7
        %v9678 = vsub.s32 %v9675, %v9677
        %v9679 = vrot.slane %v9651, %v9678
        %v9680 = vcombine.low %v9658, %v9665
        %v9681 = vcombine.low %v9672, %v9679
        %v9683 = vunpack.c.l.s4 1966171168
        %v9684 = vunpack.c.0.s8 %v9683
        %v9685 = vlaneseq
        %v9686 = vshrl.u32 %v9685, 7
        %v9687 = vsub.s32 %v9684, %v9686
        %v9688 = vrot.slane %v9680, %v9687
        %v9690 = vunpack.c.l.s4 1966171168
        %v9691 = vunpack.c.0.s8 %v9690
        %v9692 = vlaneseq
        %v9693 = vshrl.u32 %v9692, 7
        %v9694 = vsub.s32 %v9691, %v9693
        %v9695 = vrot.slane %v9681, %v9694
        %v9696 = vcombine.low %v9688, %v9695
        %v9697 = vcombine.low %v5635, %v5637
        %v9698 = vcombine.low %v5676, %v5678
        %v9699 = vcombine.low %v5717, %v5719
        %v9700 = vcombine.low %v5758, %v5760
        %v9702 = vunpack.c.l.s4 1966171168
        %v9703 = vunpack.c.0.s8 %v9702
        %v9704 = vlaneseq
        %v9705 = vshrl.u32 %v9704, 7
        %v9706 = vsub.s32 %v9703, %v9705
        %v9707 = vrot.slane %v9697, %v9706
        %v9709 = vunpack.c.l.s4 1966171168
        %v9710 = vunpack.c.0.s8 %v9709
        %v9711 = vlaneseq
        %v9712 = vshrl.u32 %v9711, 7
        %v9713 = vsub.s32 %v9710, %v9712
        %v9714 = vrot.slane %v9698, %v9713
        %v9716 = vunpack.c.l.s4 1966171168
        %v9717 = vunpack.c.0.s8 %v9716
        %v9718 = vlaneseq
        %v9719 = vshrl.u32 %v9718, 7
        %v9720 = vsub.s32 %v9717, %v9719
        %v9721 = vrot.slane %v9699, %v9720
        %v9723 = vunpack.c.l.s4 1966171168
        %v9724 = vunpack.c.0.s8 %v9723
        %v9725 = vlaneseq
        %v9726 = vshrl.u32 %v9725, 7
        %v9727 = vsub.s32 %v9724, %v9726
        %v9728 = vrot.slane %v9700, %v9727
        %v9729 = vcombine.low %v9707, %v9714
        %v9730 = vcombine.low %v9721, %v9728
        %v9732 = vunpack.c.l.s4 1966171168
        %v9733 = vunpack.c.0.s8 %v9732
        %v9734 = vlaneseq
        %v9735 = vshrl.u32 %v9734, 7
        %v9736 = vsub.s32 %v9733, %v9735
        %v9737 = vrot.slane %v9729, %v9736
        %v9739 = vunpack.c.l.s4 1966171168
        %v9740 = vunpack.c.0.s8 %v9739
        %v9741 = vlaneseq
        %v9742 = vshrl.u32 %v9741, 7
        %v9743 = vsub.s32 %v9740, %v9742
        %v9744 = vrot.slane %v9730, %v9743
        %v9745 = vcombine.low %v9737, %v9744
        %v9746 = vcombine.low %v5799, %v5801
        %v9747 = vcombine.low %v5840, %v5842
        %v9748 = vcombine.low %v5881, %v5883
        %v9749 = vcombine.low %v5922, %v5924
        %v9751 = vunpack.c.l.s4 1966171168
        %v9752 = vunpack.c.0.s8 %v9751
        %v9753 = vlaneseq
        %v9754 = vshrl.u32 %v9753, 7
        %v9755 = vsub.s32 %v9752, %v9754
        %v9756 = vrot.slane %v9746, %v9755
        %v9758 = vunpack.c.l.s4 1966171168
        %v9759 = vunpack.c.0.s8 %v9758
        %v9760 = vlaneseq
        %v9761 = vshrl.u32 %v9760, 7
        %v9762 = vsub.s32 %v9759, %v9761
        %v9763 = vrot.slane %v9747, %v9762
        %v9765 = vunpack.c.l.s4 1966171168
        %v9766 = vunpack.c.0.s8 %v9765
        %v9767 = vlaneseq
        %v9768 = vshrl.u32 %v9767, 7
        %v9769 = vsub.s32 %v9766, %v9768
        %v9770 = vrot.slane %v9748, %v9769
        %v9772 = vunpack.c.l.s4 1966171168
        %v9773 = vunpack.c.0.s8 %v9772
        %v9774 = vlaneseq
        %v9775 = vshrl.u32 %v9774, 7
        %v9776 = vsub.s32 %v9773, %v9775
        %v9777 = vrot.slane %v9749, %v9776
        %v9778 = vcombine.low %v9756, %v9763
        %v9779 = vcombine.low %v9770, %v9777
        %v9781 = vunpack.c.l.s4 1966171168
        %v9782 = vunpack.c.0.s8 %v9781
        %v9783 = vlaneseq
        %v9784 = vshrl.u32 %v9783, 7
        %v9785 = vsub.s32 %v9782, %v9784
        %v9786 = vrot.slane %v9778, %v9785
        %v9788 = vunpack.c.l.s4 1966171168
        %v9789 = vunpack.c.0.s8 %v9788
        %v9790 = vlaneseq
        %v9791 = vshrl.u32 %v9790, 7
        %v9792 = vsub.s32 %v9789, %v9791
        %v9793 = vrot.slane %v9779, %v9792
        %v9794 = vcombine.low %v9786, %v9793
        %v9795 = vcombine.low %v5963, %v5965
        %v9796 = vcombine.low %v6004, %v6006
        %v9797 = vcombine.low %v6045, %v6047
        %v9798 = vcombine.low %v6086, %v6088
        %v9800 = vunpack.c.l.s4 1966171168
        %v9801 = vunpack.c.0.s8 %v9800
        %v9802 = vlaneseq
        %v9803 = vshrl.u32 %v9802, 7
        %v9804 = vsub.s32 %v9801, %v9803
        %v9805 = vrot.slane %v9795, %v9804
        %v9807 = vunpack.c.l.s4 1966171168
        %v9808 = vunpack.c.0.s8 %v9807
        %v9809 = vlaneseq
        %v9810 = vshrl.u32 %v9809, 7
        %v9811 = vsub.s32 %v9808, %v9810
        %v9812 = vrot.slane %v9796, %v9811
        %v9814 = vunpack.c.l.s4 1966171168
        %v9815 = vunpack.c.0.s8 %v9814
        %v9816 = vlaneseq
        %v9817 = vshrl.u32 %v9816, 7
        %v9818 = vsub.s32 %v9815, %v9817
        %v9819 = vrot.slane %v9797, %v9818
        %v9821 = vunpack.c.l.s4 1966171168
        %v9822 = vunpack.c.0.s8 %v9821
        %v9823 = vlaneseq
        %v9824 = vshrl.u32 %v9823, 7
        %v9825 = vsub.s32 %v9822, %v9824
        %v9826 = vrot.slane %v9798, %v9825
        %v9827 = vcombine.low %v9805, %v9812
        %v9828 = vcombine.low %v9819, %v9826
        %v9830 = vunpack.c.l.s4 1966171168
        %v9831 = vunpack.c.0.s8 %v9830
        %v9832 = vlaneseq
        %v9833 = vshrl.u32 %v9832, 7
        %v9834 = vsub.s32 %v9831, %v9833
        %v9835 = vrot.slane %v9827, %v9834
        %v9837 = vunpack.c.l.s4 1966171168
        %v9838 = vunpack.c.0.s8 %v9837
        %v9839 = vlaneseq
        %v9840 = vshrl.u32 %v9839, 7
        %v9841 = vsub.s32 %v9838, %v9840
        %v9842 = vrot.slane %v9828, %v9841
        %v9843 = vcombine.low %v9835, %v9842
        %v9844 = vcombine.low %v6127, %v6129
        %v9845 = vcombine.low %v6168, %v6170
        %v9846 = vcombine.low %v6209, %v6211
        %v9847 = vcombine.low %v6250, %v6252
        %v9849 = vunpack.c.l.s4 1966171168
        %v9850 = vunpack.c.0.s8 %v9849
        %v9851 = vlaneseq
        %v9852 = vshrl.u32 %v9851, 7
        %v9853 = vsub.s32 %v9850, %v9852
        %v9854 = vrot.slane %v9844, %v9853
        %v9856 = vunpack.c.l.s4 1966171168
        %v9857 = vunpack.c.0.s8 %v9856
        %v9858 = vlaneseq
        %v9859 = vshrl.u32 %v9858, 7
        %v9860 = vsub.s32 %v9857, %v9859
        %v9861 = vrot.slane %v9845, %v9860
        %v9863 = vunpack.c.l.s4 1966171168
        %v9864 = vunpack.c.0.s8 %v9863
        %v9865 = vlaneseq
        %v9866 = vshrl.u32 %v9865, 7
        %v9867 = vsub.s32 %v9864, %v9866
        %v9868 = vrot.slane %v9846, %v9867
        %v9870 = vunpack.c.l.s4 1966171168
        %v9871 = vunpack.c.0.s8 %v9870
        %v9872 = vlaneseq
        %v9873 = vshrl.u32 %v9872, 7
        %v9874 = vsub.s32 %v9871, %v9873
        %v9875 = vrot.slane %v9847, %v9874
        %v9876 = vcombine.low %v9854, %v9861
        %v9877 = vcombine.low %v9868, %v9875
        %v9879 = vunpack.c.l.s4 1966171168
        %v9880 = vunpack.c.0.s8 %v9879
        %v9881 = vlaneseq
        %v9882 = vshrl.u32 %v9881, 7
        %v9883 = vsub.s32 %v9880, %v9882
        %v9884 = vrot.slane %v9876, %v9883
        %v9886 = vunpack.c.l.s4 1966171168
        %v9887 = vunpack.c.0.s8 %v9886
        %v9888 = vlaneseq
        %v9889 = vshrl.u32 %v9888, 7
        %v9890 = vsub.s32 %v9887, %v9889
        %v9891 = vrot.slane %v9877, %v9890
        %v9892 = vcombine.low %v9884, %v9891
        %v9893 = vcombine.low %v6291, %v6293
        %v9894 = vcombine.low %v6332, %v6334
        %v9895 = vcombine.low %v6373, %v6375
        %v9896 = vcombine.low %v6414, %v6416
        %v9898 = vunpack.c.l.s4 1966171168
        %v9899 = vunpack.c.0.s8 %v9898
        %v9900 = vlaneseq
        %v9901 = vshrl.u32 %v9900, 7
        %v9902 = vsub.s32 %v9899, %v9901
        %v9903 = vrot.slane %v9893, %v9902
        %v9905 = vunpack.c.l.s4 1966171168
        %v9906 = vunpack.c.0.s8 %v9905
        %v9907 = vlaneseq
        %v9908 = vshrl.u32 %v9907, 7
        %v9909 = vsub.s32 %v9906, %v9908
        %v9910 = vrot.slane %v9894, %v9909
        %v9912 = vunpack.c.l.s4 1966171168
        %v9913 = vunpack.c.0.s8 %v9912
        %v9914 = vlaneseq
        %v9915 = vshrl.u32 %v9914, 7
        %v9916 = vsub.s32 %v9913, %v9915
        %v9917 = vrot.slane %v9895, %v9916
        %v9919 = vunpack.c.l.s4 1966171168
        %v9920 = vunpack.c.0.s8 %v9919
        %v9921 = vlaneseq
        %v9922 = vshrl.u32 %v9921, 7
        %v9923 = vsub.s32 %v9920, %v9922
        %v9924 = vrot.slane %v9896, %v9923
        %v9925 = vcombine.low %v9903, %v9910
        %v9926 = vcombine.low %v9917, %v9924
        %v9928 = vunpack.c.l.s4 1966171168
        %v9929 = vunpack.c.0.s8 %v9928
        %v9930 = vlaneseq
        %v9931 = vshrl.u32 %v9930, 7
        %v9932 = vsub.s32 %v9929, %v9931
        %v9933 = vrot.slane %v9925, %v9932
        %v9935 = vunpack.c.l.s4 1966171168
        %v9936 = vunpack.c.0.s8 %v9935
        %v9937 = vlaneseq
        %v9938 = vshrl.u32 %v9937, 7
        %v9939 = vsub.s32 %v9936, %v9938
        %v9940 = vrot.slane %v9926, %v9939
        %v9941 = vcombine.low %v9933, %v9940
        %v9942 = vcombine.low %v6455, %v6457
        %v9943 = vcombine.low %v6496, %v6498
        %v9944 = vcombine.low %v6537, %v6539
        %v9945 = vcombine.low %v6578, %v6580
        %v9947 = vunpack.c.l.s4 1966171168
        %v9948 = vunpack.c.0.s8 %v9947
        %v9949 = vlaneseq
        %v9950 = vshrl.u32 %v9949, 7
        %v9951 = vsub.s32 %v9948, %v9950
        %v9952 = vrot.slane %v9942, %v9951
        %v9954 = vunpack.c.l.s4 1966171168
        %v9955 = vunpack.c.0.s8 %v9954
        %v9956 = vlaneseq
        %v9957 = vshrl.u32 %v9956, 7
        %v9958 = vsub.s32 %v9955, %v9957
        %v9959 = vrot.slane %v9943, %v9958
        %v9961 = vunpack.c.l.s4 1966171168
        %v9962 = vunpack.c.0.s8 %v9961
        %v9963 = vlaneseq
        %v9964 = vshrl.u32 %v9963, 7
        %v9965 = vsub.s32 %v9962, %v9964
        %v9966 = vrot.slane %v9944, %v9965
        %v9968 = vunpack.c.l.s4 1966171168
        %v9969 = vunpack.c.0.s8 %v9968
        %v9970 = vlaneseq
        %v9971 = vshrl.u32 %v9970, 7
        %v9972 = vsub.s32 %v9969, %v9971
        %v9973 = vrot.slane %v9945, %v9972
        %v9974 = vcombine.low %v9952, %v9959
        %v9975 = vcombine.low %v9966, %v9973
        %v9977 = vunpack.c.l.s4 1966171168
        %v9978 = vunpack.c.0.s8 %v9977
        %v9979 = vlaneseq
        %v9980 = vshrl.u32 %v9979, 7
        %v9981 = vsub.s32 %v9978, %v9980
        %v9982 = vrot.slane %v9974, %v9981
        %v9984 = vunpack.c.l.s4 1966171168
        %v9985 = vunpack.c.0.s8 %v9984
        %v9986 = vlaneseq
        %v9987 = vshrl.u32 %v9986, 7
        %v9988 = vsub.s32 %v9985, %v9987
        %v9989 = vrot.slane %v9975, %v9988
        %v9990 = vcombine.low %v9982, %v9989
        %v9991 = vcombine.low %v6619, %v6621
        %v9992 = vcombine.low %v6660, %v6662
        %v9993 = vcombine.low %v6701, %v6703
        %v9994 = vcombine.low %v6742, %v6744
        %v9996 = vunpack.c.l.s4 1966171168
        %v9997 = vunpack.c.0.s8 %v9996
        %v9998 = vlaneseq
        %v9999 = vshrl.u32 %v9998, 7
        %v10000 = vsub.s32 %v9997, %v9999
        %v10001 = vrot.slane %v9991, %v10000
        %v10003 = vunpack.c.l.s4 1966171168
        %v10004 = vunpack.c.0.s8 %v10003
        %v10005 = vlaneseq
        %v10006 = vshrl.u32 %v10005, 7
        %v10007 = vsub.s32 %v10004, %v10006
        %v10008 = vrot.slane %v9992, %v10007
        %v10010 = vunpack.c.l.s4 1966171168
        %v10011 = vunpack.c.0.s8 %v10010
        %v10012 = vlaneseq
        %v10013 = vshrl.u32 %v10012, 7
        %v10014 = vsub.s32 %v10011, %v10013
        %v10015 = vrot.slane %v9993, %v10014
        %v10017 = vunpack.c.l.s4 1966171168
        %v10018 = vunpack.c.0.s8 %v10017
        %v10019 = vlaneseq
        %v10020 = vshrl.u32 %v10019, 7
        %v10021 = vsub.s32 %v10018, %v10020
        %v10022 = vrot.slane %v9994, %v10021
        %v10023 = vcombine.low %v10001, %v10008
        %v10024 = vcombine.low %v10015, %v10022
        %v10026 = vunpack.c.l.s4 1966171168
        %v10027 = vunpack.c.0.s8 %v10026
        %v10028 = vlaneseq
        %v10029 = vshrl.u32 %v10028, 7
        %v10030 = vsub.s32 %v10027, %v10029
        %v10031 = vrot.slane %v10023, %v10030
        %v10033 = vunpack.c.l.s4 1966171168
        %v10034 = vunpack.c.0.s8 %v10033
        %v10035 = vlaneseq
        %v10036 = vshrl.u32 %v10035, 7
        %v10037 = vsub.s32 %v10034, %v10036
        %v10038 = vrot.slane %v10024, %v10037
        %v10039 = vcombine.low %v10031, %v10038
        %v10040 = vcombine.low %v6783, %v6785
        %v10041 = vcombine.low %v6824, %v6826
        %v10042 = vcombine.low %v6865, %v6867
        %v10043 = vcombine.low %v6906, %v6908
        %v10045 = vunpack.c.l.s4 1966171168
        %v10046 = vunpack.c.0.s8 %v10045
        %v10047 = vlaneseq
        %v10048 = vshrl.u32 %v10047, 7
        %v10049 = vsub.s32 %v10046, %v10048
        %v10050 = vrot.slane %v10040, %v10049
        %v10052 = vunpack.c.l.s4 1966171168
        %v10053 = vunpack.c.0.s8 %v10052
        %v10054 = vlaneseq
        %v10055 = vshrl.u32 %v10054, 7
        %v10056 = vsub.s32 %v10053, %v10055
        %v10057 = vrot.slane %v10041, %v10056
        %v10059 = vunpack.c.l.s4 1966171168
        %v10060 = vunpack.c.0.s8 %v10059
        %v10061 = vlaneseq
        %v10062 = vshrl.u32 %v10061, 7
        %v10063 = vsub.s32 %v10060, %v10062
        %v10064 = vrot.slane %v10042, %v10063
        %v10066 = vunpack.c.l.s4 1966171168
        %v10067 = vunpack.c.0.s8 %v10066
        %v10068 = vlaneseq
        %v10069 = vshrl.u32 %v10068, 7
        %v10070 = vsub.s32 %v10067, %v10069
        %v10071 = vrot.slane %v10043, %v10070
        %v10072 = vcombine.low %v10050, %v10057
        %v10073 = vcombine.low %v10064, %v10071
        %v10075 = vunpack.c.l.s4 1966171168
        %v10076 = vunpack.c.0.s8 %v10075
        %v10077 = vlaneseq
        %v10078 = vshrl.u32 %v10077, 7
        %v10079 = vsub.s32 %v10076, %v10078
        %v10080 = vrot.slane %v10072, %v10079
        %v10082 = vunpack.c.l.s4 1966171168
        %v10083 = vunpack.c.0.s8 %v10082
        %v10084 = vlaneseq
        %v10085 = vshrl.u32 %v10084, 7
        %v10086 = vsub.s32 %v10083, %v10085
        %v10087 = vrot.slane %v10073, %v10086
        %v10088 = vcombine.low %v10080, %v10087
        %v10089 = vcombine.low %v6947, %v6949
        %v10090 = vcombine.low %v6988, %v6990
        %v10091 = vcombine.low %v7029, %v7031
        %v10092 = vcombine.low %v7070, %v7072
        %v10094 = vunpack.c.l.s4 1966171168
        %v10095 = vunpack.c.0.s8 %v10094
        %v10096 = vlaneseq
        %v10097 = vshrl.u32 %v10096, 7
        %v10098 = vsub.s32 %v10095, %v10097
        %v10099 = vrot.slane %v10089, %v10098
        %v10101 = vunpack.c.l.s4 1966171168
        %v10102 = vunpack.c.0.s8 %v10101
        %v10103 = vlaneseq
        %v10104 = vshrl.u32 %v10103, 7
        %v10105 = vsub.s32 %v10102, %v10104
        %v10106 = vrot.slane %v10090, %v10105
        %v10108 = vunpack.c.l.s4 1966171168
        %v10109 = vunpack.c.0.s8 %v10108
        %v10110 = vlaneseq
        %v10111 = vshrl.u32 %v10110, 7
        %v10112 = vsub.s32 %v10109, %v10111
        %v10113 = vrot.slane %v10091, %v10112
        %v10115 = vunpack.c.l.s4 1966171168
        %v10116 = vunpack.c.0.s8 %v10115
        %v10117 = vlaneseq
        %v10118 = vshrl.u32 %v10117, 7
        %v10119 = vsub.s32 %v10116, %v10118
        %v10120 = vrot.slane %v10092, %v10119
        %v10121 = vcombine.low %v10099, %v10106
        %v10122 = vcombine.low %v10113, %v10120
        %v10124 = vunpack.c.l.s4 1966171168
        %v10125 = vunpack.c.0.s8 %v10124
        %v10126 = vlaneseq
        %v10127 = vshrl.u32 %v10126, 7
        %v10128 = vsub.s32 %v10125, %v10127
        %v10129 = vrot.slane %v10121, %v10128
        %v10131 = vunpack.c.l.s4 1966171168
        %v10132 = vunpack.c.0.s8 %v10131
        %v10133 = vlaneseq
        %v10134 = vshrl.u32 %v10133, 7
        %v10135 = vsub.s32 %v10132, %v10134
        %v10136 = vrot.slane %v10122, %v10135
        %v10137 = vcombine.low %v10129, %v10136
        %v10138 = vcombine.low %v7111, %v7113
        %v10139 = vcombine.low %v7152, %v7154
        %v10140 = vcombine.low %v7193, %v7195
        %v10141 = vcombine.low %v7234, %v7236
        %v10143 = vunpack.c.l.s4 1966171168
        %v10144 = vunpack.c.0.s8 %v10143
        %v10145 = vlaneseq
        %v10146 = vshrl.u32 %v10145, 7
        %v10147 = vsub.s32 %v10144, %v10146
        %v10148 = vrot.slane %v10138, %v10147
        %v10150 = vunpack.c.l.s4 1966171168
        %v10151 = vunpack.c.0.s8 %v10150
        %v10152 = vlaneseq
        %v10153 = vshrl.u32 %v10152, 7
        %v10154 = vsub.s32 %v10151, %v10153
        %v10155 = vrot.slane %v10139, %v10154
        %v10157 = vunpack.c.l.s4 1966171168
        %v10158 = vunpack.c.0.s8 %v10157
        %v10159 = vlaneseq
        %v10160 = vshrl.u32 %v10159, 7
        %v10161 = vsub.s32 %v10158, %v10160
        %v10162 = vrot.slane %v10140, %v10161
        %v10164 = vunpack.c.l.s4 1966171168
        %v10165 = vunpack.c.0.s8 %v10164
        %v10166 = vlaneseq
        %v10167 = vshrl.u32 %v10166, 7
        %v10168 = vsub.s32 %v10165, %v10167
        %v10169 = vrot.slane %v10141, %v10168
        %v10170 = vcombine.low %v10148, %v10155
        %v10171 = vcombine.low %v10162, %v10169
        %v10173 = vunpack.c.l.s4 1966171168
        %v10174 = vunpack.c.0.s8 %v10173
        %v10175 = vlaneseq
        %v10176 = vshrl.u32 %v10175, 7
        %v10177 = vsub.s32 %v10174, %v10176
        %v10178 = vrot.slane %v10170, %v10177
        %v10180 = vunpack.c.l.s4 1966171168
        %v10181 = vunpack.c.0.s8 %v10180
        %v10182 = vlaneseq
        %v10183 = vshrl.u32 %v10182, 7
        %v10184 = vsub.s32 %v10181, %v10183
        %v10185 = vrot.slane %v10171, %v10184
        %v10186 = vcombine.low %v10178, %v10185
        %v10187 = vcombine.low %v7275, %v7277
        %v10188 = vcombine.low %v7316, %v7318
        %v10189 = vcombine.low %v7357, %v7359
        %v10190 = vcombine.low %v7398, %v7400
        %v10192 = vunpack.c.l.s4 1966171168
        %v10193 = vunpack.c.0.s8 %v10192
        %v10194 = vlaneseq
        %v10195 = vshrl.u32 %v10194, 7
        %v10196 = vsub.s32 %v10193, %v10195
        %v10197 = vrot.slane %v10187, %v10196
        %v10199 = vunpack.c.l.s4 1966171168
        %v10200 = vunpack.c.0.s8 %v10199
        %v10201 = vlaneseq
        %v10202 = vshrl.u32 %v10201, 7
        %v10203 = vsub.s32 %v10200, %v10202
        %v10204 = vrot.slane %v10188, %v10203
        %v10206 = vunpack.c.l.s4 1966171168
        %v10207 = vunpack.c.0.s8 %v10206
        %v10208 = vlaneseq
        %v10209 = vshrl.u32 %v10208, 7
        %v10210 = vsub.s32 %v10207, %v10209
        %v10211 = vrot.slane %v10189, %v10210
        %v10213 = vunpack.c.l.s4 1966171168
        %v10214 = vunpack.c.0.s8 %v10213
        %v10215 = vlaneseq
        %v10216 = vshrl.u32 %v10215, 7
        %v10217 = vsub.s32 %v10214, %v10216
        %v10218 = vrot.slane %v10190, %v10217
        %v10219 = vcombine.low %v10197, %v10204
        %v10220 = vcombine.low %v10211, %v10218
        %v10222 = vunpack.c.l.s4 1966171168
        %v10223 = vunpack.c.0.s8 %v10222
        %v10224 = vlaneseq
        %v10225 = vshrl.u32 %v10224, 7
        %v10226 = vsub.s32 %v10223, %v10225
        %v10227 = vrot.slane %v10219, %v10226
        %v10229 = vunpack.c.l.s4 1966171168
        %v10230 = vunpack.c.0.s8 %v10229
        %v10231 = vlaneseq
        %v10232 = vshrl.u32 %v10231, 7
        %v10233 = vsub.s32 %v10230, %v10232
        %v10234 = vrot.slane %v10220, %v10233
        %v10235 = vcombine.low %v10227, %v10234
        %v10236 = vcombine.low %v7439, %v7441
        %v10237 = vcombine.low %v7480, %v7482
        %v10238 = vcombine.low %v7521, %v7523
        %v10239 = vcombine.low %v7562, %v7564
        %v10241 = vunpack.c.l.s4 1966171168
        %v10242 = vunpack.c.0.s8 %v10241
        %v10243 = vlaneseq
        %v10244 = vshrl.u32 %v10243, 7
        %v10245 = vsub.s32 %v10242, %v10244
        %v10246 = vrot.slane %v10236, %v10245
        %v10248 = vunpack.c.l.s4 1966171168
        %v10249 = vunpack.c.0.s8 %v10248
        %v10250 = vlaneseq
        %v10251 = vshrl.u32 %v10250, 7
        %v10252 = vsub.s32 %v10249, %v10251
        %v10253 = vrot.slane %v10237, %v10252
        %v10255 = vunpack.c.l.s4 1966171168
        %v10256 = vunpack.c.0.s8 %v10255
        %v10257 = vlaneseq
        %v10258 = vshrl.u32 %v10257, 7
        %v10259 = vsub.s32 %v10256, %v10258
        %v10260 = vrot.slane %v10238, %v10259
        %v10262 = vunpack.c.l.s4 1966171168
        %v10263 = vunpack.c.0.s8 %v10262
        %v10264 = vlaneseq
        %v10265 = vshrl.u32 %v10264, 7
        %v10266 = vsub.s32 %v10263, %v10265
        %v10267 = vrot.slane %v10239, %v10266
        %v10268 = vcombine.low %v10246, %v10253
        %v10269 = vcombine.low %v10260, %v10267
        %v10271 = vunpack.c.l.s4 1966171168
        %v10272 = vunpack.c.0.s8 %v10271
        %v10273 = vlaneseq
        %v10274 = vshrl.u32 %v10273, 7
        %v10275 = vsub.s32 %v10272, %v10274
        %v10276 = vrot.slane %v10268, %v10275
        %v10278 = vunpack.c.l.s4 1966171168
        %v10279 = vunpack.c.0.s8 %v10278
        %v10280 = vlaneseq
        %v10281 = vshrl.u32 %v10280, 7
        %v10282 = vsub.s32 %v10279, %v10281
        %v10283 = vrot.slane %v10269, %v10282
        %v10284 = vcombine.low %v10276, %v10283
        %v10285 = vcombine.low %v7603, %v7605
        %v10286 = vcombine.low %v7644, %v7646
        %v10287 = vcombine.low %v7685, %v7687
        %v10288 = vcombine.low %v7726, %v7728
        %v10290 = vunpack.c.l.s4 1966171168
        %v10291 = vunpack.c.0.s8 %v10290
        %v10292 = vlaneseq
        %v10293 = vshrl.u32 %v10292, 7
        %v10294 = vsub.s32 %v10291, %v10293
        %v10295 = vrot.slane %v10285, %v10294
        %v10297 = vunpack.c.l.s4 1966171168
        %v10298 = vunpack.c.0.s8 %v10297
        %v10299 = vlaneseq
        %v10300 = vshrl.u32 %v10299, 7
        %v10301 = vsub.s32 %v10298, %v10300
        %v10302 = vrot.slane %v10286, %v10301
        %v10304 = vunpack.c.l.s4 1966171168
        %v10305 = vunpack.c.0.s8 %v10304
        %v10306 = vlaneseq
        %v10307 = vshrl.u32 %v10306, 7
        %v10308 = vsub.s32 %v10305, %v10307
        %v10309 = vrot.slane %v10287, %v10308
        %v10311 = vunpack.c.l.s4 1966171168
        %v10312 = vunpack.c.0.s8 %v10311
        %v10313 = vlaneseq
        %v10314 = vshrl.u32 %v10313, 7
        %v10315 = vsub.s32 %v10312, %v10314
        %v10316 = vrot.slane %v10288, %v10315
        %v10317 = vcombine.low %v10295, %v10302
        %v10318 = vcombine.low %v10309, %v10316
        %v10320 = vunpack.c.l.s4 1966171168
        %v10321 = vunpack.c.0.s8 %v10320
        %v10322 = vlaneseq
        %v10323 = vshrl.u32 %v10322, 7
        %v10324 = vsub.s32 %v10321, %v10323
        %v10325 = vrot.slane %v10317, %v10324
        %v10327 = vunpack.c.l.s4 1966171168
        %v10328 = vunpack.c.0.s8 %v10327
        %v10329 = vlaneseq
        %v10330 = vshrl.u32 %v10329, 7
        %v10331 = vsub.s32 %v10328, %v10330
        %v10332 = vrot.slane %v10318, %v10331
        %v10333 = vcombine.low %v10325, %v10332
        %v10334 = vcombine.low %v7767, %v7769
        %v10335 = vcombine.low %v7808, %v7810
        %v10336 = vcombine.low %v7849, %v7851
        %v10337 = vcombine.low %v7890, %v7892
        %v10339 = vunpack.c.l.s4 1966171168
        %v10340 = vunpack.c.0.s8 %v10339
        %v10341 = vlaneseq
        %v10342 = vshrl.u32 %v10341, 7
        %v10343 = vsub.s32 %v10340, %v10342
        %v10344 = vrot.slane %v10334, %v10343
        %v10346 = vunpack.c.l.s4 1966171168
        %v10347 = vunpack.c.0.s8 %v10346
        %v10348 = vlaneseq
        %v10349 = vshrl.u32 %v10348, 7
        %v10350 = vsub.s32 %v10347, %v10349
        %v10351 = vrot.slane %v10335, %v10350
        %v10353 = vunpack.c.l.s4 1966171168
        %v10354 = vunpack.c.0.s8 %v10353
        %v10355 = vlaneseq
        %v10356 = vshrl.u32 %v10355, 7
        %v10357 = vsub.s32 %v10354, %v10356
        %v10358 = vrot.slane %v10336, %v10357
        %v10360 = vunpack.c.l.s4 1966171168
        %v10361 = vunpack.c.0.s8 %v10360
        %v10362 = vlaneseq
        %v10363 = vshrl.u32 %v10362, 7
        %v10364 = vsub.s32 %v10361, %v10363
        %v10365 = vrot.slane %v10337, %v10364
        %v10366 = vcombine.low %v10344, %v10351
        %v10367 = vcombine.low %v10358, %v10365
        %v10369 = vunpack.c.l.s4 1966171168
        %v10370 = vunpack.c.0.s8 %v10369
        %v10371 = vlaneseq
        %v10372 = vshrl.u32 %v10371, 7
        %v10373 = vsub.s32 %v10370, %v10372
        %v10374 = vrot.slane %v10366, %v10373
        %v10376 = vunpack.c.l.s4 1966171168
        %v10377 = vunpack.c.0.s8 %v10376
        %v10378 = vlaneseq
        %v10379 = vshrl.u32 %v10378, 7
        %v10380 = vsub.s32 %v10377, %v10379
        %v10381 = vrot.slane %v10367, %v10380
        %v10382 = vcombine.low %v10374, %v10381
        %v10383 = vcombine.low %v7931, %v7933
        %v10384 = vcombine.low %v7972, %v7974
        %v10385 = vcombine.low %v8013, %v8015
        %v10386 = vcombine.low %v8054, %v8056
        %v10388 = vunpack.c.l.s4 1966171168
        %v10389 = vunpack.c.0.s8 %v10388
        %v10390 = vlaneseq
        %v10391 = vshrl.u32 %v10390, 7
        %v10392 = vsub.s32 %v10389, %v10391
        %v10393 = vrot.slane %v10383, %v10392
        %v10395 = vunpack.c.l.s4 1966171168
        %v10396 = vunpack.c.0.s8 %v10395
        %v10397 = vlaneseq
        %v10398 = vshrl.u32 %v10397, 7
        %v10399 = vsub.s32 %v10396, %v10398
        %v10400 = vrot.slane %v10384, %v10399
        %v10402 = vunpack.c.l.s4 1966171168
        %v10403 = vunpack.c.0.s8 %v10402
        %v10404 = vlaneseq
        %v10405 = vshrl.u32 %v10404, 7
        %v10406 = vsub.s32 %v10403, %v10405
        %v10407 = vrot.slane %v10385, %v10406
        %v10409 = vunpack.c.l.s4 1966171168
        %v10410 = vunpack.c.0.s8 %v10409
        %v10411 = vlaneseq
        %v10412 = vshrl.u32 %v10411, 7
        %v10413 = vsub.s32 %v10410, %v10412
        %v10414 = vrot.slane %v10386, %v10413
        %v10415 = vcombine.low %v10393, %v10400
        %v10416 = vcombine.low %v10407, %v10414
        %v10418 = vunpack.c.l.s4 1966171168
        %v10419 = vunpack.c.0.s8 %v10418
        %v10420 = vlaneseq
        %v10421 = vshrl.u32 %v10420, 7
        %v10422 = vsub.s32 %v10419, %v10421
        %v10423 = vrot.slane %v10415, %v10422
        %v10425 = vunpack.c.l.s4 1966171168
        %v10426 = vunpack.c.0.s8 %v10425
        %v10427 = vlaneseq
        %v10428 = vshrl.u32 %v10427, 7
        %v10429 = vsub.s32 %v10426, %v10428
        %v10430 = vrot.slane %v10416, %v10429
        %v10431 = vcombine.low %v10423, %v10430
        %v10432 = vcombine.low %v8095, %v8097
        %v10433 = vcombine.low %v8136, %v8138
        %v10434 = vcombine.low %v8177, %v8179
        %v10435 = vcombine.low %v8218, %v8220
        %v10437 = vunpack.c.l.s4 1966171168
        %v10438 = vunpack.c.0.s8 %v10437
        %v10439 = vlaneseq
        %v10440 = vshrl.u32 %v10439, 7
        %v10441 = vsub.s32 %v10438, %v10440
        %v10442 = vrot.slane %v10432, %v10441
        %v10444 = vunpack.c.l.s4 1966171168
        %v10445 = vunpack.c.0.s8 %v10444
        %v10446 = vlaneseq
        %v10447 = vshrl.u32 %v10446, 7
        %v10448 = vsub.s32 %v10445, %v10447
        %v10449 = vrot.slane %v10433, %v10448
        %v10451 = vunpack.c.l.s4 1966171168
        %v10452 = vunpack.c.0.s8 %v10451
        %v10453 = vlaneseq
        %v10454 = vshrl.u32 %v10453, 7
        %v10455 = vsub.s32 %v10452, %v10454
        %v10456 = vrot.slane %v10434, %v10455
        %v10458 = vunpack.c.l.s4 1966171168
        %v10459 = vunpack.c.0.s8 %v10458
        %v10460 = vlaneseq
        %v10461 = vshrl.u32 %v10460, 7
        %v10462 = vsub.s32 %v10459, %v10461
        %v10463 = vrot.slane %v10435, %v10462
        %v10464 = vcombine.low %v10442, %v10449
        %v10465 = vcombine.low %v10456, %v10463
        %v10467 = vunpack.c.l.s4 1966171168
        %v10468 = vunpack.c.0.s8 %v10467
        %v10469 = vlaneseq
        %v10470 = vshrl.u32 %v10469, 7
        %v10471 = vsub.s32 %v10468, %v10470
        %v10472 = vrot.slane %v10464, %v10471
        %v10474 = vunpack.c.l.s4 1966171168
        %v10475 = vunpack.c.0.s8 %v10474
        %v10476 = vlaneseq
        %v10477 = vshrl.u32 %v10476, 7
        %v10478 = vsub.s32 %v10475, %v10477
        %v10479 = vrot.slane %v10465, %v10478
        %v10480 = vcombine.low %v10472, %v10479
        %v10481 = vcombine.low %v8259, %v8261
        %v10482 = vcombine.low %v8300, %v8302
        %v10483 = vcombine.low %v8341, %v8343
        %v10484 = vcombine.low %v8382, %v8384
        %v10486 = vunpack.c.l.s4 1966171168
        %v10487 = vunpack.c.0.s8 %v10486
        %v10488 = vlaneseq
        %v10489 = vshrl.u32 %v10488, 7
        %v10490 = vsub.s32 %v10487, %v10489
        %v10491 = vrot.slane %v10481, %v10490
        %v10493 = vunpack.c.l.s4 1966171168
        %v10494 = vunpack.c.0.s8 %v10493
        %v10495 = vlaneseq
        %v10496 = vshrl.u32 %v10495, 7
        %v10497 = vsub.s32 %v10494, %v10496
        %v10498 = vrot.slane %v10482, %v10497
        %v10500 = vunpack.c.l.s4 1966171168
        %v10501 = vunpack.c.0.s8 %v10500
        %v10502 = vlaneseq
        %v10503 = vshrl.u32 %v10502, 7
        %v10504 = vsub.s32 %v10501, %v10503
        %v10505 = vrot.slane %v10483, %v10504
        %v10507 = vunpack.c.l.s4 1966171168
        %v10508 = vunpack.c.0.s8 %v10507
        %v10509 = vlaneseq
        %v10510 = vshrl.u32 %v10509, 7
        %v10511 = vsub.s32 %v10508, %v10510
        %v10512 = vrot.slane %v10484, %v10511
        %v10513 = vcombine.low %v10491, %v10498
        %v10514 = vcombine.low %v10505, %v10512
        %v10516 = vunpack.c.l.s4 1966171168
        %v10517 = vunpack.c.0.s8 %v10516
        %v10518 = vlaneseq
        %v10519 = vshrl.u32 %v10518, 7
        %v10520 = vsub.s32 %v10517, %v10519
        %v10521 = vrot.slane %v10513, %v10520
        %v10523 = vunpack.c.l.s4 1966171168
        %v10524 = vunpack.c.0.s8 %v10523
        %v10525 = vlaneseq
        %v10526 = vshrl.u32 %v10525, 7
        %v10527 = vsub.s32 %v10524, %v10526
        %v10528 = vrot.slane %v10514, %v10527
        %v10529 = vcombine.low %v10521, %v10528
        %v10530 = vcombine.low %v8423, %v8425
        %v10531 = vcombine.low %v8464, %v8466
        %v10532 = vcombine.low %v8505, %v8507
        %v10533 = vcombine.low %v8546, %v8548
        %v10535 = vunpack.c.l.s4 1966171168
        %v10536 = vunpack.c.0.s8 %v10535
        %v10537 = vlaneseq
        %v10538 = vshrl.u32 %v10537, 7
        %v10539 = vsub.s32 %v10536, %v10538
        %v10540 = vrot.slane %v10530, %v10539
        %v10542 = vunpack.c.l.s4 1966171168
        %v10543 = vunpack.c.0.s8 %v10542
        %v10544 = vlaneseq
        %v10545 = vshrl.u32 %v10544, 7
        %v10546 = vsub.s32 %v10543, %v10545
        %v10547 = vrot.slane %v10531, %v10546
        %v10549 = vunpack.c.l.s4 1966171168
        %v10550 = vunpack.c.0.s8 %v10549
        %v10551 = vlaneseq
        %v10552 = vshrl.u32 %v10551, 7
        %v10553 = vsub.s32 %v10550, %v10552
        %v10554 = vrot.slane %v10532, %v10553
        %v10556 = vunpack.c.l.s4 1966171168
        %v10557 = vunpack.c.0.s8 %v10556
        %v10558 = vlaneseq
        %v10559 = vshrl.u32 %v10558, 7
        %v10560 = vsub.s32 %v10557, %v10559
        %v10561 = vrot.slane %v10533, %v10560
        %v10562 = vcombine.low %v10540, %v10547
        %v10563 = vcombine.low %v10554, %v10561
        %v10565 = vunpack.c.l.s4 1966171168
        %v10566 = vunpack.c.0.s8 %v10565
        %v10567 = vlaneseq
        %v10568 = vshrl.u32 %v10567, 7
        %v10569 = vsub.s32 %v10566, %v10568
        %v10570 = vrot.slane %v10562, %v10569
        %v10572 = vunpack.c.l.s4 1966171168
        %v10573 = vunpack.c.0.s8 %v10572
        %v10574 = vlaneseq
        %v10575 = vshrl.u32 %v10574, 7
        %v10576 = vsub.s32 %v10573, %v10575
        %v10577 = vrot.slane %v10563, %v10576
        %v10578 = vcombine.low %v10570, %v10577
        %v10579 = vcombine.low %v8587, %v8589
        %v10580 = vcombine.low %v8628, %v8630
        %v10581 = vcombine.low %v8669, %v8671
        %v10582 = vcombine.low %v8710, %v8712
        %v10584 = vunpack.c.l.s4 1966171168
        %v10585 = vunpack.c.0.s8 %v10584
        %v10586 = vlaneseq
        %v10587 = vshrl.u32 %v10586, 7
        %v10588 = vsub.s32 %v10585, %v10587
        %v10589 = vrot.slane %v10579, %v10588
        %v10591 = vunpack.c.l.s4 1966171168
        %v10592 = vunpack.c.0.s8 %v10591
        %v10593 = vlaneseq
        %v10594 = vshrl.u32 %v10593, 7
        %v10595 = vsub.s32 %v10592, %v10594
        %v10596 = vrot.slane %v10580, %v10595
        %v10598 = vunpack.c.l.s4 1966171168
        %v10599 = vunpack.c.0.s8 %v10598
        %v10600 = vlaneseq
        %v10601 = vshrl.u32 %v10600, 7
        %v10602 = vsub.s32 %v10599, %v10601
        %v10603 = vrot.slane %v10581, %v10602
        %v10605 = vunpack.c.l.s4 1966171168
        %v10606 = vunpack.c.0.s8 %v10605
        %v10607 = vlaneseq
        %v10608 = vshrl.u32 %v10607, 7
        %v10609 = vsub.s32 %v10606, %v10608
        %v10610 = vrot.slane %v10582, %v10609
        %v10611 = vcombine.low %v10589, %v10596
        %v10612 = vcombine.low %v10603, %v10610
        %v10614 = vunpack.c.l.s4 1966171168
        %v10615 = vunpack.c.0.s8 %v10614
        %v10616 = vlaneseq
        %v10617 = vshrl.u32 %v10616, 7
        %v10618 = vsub.s32 %v10615, %v10617
        %v10619 = vrot.slane %v10611, %v10618
        %v10621 = vunpack.c.l.s4 1966171168
        %v10622 = vunpack.c.0.s8 %v10621
        %v10623 = vlaneseq
        %v10624 = vshrl.u32 %v10623, 7
        %v10625 = vsub.s32 %v10622, %v10624
        %v10626 = vrot.slane %v10612, %v10625
        %v10627 = vcombine.low %v10619, %v10626
        %v10628 = vcombine.low %v8751, %v8753
        %v10629 = vcombine.low %v8792, %v8794
        %v10630 = vcombine.low %v8833, %v8835
        %v10631 = vcombine.low %v8874, %v8876
        %v10633 = vunpack.c.l.s4 1966171168
        %v10634 = vunpack.c.0.s8 %v10633
        %v10635 = vlaneseq
        %v10636 = vshrl.u32 %v10635, 7
        %v10637 = vsub.s32 %v10634, %v10636
        %v10638 = vrot.slane %v10628, %v10637
        %v10640 = vunpack.c.l.s4 1966171168
        %v10641 = vunpack.c.0.s8 %v10640
        %v10642 = vlaneseq
        %v10643 = vshrl.u32 %v10642, 7
        %v10644 = vsub.s32 %v10641, %v10643
        %v10645 = vrot.slane %v10629, %v10644
        %v10647 = vunpack.c.l.s4 1966171168
        %v10648 = vunpack.c.0.s8 %v10647
        %v10649 = vlaneseq
        %v10650 = vshrl.u32 %v10649, 7
        %v10651 = vsub.s32 %v10648, %v10650
        %v10652 = vrot.slane %v10630, %v10651
        %v10654 = vunpack.c.l.s4 1966171168
        %v10655 = vunpack.c.0.s8 %v10654
        %v10656 = vlaneseq
        %v10657 = vshrl.u32 %v10656, 7
        %v10658 = vsub.s32 %v10655, %v10657
        %v10659 = vrot.slane %v10631, %v10658
        %v10660 = vcombine.low %v10638, %v10645
        %v10661 = vcombine.low %v10652, %v10659
        %v10663 = vunpack.c.l.s4 1966171168
        %v10664 = vunpack.c.0.s8 %v10663
        %v10665 = vlaneseq
        %v10666 = vshrl.u32 %v10665, 7
        %v10667 = vsub.s32 %v10664, %v10666
        %v10668 = vrot.slane %v10660, %v10667
        %v10670 = vunpack.c.l.s4 1966171168
        %v10671 = vunpack.c.0.s8 %v10670
        %v10672 = vlaneseq
        %v10673 = vshrl.u32 %v10672, 7
        %v10674 = vsub.s32 %v10671, %v10673
        %v10675 = vrot.slane %v10661, %v10674
        %v10676 = vcombine.low %v10668, %v10675
        %v10677 = vcombine.low %v8915, %v8917
        %v10678 = vcombine.low %v8956, %v8958
        %v10679 = vcombine.low %v8997, %v8999
        %v10680 = vcombine.low %v9038, %v9040
        %v10682 = vunpack.c.l.s4 1966171168
        %v10683 = vunpack.c.0.s8 %v10682
        %v10684 = vlaneseq
        %v10685 = vshrl.u32 %v10684, 7
        %v10686 = vsub.s32 %v10683, %v10685
        %v10687 = vrot.slane %v10677, %v10686
        %v10689 = vunpack.c.l.s4 1966171168
        %v10690 = vunpack.c.0.s8 %v10689
        %v10691 = vlaneseq
        %v10692 = vshrl.u32 %v10691, 7
        %v10693 = vsub.s32 %v10690, %v10692
        %v10694 = vrot.slane %v10678, %v10693
        %v10696 = vunpack.c.l.s4 1966171168
        %v10697 = vunpack.c.0.s8 %v10696
        %v10698 = vlaneseq
        %v10699 = vshrl.u32 %v10698, 7
        %v10700 = vsub.s32 %v10697, %v10699
        %v10701 = vrot.slane %v10679, %v10700
        %v10703 = vunpack.c.l.s4 1966171168
        %v10704 = vunpack.c.0.s8 %v10703
        %v10705 = vlaneseq
        %v10706 = vshrl.u32 %v10705, 7
        %v10707 = vsub.s32 %v10704, %v10706
        %v10708 = vrot.slane %v10680, %v10707
        %v10709 = vcombine.low %v10687, %v10694
        %v10710 = vcombine.low %v10701, %v10708
        %v10712 = vunpack.c.l.s4 1966171168
        %v10713 = vunpack.c.0.s8 %v10712
        %v10714 = vlaneseq
        %v10715 = vshrl.u32 %v10714, 7
        %v10716 = vsub.s32 %v10713, %v10715
        %v10717 = vrot.slane %v10709, %v10716
        %v10719 = vunpack.c.l.s4 1966171168
        %v10720 = vunpack.c.0.s8 %v10719
        %v10721 = vlaneseq
        %v10722 = vshrl.u32 %v10721, 7
        %v10723 = vsub.s32 %v10720, %v10722
        %v10724 = vrot.slane %v10710, %v10723
        %v10725 = vcombine.low %v10717, %v10724
        %v10726 = vcombine.low %v9079, %v9081
        %v10727 = vcombine.low %v9120, %v9122
        %v10729 = vunpack.c.l.s4 1966171168
        %v10730 = vunpack.c.0.s8 %v10729
        %v10731 = vlaneseq
        %v10732 = vshrl.u32 %v10731, 7
        %v10733 = vsub.s32 %v10730, %v10732
        %v10734 = vrot.slane %v10726, %v10733
        %v10736 = vunpack.c.l.s4 1966171168
        %v10737 = vunpack.c.0.s8 %v10736
        %v10738 = vlaneseq
        %v10739 = vshrl.u32 %v10738, 7
        %v10740 = vsub.s32 %v10737, %v10739
        %v10741 = vrot.slane %v10727, %v10740
        %v10742 = vcombine.low %v10734, %v10741
        %v10744 = vunpack.c.l.s4 1966171168
        %v10745 = vunpack.c.0.s8 %v10744
        %v10746 = vlaneseq
        %v10747 = vshrl.u32 %v10746, 7
        %v10748 = vsub.s32 %v10745, %v10747
        %v10749 = vrot.slane %v10742, %v10748
        %10779 = vst [vmem:[%s256] sm:$0xff] %v9402
        %10780 = vst [vmem:[%s256 + $0x8] sm:$0xff] %v9451
        %10781 = vst [vmem:[%s256 + $0x10] sm:$0xff] %v9500
        %10782 = vst [vmem:[%s256 + $0x18] sm:$0xff] %v9549
        %10783 = vst [vmem:[%s256 + $0x20] sm:$0xff] %v9598
        %10784 = vst [vmem:[%s256 + $0x28] sm:$0xff] %v9647
        %10785 = vst [vmem:[%s256 + $0x30] sm:$0xff] %v9696
        %10786 = vst [vmem:[%s256 + $0x38] sm:$0xff] %v9745
        %10787 = vst [vmem:[%s256 + $0x40] sm:$0xff] %v9794
        %10788 = vst [vmem:[%s256 + $0x48] sm:$0xff] %v9843
        %10789 = vst [vmem:[%s256 + $0x50] sm:$0xff] %v9892
        %10790 = vst [vmem:[%s256 + $0x58] sm:$0xff] %v9941
        %10791 = vst [vmem:[%s256 + $0x60] sm:$0xff] %v9990
        %10792 = vst [vmem:[%s256 + $0x68] sm:$0xff] %v10039
        %10793 = vst [vmem:[%s256 + $0x70] sm:$0xff] %v10088
        %10794 = vst [vmem:[%s256 + $0x78] sm:$0xff] %v10137
        %10795 = vst [vmem:[%s256 + $0x80] sm:$0xff] %v10186
        %10796 = vst [vmem:[%s256 + $0x88] sm:$0xff] %v10235
        %10797 = vst [vmem:[%s256 + $0x90] sm:$0xff] %v10284
        %10798 = vst [vmem:[%s256 + $0x98] sm:$0xff] %v10333
        %10799 = vst [vmem:[%s256 + $0xa0] sm:$0xff] %v10382
        %10800 = vst [vmem:[%s256 + $0xa8] sm:$0xff] %v10431
        %10801 = vst [vmem:[%s256 + $0xb0] sm:$0xff] %v10480
        %10802 = vst [vmem:[%s256 + $0xb8] sm:$0xff] %v10529
        %10803 = vst [vmem:[%s256 + $0xc0] sm:$0xff] %v10578
        %10804 = vst [vmem:[%s256 + $0xc8] sm:$0xff] %v10627
        %10805 = vst [vmem:[%s256 + $0xd0] sm:$0xff] %v10676
        %10806 = vst [vmem:[%s256 + $0xd8] sm:$0xff] %v10725
        %v10807 = vlaneseq
        %vm10808 = vcmp.ge.s32.totalorder %v10807, 0
        %vm10809 = vcmp.lt.s32.totalorder %v10807, 512
        %vm10810 = vmand %vm10808, %vm10809
        %10811 = vst.msk [vmem:[%s256 + $0xe0] sm:$0xf] %vm10810, %v10749
        %s10812 = smul.u32 228, %s20
        %p10813 = scmp.lt.s32.totalorder %s10812, 911
        %s10814 = scalar_select %p10813, %s10812, 911
        %s10815 = scalar_lea.vmem %s4, %s10814
        // Predicated region
        $region53: #{hypernetwork_cnn_fmnist.1} parent=35 // pred_check
          %p10816 = pneg %p127
        $region54: #{hypernetwork_cnn_fmnist.1} parent=35 // pred_check_branch
          %10818 = sbr.rel (%p10816) target = $region56
        $region55: #{hypernetwork_cnn_fmnist.1} parent=35 // pred_region
          %s10819 = smul.u32 228, %s20
        $region56: #{hypernetwork_cnn_fmnist.1} parent=35 // pred_fallthru
          _
      $region36: #{hypernetwork_cnn_fmnist.1} parent=5 // pred_fallthru
        _
      %p10820 = scmp.le.s32.totalorder 2, %s15
      // Predicated region
      $region57: #{hypernetwork_cnn_fmnist.1} parent=5 // pred_check
        %p10821 = pneg %p10820
      $region58: #{hypernetwork_cnn_fmnist.1} parent=5 // pred_check_branch
        %10823 = sbr.rel (%p10821) target = $region60
      $region59: #{hypernetwork_cnn_fmnist.1} parent=5 // pred_region
        %s10824 = ssub.s32 %s15, 2
        // Predicated region
        $region61: #{hypernetwork_cnn_fmnist.1} parent=59 // pred_check
          %p10825 = pneg %p133
        $region62: #{hypernetwork_cnn_fmnist.1} parent=59 // pred_check_branch
          %10827 = sbr.rel (%p10825) target = $region64
        $region63: #{hypernetwork_cnn_fmnist.1} parent=59 // pred_region
          %s10828 = smul.u32 228, %s21
          %p10829 = scmp.lt.s32.totalorder %s10828, 911
          %s10830 = scalar_select %p10829, %s10828, 911
          %s10831 = scalar_lea.vmem %s4, %s10830
        $region64: #{hypernetwork_cnn_fmnist.1} parent=59 // pred_fallthru
          _
      $region60: #{hypernetwork_cnn_fmnist.1} parent=5 // pred_fallthru
        _
    $region6: #{hypernetwork_cnn_fmnist.1} parent=1 // loop_footer
      %s19 = sadd.s32 1, %s15
    $region7: #{hypernetwork_cnn_fmnist.1} parent=1 // loop_footer_branch
      %14 = sbr.rel target = $region3
    $region8: #{hypernetwork_cnn_fmnist.1} parent=1 // loop_exit
      _
    %10832 = vsyncpa [#allocation3], 1
    %s10833 = scalar_lea.sflag [#allocation3], 1
    %10834 = vsyncpa %s10833, 1
    %10835 = vsyncpa [#allocation5], 1
    %10836 = vsyncpa [#allocation8], 1
    %s10837 = scalar_lea.sflag [#allocation8], 1
    %10838 = vsyncpa %s10837, 1

</llo_original>
